<compile_context>
chip_gen: v6e
topology: v6e:2x2x1
jax: 0.10.0
libtpu: 0.0.40
codegen_flags: <defaults>
</compile_context>

<pallas_src>
import jax
import jax.numpy as jnp
from jax.experimental import pallas as pl
from jax.experimental.pallas import tpu as pltpu

NUM_LAYERS = 4                           # nn.RNN(i_size, h_size, 4)
T_EFF = 4                                # out[3] depends only on timesteps 0..3
N_WAVEFRONTS = NUM_LAYERS + T_EFF - 1    # 7 anti-diagonals of the (layer,time) grid
# Full-f32 matmul accuracy so the 1e-4 check against the reference is robust.
# (DEFAULT precision / bf16 operands would cut MXU passes ~3-6x if the
#  tolerance were relaxed — explicitly deferred per the review.)
_PREC = jax.lax.Precision.HIGHEST


def specified_rnn_kernel(x_ref, p_ref, wd_ref, out_ref):
    """Whole truncated forward pass in VMEM, fully unrolled.

    State layout (lanes):  for layer l, below[l] = [2lh, 2lh+h) holds the
    input coming from layer l-1, self[l] = [(2l+1)h, (2l+2)h) holds layer l's
    previous hidden state.  lanes = 2*NUM_LAYERS*h = 256 for h=32.

    x_ref:  (T_EFF*bpad, i_pad)  first 4 timesteps, batch padded to 8, flat
    p_ref:  (lanes+i_pad+8, lanes) packed [W_big ; Wx_big ; bias_wf]
    wd_ref: (lanes, o)           dense weight lifted to the state width
    out_ref:(batch, o)           log_softmax(dense(h[3][3]), dim=0)
    """
    batch, _ = out_ref.shape
    lanes = p_ref.shape[1]                  # 2 * NUM_LAYERS * h
    bpad = x_ref.shape[0] // T_EFF          # batch padded to a sublane multiple
    i_pad = x_ref.shape[1]

    w_big = p_ref[0:lanes, :]                               # (8h, 8h) block-diag
    wx_big = p_ref[lanes:lanes + i_pad, :]                  # (i_pad, 8h)
    bias_wf = p_ref[lanes + i_pad:lanes + i_pad + 8, :]     # (8, 8h), rows 0..6 used

    # Hoisted layer-0 input projection for all 4 timesteps in ONE matmul,
    # already placed into the self[0]/below[1] lane slots by the wrapper.
    prex = jnp.dot(x_ref[...], wx_big,
                   preferred_element_type=jnp.float32, precision=_PREC)

    # Wavefront d = 0: state is all-zero, recurrent matmul skipped entirely.
    hstate = jnp.tanh(prex[0:bpad] + bias_wf[0])
    # Wavefronts d = 1..6: one block-diagonal MXU push + one EUP tanh each.
    for d in range(1, N_WAVEFRONTS):
        pre = jnp.dot(hstate, w_big,
                      preferred_element_type=jnp.float32, precision=_PREC)
        pre = pre + bias_wf[d]                               # gated per wavefront
        if d < T_EFF:                                        # layer 0 still active
            pre = pre + prex[d * bpad:(d + 1) * bpad]        # sublane-aligned slice
        hstate = jnp.tanh(pre)

    # Dense head: wd_ref has dense.weight.T planted in layer-3's self slot, so
    # no lane slice of hstate is needed.  Dense bias omitted (constant along
    # dim 0 -> cancels exactly in log_softmax over dim 0).
    z = jnp.dot(hstate, wd_ref[...],
                preferred_element_type=jnp.float32, precision=_PREC)
    z = z[0:batch]                           # drop batch-padding rows BEFORE softmax
    m = jnp.max(z, axis=0, keepdims=True)
    lse = jnp.log(jnp.sum(jnp.exp(z - m), axis=0, keepdims=True))
    out_ref[...] = z - m - lse


def specified_rnn_forward(x, params):
    """Wrapper: pad batch to 8 sublanes, build the block-diagonal wavefront
    weight / gated biases, pack everything into 3 VMEM buffers, single-program
    launch (no grid — tiny, purely latency-bound problem)."""
    seq, batch, i_size = x.shape
    assert seq >= T_EFF, "SpecifiedRNN reads out[3]; requires seq_len >= 4"
    h = params["w_hh"].shape[-1]
    o_size = params["wd"].shape[0]
    lanes = 2 * NUM_LAYERS * h
    bpad = ((batch + 7) // 8) * 8
    i_pad = ((i_size + 7) // 8) * 8

    def below(l):   # lane offset of layer l's "input from the layer below" slot
        return 2 * l * h

    def self_(l):   # lane offset of layer l's "own previous hidden state" slot
        return (2 * l + 1) * h

    # x: first 4 timesteps, batch padded to a sublane multiple, flattened so the
    # in-kernel per-wavefront row slices are whole-vreg (tile-aligned) slices.
    x4 = jnp.zeros((T_EFF, bpad, i_pad), jnp.float32)
    x4 = x4.at[:, :batch, :i_size].set(x[:T_EFF].astype(jnp.float32))
    x4 = x4.reshape(T_EFF * bpad, i_pad)

    # Block-diagonal wavefront weight; layer l's output columns are duplicated
    # into self[l] AND below[l+1] so the next state needs no lane repacking.
    w_big = jnp.zeros((lanes, lanes), jnp.float32)
    for l in range(NUM_LAYERS):
        wih_t = (jnp.zeros((h, h), jnp.float32) if l == 0        # layer-0 x-proj hoisted
                 else params["w_ihr"][l - 1].T.astype(jnp.float32))
        whh_t = params["w_hh"][l].T.astype(jnp.float32)
        cols = [self_(l)] + ([below(l + 1)] if l < NUM_LAYERS - 1 else [])
        for c in cols:
            w_big = w_big.at[below(l):below(l) + h, c:c + h].set(wih_t)
            w_big = w_big.at[self_(l):self_(l) + h, c:c + h].set(whh_t)

    # Layer-0 input projection weight, planted directly into its lane slots.
    wx_big = jnp.zeros((i_pad, lanes), jnp.float32)
    wih0_t = params["w_ih0"].T.astype(jnp.float32)
    wx_big = wx_big.at[:i_size, self_(0):self_(0) + h].set(wih0_t)
    wx_big = wx_big.at[:i_size, below(1):below(1) + h].set(wih0_t)

    # Per-wavefront gated biases: only (layer,time) cells active on diagonal d
    # receive their bias, so not-yet-started layers stay exactly zero.
    bias = (params["b_ih"] + params["b_hh"]).astype(jnp.float32)      # (4, h)
    bias_wf = jnp.zeros((8, lanes), jnp.float32)                      # rows 0..6 used
    for d in range(N_WAVEFRONTS):
        for l in range(max(0, d - (T_EFF - 1)), min(NUM_LAYERS - 1, d) + 1):
            bias_wf = bias_wf.at[d, self_(l):self_(l) + h].set(bias[l])
            if l < NUM_LAYERS - 1:
                bias_wf = bias_wf.at[d, below(l + 1):below(l + 1) + h].set(bias[l])

    packed = jnp.concatenate([w_big, wx_big, bias_wf], axis=0)   # one weights DMA

    # Dense head lifted to the full state width: picks layer-3's self slot, so
    # the kernel avoids a non-tile-aligned lane slice of the final state.
    wd_big = jnp.zeros((lanes, o_size), jnp.float32)
    wd_big = wd_big.at[self_(NUM_LAYERS - 1):self_(NUM_LAYERS - 1) + h, :].set(
        params["wd"].T.astype(jnp.float32))
    # Dense bias intentionally dropped: constant over dim 0 => cancels in
    # log_softmax(dim=0); mathematically exact.

    vmem = pl.BlockSpec(memory_space=pltpu.MemorySpace.VMEM)
    # TODO(synk): if scaled up (large batch/hidden), add a batch grid axis with
    # dimension_semantics=("parallel",) to use both v7x TensorCores and budget
    # tiles against v7x's 64 MiB physical / 32 MiB default-scoped VMEM.
    return pl.pallas_call(
        specified_rnn_kernel,
        out_shape=jax.ShapeDtypeStruct((batch, o_size), jnp.float32),
        in_specs=[vmem, vmem, vmem],
        out_specs=vmem,
    )(x4, packed, wd_big)


def ref_forward(x, p):
    """Pure-JAX reference mirroring PyTorch nn.RNN(num_layers=4) semantics."""
    seq, batch, _ = x.shape
    h_size = p["w_hh"].shape[-1]
    layer_in = x
    for l in range(NUM_LAYERS):
        w_ih = p["w_ih0"] if l == 0 else p["w_ihr"][l - 1]
        w_hh = p["w_hh"][l]
        bias = p["b_ih"][l] + p["b_hh"][l]
        h_prev = jnp.zeros((batch, h_size), jnp.float32)
        outs = []
        for t in range(seq):
            h_prev = jnp.tanh(
                jnp.dot(layer_in[t], w_ih.T, precision=_PREC)
                + jnp.dot(h_prev, w_hh.T, precision=_PREC) + bias)
            outs.append(h_prev)
        layer_in = jnp.stack(outs)
    z = jnp.dot(layer_in[3], p["wd"].T, precision=_PREC) + p["bd"]
    return jax.nn.log_softmax(z, axis=0)


def init_params(key, i_size, h_size, o_size):
    """Deterministic init mimicking PyTorch's U(-1/sqrt(h), 1/sqrt(h))."""
    k = 1.0 / jnp.sqrt(jnp.float32(h_size))
    keys = jax.random.split(key, 8)
    u = lambda kk, shape: jax.random.uniform(kk, shape, jnp.float32, -k, k)
    return {
        "w_ih0": u(keys[0], (h_size, i_size)),                  # layer 0
        "w_ihr": u(keys[1], (NUM_LAYERS - 1, h_size, h_size)),  # layers 1..3
        "w_hh": u(keys[2], (NUM_LAYERS, h_size, h_size)),
        "b_ih": u(keys[3], (NUM_LAYERS, h_size)),
        "b_hh": u(keys[4], (NUM_LAYERS, h_size)),
        "wd": u(keys[5], (o_size, h_size)),
        "bd": u(keys[6], (o_size,)),
    }


if __name__ == "__main__":
    SEQ, BATCH, I_SIZE, H_SIZE, O_SIZE = 8, 4, 16, 32, 8

    key = jax.random.PRNGKey(0)
    k_x, k_p = jax.random.split(key)
    x = jax.random.normal(k_x, (SEQ, BATCH, I_SIZE), jnp.float32)
    params = init_params(k_p, I_SIZE, H_SIZE, O_SIZE)

    out = jax.block_until_ready(specified_rnn_forward(x, params))
    ref = jax.block_until_ready(ref_forward(x, params))

    assert out.shape == (BATCH, O_SIZE)
    assert bool(jnp.all(jnp.isfinite(out)))
    err = float(jnp.max(jnp.abs(out - ref)))
    assert err < 1e-4, f"max abs err {err}"
    print("KERNEL_OK")
</pallas_src>

<mosaic_0001>
module attributes {stable_mosaic.version = 11 : i64} {
  func.func @specified_rnn_kernel(%arg0: memref<32x16xf32, #tpu.memory_space<vmem>>, %arg1: memref<280x256xf32, #tpu.memory_space<vmem>>, %arg2: memref<256x8xf32, #tpu.memory_space<vmem>>, %arg3: memref<4x8xf32, #tpu.memory_space<vmem>>) attributes {dimension_semantics = [], scalar_prefetch = 0 : i64, scratch_operands = 0 : i64, tpu.core_type = #tpu.core_type<tc>} {
    %c0 = arith.constant 0 : index
    %c0_0 = arith.constant 0 : index
    %0 = vector.load %arg1[%c0, %c0_0] : memref<280x256xf32, #tpu.memory_space<vmem>>, vector<256x256xf32>
    %c256 = arith.constant 256 : index
    %c0_1 = arith.constant 0 : index
    %1 = vector.load %arg1[%c256, %c0_1] : memref<280x256xf32, #tpu.memory_space<vmem>>, vector<16x256xf32>
    %c272 = arith.constant 272 : index
    %c0_2 = arith.constant 0 : index
    %2 = vector.load %arg1[%c272, %c0_2] : memref<280x256xf32, #tpu.memory_space<vmem>>, vector<8x256xf32>
    %c0_3 = arith.constant 0 : index
    %c0_4 = arith.constant 0 : index
    %3 = vector.load %arg0[%c0_3, %c0_4] : memref<32x16xf32, #tpu.memory_space<vmem>>, vector<32x16xf32>
    %cst = arith.constant dense<0.000000e+00> : vector<32x256xf32>
    %4 = tpu.matmul %3, %1, %cst {dimension_numbers = #tpu.dot_dimension_numbers<[1], [0], [0], [1], [0, 0, 1, 1], [], []>, precision = #tpu.contract_precision<fp32>} : vector<32x16xf32>, vector<16x256xf32>, vector<32x256xf32> -> vector<32x256xf32>
    %5 = vector.extract_strided_slice %4 {offsets = [0, 0], sizes = [8, 256], strides = [1, 1]} : vector<32x256xf32> to vector<8x256xf32>
    %6 = vector.extract_strided_slice %2 {offsets = [0, 0], sizes = [1, 256], strides = [1, 1]} : vector<8x256xf32> to vector<1x256xf32>
    %7 = vector.shape_cast %6 : vector<1x256xf32> to vector<256xf32>
    %8 = vector.shape_cast %7 : vector<256xf32> to vector<1x256xf32>
    %9 = vector.broadcast %8 : vector<1x256xf32> to vector<8x256xf32>
    %10 = arith.addf %5, %9 : vector<8x256xf32>
    %11 = math.tanh %10 : vector<8x256xf32>
    %cst_5 = arith.constant dense<0.000000e+00> : vector<8x256xf32>
    %12 = tpu.matmul %11, %0, %cst_5 {dimension_numbers = #tpu.dot_dimension_numbers<[1], [0], [0], [1], [0, 0, 1, 1], [], []>, precision = #tpu.contract_precision<fp32>} : vector<8x256xf32>, vector<256x256xf32>, vector<8x256xf32> -> vector<8x256xf32>
    %13 = vector.extract_strided_slice %2 {offsets = [1, 0], sizes = [1, 256], strides = [1, 1]} : vector<8x256xf32> to vector<1x256xf32>
    %14 = vector.shape_cast %13 : vector<1x256xf32> to vector<256xf32>
    %15 = vector.shape_cast %14 : vector<256xf32> to vector<1x256xf32>
    %16 = vector.broadcast %15 : vector<1x256xf32> to vector<8x256xf32>
    %17 = arith.addf %12, %16 : vector<8x256xf32>
    %18 = vector.extract_strided_slice %4 {offsets = [8, 0], sizes = [8, 256], strides = [1, 1]} : vector<32x256xf32> to vector<8x256xf32>
    %19 = arith.addf %17, %18 : vector<8x256xf32>
    %20 = math.tanh %19 : vector<8x256xf32>
    %cst_6 = arith.constant dense<0.000000e+00> : vector<8x256xf32>
    %21 = tpu.matmul %20, %0, %cst_6 {dimension_numbers = #tpu.dot_dimension_numbers<[1], [0], [0], [1], [0, 0, 1, 1], [], []>, precision = #tpu.contract_precision<fp32>} : vector<8x256xf32>, vector<256x256xf32>, vector<8x256xf32> -> vector<8x256xf32>
    %22 = vector.extract_strided_slice %2 {offsets = [2, 0], sizes = [1, 256], strides = [1, 1]} : vector<8x256xf32> to vector<1x256xf32>
    %23 = vector.shape_cast %22 : vector<1x256xf32> to vector<256xf32>
    %24 = vector.shape_cast %23 : vector<256xf32> to vector<1x256xf32>
    %25 = vector.broadcast %24 : vector<1x256xf32> to vector<8x256xf32>
    %26 = arith.addf %21, %25 : vector<8x256xf32>
    %27 = vector.extract_strided_slice %4 {offsets = [16, 0], sizes = [8, 256], strides = [1, 1]} : vector<32x256xf32> to vector<8x256xf32>
    %28 = arith.addf %26, %27 : vector<8x256xf32>
    %29 = math.tanh %28 : vector<8x256xf32>
    %cst_7 = arith.constant dense<0.000000e+00> : vector<8x256xf32>
    %30 = tpu.matmul %29, %0, %cst_7 {dimension_numbers = #tpu.dot_dimension_numbers<[1], [0], [0], [1], [0, 0, 1, 1], [], []>, precision = #tpu.contract_precision<fp32>} : vector<8x256xf32>, vector<256x256xf32>, vector<8x256xf32> -> vector<8x256xf32>
    %31 = vector.extract_strided_slice %2 {offsets = [3, 0], sizes = [1, 256], strides = [1, 1]} : vector<8x256xf32> to vector<1x256xf32>
    %32 = vector.shape_cast %31 : vector<1x256xf32> to vector<256xf32>
    %33 = vector.shape_cast %32 : vector<256xf32> to vector<1x256xf32>
    %34 = vector.broadcast %33 : vector<1x256xf32> to vector<8x256xf32>
    %35 = arith.addf %30, %34 : vector<8x256xf32>
    %36 = vector.extract_strided_slice %4 {offsets = [24, 0], sizes = [8, 256], strides = [1, 1]} : vector<32x256xf32> to vector<8x256xf32>
    %37 = arith.addf %35, %36 : vector<8x256xf32>
    %38 = math.tanh %37 : vector<8x256xf32>
    %cst_8 = arith.constant dense<0.000000e+00> : vector<8x256xf32>
    %39 = tpu.matmul %38, %0, %cst_8 {dimension_numbers = #tpu.dot_dimension_numbers<[1], [0], [0], [1], [0, 0, 1, 1], [], []>, precision = #tpu.contract_precision<fp32>} : vector<8x256xf32>, vector<256x256xf32>, vector<8x256xf32> -> vector<8x256xf32>
    %40 = vector.extract_strided_slice %2 {offsets = [4, 0], sizes = [1, 256], strides = [1, 1]} : vector<8x256xf32> to vector<1x256xf32>
    %41 = vector.shape_cast %40 : vector<1x256xf32> to vector<256xf32>
    %42 = vector.shape_cast %41 : vector<256xf32> to vector<1x256xf32>
    %43 = vector.broadcast %42 : vector<1x256xf32> to vector<8x256xf32>
    %44 = arith.addf %39, %43 : vector<8x256xf32>
    %45 = math.tanh %44 : vector<8x256xf32>
    %cst_9 = arith.constant dense<0.000000e+00> : vector<8x256xf32>
    %46 = tpu.matmul %45, %0, %cst_9 {dimension_numbers = #tpu.dot_dimension_numbers<[1], [0], [0], [1], [0, 0, 1, 1], [], []>, precision = #tpu.contract_precision<fp32>} : vector<8x256xf32>, vector<256x256xf32>, vector<8x256xf32> -> vector<8x256xf32>
    %47 = vector.extract_strided_slice %2 {offsets = [5, 0], sizes = [1, 256], strides = [1, 1]} : vector<8x256xf32> to vector<1x256xf32>
    %48 = vector.shape_cast %47 : vector<1x256xf32> to vector<256xf32>
    %49 = vector.shape_cast %48 : vector<256xf32> to vector<1x256xf32>
    %50 = vector.broadcast %49 : vector<1x256xf32> to vector<8x256xf32>
    %51 = arith.addf %46, %50 : vector<8x256xf32>
    %52 = math.tanh %51 : vector<8x256xf32>
    %cst_10 = arith.constant dense<0.000000e+00> : vector<8x256xf32>
    %53 = tpu.matmul %52, %0, %cst_10 {dimension_numbers = #tpu.dot_dimension_numbers<[1], [0], [0], [1], [0, 0, 1, 1], [], []>, precision = #tpu.contract_precision<fp32>} : vector<8x256xf32>, vector<256x256xf32>, vector<8x256xf32> -> vector<8x256xf32>
    %54 = vector.extract_strided_slice %2 {offsets = [6, 0], sizes = [1, 256], strides = [1, 1]} : vector<8x256xf32> to vector<1x256xf32>
    %55 = vector.shape_cast %54 : vector<1x256xf32> to vector<256xf32>
    %56 = vector.shape_cast %55 : vector<256xf32> to vector<1x256xf32>
    %57 = vector.broadcast %56 : vector<1x256xf32> to vector<8x256xf32>
    %58 = arith.addf %53, %57 : vector<8x256xf32>
    %59 = math.tanh %58 : vector<8x256xf32>
    %c0_11 = arith.constant 0 : index
    %c0_12 = arith.constant 0 : index
    %60 = vector.load %arg2[%c0_11, %c0_12] : memref<256x8xf32, #tpu.memory_space<vmem>>, vector<256x8xf32>
    %cst_13 = arith.constant dense<0.000000e+00> : vector<8x8xf32>
    %61 = tpu.matmul %59, %60, %cst_13 {dimension_numbers = #tpu.dot_dimension_numbers<[1], [0], [0], [1], [0, 0, 1, 1], [], []>, precision = #tpu.contract_precision<fp32>} : vector<8x256xf32>, vector<256x8xf32>, vector<8x8xf32> -> vector<8x8xf32>
    %62 = vector.extract_strided_slice %61 {offsets = [0, 0], sizes = [4, 8], strides = [1, 1]} : vector<8x8xf32> to vector<4x8xf32>
    %cst_14 = arith.constant dense<0xFF800000> : vector<8xf32>
    %63 = vector.multi_reduction <maximumf>, %62, %cst_14 [0] : vector<4x8xf32> to vector<8xf32>
    %64 = vector.shape_cast %63 : vector<8xf32> to vector<1x8xf32>
    %65 = vector.broadcast %64 : vector<1x8xf32> to vector<4x8xf32>
    %66 = arith.subf %62, %65 : vector<4x8xf32>
    %67 = math.exp %66 : vector<4x8xf32>
    %cst_15 = arith.constant dense<0.000000e+00> : vector<8xf32>
    %68 = vector.multi_reduction <add>, %67, %cst_15 [0] : vector<4x8xf32> to vector<8xf32>
    %69 = vector.shape_cast %68 : vector<8xf32> to vector<1x8xf32>
    %70 = math.log %69 : vector<1x8xf32>
    %71 = vector.broadcast %64 : vector<1x8xf32> to vector<4x8xf32>
    %72 = arith.subf %62, %71 : vector<4x8xf32>
    %73 = vector.broadcast %70 : vector<1x8xf32> to vector<4x8xf32>
    %74 = arith.subf %72, %73 : vector<4x8xf32>
    %c0_16 = arith.constant 0 : index
    %c0_17 = arith.constant 0 : index
    %75 = vector.load %arg3[%c0_16, %c0_17] : memref<4x8xf32, #tpu.memory_space<vmem>>, vector<4x8xf32>
    tpu.vector_store %arg3[%c0_16, %c0_17], %74 {strides = array<i32>} : memref<4x8xf32, #tpu.memory_space<vmem>>, vector<4x8xf32>,
    return
  }
}

</mosaic_0001>

<llo_original>
// kernel: tpu_custom_call.1
$region0: #{tpu_custom_call.1}
  #allocation0 [shape = 'u32[]', space=smem, size = 0x4, offset = 0x4, fixed_abs, tag = 'smem constant byte address 0x4 - core index']
  #allocation1 [shape = 'u32[144,128]{1,0:T(1,128)}', space=vmem, size = 0x12000, scoped, tag = 'internal scratch']
  %s0 = inlined_call_operand.vmem [shape: f32[32,16], index: 0, kind: input, shape index: {}]
  %s1 = inlined_call_operand.hbm [shape: f32[280,256], index: 1, kind: input, shape index: {}]
  %s2 = inlined_call_operand.vmem [shape: f32[256,8], index: 2, kind: input, shape index: {}]
  %s3 = inlined_call_operand.hbm [shape: f32[4,8], index: 3, kind: output, shape index: {}]
  %s4 = sld [smem:[#allocation0]]
  $region26: #{tpu_custom_call.1} parent=0
    _
  %s6 = ssub.s32 1, %s4
  %s7 = scalar_select 0, %s6, %s4
  $region1: #{tpu_custom_call.1} parent=0
    #allocation2 [shape = 'u8[286720]{0}', space=vmem, size = 0x46000, scoped, tag = 'input window, operand 1, single buffered']
    #allocation3 [shape = 's32[1]{0}', space=sflag, size = 0x4, scoped, tag = 'scoped memory for tpu_custom_call.1']
    #allocation4 [shape = 's32[1]{0}', space=sflag, size = 0x4, scoped, tag = 'scoped memory for tpu_custom_call.1']
    #allocation5 [shape = 'u8[2048]{0}', space=vmem, size = 0x800, scoped, tag = 'output window, operand 0, single buffered']
    %8 = vsyncpa [#allocation3], 0
    %9 = vsyncpa [#allocation4], 0
    // Predicated region
    $region2: #{tpu_custom_call.1} parent=1 // pred_check
      _
    $region3: #{tpu_custom_call.1} parent=1 // pred_check_branch
      %11 = sbr.rel (0) target = $region5
    $region4: #{tpu_custom_call.1} parent=1 // pred_region
      _
    $region5: #{tpu_custom_call.1} parent=1 // pred_fallthru
      _
    // Predicated region
    $region6: #{tpu_custom_call.1} parent=1 // pred_check
      _
    $region7: #{tpu_custom_call.1} parent=1 // pred_check_branch
      %13 = sbr.rel (0) target = $region9
    $region8: #{tpu_custom_call.1} parent=1 // pred_region
      %s15 = ssub.s32 8960, 8960
      %16 = vsyncadd [#allocation3], %s15
      %s17 = sshll.u32 [#allocation2], 4
      %s18 = int_to_ptr.vmem [resolvable:$true] %s17
      %23 = dma.hbm_to_vmem [thread:$0]  %s1, 8960, %s18, [#allocation3], 256, 256, 16
    $region9: #{tpu_custom_call.1} parent=1 // pred_fallthru
      _
    // Predicated region
    $region10: #{tpu_custom_call.1} parent=1 // pred_check
      _
    $region11: #{tpu_custom_call.1} parent=1 // pred_check_branch
      %25 = sbr.rel (0) target = $region13
    $region12: #{tpu_custom_call.1} parent=1 // pred_region
      _
    $region13: #{tpu_custom_call.1} parent=1 // pred_fallthru
      _
    // Predicated region
    $region14: #{tpu_custom_call.1} parent=1 // pred_check
      _
    $region15: #{tpu_custom_call.1} parent=1 // pred_check_branch
      %27 = sbr.rel (0) target = $region17
    $region16: #{tpu_custom_call.1} parent=1 // pred_region
      %28 = dma.done [#allocation3], 8960
    $region17: #{tpu_custom_call.1} parent=1 // pred_fallthru
      _
    %v29 = vld [vmem:[#allocation2] sm:$0xff]
    %v30 = vld [vmem:[#allocation2 + $0x8] sm:$0xff]
    %v31 = vld [vmem:[#allocation2 + $0x10] sm:$0xff]
    %v32 = vld [vmem:[#allocation2 + $0x18] sm:$0xff]
    %v33 = vld [vmem:[#allocation2 + $0x20] sm:$0xff]
    %v34 = vld [vmem:[#allocation2 + $0x28] sm:$0xff]
    %v35 = vld [vmem:[#allocation2 + $0x30] sm:$0xff]
    %v36 = vld [vmem:[#allocation2 + $0x38] sm:$0xff]
    %v37 = vld [vmem:[#allocation2 + $0x40] sm:$0xff]
    %v38 = vld [vmem:[#allocation2 + $0x48] sm:$0xff]
    %v39 = vld [vmem:[#allocation2 + $0x50] sm:$0xff]
    %v40 = vld [vmem:[#allocation2 + $0x58] sm:$0xff]
    %v41 = vld [vmem:[#allocation2 + $0x60] sm:$0xff]
    %v42 = vld [vmem:[#allocation2 + $0x68] sm:$0xff]
    %v43 = vld [vmem:[#allocation2 + $0x70] sm:$0xff]
    %v44 = vld [vmem:[#allocation2 + $0x78] sm:$0xff]
    %v45 = vld [vmem:[#allocation2 + $0x80] sm:$0xff]
    %v46 = vld [vmem:[#allocation2 + $0x88] sm:$0xff]
    %v47 = vld [vmem:[#allocation2 + $0x90] sm:$0xff]
    %v48 = vld [vmem:[#allocation2 + $0x98] sm:$0xff]
    %v49 = vld [vmem:[#allocation2 + $0xa0] sm:$0xff]
    %v50 = vld [vmem:[#allocation2 + $0xa8] sm:$0xff]
    %v51 = vld [vmem:[#allocation2 + $0xb0] sm:$0xff]
    %v52 = vld [vmem:[#allocation2 + $0xb8] sm:$0xff]
    %v53 = vld [vmem:[#allocation2 + $0xc0] sm:$0xff]
    %v54 = vld [vmem:[#allocation2 + $0xc8] sm:$0xff]
    %v55 = vld [vmem:[#allocation2 + $0xd0] sm:$0xff]
    %v56 = vld [vmem:[#allocation2 + $0xd8] sm:$0xff]
    %v57 = vld [vmem:[#allocation2 + $0xe0] sm:$0xff]
    %v58 = vld [vmem:[#allocation2 + $0xe8] sm:$0xff]
    %v59 = vld [vmem:[#allocation2 + $0xf0] sm:$0xff]
    %v60 = vld [vmem:[#allocation2 + $0xf8] sm:$0xff]
    %v61 = vld [vmem:[#allocation2 + $0x100] sm:$0xff]
    %v62 = vld [vmem:[#allocation2 + $0x108] sm:$0xff]
    %v63 = vld [vmem:[#allocation2 + $0x110] sm:$0xff]
    %v64 = vld [vmem:[#allocation2 + $0x118] sm:$0xff]
    %v65 = vld [vmem:[#allocation2 + $0x120] sm:$0xff]
    %v66 = vld [vmem:[#allocation2 + $0x128] sm:$0xff]
    %v67 = vld [vmem:[#allocation2 + $0x130] sm:$0xff]
    %v68 = vld [vmem:[#allocation2 + $0x138] sm:$0xff]
    %v69 = vld [vmem:[#allocation2 + $0x140] sm:$0xff]
    %v70 = vld [vmem:[#allocation2 + $0x148] sm:$0xff]
    %v71 = vld [vmem:[#allocation2 + $0x150] sm:$0xff]
    %v72 = vld [vmem:[#allocation2 + $0x158] sm:$0xff]
    %v73 = vld [vmem:[#allocation2 + $0x160] sm:$0xff]
    %v74 = vld [vmem:[#allocation2 + $0x168] sm:$0xff]
    %v75 = vld [vmem:[#allocation2 + $0x170] sm:$0xff]
    %v76 = vld [vmem:[#allocation2 + $0x178] sm:$0xff]
    %v77 = vld [vmem:[#allocation2 + $0x180] sm:$0xff]
    %v78 = vld [vmem:[#allocation2 + $0x188] sm:$0xff]
    %v79 = vld [vmem:[#allocation2 + $0x190] sm:$0xff]
    %v80 = vld [vmem:[#allocation2 + $0x198] sm:$0xff]
    %v81 = vld [vmem:[#allocation2 + $0x1a0] sm:$0xff]
    %v82 = vld [vmem:[#allocation2 + $0x1a8] sm:$0xff]
    %v83 = vld [vmem:[#allocation2 + $0x1b0] sm:$0xff]
    %v84 = vld [vmem:[#allocation2 + $0x1b8] sm:$0xff]
    %v85 = vld [vmem:[#allocation2 + $0x1c0] sm:$0xff]
    %v86 = vld [vmem:[#allocation2 + $0x1c8] sm:$0xff]
    %v87 = vld [vmem:[#allocation2 + $0x1d0] sm:$0xff]
    %v88 = vld [vmem:[#allocation2 + $0x1d8] sm:$0xff]
    %v89 = vld [vmem:[#allocation2 + $0x1e0] sm:$0xff]
    %v90 = vld [vmem:[#allocation2 + $0x1e8] sm:$0xff]
    %v91 = vld [vmem:[#allocation2 + $0x1f0] sm:$0xff]
    %v92 = vld [vmem:[#allocation2 + $0x1f8] sm:$0xff]
    %v93 = vld [vmem:[#allocation2 + $0x200] sm:$0xff]
    %v94 = vld [vmem:[#allocation2 + $0x208] sm:$0xff]
    %v95 = vld [vmem:[#allocation2 + $0x210] sm:$0xff]
    %v96 = vld [vmem:[#allocation2 + $0x218] sm:$0xff]
    %v97 = vld [vmem:[#allocation2 + $0x220] sm:$0xff]
    %v98 = vld [vmem:[#allocation2 + $0x228] sm:$0xff]
    %v99 = vld [vmem:[%s0] sm:$0xff]
    %v100 = vld [vmem:[%s0 + $0x8] sm:$0xff]
    %v101 = vld [vmem:[%s0 + $0x10] sm:$0xff]
    %v102 = vld [vmem:[%s0 + $0x18] sm:$0xff]
    %vm103 = vcmask 130048
    %v105 = vsel %vm103, %v99, 0
    %v108 = vsel %vm103, %v100, 0
    %v111 = vsel %vm103, %v101, 0
    %v114 = vsel %vm103, %v102, 0
    %116 = vmatprep.subr.mxu0 0.0
    %117 = vmatpush1.msra.mxu0 0.0
    %118 = vmatprep.subr.mxu0 0.0
    %119 = vmatpush1.msra.mxu0 0.0
    %120 = vmatprep.subr.mxu0 0.0
    %121 = vmatpush1.msra.mxu0 0.0
    %122 = vmatprep.subr.mxu0 0.0
    %123 = vmatpush1.msra.mxu0 0.0
    %124 = vmatprep.subr.mxu0 0.0
    %125 = vmatpush1.msra.mxu0 0.0
    %126 = vmatprep.subr.mxu0 0.0
    %127 = vmatpush1.msra.mxu0 0.0
    %128 = vmatprep.subr.mxu0 0.0
    %129 = vmatpush1.msra.mxu0 0.0
    %130 = vmatprep.subr.mxu0 0.0
    %131 = vmatpush1.msra.mxu0 0.0
    %132 = vmatprep.subr.mxu0 0.0
    %133 = vmatpush1.msra.mxu0 0.0
    %134 = vmatprep.subr.mxu0 0.0
    %135 = vmatpush1.msra.mxu0 0.0
    %136 = vmatprep.subr.mxu0 0.0
    %137 = vmatpush1.msra.mxu0 0.0
    %138 = vmatprep.subr.mxu0 0.0
    %139 = vmatpush1.msra.mxu0 0.0
    %140 = vmatprep.subr.mxu0 0.0
    %141 = vmatpush1.msra.mxu0 0.0
    %142 = vmatprep.subr.mxu0 0.0
    %143 = vmatpush1.msra.mxu0 0.0
    %v144 = vand.u32 %v96, 4294901760
    %145 = vmatprep.subr.mxu0 %v144
    %v146 = vand.u32 %v95, 4294901760
    %147 = vmatpush1.msra.mxu0 %v146
    %v148 = vand.u32 %v94, 4294901760
    %149 = vmatprep.subr.mxu0 %v148
    %v150 = vand.u32 %v93, 4294901760
    %151 = vmatpush1.msra.mxu0 %v150
    %152 = vmatprep.subr.mxu0 0.0
    %153 = vmatpush2.msra.mxu0 0.0
    %154 = vmatprep.subr.mxu0 0.0
    %155 = vmatpush2.msra.mxu0 0.0
    %156 = vmatprep.subr.mxu0 0.0
    %157 = vmatpush2.msra.mxu0 0.0
    %158 = vmatprep.subr.mxu0 0.0
    %159 = vmatpush2.msra.mxu0 0.0
    %160 = vmatprep.subr.mxu0 0.0
    %161 = vmatpush2.msra.mxu0 0.0
    %162 = vmatprep.subr.mxu0 0.0
    %163 = vmatpush2.msra.mxu0 0.0
    %164 = vmatprep.subr.mxu0 0.0
    %165 = vmatpush2.msra.mxu0 0.0
    %166 = vmatprep.subr.mxu0 0.0
    %167 = vmatpush2.msra.mxu0 0.0
    %168 = vmatprep.subr.mxu0 0.0
    %169 = vmatpush2.msra.mxu0 0.0
    %170 = vmatprep.subr.mxu0 0.0
    %171 = vmatpush2.msra.mxu0 0.0
    %172 = vmatprep.subr.mxu0 0.0
    %173 = vmatpush2.msra.mxu0 0.0
    %174 = vmatprep.subr.mxu0 0.0
    %175 = vmatpush2.msra.mxu0 0.0
    %176 = vmatprep.subr.mxu0 0.0
    %177 = vmatpush2.msra.mxu0 0.0
    %178 = vmatprep.subr.mxu0 0.0
    %179 = vmatpush2.msra.mxu0 0.0
    %180 = vmatprep.subr.mxu0 0.0
    %181 = vmatpush2.msra.mxu0 0.0
    %182 = vmatprep.subr.mxu0 0.0
    %183 = vmatpush2.msra.mxu0 0.0
    %184 = vmatprep.mubr.f32.mxu0 0.0
    %v185 = vand.u32 %v105, 4294901760
    %v186 = vsub.f32 %v105, %v185
    %v187 = vand.u32 %v186, 4294901760
    %v188 = vsub.f32 %v186, %v187
    %v189 = vand.u32 %v188, 4294901760
    %190 = vmatmul.mubr.f32.gmra.mxu0 %v189
    %v191 = vpop.f32.mrf.mxu0
    %v192 = vadd.f32 0.0, %v191
    %v193 = vpop.f32.mrf.mxu0
    %v194 = vadd.f32 0.0, %v193
    %195 = vmatprep.mubr.f32.mxu0 0.0
    %v196 = vand.u32 %v108, 4294901760
    %v197 = vsub.f32 %v108, %v196
    %v198 = vand.u32 %v197, 4294901760
    %v199 = vsub.f32 %v197, %v198
    %v200 = vand.u32 %v199, 4294901760
    %201 = vmatmul.mubr.f32.gmra.mxu0 %v200
    %v202 = vpop.f32.mrf.mxu0
    %v203 = vadd.f32 0.0, %v202
    %v204 = vpop.f32.mrf.mxu0
    %v205 = vadd.f32 0.0, %v204
    %206 = vmatprep.mubr.f32.mxu0 0.0
    %v207 = vand.u32 %v111, 4294901760
    %v208 = vsub.f32 %v111, %v207
    %v209 = vand.u32 %v208, 4294901760
    %v210 = vsub.f32 %v208, %v209
    %v211 = vand.u32 %v210, 4294901760
    %212 = vmatmul.mubr.f32.gmra.mxu0 %v211
    %v213 = vpop.f32.mrf.mxu0
    %v214 = vadd.f32 0.0, %v213
    %v215 = vpop.f32.mrf.mxu0
    %v216 = vadd.f32 0.0, %v215
    %217 = vmatprep.mubr.f32.mxu0 0.0
    %v218 = vand.u32 %v114, 4294901760
    %v219 = vsub.f32 %v114, %v218
    %v220 = vand.u32 %v219, 4294901760
    %v221 = vsub.f32 %v219, %v220
    %v222 = vand.u32 %v221, 4294901760
    %223 = vmatmul.mubr.f32.gmra.mxu0 %v222
    %v224 = vpop.f32.mrf.mxu0
    %v225 = vadd.f32 0.0, %v224
    %v226 = vpop.f32.mrf.mxu0
    %v227 = vadd.f32 0.0, %v226
    %228 = vdwg.mxu0
    %229 = vmatprep.subr.mxu0 0.0
    %230 = vmatpush1.msra.mxu0 0.0
    %231 = vmatprep.subr.mxu0 0.0
    %232 = vmatpush1.msra.mxu0 0.0
    %233 = vmatprep.subr.mxu0 0.0
    %234 = vmatpush1.msra.mxu0 0.0
    %235 = vmatprep.subr.mxu0 0.0
    %236 = vmatpush1.msra.mxu0 0.0
    %237 = vmatprep.subr.mxu0 0.0
    %238 = vmatpush1.msra.mxu0 0.0
    %239 = vmatprep.subr.mxu0 0.0
    %240 = vmatpush1.msra.mxu0 0.0
    %241 = vmatprep.subr.mxu0 0.0
    %242 = vmatpush1.msra.mxu0 0.0
    %243 = vmatprep.subr.mxu0 0.0
    %244 = vmatpush1.msra.mxu0 0.0
    %245 = vmatprep.subr.mxu0 0.0
    %246 = vmatpush1.msra.mxu0 0.0
    %247 = vmatprep.subr.mxu0 0.0
    %248 = vmatpush1.msra.mxu0 0.0
    %249 = vmatprep.subr.mxu0 0.0
    %250 = vmatpush1.msra.mxu0 0.0
    %251 = vmatprep.subr.mxu0 0.0
    %252 = vmatpush1.msra.mxu0 0.0
    %253 = vmatprep.subr.mxu0 0.0
    %254 = vmatpush1.msra.mxu0 0.0
    %255 = vmatprep.subr.mxu0 0.0
    %256 = vmatpush1.msra.mxu0 0.0
    %v257 = vand.u32 %v96, 4294901760
    %v258 = vsub.f32 %v96, %v257
    %v259 = vand.u32 %v258, 4294901760
    %v260 = vsub.f32 %v258, %v259
    %v261 = vand.u32 %v260, 4294901760
    %262 = vmatprep.subr.mxu0 %v261
    %v263 = vand.u32 %v95, 4294901760
    %v264 = vsub.f32 %v95, %v263
    %v265 = vand.u32 %v264, 4294901760
    %v266 = vsub.f32 %v264, %v265
    %v267 = vand.u32 %v266, 4294901760
    %268 = vmatpush1.msra.mxu0 %v267
    %v269 = vand.u32 %v94, 4294901760
    %v270 = vsub.f32 %v94, %v269
    %v271 = vand.u32 %v270, 4294901760
    %v272 = vsub.f32 %v270, %v271
    %v273 = vand.u32 %v272, 4294901760
    %274 = vmatprep.subr.mxu0 %v273
    %v275 = vand.u32 %v93, 4294901760
    %v276 = vsub.f32 %v93, %v275
    %v277 = vand.u32 %v276, 4294901760
    %v278 = vsub.f32 %v276, %v277
    %v279 = vand.u32 %v278, 4294901760
    %280 = vmatpush1.msra.mxu0 %v279
    %281 = vmatprep.subr.mxu0 0.0
    %282 = vmatpush2.msra.mxu0 0.0
    %283 = vmatprep.subr.mxu0 0.0
    %284 = vmatpush2.msra.mxu0 0.0
    %285 = vmatprep.subr.mxu0 0.0
    %286 = vmatpush2.msra.mxu0 0.0
    %287 = vmatprep.subr.mxu0 0.0
    %288 = vmatpush2.msra.mxu0 0.0
    %289 = vmatprep.subr.mxu0 0.0
    %290 = vmatpush2.msra.mxu0 0.0
    %291 = vmatprep.subr.mxu0 0.0
    %292 = vmatpush2.msra.mxu0 0.0
    %293 = vmatprep.subr.mxu0 0.0
    %294 = vmatpush2.msra.mxu0 0.0
    %295 = vmatprep.subr.mxu0 0.0
    %296 = vmatpush2.msra.mxu0 0.0
    %297 = vmatprep.subr.mxu0 0.0
    %298 = vmatpush2.msra.mxu0 0.0
    %299 = vmatprep.subr.mxu0 0.0
    %300 = vmatpush2.msra.mxu0 0.0
    %301 = vmatprep.subr.mxu0 0.0
    %302 = vmatpush2.msra.mxu0 0.0
    %303 = vmatprep.subr.mxu0 0.0
    %304 = vmatpush2.msra.mxu0 0.0
    %305 = vmatprep.subr.mxu0 0.0
    %306 = vmatpush2.msra.mxu0 0.0
    %307 = vmatprep.subr.mxu0 0.0
    %308 = vmatpush2.msra.mxu0 0.0
    %309 = vmatprep.subr.mxu0 0.0
    %310 = vmatpush2.msra.mxu0 0.0
    %311 = vmatprep.subr.mxu0 0.0
    %312 = vmatpush2.msra.mxu0 0.0
    %313 = vmatprep.mubr.f32.mxu0 0.0
    %v314 = vand.u32 %v105, 4294901760
    %315 = vmatmul.mubr.f32.gmra.mxu0 %v314
    %v316 = vpop.f32.mrf.mxu0
    %v317 = vadd.f32 %v192, %v316
    %v318 = vpop.f32.mrf.mxu0
    %v319 = vadd.f32 %v194, %v318
    %320 = vmatprep.mubr.f32.mxu0 0.0
    %v321 = vand.u32 %v108, 4294901760
    %322 = vmatmul.mubr.f32.gmra.mxu0 %v321
    %v323 = vpop.f32.mrf.mxu0
    %v324 = vadd.f32 %v203, %v323
    %v325 = vpop.f32.mrf.mxu0
    %v326 = vadd.f32 %v205, %v325
    %327 = vmatprep.mubr.f32.mxu0 0.0
    %v328 = vand.u32 %v111, 4294901760
    %329 = vmatmul.mubr.f32.gmra.mxu0 %v328
    %v330 = vpop.f32.mrf.mxu0
    %v331 = vadd.f32 %v214, %v330
    %v332 = vpop.f32.mrf.mxu0
    %v333 = vadd.f32 %v216, %v332
    %334 = vmatprep.mubr.f32.mxu0 0.0
    %v335 = vand.u32 %v114, 4294901760
    %336 = vmatmul.mubr.f32.gmra.mxu0 %v335
    %v337 = vpop.f32.mrf.mxu0
    %v338 = vadd.f32 %v225, %v337
    %v339 = vpop.f32.mrf.mxu0
    %v340 = vadd.f32 %v227, %v339
    %341 = vdwg.mxu0
    %342 = vmatprep.subr.mxu0 0.0
    %343 = vmatpush1.msra.mxu0 0.0
    %344 = vmatprep.subr.mxu0 0.0
    %345 = vmatpush1.msra.mxu0 0.0
    %346 = vmatprep.subr.mxu0 0.0
    %347 = vmatpush1.msra.mxu0 0.0
    %348 = vmatprep.subr.mxu0 0.0
    %349 = vmatpush1.msra.mxu0 0.0
    %350 = vmatprep.subr.mxu0 0.0
    %351 = vmatpush1.msra.mxu0 0.0
    %352 = vmatprep.subr.mxu0 0.0
    %353 = vmatpush1.msra.mxu0 0.0
    %354 = vmatprep.subr.mxu0 0.0
    %355 = vmatpush1.msra.mxu0 0.0
    %356 = vmatprep.subr.mxu0 0.0
    %357 = vmatpush1.msra.mxu0 0.0
    %358 = vmatprep.subr.mxu0 0.0
    %359 = vmatpush1.msra.mxu0 0.0
    %360 = vmatprep.subr.mxu0 0.0
    %361 = vmatpush1.msra.mxu0 0.0
    %362 = vmatprep.subr.mxu0 0.0
    %363 = vmatpush1.msra.mxu0 0.0
    %364 = vmatprep.subr.mxu0 0.0
    %365 = vmatpush1.msra.mxu0 0.0
    %366 = vmatprep.subr.mxu0 0.0
    %367 = vmatpush1.msra.mxu0 0.0
    %368 = vmatprep.subr.mxu0 0.0
    %369 = vmatpush1.msra.mxu0 0.0
    %v370 = vand.u32 %v96, 4294901760
    %v371 = vsub.f32 %v96, %v370
    %372 = vmatprep.subr.mxu0 %v371
    %v373 = vand.u32 %v95, 4294901760
    %v374 = vsub.f32 %v95, %v373
    %375 = vmatpush1.msra.mxu0 %v374
    %v376 = vand.u32 %v94, 4294901760
    %v377 = vsub.f32 %v94, %v376
    %378 = vmatprep.subr.mxu0 %v377
    %v379 = vand.u32 %v93, 4294901760
    %v380 = vsub.f32 %v93, %v379
    %381 = vmatpush1.msra.mxu0 %v380
    %382 = vmatprep.subr.mxu0 0.0
    %383 = vmatpush2.msra.mxu0 0.0
    %384 = vmatprep.subr.mxu0 0.0
    %385 = vmatpush2.msra.mxu0 0.0
    %386 = vmatprep.subr.mxu0 0.0
    %387 = vmatpush2.msra.mxu0 0.0
    %388 = vmatprep.subr.mxu0 0.0
    %389 = vmatpush2.msra.mxu0 0.0
    %390 = vmatprep.subr.mxu0 0.0
    %391 = vmatpush2.msra.mxu0 0.0
    %392 = vmatprep.subr.mxu0 0.0
    %393 = vmatpush2.msra.mxu0 0.0
    %394 = vmatprep.subr.mxu0 0.0
    %395 = vmatpush2.msra.mxu0 0.0
    %396 = vmatprep.subr.mxu0 0.0
    %397 = vmatpush2.msra.mxu0 0.0
    %398 = vmatprep.subr.mxu0 0.0
    %399 = vmatpush2.msra.mxu0 0.0
    %400 = vmatprep.subr.mxu0 0.0
    %401 = vmatpush2.msra.mxu0 0.0
    %402 = vmatprep.subr.mxu0 0.0
    %403 = vmatpush2.msra.mxu0 0.0
    %404 = vmatprep.subr.mxu0 0.0
    %405 = vmatpush2.msra.mxu0 0.0
    %406 = vmatprep.subr.mxu0 0.0
    %407 = vmatpush2.msra.mxu0 0.0
    %408 = vmatprep.subr.mxu0 0.0
    %409 = vmatpush2.msra.mxu0 0.0
    %410 = vmatprep.subr.mxu0 0.0
    %411 = vmatpush2.msra.mxu0 0.0
    %412 = vmatprep.subr.mxu0 0.0
    %413 = vmatpush2.msra.mxu0 0.0
    %414 = vmatprep.mubr.f32.mxu0 0.0
    %v415 = vand.u32 %v105, 4294901760
    %v416 = vsub.f32 %v105, %v415
    %417 = vmatmul.mubr.f32.gmra.mxu0 %v416
    %v418 = vpop.f32.mrf.mxu0
    %v419 = vadd.f32 %v317, %v418
    %v420 = vpop.f32.mrf.mxu0
    %v421 = vadd.f32 %v319, %v420
    %422 = vmatprep.mubr.f32.mxu0 0.0
    %v423 = vand.u32 %v108, 4294901760
    %v424 = vsub.f32 %v108, %v423
    %425 = vmatmul.mubr.f32.gmra.mxu0 %v424
    %v426 = vpop.f32.mrf.mxu0
    %v427 = vadd.f32 %v324, %v426
    %v428 = vpop.f32.mrf.mxu0
    %v429 = vadd.f32 %v326, %v428
    %430 = vmatprep.mubr.f32.mxu0 0.0
    %v431 = vand.u32 %v111, 4294901760
    %v432 = vsub.f32 %v111, %v431
    %433 = vmatmul.mubr.f32.gmra.mxu0 %v432
    %v434 = vpop.f32.mrf.mxu0
    %v435 = vadd.f32 %v331, %v434
    %v436 = vpop.f32.mrf.mxu0
    %v437 = vadd.f32 %v333, %v436
    %438 = vmatprep.mubr.f32.mxu0 0.0
    %v439 = vand.u32 %v114, 4294901760
    %v440 = vsub.f32 %v114, %v439
    %441 = vmatmul.mubr.f32.gmra.mxu0 %v440
    %v442 = vpop.f32.mrf.mxu0
    %v443 = vadd.f32 %v338, %v442
    %v444 = vpop.f32.mrf.mxu0
    %v445 = vadd.f32 %v340, %v444
    %446 = vdwg.mxu0
    %447 = vmatprep.subr.mxu0 0.0
    %448 = vmatpush1.msra.mxu0 0.0
    %449 = vmatprep.subr.mxu0 0.0
    %450 = vmatpush1.msra.mxu0 0.0
    %451 = vmatprep.subr.mxu0 0.0
    %452 = vmatpush1.msra.mxu0 0.0
    %453 = vmatprep.subr.mxu0 0.0
    %454 = vmatpush1.msra.mxu0 0.0
    %455 = vmatprep.subr.mxu0 0.0
    %456 = vmatpush1.msra.mxu0 0.0
    %457 = vmatprep.subr.mxu0 0.0
    %458 = vmatpush1.msra.mxu0 0.0
    %459 = vmatprep.subr.mxu0 0.0
    %460 = vmatpush1.msra.mxu0 0.0
    %461 = vmatprep.subr.mxu0 0.0
    %462 = vmatpush1.msra.mxu0 0.0
    %463 = vmatprep.subr.mxu0 0.0
    %464 = vmatpush1.msra.mxu0 0.0
    %465 = vmatprep.subr.mxu0 0.0
    %466 = vmatpush1.msra.mxu0 0.0
    %467 = vmatprep.subr.mxu0 0.0
    %468 = vmatpush1.msra.mxu0 0.0
    %469 = vmatprep.subr.mxu0 0.0
    %470 = vmatpush1.msra.mxu0 0.0
    %471 = vmatprep.subr.mxu0 0.0
    %472 = vmatpush1.msra.mxu0 0.0
    %473 = vmatprep.subr.mxu0 0.0
    %474 = vmatpush1.msra.mxu0 0.0
    %v475 = vand.u32 %v96, 4294901760
    %476 = vmatprep.subr.mxu0 %v475
    %v477 = vand.u32 %v95, 4294901760
    %478 = vmatpush1.msra.mxu0 %v477
    %v479 = vand.u32 %v94, 4294901760
    %480 = vmatprep.subr.mxu0 %v479
    %v481 = vand.u32 %v93, 4294901760
    %482 = vmatpush1.msra.mxu0 %v481
    %483 = vmatprep.subr.mxu0 0.0
    %484 = vmatpush2.msra.mxu0 0.0
    %485 = vmatprep.subr.mxu0 0.0
    %486 = vmatpush2.msra.mxu0 0.0
    %487 = vmatprep.subr.mxu0 0.0
    %488 = vmatpush2.msra.mxu0 0.0
    %489 = vmatprep.subr.mxu0 0.0
    %490 = vmatpush2.msra.mxu0 0.0
    %491 = vmatprep.subr.mxu0 0.0
    %492 = vmatpush2.msra.mxu0 0.0
    %493 = vmatprep.subr.mxu0 0.0
    %494 = vmatpush2.msra.mxu0 0.0
    %495 = vmatprep.subr.mxu0 0.0
    %496 = vmatpush2.msra.mxu0 0.0
    %497 = vmatprep.subr.mxu0 0.0
    %498 = vmatpush2.msra.mxu0 0.0
    %499 = vmatprep.subr.mxu0 0.0
    %500 = vmatpush2.msra.mxu0 0.0
    %501 = vmatprep.subr.mxu0 0.0
    %502 = vmatpush2.msra.mxu0 0.0
    %503 = vmatprep.subr.mxu0 0.0
    %504 = vmatpush2.msra.mxu0 0.0
    %505 = vmatprep.subr.mxu0 0.0
    %506 = vmatpush2.msra.mxu0 0.0
    %507 = vmatprep.subr.mxu0 0.0
    %508 = vmatpush2.msra.mxu0 0.0
    %509 = vmatprep.subr.mxu0 0.0
    %510 = vmatpush2.msra.mxu0 0.0
    %511 = vmatprep.subr.mxu0 0.0
    %512 = vmatpush2.msra.mxu0 0.0
    %513 = vmatprep.subr.mxu0 0.0
    %514 = vmatpush2.msra.mxu0 0.0
    %515 = vmatprep.mubr.f32.mxu0 0.0
    %v516 = vand.u32 %v105, 4294901760
    %v517 = vsub.f32 %v105, %v516
    %v518 = vand.u32 %v517, 4294901760
    %519 = vmatmul.mubr.f32.gmra.mxu0 %v518
    %v520 = vpop.f32.mrf.mxu0
    %v521 = vadd.f32 %v419, %v520
    %v522 = vpop.f32.mrf.mxu0
    %v523 = vadd.f32 %v421, %v522
    %524 = vmatprep.mubr.f32.mxu0 0.0
    %v525 = vand.u32 %v108, 4294901760
    %v526 = vsub.f32 %v108, %v525
    %v527 = vand.u32 %v526, 4294901760
    %528 = vmatmul.mubr.f32.gmra.mxu0 %v527
    %v529 = vpop.f32.mrf.mxu0
    %v530 = vadd.f32 %v427, %v529
    %v531 = vpop.f32.mrf.mxu0
    %v532 = vadd.f32 %v429, %v531
    %533 = vmatprep.mubr.f32.mxu0 0.0
    %v534 = vand.u32 %v111, 4294901760
    %v535 = vsub.f32 %v111, %v534
    %v536 = vand.u32 %v535, 4294901760
    %537 = vmatmul.mubr.f32.gmra.mxu0 %v536
    %v538 = vpop.f32.mrf.mxu0
    %v539 = vadd.f32 %v435, %v538
    %v540 = vpop.f32.mrf.mxu0
    %v541 = vadd.f32 %v437, %v540
    %542 = vmatprep.mubr.f32.mxu0 0.0
    %v543 = vand.u32 %v114, 4294901760
    %v544 = vsub.f32 %v114, %v543
    %v545 = vand.u32 %v544, 4294901760
    %546 = vmatmul.mubr.f32.gmra.mxu0 %v545
    %v547 = vpop.f32.mrf.mxu0
    %v548 = vadd.f32 %v443, %v547
    %v549 = vpop.f32.mrf.mxu0
    %v550 = vadd.f32 %v445, %v549
    %551 = vdwg.mxu0
    %552 = vmatprep.subr.mxu0 0.0
    %553 = vmatpush1.msra.mxu0 0.0
    %554 = vmatprep.subr.mxu0 0.0
    %555 = vmatpush1.msra.mxu0 0.0
    %556 = vmatprep.subr.mxu0 0.0
    %557 = vmatpush1.msra.mxu0 0.0
    %558 = vmatprep.subr.mxu0 0.0
    %559 = vmatpush1.msra.mxu0 0.0
    %560 = vmatprep.subr.mxu0 0.0
    %561 = vmatpush1.msra.mxu0 0.0
    %562 = vmatprep.subr.mxu0 0.0
    %563 = vmatpush1.msra.mxu0 0.0
    %564 = vmatprep.subr.mxu0 0.0
    %565 = vmatpush1.msra.mxu0 0.0
    %566 = vmatprep.subr.mxu0 0.0
    %567 = vmatpush1.msra.mxu0 0.0
    %568 = vmatprep.subr.mxu0 0.0
    %569 = vmatpush1.msra.mxu0 0.0
    %570 = vmatprep.subr.mxu0 0.0
    %571 = vmatpush1.msra.mxu0 0.0
    %572 = vmatprep.subr.mxu0 0.0
    %573 = vmatpush1.msra.mxu0 0.0
    %574 = vmatprep.subr.mxu0 0.0
    %575 = vmatpush1.msra.mxu0 0.0
    %576 = vmatprep.subr.mxu0 0.0
    %577 = vmatpush1.msra.mxu0 0.0
    %578 = vmatprep.subr.mxu0 0.0
    %579 = vmatpush1.msra.mxu0 0.0
    %v580 = vand.u32 %v96, 4294901760
    %v581 = vsub.f32 %v96, %v580
    %v582 = vand.u32 %v581, 4294901760
    %583 = vmatprep.subr.mxu0 %v582
    %v584 = vand.u32 %v95, 4294901760
    %v585 = vsub.f32 %v95, %v584
    %v586 = vand.u32 %v585, 4294901760
    %587 = vmatpush1.msra.mxu0 %v586
    %v588 = vand.u32 %v94, 4294901760
    %v589 = vsub.f32 %v94, %v588
    %v590 = vand.u32 %v589, 4294901760
    %591 = vmatprep.subr.mxu0 %v590
    %v592 = vand.u32 %v93, 4294901760
    %v593 = vsub.f32 %v93, %v592
    %v594 = vand.u32 %v593, 4294901760
    %595 = vmatpush1.msra.mxu0 %v594
    %596 = vmatprep.subr.mxu0 0.0
    %597 = vmatpush2.msra.mxu0 0.0
    %598 = vmatprep.subr.mxu0 0.0
    %599 = vmatpush2.msra.mxu0 0.0
    %600 = vmatprep.subr.mxu0 0.0
    %601 = vmatpush2.msra.mxu0 0.0
    %602 = vmatprep.subr.mxu0 0.0
    %603 = vmatpush2.msra.mxu0 0.0
    %604 = vmatprep.subr.mxu0 0.0
    %605 = vmatpush2.msra.mxu0 0.0
    %606 = vmatprep.subr.mxu0 0.0
    %607 = vmatpush2.msra.mxu0 0.0
    %608 = vmatprep.subr.mxu0 0.0
    %609 = vmatpush2.msra.mxu0 0.0
    %610 = vmatprep.subr.mxu0 0.0
    %611 = vmatpush2.msra.mxu0 0.0
    %612 = vmatprep.subr.mxu0 0.0
    %613 = vmatpush2.msra.mxu0 0.0
    %614 = vmatprep.subr.mxu0 0.0
    %615 = vmatpush2.msra.mxu0 0.0
    %616 = vmatprep.subr.mxu0 0.0
    %617 = vmatpush2.msra.mxu0 0.0
    %618 = vmatprep.subr.mxu0 0.0
    %619 = vmatpush2.msra.mxu0 0.0
    %620 = vmatprep.subr.mxu0 0.0
    %621 = vmatpush2.msra.mxu0 0.0
    %622 = vmatprep.subr.mxu0 0.0
    %623 = vmatpush2.msra.mxu0 0.0
    %624 = vmatprep.subr.mxu0 0.0
    %625 = vmatpush2.msra.mxu0 0.0
    %626 = vmatprep.subr.mxu0 0.0
    %627 = vmatpush2.msra.mxu0 0.0
    %628 = vmatprep.mubr.f32.mxu0 0.0
    %v629 = vand.u32 %v105, 4294901760
    %630 = vmatmul.mubr.f32.gmra.mxu0 %v629
    %v631 = vpop.f32.mrf.mxu0
    %v632 = vadd.f32 %v521, %v631
    %v633 = vpop.f32.mrf.mxu0
    %v634 = vadd.f32 %v523, %v633
    %635 = vmatprep.mubr.f32.mxu0 0.0
    %v636 = vand.u32 %v108, 4294901760
    %637 = vmatmul.mubr.f32.gmra.mxu0 %v636
    %v638 = vpop.f32.mrf.mxu0
    %v639 = vadd.f32 %v530, %v638
    %v640 = vpop.f32.mrf.mxu0
    %v641 = vadd.f32 %v532, %v640
    %642 = vmatprep.mubr.f32.mxu0 0.0
    %v643 = vand.u32 %v111, 4294901760
    %644 = vmatmul.mubr.f32.gmra.mxu0 %v643
    %v645 = vpop.f32.mrf.mxu0
    %v646 = vadd.f32 %v539, %v645
    %v647 = vpop.f32.mrf.mxu0
    %v648 = vadd.f32 %v541, %v647
    %649 = vmatprep.mubr.f32.mxu0 0.0
    %v650 = vand.u32 %v114, 4294901760
    %651 = vmatmul.mubr.f32.gmra.mxu0 %v650
    %v652 = vpop.f32.mrf.mxu0
    %v653 = vadd.f32 %v548, %v652
    %v654 = vpop.f32.mrf.mxu0
    %v655 = vadd.f32 %v550, %v654
    %656 = vdwg.mxu0
    %657 = vmatprep.subr.mxu0 0.0
    %658 = vmatpush1.msra.mxu0 0.0
    %659 = vmatprep.subr.mxu0 0.0
    %660 = vmatpush1.msra.mxu0 0.0
    %661 = vmatprep.subr.mxu0 0.0
    %662 = vmatpush1.msra.mxu0 0.0
    %663 = vmatprep.subr.mxu0 0.0
    %664 = vmatpush1.msra.mxu0 0.0
    %665 = vmatprep.subr.mxu0 0.0
    %666 = vmatpush1.msra.mxu0 0.0
    %667 = vmatprep.subr.mxu0 0.0
    %668 = vmatpush1.msra.mxu0 0.0
    %669 = vmatprep.subr.mxu0 0.0
    %670 = vmatpush1.msra.mxu0 0.0
    %671 = vmatprep.subr.mxu0 0.0
    %672 = vmatpush1.msra.mxu0 0.0
    %673 = vmatprep.subr.mxu0 0.0
    %674 = vmatpush1.msra.mxu0 0.0
    %675 = vmatprep.subr.mxu0 0.0
    %676 = vmatpush1.msra.mxu0 0.0
    %677 = vmatprep.subr.mxu0 0.0
    %678 = vmatpush1.msra.mxu0 0.0
    %679 = vmatprep.subr.mxu0 0.0
    %680 = vmatpush1.msra.mxu0 0.0
    %681 = vmatprep.subr.mxu0 0.0
    %682 = vmatpush1.msra.mxu0 0.0
    %683 = vmatprep.subr.mxu0 0.0
    %684 = vmatpush1.msra.mxu0 0.0
    %v685 = vand.u32 %v96, 4294901760
    %686 = vmatprep.subr.mxu0 %v685
    %v687 = vand.u32 %v95, 4294901760
    %688 = vmatpush1.msra.mxu0 %v687
    %v689 = vand.u32 %v94, 4294901760
    %690 = vmatprep.subr.mxu0 %v689
    %v691 = vand.u32 %v93, 4294901760
    %692 = vmatpush1.msra.mxu0 %v691
    %693 = vmatprep.subr.mxu0 0.0
    %694 = vmatpush2.msra.mxu0 0.0
    %695 = vmatprep.subr.mxu0 0.0
    %696 = vmatpush2.msra.mxu0 0.0
    %697 = vmatprep.subr.mxu0 0.0
    %698 = vmatpush2.msra.mxu0 0.0
    %699 = vmatprep.subr.mxu0 0.0
    %700 = vmatpush2.msra.mxu0 0.0
    %701 = vmatprep.subr.mxu0 0.0
    %702 = vmatpush2.msra.mxu0 0.0
    %703 = vmatprep.subr.mxu0 0.0
    %704 = vmatpush2.msra.mxu0 0.0
    %705 = vmatprep.subr.mxu0 0.0
    %706 = vmatpush2.msra.mxu0 0.0
    %707 = vmatprep.subr.mxu0 0.0
    %708 = vmatpush2.msra.mxu0 0.0
    %709 = vmatprep.subr.mxu0 0.0
    %710 = vmatpush2.msra.mxu0 0.0
    %711 = vmatprep.subr.mxu0 0.0
    %712 = vmatpush2.msra.mxu0 0.0
    %713 = vmatprep.subr.mxu0 0.0
    %714 = vmatpush2.msra.mxu0 0.0
    %715 = vmatprep.subr.mxu0 0.0
    %716 = vmatpush2.msra.mxu0 0.0
    %717 = vmatprep.subr.mxu0 0.0
    %718 = vmatpush2.msra.mxu0 0.0
    %719 = vmatprep.subr.mxu0 0.0
    %720 = vmatpush2.msra.mxu0 0.0
    %721 = vmatprep.subr.mxu0 0.0
    %722 = vmatpush2.msra.mxu0 0.0
    %723 = vmatprep.subr.mxu0 0.0
    %724 = vmatpush2.msra.mxu0 0.0
    %725 = vmatprep.mubr.f32.mxu0 0.0
    %v726 = vand.u32 %v105, 4294901760
    %727 = vmatmul.mubr.f32.gmra.mxu0 %v726
    %v728 = vpop.f32.mrf.mxu0
    %v729 = vadd.f32 %v632, %v728
    %v730 = vpop.f32.mrf.mxu0
    %v731 = vadd.f32 %v634, %v730
    %732 = vmatprep.mubr.f32.mxu0 0.0
    %v733 = vand.u32 %v108, 4294901760
    %734 = vmatmul.mubr.f32.gmra.mxu0 %v733
    %v735 = vpop.f32.mrf.mxu0
    %v736 = vadd.f32 %v639, %v735
    %v737 = vpop.f32.mrf.mxu0
    %v738 = vadd.f32 %v641, %v737
    %739 = vmatprep.mubr.f32.mxu0 0.0
    %v740 = vand.u32 %v111, 4294901760
    %741 = vmatmul.mubr.f32.gmra.mxu0 %v740
    %v742 = vpop.f32.mrf.mxu0
    %v743 = vadd.f32 %v646, %v742
    %v744 = vpop.f32.mrf.mxu0
    %v745 = vadd.f32 %v648, %v744
    %746 = vmatprep.mubr.f32.mxu0 0.0
    %v747 = vand.u32 %v114, 4294901760
    %748 = vmatmul.mubr.f32.gmra.mxu0 %v747
    %v749 = vpop.f32.mrf.mxu0
    %v750 = vadd.f32 %v653, %v749
    %v751 = vpop.f32.mrf.mxu0
    %v752 = vadd.f32 %v655, %v751
    %753 = vdwg.mxu0
    %v754 = vlaneseq
    %v755 = vshrl.u32 %v754, 7
    %v756 = vsub.s32 0, %v755
    %v757 = vrot.slane %v97, %v756
    %v758 = vlaneseq
    %v759 = vshrl.u32 %v758, 7
    %v760 = vsub.s32 0, %v759
    %v761 = vrot.slane %v98, %v760
    %v762 = vadd.f32 %v729, %v757
    %v763 = vadd.f32 %v731, %v761
    %v764 = vtanh.pop %v762
    %v765 = vtanh.pop %v763
    %v766 = vlaneseq
    %v767 = vshrl.u32 %v766, 7
    %v768 = vsub.s32 1, %v767
    %v769 = vrot.slane %v97, %v768
    %v770 = vlaneseq
    %v771 = vshrl.u32 %v770, 7
    %v772 = vsub.s32 1, %v771
    %v773 = vrot.slane %v98, %v772
    %v774 = vand.u32 %v60, 4294901760
    %775 = vmatprep.subr.mxu0 %v774
    %v776 = vand.u32 %v59, 4294901760
    %777 = vmatpush1.msra.mxu0 %v776
    %v778 = vand.u32 %v58, 4294901760
    %779 = vmatprep.subr.mxu0 %v778
    %v780 = vand.u32 %v57, 4294901760
    %781 = vmatpush1.msra.mxu0 %v780
    %v782 = vand.u32 %v56, 4294901760
    %783 = vmatprep.subr.mxu0 %v782
    %v784 = vand.u32 %v55, 4294901760
    %785 = vmatpush1.msra.mxu0 %v784
    %v786 = vand.u32 %v54, 4294901760
    %787 = vmatprep.subr.mxu0 %v786
    %v788 = vand.u32 %v53, 4294901760
    %789 = vmatpush1.msra.mxu0 %v788
    %v790 = vand.u32 %v52, 4294901760
    %791 = vmatprep.subr.mxu0 %v790
    %v792 = vand.u32 %v51, 4294901760
    %793 = vmatpush1.msra.mxu0 %v792
    %v794 = vand.u32 %v50, 4294901760
    %795 = vmatprep.subr.mxu0 %v794
    %v796 = vand.u32 %v49, 4294901760
    %797 = vmatpush1.msra.mxu0 %v796
    %v798 = vand.u32 %v48, 4294901760
    %799 = vmatprep.subr.mxu0 %v798
    %v800 = vand.u32 %v47, 4294901760
    %801 = vmatpush1.msra.mxu0 %v800
    %v802 = vand.u32 %v46, 4294901760
    %803 = vmatprep.subr.mxu0 %v802
    %v804 = vand.u32 %v45, 4294901760
    %805 = vmatpush1.msra.mxu0 %v804
    %v806 = vand.u32 %v44, 4294901760
    %807 = vmatprep.subr.mxu0 %v806
    %v808 = vand.u32 %v43, 4294901760
    %809 = vmatpush1.msra.mxu0 %v808
    %v810 = vand.u32 %v42, 4294901760
    %811 = vmatprep.subr.mxu0 %v810
    %v812 = vand.u32 %v41, 4294901760
    %813 = vmatpush1.msra.mxu0 %v812
    %v814 = vand.u32 %v40, 4294901760
    %815 = vmatprep.subr.mxu0 %v814
    %v816 = vand.u32 %v39, 4294901760
    %817 = vmatpush1.msra.mxu0 %v816
    %v818 = vand.u32 %v38, 4294901760
    %819 = vmatprep.subr.mxu0 %v818
    %v820 = vand.u32 %v37, 4294901760
    %821 = vmatpush1.msra.mxu0 %v820
    %v822 = vand.u32 %v36, 4294901760
    %823 = vmatprep.subr.mxu0 %v822
    %v824 = vand.u32 %v35, 4294901760
    %825 = vmatpush1.msra.mxu0 %v824
    %v826 = vand.u32 %v34, 4294901760
    %827 = vmatprep.subr.mxu0 %v826
    %v828 = vand.u32 %v33, 4294901760
    %829 = vmatpush1.msra.mxu0 %v828
    %v830 = vand.u32 %v32, 4294901760
    %831 = vmatprep.subr.mxu0 %v830
    %v832 = vand.u32 %v31, 4294901760
    %833 = vmatpush1.msra.mxu0 %v832
    %v834 = vand.u32 %v30, 4294901760
    %835 = vmatprep.subr.mxu0 %v834
    %v836 = vand.u32 %v29, 4294901760
    %837 = vmatpush1.msra.mxu0 %v836
    %v838 = vand.u32 %v92, 4294901760
    %839 = vmatprep.subr.mxu0 %v838
    %v840 = vand.u32 %v91, 4294901760
    %841 = vmatpush2.msra.mxu0 %v840
    %v842 = vand.u32 %v90, 4294901760
    %843 = vmatprep.subr.mxu0 %v842
    %v844 = vand.u32 %v89, 4294901760
    %845 = vmatpush2.msra.mxu0 %v844
    %v846 = vand.u32 %v88, 4294901760
    %847 = vmatprep.subr.mxu0 %v846
    %v848 = vand.u32 %v87, 4294901760
    %849 = vmatpush2.msra.mxu0 %v848
    %v850 = vand.u32 %v86, 4294901760
    %851 = vmatprep.subr.mxu0 %v850
    %v852 = vand.u32 %v85, 4294901760
    %853 = vmatpush2.msra.mxu0 %v852
    %v854 = vand.u32 %v84, 4294901760
    %855 = vmatprep.subr.mxu0 %v854
    %v856 = vand.u32 %v83, 4294901760
    %857 = vmatpush2.msra.mxu0 %v856
    %v858 = vand.u32 %v82, 4294901760
    %859 = vmatprep.subr.mxu0 %v858
    %v860 = vand.u32 %v81, 4294901760
    %861 = vmatpush2.msra.mxu0 %v860
    %v862 = vand.u32 %v80, 4294901760
    %863 = vmatprep.subr.mxu0 %v862
    %v864 = vand.u32 %v79, 4294901760
    %865 = vmatpush2.msra.mxu0 %v864
    %v866 = vand.u32 %v78, 4294901760
    %867 = vmatprep.subr.mxu0 %v866
    %v868 = vand.u32 %v77, 4294901760
    %869 = vmatpush2.msra.mxu0 %v868
    %v870 = vand.u32 %v76, 4294901760
    %871 = vmatprep.subr.mxu0 %v870
    %v872 = vand.u32 %v75, 4294901760
    %873 = vmatpush2.msra.mxu0 %v872
    %v874 = vand.u32 %v74, 4294901760
    %875 = vmatprep.subr.mxu0 %v874
    %v876 = vand.u32 %v73, 4294901760
    %877 = vmatpush2.msra.mxu0 %v876
    %v878 = vand.u32 %v72, 4294901760
    %879 = vmatprep.subr.mxu0 %v878
    %v880 = vand.u32 %v71, 4294901760
    %881 = vmatpush2.msra.mxu0 %v880
    %v882 = vand.u32 %v70, 4294901760
    %883 = vmatprep.subr.mxu0 %v882
    %v884 = vand.u32 %v69, 4294901760
    %885 = vmatpush2.msra.mxu0 %v884
    %v886 = vand.u32 %v68, 4294901760
    %887 = vmatprep.subr.mxu0 %v886
    %v888 = vand.u32 %v67, 4294901760
    %889 = vmatpush2.msra.mxu0 %v888
    %v890 = vand.u32 %v66, 4294901760
    %891 = vmatprep.subr.mxu0 %v890
    %v892 = vand.u32 %v65, 4294901760
    %893 = vmatpush2.msra.mxu0 %v892
    %v894 = vand.u32 %v64, 4294901760
    %895 = vmatprep.subr.mxu0 %v894
    %v896 = vand.u32 %v63, 4294901760
    %897 = vmatpush2.msra.mxu0 %v896
    %v898 = vand.u32 %v62, 4294901760
    %899 = vmatprep.subr.mxu0 %v898
    %v900 = vand.u32 %v61, 4294901760
    %901 = vmatpush2.msra.mxu0 %v900
    %v902 = vand.u32 %v765, 4294901760
    %v903 = vsub.f32 %v765, %v902
    %v904 = vand.u32 %v903, 4294901760
    %v905 = vsub.f32 %v903, %v904
    %v906 = vand.u32 %v905, 4294901760
    %907 = vmatprep.mubr.f32.mxu0 %v906
    %v908 = vand.u32 %v764, 4294901760
    %v909 = vsub.f32 %v764, %v908
    %v910 = vand.u32 %v909, 4294901760
    %v911 = vsub.f32 %v909, %v910
    %v912 = vand.u32 %v911, 4294901760
    %913 = vmatmul.mubr.f32.gmra.mxu0 %v912
    %v914 = vpop.f32.mrf.mxu0
    %v915 = vadd.f32 %v769, %v914
    %v916 = vpop.f32.mrf.mxu0
    %v917 = vadd.f32 %v773, %v916
    %918 = vdwg.mxu0
    %v919 = vand.u32 %v60, 4294901760
    %v920 = vsub.f32 %v60, %v919
    %v921 = vand.u32 %v920, 4294901760
    %v922 = vsub.f32 %v920, %v921
    %v923 = vand.u32 %v922, 4294901760
    %924 = vmatprep.subr.mxu0 %v923
    %v925 = vand.u32 %v59, 4294901760
    %v926 = vsub.f32 %v59, %v925
    %v927 = vand.u32 %v926, 4294901760
    %v928 = vsub.f32 %v926, %v927
    %v929 = vand.u32 %v928, 4294901760
    %930 = vmatpush1.msra.mxu0 %v929
    %v931 = vand.u32 %v58, 4294901760
    %v932 = vsub.f32 %v58, %v931
    %v933 = vand.u32 %v932, 4294901760
    %v934 = vsub.f32 %v932, %v933
    %v935 = vand.u32 %v934, 4294901760
    %936 = vmatprep.subr.mxu0 %v935
    %v937 = vand.u32 %v57, 4294901760
    %v938 = vsub.f32 %v57, %v937
    %v939 = vand.u32 %v938, 4294901760
    %v940 = vsub.f32 %v938, %v939
    %v941 = vand.u32 %v940, 4294901760
    %942 = vmatpush1.msra.mxu0 %v941
    %v943 = vand.u32 %v56, 4294901760
    %v944 = vsub.f32 %v56, %v943
    %v945 = vand.u32 %v944, 4294901760
    %v946 = vsub.f32 %v944, %v945
    %v947 = vand.u32 %v946, 4294901760
    %948 = vmatprep.subr.mxu0 %v947
    %v949 = vand.u32 %v55, 4294901760
    %v950 = vsub.f32 %v55, %v949
    %v951 = vand.u32 %v950, 4294901760
    %v952 = vsub.f32 %v950, %v951
    %v953 = vand.u32 %v952, 4294901760
    %954 = vmatpush1.msra.mxu0 %v953
    %v955 = vand.u32 %v54, 4294901760
    %v956 = vsub.f32 %v54, %v955
    %v957 = vand.u32 %v956, 4294901760
    %v958 = vsub.f32 %v956, %v957
    %v959 = vand.u32 %v958, 4294901760
    %960 = vmatprep.subr.mxu0 %v959
    %v961 = vand.u32 %v53, 4294901760
    %v962 = vsub.f32 %v53, %v961
    %v963 = vand.u32 %v962, 4294901760
    %v964 = vsub.f32 %v962, %v963
    %v965 = vand.u32 %v964, 4294901760
    %966 = vmatpush1.msra.mxu0 %v965
    %v967 = vand.u32 %v52, 4294901760
    %v968 = vsub.f32 %v52, %v967
    %v969 = vand.u32 %v968, 4294901760
    %v970 = vsub.f32 %v968, %v969
    %v971 = vand.u32 %v970, 4294901760
    %972 = vmatprep.subr.mxu0 %v971
    %v973 = vand.u32 %v51, 4294901760
    %v974 = vsub.f32 %v51, %v973
    %v975 = vand.u32 %v974, 4294901760
    %v976 = vsub.f32 %v974, %v975
    %v977 = vand.u32 %v976, 4294901760
    %978 = vmatpush1.msra.mxu0 %v977
    %v979 = vand.u32 %v50, 4294901760
    %v980 = vsub.f32 %v50, %v979
    %v981 = vand.u32 %v980, 4294901760
    %v982 = vsub.f32 %v980, %v981
    %v983 = vand.u32 %v982, 4294901760
    %984 = vmatprep.subr.mxu0 %v983
    %v985 = vand.u32 %v49, 4294901760
    %v986 = vsub.f32 %v49, %v985
    %v987 = vand.u32 %v986, 4294901760
    %v988 = vsub.f32 %v986, %v987
    %v989 = vand.u32 %v988, 4294901760
    %990 = vmatpush1.msra.mxu0 %v989
    %v991 = vand.u32 %v48, 4294901760
    %v992 = vsub.f32 %v48, %v991
    %v993 = vand.u32 %v992, 4294901760
    %v994 = vsub.f32 %v992, %v993
    %v995 = vand.u32 %v994, 4294901760
    %996 = vmatprep.subr.mxu0 %v995
    %v997 = vand.u32 %v47, 4294901760
    %v998 = vsub.f32 %v47, %v997
    %v999 = vand.u32 %v998, 4294901760
    %v1000 = vsub.f32 %v998, %v999
    %v1001 = vand.u32 %v1000, 4294901760
    %1002 = vmatpush1.msra.mxu0 %v1001
    %v1003 = vand.u32 %v46, 4294901760
    %v1004 = vsub.f32 %v46, %v1003
    %v1005 = vand.u32 %v1004, 4294901760
    %v1006 = vsub.f32 %v1004, %v1005
    %v1007 = vand.u32 %v1006, 4294901760
    %1008 = vmatprep.subr.mxu0 %v1007
    %v1009 = vand.u32 %v45, 4294901760
    %v1010 = vsub.f32 %v45, %v1009
    %v1011 = vand.u32 %v1010, 4294901760
    %v1012 = vsub.f32 %v1010, %v1011
    %v1013 = vand.u32 %v1012, 4294901760
    %1014 = vmatpush1.msra.mxu0 %v1013
    %v1015 = vand.u32 %v44, 4294901760
    %v1016 = vsub.f32 %v44, %v1015
    %v1017 = vand.u32 %v1016, 4294901760
    %v1018 = vsub.f32 %v1016, %v1017
    %v1019 = vand.u32 %v1018, 4294901760
    %1020 = vmatprep.subr.mxu0 %v1019
    %v1021 = vand.u32 %v43, 4294901760
    %v1022 = vsub.f32 %v43, %v1021
    %v1023 = vand.u32 %v1022, 4294901760
    %v1024 = vsub.f32 %v1022, %v1023
    %v1025 = vand.u32 %v1024, 4294901760
    %1026 = vmatpush1.msra.mxu0 %v1025
    %v1027 = vand.u32 %v42, 4294901760
    %v1028 = vsub.f32 %v42, %v1027
    %v1029 = vand.u32 %v1028, 4294901760
    %v1030 = vsub.f32 %v1028, %v1029
    %v1031 = vand.u32 %v1030, 4294901760
    %1032 = vmatprep.subr.mxu0 %v1031
    %v1033 = vand.u32 %v41, 4294901760
    %v1034 = vsub.f32 %v41, %v1033
    %v1035 = vand.u32 %v1034, 4294901760
    %v1036 = vsub.f32 %v1034, %v1035
    %v1037 = vand.u32 %v1036, 4294901760
    %1038 = vmatpush1.msra.mxu0 %v1037
    %v1039 = vand.u32 %v40, 4294901760
    %v1040 = vsub.f32 %v40, %v1039
    %v1041 = vand.u32 %v1040, 4294901760
    %v1042 = vsub.f32 %v1040, %v1041
    %v1043 = vand.u32 %v1042, 4294901760
    %1044 = vmatprep.subr.mxu0 %v1043
    %v1045 = vand.u32 %v39, 4294901760
    %v1046 = vsub.f32 %v39, %v1045
    %v1047 = vand.u32 %v1046, 4294901760
    %v1048 = vsub.f32 %v1046, %v1047
    %v1049 = vand.u32 %v1048, 4294901760
    %1050 = vmatpush1.msra.mxu0 %v1049
    %v1051 = vand.u32 %v38, 4294901760
    %v1052 = vsub.f32 %v38, %v1051
    %v1053 = vand.u32 %v1052, 4294901760
    %v1054 = vsub.f32 %v1052, %v1053
    %v1055 = vand.u32 %v1054, 4294901760
    %1056 = vmatprep.subr.mxu0 %v1055
    %v1057 = vand.u32 %v37, 4294901760
    %v1058 = vsub.f32 %v37, %v1057
    %v1059 = vand.u32 %v1058, 4294901760
    %v1060 = vsub.f32 %v1058, %v1059
    %v1061 = vand.u32 %v1060, 4294901760
    %1062 = vmatpush1.msra.mxu0 %v1061
    %v1063 = vand.u32 %v36, 4294901760
    %v1064 = vsub.f32 %v36, %v1063
    %v1065 = vand.u32 %v1064, 4294901760
    %v1066 = vsub.f32 %v1064, %v1065
    %v1067 = vand.u32 %v1066, 4294901760
    %1068 = vmatprep.subr.mxu0 %v1067
    %v1069 = vand.u32 %v35, 4294901760
    %v1070 = vsub.f32 %v35, %v1069
    %v1071 = vand.u32 %v1070, 4294901760
    %v1072 = vsub.f32 %v1070, %v1071
    %v1073 = vand.u32 %v1072, 4294901760
    %1074 = vmatpush1.msra.mxu0 %v1073
    %v1075 = vand.u32 %v34, 4294901760
    %v1076 = vsub.f32 %v34, %v1075
    %v1077 = vand.u32 %v1076, 4294901760
    %v1078 = vsub.f32 %v1076, %v1077
    %v1079 = vand.u32 %v1078, 4294901760
    %1080 = vmatprep.subr.mxu0 %v1079
    %v1081 = vand.u32 %v33, 4294901760
    %v1082 = vsub.f32 %v33, %v1081
    %v1083 = vand.u32 %v1082, 4294901760
    %v1084 = vsub.f32 %v1082, %v1083
    %v1085 = vand.u32 %v1084, 4294901760
    %1086 = vmatpush1.msra.mxu0 %v1085
    %v1087 = vand.u32 %v32, 4294901760
    %v1088 = vsub.f32 %v32, %v1087
    %v1089 = vand.u32 %v1088, 4294901760
    %v1090 = vsub.f32 %v1088, %v1089
    %v1091 = vand.u32 %v1090, 4294901760
    %1092 = vmatprep.subr.mxu0 %v1091
    %v1093 = vand.u32 %v31, 4294901760
    %v1094 = vsub.f32 %v31, %v1093
    %v1095 = vand.u32 %v1094, 4294901760
    %v1096 = vsub.f32 %v1094, %v1095
    %v1097 = vand.u32 %v1096, 4294901760
    %1098 = vmatpush1.msra.mxu0 %v1097
    %v1099 = vand.u32 %v30, 4294901760
    %v1100 = vsub.f32 %v30, %v1099
    %v1101 = vand.u32 %v1100, 4294901760
    %v1102 = vsub.f32 %v1100, %v1101
    %v1103 = vand.u32 %v1102, 4294901760
    %1104 = vmatprep.subr.mxu0 %v1103
    %v1105 = vand.u32 %v29, 4294901760
    %v1106 = vsub.f32 %v29, %v1105
    %v1107 = vand.u32 %v1106, 4294901760
    %v1108 = vsub.f32 %v1106, %v1107
    %v1109 = vand.u32 %v1108, 4294901760
    %1110 = vmatpush1.msra.mxu0 %v1109
    %v1111 = vand.u32 %v92, 4294901760
    %v1112 = vsub.f32 %v92, %v1111
    %v1113 = vand.u32 %v1112, 4294901760
    %v1114 = vsub.f32 %v1112, %v1113
    %v1115 = vand.u32 %v1114, 4294901760
    %1116 = vmatprep.subr.mxu0 %v1115
    %v1117 = vand.u32 %v91, 4294901760
    %v1118 = vsub.f32 %v91, %v1117
    %v1119 = vand.u32 %v1118, 4294901760
    %v1120 = vsub.f32 %v1118, %v1119
    %v1121 = vand.u32 %v1120, 4294901760
    %1122 = vmatpush2.msra.mxu0 %v1121
    %v1123 = vand.u32 %v90, 4294901760
    %v1124 = vsub.f32 %v90, %v1123
    %v1125 = vand.u32 %v1124, 4294901760
    %v1126 = vsub.f32 %v1124, %v1125
    %v1127 = vand.u32 %v1126, 4294901760
    %1128 = vmatprep.subr.mxu0 %v1127
    %v1129 = vand.u32 %v89, 4294901760
    %v1130 = vsub.f32 %v89, %v1129
    %v1131 = vand.u32 %v1130, 4294901760
    %v1132 = vsub.f32 %v1130, %v1131
    %v1133 = vand.u32 %v1132, 4294901760
    %1134 = vmatpush2.msra.mxu0 %v1133
    %v1135 = vand.u32 %v88, 4294901760
    %v1136 = vsub.f32 %v88, %v1135
    %v1137 = vand.u32 %v1136, 4294901760
    %v1138 = vsub.f32 %v1136, %v1137
    %v1139 = vand.u32 %v1138, 4294901760
    %1140 = vmatprep.subr.mxu0 %v1139
    %v1141 = vand.u32 %v87, 4294901760
    %v1142 = vsub.f32 %v87, %v1141
    %v1143 = vand.u32 %v1142, 4294901760
    %v1144 = vsub.f32 %v1142, %v1143
    %v1145 = vand.u32 %v1144, 4294901760
    %1146 = vmatpush2.msra.mxu0 %v1145
    %v1147 = vand.u32 %v86, 4294901760
    %v1148 = vsub.f32 %v86, %v1147
    %v1149 = vand.u32 %v1148, 4294901760
    %v1150 = vsub.f32 %v1148, %v1149
    %v1151 = vand.u32 %v1150, 4294901760
    %1152 = vmatprep.subr.mxu0 %v1151
    %v1153 = vand.u32 %v85, 4294901760
    %v1154 = vsub.f32 %v85, %v1153
    %v1155 = vand.u32 %v1154, 4294901760
    %v1156 = vsub.f32 %v1154, %v1155
    %v1157 = vand.u32 %v1156, 4294901760
    %1158 = vmatpush2.msra.mxu0 %v1157
    %v1159 = vand.u32 %v84, 4294901760
    %v1160 = vsub.f32 %v84, %v1159
    %v1161 = vand.u32 %v1160, 4294901760
    %v1162 = vsub.f32 %v1160, %v1161
    %v1163 = vand.u32 %v1162, 4294901760
    %1164 = vmatprep.subr.mxu0 %v1163
    %v1165 = vand.u32 %v83, 4294901760
    %v1166 = vsub.f32 %v83, %v1165
    %v1167 = vand.u32 %v1166, 4294901760
    %v1168 = vsub.f32 %v1166, %v1167
    %v1169 = vand.u32 %v1168, 4294901760
    %1170 = vmatpush2.msra.mxu0 %v1169
    %v1171 = vand.u32 %v82, 4294901760
    %v1172 = vsub.f32 %v82, %v1171
    %v1173 = vand.u32 %v1172, 4294901760
    %v1174 = vsub.f32 %v1172, %v1173
    %v1175 = vand.u32 %v1174, 4294901760
    %1176 = vmatprep.subr.mxu0 %v1175
    %v1177 = vand.u32 %v81, 4294901760
    %v1178 = vsub.f32 %v81, %v1177
    %v1179 = vand.u32 %v1178, 4294901760
    %v1180 = vsub.f32 %v1178, %v1179
    %v1181 = vand.u32 %v1180, 4294901760
    %1182 = vmatpush2.msra.mxu0 %v1181
    %v1183 = vand.u32 %v80, 4294901760
    %v1184 = vsub.f32 %v80, %v1183
    %v1185 = vand.u32 %v1184, 4294901760
    %v1186 = vsub.f32 %v1184, %v1185
    %v1187 = vand.u32 %v1186, 4294901760
    %1188 = vmatprep.subr.mxu0 %v1187
    %v1189 = vand.u32 %v79, 4294901760
    %v1190 = vsub.f32 %v79, %v1189
    %v1191 = vand.u32 %v1190, 4294901760
    %v1192 = vsub.f32 %v1190, %v1191
    %v1193 = vand.u32 %v1192, 4294901760
    %1194 = vmatpush2.msra.mxu0 %v1193
    %v1195 = vand.u32 %v78, 4294901760
    %v1196 = vsub.f32 %v78, %v1195
    %v1197 = vand.u32 %v1196, 4294901760
    %v1198 = vsub.f32 %v1196, %v1197
    %v1199 = vand.u32 %v1198, 4294901760
    %1200 = vmatprep.subr.mxu0 %v1199
    %v1201 = vand.u32 %v77, 4294901760
    %v1202 = vsub.f32 %v77, %v1201
    %v1203 = vand.u32 %v1202, 4294901760
    %v1204 = vsub.f32 %v1202, %v1203
    %v1205 = vand.u32 %v1204, 4294901760
    %1206 = vmatpush2.msra.mxu0 %v1205
    %v1207 = vand.u32 %v76, 4294901760
    %v1208 = vsub.f32 %v76, %v1207
    %v1209 = vand.u32 %v1208, 4294901760
    %v1210 = vsub.f32 %v1208, %v1209
    %v1211 = vand.u32 %v1210, 4294901760
    %1212 = vmatprep.subr.mxu0 %v1211
    %v1213 = vand.u32 %v75, 4294901760
    %v1214 = vsub.f32 %v75, %v1213
    %v1215 = vand.u32 %v1214, 4294901760
    %v1216 = vsub.f32 %v1214, %v1215
    %v1217 = vand.u32 %v1216, 4294901760
    %1218 = vmatpush2.msra.mxu0 %v1217
    %v1219 = vand.u32 %v74, 4294901760
    %v1220 = vsub.f32 %v74, %v1219
    %v1221 = vand.u32 %v1220, 4294901760
    %v1222 = vsub.f32 %v1220, %v1221
    %v1223 = vand.u32 %v1222, 4294901760
    %1224 = vmatprep.subr.mxu0 %v1223
    %v1225 = vand.u32 %v73, 4294901760
    %v1226 = vsub.f32 %v73, %v1225
    %v1227 = vand.u32 %v1226, 4294901760
    %v1228 = vsub.f32 %v1226, %v1227
    %v1229 = vand.u32 %v1228, 4294901760
    %1230 = vmatpush2.msra.mxu0 %v1229
    %v1231 = vand.u32 %v72, 4294901760
    %v1232 = vsub.f32 %v72, %v1231
    %v1233 = vand.u32 %v1232, 4294901760
    %v1234 = vsub.f32 %v1232, %v1233
    %v1235 = vand.u32 %v1234, 4294901760
    %1236 = vmatprep.subr.mxu0 %v1235
    %v1237 = vand.u32 %v71, 4294901760
    %v1238 = vsub.f32 %v71, %v1237
    %v1239 = vand.u32 %v1238, 4294901760
    %v1240 = vsub.f32 %v1238, %v1239
    %v1241 = vand.u32 %v1240, 4294901760
    %1242 = vmatpush2.msra.mxu0 %v1241
    %v1243 = vand.u32 %v70, 4294901760
    %v1244 = vsub.f32 %v70, %v1243
    %v1245 = vand.u32 %v1244, 4294901760
    %v1246 = vsub.f32 %v1244, %v1245
    %v1247 = vand.u32 %v1246, 4294901760
    %1248 = vmatprep.subr.mxu0 %v1247
    %v1249 = vand.u32 %v69, 4294901760
    %v1250 = vsub.f32 %v69, %v1249
    %v1251 = vand.u32 %v1250, 4294901760
    %v1252 = vsub.f32 %v1250, %v1251
    %v1253 = vand.u32 %v1252, 4294901760
    %1254 = vmatpush2.msra.mxu0 %v1253
    %v1255 = vand.u32 %v68, 4294901760
    %v1256 = vsub.f32 %v68, %v1255
    %v1257 = vand.u32 %v1256, 4294901760
    %v1258 = vsub.f32 %v1256, %v1257
    %v1259 = vand.u32 %v1258, 4294901760
    %1260 = vmatprep.subr.mxu0 %v1259
    %v1261 = vand.u32 %v67, 4294901760
    %v1262 = vsub.f32 %v67, %v1261
    %v1263 = vand.u32 %v1262, 4294901760
    %v1264 = vsub.f32 %v1262, %v1263
    %v1265 = vand.u32 %v1264, 4294901760
    %1266 = vmatpush2.msra.mxu0 %v1265
    %v1267 = vand.u32 %v66, 4294901760
    %v1268 = vsub.f32 %v66, %v1267
    %v1269 = vand.u32 %v1268, 4294901760
    %v1270 = vsub.f32 %v1268, %v1269
    %v1271 = vand.u32 %v1270, 4294901760
    %1272 = vmatprep.subr.mxu0 %v1271
    %v1273 = vand.u32 %v65, 4294901760
    %v1274 = vsub.f32 %v65, %v1273
    %v1275 = vand.u32 %v1274, 4294901760
    %v1276 = vsub.f32 %v1274, %v1275
    %v1277 = vand.u32 %v1276, 4294901760
    %1278 = vmatpush2.msra.mxu0 %v1277
    %v1279 = vand.u32 %v64, 4294901760
    %v1280 = vsub.f32 %v64, %v1279
    %v1281 = vand.u32 %v1280, 4294901760
    %v1282 = vsub.f32 %v1280, %v1281
    %v1283 = vand.u32 %v1282, 4294901760
    %1284 = vmatprep.subr.mxu0 %v1283
    %v1285 = vand.u32 %v63, 4294901760
    %v1286 = vsub.f32 %v63, %v1285
    %v1287 = vand.u32 %v1286, 4294901760
    %v1288 = vsub.f32 %v1286, %v1287
    %v1289 = vand.u32 %v1288, 4294901760
    %1290 = vmatpush2.msra.mxu0 %v1289
    %v1291 = vand.u32 %v62, 4294901760
    %v1292 = vsub.f32 %v62, %v1291
    %v1293 = vand.u32 %v1292, 4294901760
    %v1294 = vsub.f32 %v1292, %v1293
    %v1295 = vand.u32 %v1294, 4294901760
    %1296 = vmatprep.subr.mxu0 %v1295
    %v1297 = vand.u32 %v61, 4294901760
    %v1298 = vsub.f32 %v61, %v1297
    %v1299 = vand.u32 %v1298, 4294901760
    %v1300 = vsub.f32 %v1298, %v1299
    %v1301 = vand.u32 %v1300, 4294901760
    %1302 = vmatpush2.msra.mxu0 %v1301
    %v1303 = vand.u32 %v765, 4294901760
    %1304 = vmatprep.mubr.f32.mxu0 %v1303
    %v1305 = vand.u32 %v764, 4294901760
    %1306 = vmatmul.mubr.f32.gmra.mxu0 %v1305
    %v1307 = vpop.f32.mrf.mxu0
    %v1308 = vadd.f32 %v915, %v1307
    %v1309 = vpop.f32.mrf.mxu0
    %v1310 = vadd.f32 %v917, %v1309
    %1311 = vdwg.mxu0
    %v1312 = vand.u32 %v60, 4294901760
    %v1313 = vsub.f32 %v60, %v1312
    %1314 = vmatprep.subr.mxu0 %v1313
    %v1315 = vand.u32 %v59, 4294901760
    %v1316 = vsub.f32 %v59, %v1315
    %1317 = vmatpush1.msra.mxu0 %v1316
    %v1318 = vand.u32 %v58, 4294901760
    %v1319 = vsub.f32 %v58, %v1318
    %1320 = vmatprep.subr.mxu0 %v1319
    %v1321 = vand.u32 %v57, 4294901760
    %v1322 = vsub.f32 %v57, %v1321
    %1323 = vmatpush1.msra.mxu0 %v1322
    %v1324 = vand.u32 %v56, 4294901760
    %v1325 = vsub.f32 %v56, %v1324
    %1326 = vmatprep.subr.mxu0 %v1325
    %v1327 = vand.u32 %v55, 4294901760
    %v1328 = vsub.f32 %v55, %v1327
    %1329 = vmatpush1.msra.mxu0 %v1328
    %v1330 = vand.u32 %v54, 4294901760
    %v1331 = vsub.f32 %v54, %v1330
    %1332 = vmatprep.subr.mxu0 %v1331
    %v1333 = vand.u32 %v53, 4294901760
    %v1334 = vsub.f32 %v53, %v1333
    %1335 = vmatpush1.msra.mxu0 %v1334
    %v1336 = vand.u32 %v52, 4294901760
    %v1337 = vsub.f32 %v52, %v1336
    %1338 = vmatprep.subr.mxu0 %v1337
    %v1339 = vand.u32 %v51, 4294901760
    %v1340 = vsub.f32 %v51, %v1339
    %1341 = vmatpush1.msra.mxu0 %v1340
    %v1342 = vand.u32 %v50, 4294901760
    %v1343 = vsub.f32 %v50, %v1342
    %1344 = vmatprep.subr.mxu0 %v1343
    %v1345 = vand.u32 %v49, 4294901760
    %v1346 = vsub.f32 %v49, %v1345
    %1347 = vmatpush1.msra.mxu0 %v1346
    %v1348 = vand.u32 %v48, 4294901760
    %v1349 = vsub.f32 %v48, %v1348
    %1350 = vmatprep.subr.mxu0 %v1349
    %v1351 = vand.u32 %v47, 4294901760
    %v1352 = vsub.f32 %v47, %v1351
    %1353 = vmatpush1.msra.mxu0 %v1352
    %v1354 = vand.u32 %v46, 4294901760
    %v1355 = vsub.f32 %v46, %v1354
    %1356 = vmatprep.subr.mxu0 %v1355
    %v1357 = vand.u32 %v45, 4294901760
    %v1358 = vsub.f32 %v45, %v1357
    %1359 = vmatpush1.msra.mxu0 %v1358
    %v1360 = vand.u32 %v44, 4294901760
    %v1361 = vsub.f32 %v44, %v1360
    %1362 = vmatprep.subr.mxu0 %v1361
    %v1363 = vand.u32 %v43, 4294901760
    %v1364 = vsub.f32 %v43, %v1363
    %1365 = vmatpush1.msra.mxu0 %v1364
    %v1366 = vand.u32 %v42, 4294901760
    %v1367 = vsub.f32 %v42, %v1366
    %1368 = vmatprep.subr.mxu0 %v1367
    %v1369 = vand.u32 %v41, 4294901760
    %v1370 = vsub.f32 %v41, %v1369
    %1371 = vmatpush1.msra.mxu0 %v1370
    %v1372 = vand.u32 %v40, 4294901760
    %v1373 = vsub.f32 %v40, %v1372
    %1374 = vmatprep.subr.mxu0 %v1373
    %v1375 = vand.u32 %v39, 4294901760
    %v1376 = vsub.f32 %v39, %v1375
    %1377 = vmatpush1.msra.mxu0 %v1376
    %v1378 = vand.u32 %v38, 4294901760
    %v1379 = vsub.f32 %v38, %v1378
    %1380 = vmatprep.subr.mxu0 %v1379
    %v1381 = vand.u32 %v37, 4294901760
    %v1382 = vsub.f32 %v37, %v1381
    %1383 = vmatpush1.msra.mxu0 %v1382
    %v1384 = vand.u32 %v36, 4294901760
    %v1385 = vsub.f32 %v36, %v1384
    %1386 = vmatprep.subr.mxu0 %v1385
    %v1387 = vand.u32 %v35, 4294901760
    %v1388 = vsub.f32 %v35, %v1387
    %1389 = vmatpush1.msra.mxu0 %v1388
    %v1390 = vand.u32 %v34, 4294901760
    %v1391 = vsub.f32 %v34, %v1390
    %1392 = vmatprep.subr.mxu0 %v1391
    %v1393 = vand.u32 %v33, 4294901760
    %v1394 = vsub.f32 %v33, %v1393
    %1395 = vmatpush1.msra.mxu0 %v1394
    %v1396 = vand.u32 %v32, 4294901760
    %v1397 = vsub.f32 %v32, %v1396
    %1398 = vmatprep.subr.mxu0 %v1397
    %v1399 = vand.u32 %v31, 4294901760
    %v1400 = vsub.f32 %v31, %v1399
    %1401 = vmatpush1.msra.mxu0 %v1400
    %v1402 = vand.u32 %v30, 4294901760
    %v1403 = vsub.f32 %v30, %v1402
    %1404 = vmatprep.subr.mxu0 %v1403
    %v1405 = vand.u32 %v29, 4294901760
    %v1406 = vsub.f32 %v29, %v1405
    %1407 = vmatpush1.msra.mxu0 %v1406
    %v1408 = vand.u32 %v92, 4294901760
    %v1409 = vsub.f32 %v92, %v1408
    %1410 = vmatprep.subr.mxu0 %v1409
    %v1411 = vand.u32 %v91, 4294901760
    %v1412 = vsub.f32 %v91, %v1411
    %1413 = vmatpush2.msra.mxu0 %v1412
    %v1414 = vand.u32 %v90, 4294901760
    %v1415 = vsub.f32 %v90, %v1414
    %1416 = vmatprep.subr.mxu0 %v1415
    %v1417 = vand.u32 %v89, 4294901760
    %v1418 = vsub.f32 %v89, %v1417
    %1419 = vmatpush2.msra.mxu0 %v1418
    %v1420 = vand.u32 %v88, 4294901760
    %v1421 = vsub.f32 %v88, %v1420
    %1422 = vmatprep.subr.mxu0 %v1421
    %v1423 = vand.u32 %v87, 4294901760
    %v1424 = vsub.f32 %v87, %v1423
    %1425 = vmatpush2.msra.mxu0 %v1424
    %v1426 = vand.u32 %v86, 4294901760
    %v1427 = vsub.f32 %v86, %v1426
    %1428 = vmatprep.subr.mxu0 %v1427
    %v1429 = vand.u32 %v85, 4294901760
    %v1430 = vsub.f32 %v85, %v1429
    %1431 = vmatpush2.msra.mxu0 %v1430
    %v1432 = vand.u32 %v84, 4294901760
    %v1433 = vsub.f32 %v84, %v1432
    %1434 = vmatprep.subr.mxu0 %v1433
    %v1435 = vand.u32 %v83, 4294901760
    %v1436 = vsub.f32 %v83, %v1435
    %1437 = vmatpush2.msra.mxu0 %v1436
    %v1438 = vand.u32 %v82, 4294901760
    %v1439 = vsub.f32 %v82, %v1438
    %1440 = vmatprep.subr.mxu0 %v1439
    %v1441 = vand.u32 %v81, 4294901760
    %v1442 = vsub.f32 %v81, %v1441
    %1443 = vmatpush2.msra.mxu0 %v1442
    %v1444 = vand.u32 %v80, 4294901760
    %v1445 = vsub.f32 %v80, %v1444
    %1446 = vmatprep.subr.mxu0 %v1445
    %v1447 = vand.u32 %v79, 4294901760
    %v1448 = vsub.f32 %v79, %v1447
    %1449 = vmatpush2.msra.mxu0 %v1448
    %v1450 = vand.u32 %v78, 4294901760
    %v1451 = vsub.f32 %v78, %v1450
    %1452 = vmatprep.subr.mxu0 %v1451
    %v1453 = vand.u32 %v77, 4294901760
    %v1454 = vsub.f32 %v77, %v1453
    %1455 = vmatpush2.msra.mxu0 %v1454
    %v1456 = vand.u32 %v76, 4294901760
    %v1457 = vsub.f32 %v76, %v1456
    %1458 = vmatprep.subr.mxu0 %v1457
    %v1459 = vand.u32 %v75, 4294901760
    %v1460 = vsub.f32 %v75, %v1459
    %1461 = vmatpush2.msra.mxu0 %v1460
    %v1462 = vand.u32 %v74, 4294901760
    %v1463 = vsub.f32 %v74, %v1462
    %1464 = vmatprep.subr.mxu0 %v1463
    %v1465 = vand.u32 %v73, 4294901760
    %v1466 = vsub.f32 %v73, %v1465
    %1467 = vmatpush2.msra.mxu0 %v1466
    %v1468 = vand.u32 %v72, 4294901760
    %v1469 = vsub.f32 %v72, %v1468
    %1470 = vmatprep.subr.mxu0 %v1469
    %v1471 = vand.u32 %v71, 4294901760
    %v1472 = vsub.f32 %v71, %v1471
    %1473 = vmatpush2.msra.mxu0 %v1472
    %v1474 = vand.u32 %v70, 4294901760
    %v1475 = vsub.f32 %v70, %v1474
    %1476 = vmatprep.subr.mxu0 %v1475
    %v1477 = vand.u32 %v69, 4294901760
    %v1478 = vsub.f32 %v69, %v1477
    %1479 = vmatpush2.msra.mxu0 %v1478
    %v1480 = vand.u32 %v68, 4294901760
    %v1481 = vsub.f32 %v68, %v1480
    %1482 = vmatprep.subr.mxu0 %v1481
    %v1483 = vand.u32 %v67, 4294901760
    %v1484 = vsub.f32 %v67, %v1483
    %1485 = vmatpush2.msra.mxu0 %v1484
    %v1486 = vand.u32 %v66, 4294901760
    %v1487 = vsub.f32 %v66, %v1486
    %1488 = vmatprep.subr.mxu0 %v1487
    %v1489 = vand.u32 %v65, 4294901760
    %v1490 = vsub.f32 %v65, %v1489
    %1491 = vmatpush2.msra.mxu0 %v1490
    %v1492 = vand.u32 %v64, 4294901760
    %v1493 = vsub.f32 %v64, %v1492
    %1494 = vmatprep.subr.mxu0 %v1493
    %v1495 = vand.u32 %v63, 4294901760
    %v1496 = vsub.f32 %v63, %v1495
    %1497 = vmatpush2.msra.mxu0 %v1496
    %v1498 = vand.u32 %v62, 4294901760
    %v1499 = vsub.f32 %v62, %v1498
    %1500 = vmatprep.subr.mxu0 %v1499
    %v1501 = vand.u32 %v61, 4294901760
    %v1502 = vsub.f32 %v61, %v1501
    %1503 = vmatpush2.msra.mxu0 %v1502
    %v1504 = vand.u32 %v765, 4294901760
    %v1505 = vsub.f32 %v765, %v1504
    %1506 = vmatprep.mubr.f32.mxu0 %v1505
    %v1507 = vand.u32 %v764, 4294901760
    %v1508 = vsub.f32 %v764, %v1507
    %1509 = vmatmul.mubr.f32.gmra.mxu0 %v1508
    %v1510 = vpop.f32.mrf.mxu0
    %v1511 = vadd.f32 %v1308, %v1510
    %v1512 = vpop.f32.mrf.mxu0
    %v1513 = vadd.f32 %v1310, %v1512
    %1514 = vdwg.mxu0
    %v1515 = vand.u32 %v60, 4294901760
    %1516 = vmatprep.subr.mxu0 %v1515
    %v1517 = vand.u32 %v59, 4294901760
    %1518 = vmatpush1.msra.mxu0 %v1517
    %v1519 = vand.u32 %v58, 4294901760
    %1520 = vmatprep.subr.mxu0 %v1519
    %v1521 = vand.u32 %v57, 4294901760
    %1522 = vmatpush1.msra.mxu0 %v1521
    %v1523 = vand.u32 %v56, 4294901760
    %1524 = vmatprep.subr.mxu0 %v1523
    %v1525 = vand.u32 %v55, 4294901760
    %1526 = vmatpush1.msra.mxu0 %v1525
    %v1527 = vand.u32 %v54, 4294901760
    %1528 = vmatprep.subr.mxu0 %v1527
    %v1529 = vand.u32 %v53, 4294901760
    %1530 = vmatpush1.msra.mxu0 %v1529
    %v1531 = vand.u32 %v52, 4294901760
    %1532 = vmatprep.subr.mxu0 %v1531
    %v1533 = vand.u32 %v51, 4294901760
    %1534 = vmatpush1.msra.mxu0 %v1533
    %v1535 = vand.u32 %v50, 4294901760
    %1536 = vmatprep.subr.mxu0 %v1535
    %v1537 = vand.u32 %v49, 4294901760
    %1538 = vmatpush1.msra.mxu0 %v1537
    %v1539 = vand.u32 %v48, 4294901760
    %1540 = vmatprep.subr.mxu0 %v1539
    %v1541 = vand.u32 %v47, 4294901760
    %1542 = vmatpush1.msra.mxu0 %v1541
    %v1543 = vand.u32 %v46, 4294901760
    %1544 = vmatprep.subr.mxu0 %v1543
    %v1545 = vand.u32 %v45, 4294901760
    %1546 = vmatpush1.msra.mxu0 %v1545
    %v1547 = vand.u32 %v44, 4294901760
    %1548 = vmatprep.subr.mxu0 %v1547
    %v1549 = vand.u32 %v43, 4294901760
    %1550 = vmatpush1.msra.mxu0 %v1549
    %v1551 = vand.u32 %v42, 4294901760
    %1552 = vmatprep.subr.mxu0 %v1551
    %v1553 = vand.u32 %v41, 4294901760
    %1554 = vmatpush1.msra.mxu0 %v1553
    %v1555 = vand.u32 %v40, 4294901760
    %1556 = vmatprep.subr.mxu0 %v1555
    %v1557 = vand.u32 %v39, 4294901760
    %1558 = vmatpush1.msra.mxu0 %v1557
    %v1559 = vand.u32 %v38, 4294901760
    %1560 = vmatprep.subr.mxu0 %v1559
    %v1561 = vand.u32 %v37, 4294901760
    %1562 = vmatpush1.msra.mxu0 %v1561
    %v1563 = vand.u32 %v36, 4294901760
    %1564 = vmatprep.subr.mxu0 %v1563
    %v1565 = vand.u32 %v35, 4294901760
    %1566 = vmatpush1.msra.mxu0 %v1565
    %v1567 = vand.u32 %v34, 4294901760
    %1568 = vmatprep.subr.mxu0 %v1567
    %v1569 = vand.u32 %v33, 4294901760
    %1570 = vmatpush1.msra.mxu0 %v1569
    %v1571 = vand.u32 %v32, 4294901760
    %1572 = vmatprep.subr.mxu0 %v1571
    %v1573 = vand.u32 %v31, 4294901760
    %1574 = vmatpush1.msra.mxu0 %v1573
    %v1575 = vand.u32 %v30, 4294901760
    %1576 = vmatprep.subr.mxu0 %v1575
    %v1577 = vand.u32 %v29, 4294901760
    %1578 = vmatpush1.msra.mxu0 %v1577
    %v1579 = vand.u32 %v92, 4294901760
    %1580 = vmatprep.subr.mxu0 %v1579
    %v1581 = vand.u32 %v91, 4294901760
    %1582 = vmatpush2.msra.mxu0 %v1581
    %v1583 = vand.u32 %v90, 4294901760
    %1584 = vmatprep.subr.mxu0 %v1583
    %v1585 = vand.u32 %v89, 4294901760
    %1586 = vmatpush2.msra.mxu0 %v1585
    %v1587 = vand.u32 %v88, 4294901760
    %1588 = vmatprep.subr.mxu0 %v1587
    %v1589 = vand.u32 %v87, 4294901760
    %1590 = vmatpush2.msra.mxu0 %v1589
    %v1591 = vand.u32 %v86, 4294901760
    %1592 = vmatprep.subr.mxu0 %v1591
    %v1593 = vand.u32 %v85, 4294901760
    %1594 = vmatpush2.msra.mxu0 %v1593
    %v1595 = vand.u32 %v84, 4294901760
    %1596 = vmatprep.subr.mxu0 %v1595
    %v1597 = vand.u32 %v83, 4294901760
    %1598 = vmatpush2.msra.mxu0 %v1597
    %v1599 = vand.u32 %v82, 4294901760
    %1600 = vmatprep.subr.mxu0 %v1599
    %v1601 = vand.u32 %v81, 4294901760
    %1602 = vmatpush2.msra.mxu0 %v1601
    %v1603 = vand.u32 %v80, 4294901760
    %1604 = vmatprep.subr.mxu0 %v1603
    %v1605 = vand.u32 %v79, 4294901760
    %1606 = vmatpush2.msra.mxu0 %v1605
    %v1607 = vand.u32 %v78, 4294901760
    %1608 = vmatprep.subr.mxu0 %v1607
    %v1609 = vand.u32 %v77, 4294901760
    %1610 = vmatpush2.msra.mxu0 %v1609
    %v1611 = vand.u32 %v76, 4294901760
    %1612 = vmatprep.subr.mxu0 %v1611
    %v1613 = vand.u32 %v75, 4294901760
    %1614 = vmatpush2.msra.mxu0 %v1613
    %v1615 = vand.u32 %v74, 4294901760
    %1616 = vmatprep.subr.mxu0 %v1615
    %v1617 = vand.u32 %v73, 4294901760
    %1618 = vmatpush2.msra.mxu0 %v1617
    %v1619 = vand.u32 %v72, 4294901760
    %1620 = vmatprep.subr.mxu0 %v1619
    %v1621 = vand.u32 %v71, 4294901760
    %1622 = vmatpush2.msra.mxu0 %v1621
    %v1623 = vand.u32 %v70, 4294901760
    %1624 = vmatprep.subr.mxu0 %v1623
    %v1625 = vand.u32 %v69, 4294901760
    %1626 = vmatpush2.msra.mxu0 %v1625
    %v1627 = vand.u32 %v68, 4294901760
    %1628 = vmatprep.subr.mxu0 %v1627
    %v1629 = vand.u32 %v67, 4294901760
    %1630 = vmatpush2.msra.mxu0 %v1629
    %v1631 = vand.u32 %v66, 4294901760
    %1632 = vmatprep.subr.mxu0 %v1631
    %v1633 = vand.u32 %v65, 4294901760
    %1634 = vmatpush2.msra.mxu0 %v1633
    %v1635 = vand.u32 %v64, 4294901760
    %1636 = vmatprep.subr.mxu0 %v1635
    %v1637 = vand.u32 %v63, 4294901760
    %1638 = vmatpush2.msra.mxu0 %v1637
    %v1639 = vand.u32 %v62, 4294901760
    %1640 = vmatprep.subr.mxu0 %v1639
    %v1641 = vand.u32 %v61, 4294901760
    %1642 = vmatpush2.msra.mxu0 %v1641
    %v1643 = vand.u32 %v765, 4294901760
    %v1644 = vsub.f32 %v765, %v1643
    %v1645 = vand.u32 %v1644, 4294901760
    %1646 = vmatprep.mubr.f32.mxu0 %v1645
    %v1647 = vand.u32 %v764, 4294901760
    %v1648 = vsub.f32 %v764, %v1647
    %v1649 = vand.u32 %v1648, 4294901760
    %1650 = vmatmul.mubr.f32.gmra.mxu0 %v1649
    %v1651 = vpop.f32.mrf.mxu0
    %v1652 = vadd.f32 %v1511, %v1651
    %v1653 = vpop.f32.mrf.mxu0
    %v1654 = vadd.f32 %v1513, %v1653
    %1655 = vdwg.mxu0
    %v1656 = vand.u32 %v60, 4294901760
    %v1657 = vsub.f32 %v60, %v1656
    %v1658 = vand.u32 %v1657, 4294901760
    %1659 = vmatprep.subr.mxu0 %v1658
    %v1660 = vand.u32 %v59, 4294901760
    %v1661 = vsub.f32 %v59, %v1660
    %v1662 = vand.u32 %v1661, 4294901760
    %1663 = vmatpush1.msra.mxu0 %v1662
    %v1664 = vand.u32 %v58, 4294901760
    %v1665 = vsub.f32 %v58, %v1664
    %v1666 = vand.u32 %v1665, 4294901760
    %1667 = vmatprep.subr.mxu0 %v1666
    %v1668 = vand.u32 %v57, 4294901760
    %v1669 = vsub.f32 %v57, %v1668
    %v1670 = vand.u32 %v1669, 4294901760
    %1671 = vmatpush1.msra.mxu0 %v1670
    %v1672 = vand.u32 %v56, 4294901760
    %v1673 = vsub.f32 %v56, %v1672
    %v1674 = vand.u32 %v1673, 4294901760
    %1675 = vmatprep.subr.mxu0 %v1674
    %v1676 = vand.u32 %v55, 4294901760
    %v1677 = vsub.f32 %v55, %v1676
    %v1678 = vand.u32 %v1677, 4294901760
    %1679 = vmatpush1.msra.mxu0 %v1678
    %v1680 = vand.u32 %v54, 4294901760
    %v1681 = vsub.f32 %v54, %v1680
    %v1682 = vand.u32 %v1681, 4294901760
    %1683 = vmatprep.subr.mxu0 %v1682
    %v1684 = vand.u32 %v53, 4294901760
    %v1685 = vsub.f32 %v53, %v1684
    %v1686 = vand.u32 %v1685, 4294901760
    %1687 = vmatpush1.msra.mxu0 %v1686
    %v1688 = vand.u32 %v52, 4294901760
    %v1689 = vsub.f32 %v52, %v1688
    %v1690 = vand.u32 %v1689, 4294901760
    %1691 = vmatprep.subr.mxu0 %v1690
    %v1692 = vand.u32 %v51, 4294901760
    %v1693 = vsub.f32 %v51, %v1692
    %v1694 = vand.u32 %v1693, 4294901760
    %1695 = vmatpush1.msra.mxu0 %v1694
    %v1696 = vand.u32 %v50, 4294901760
    %v1697 = vsub.f32 %v50, %v1696
    %v1698 = vand.u32 %v1697, 4294901760
    %1699 = vmatprep.subr.mxu0 %v1698
    %v1700 = vand.u32 %v49, 4294901760
    %v1701 = vsub.f32 %v49, %v1700
    %v1702 = vand.u32 %v1701, 4294901760
    %1703 = vmatpush1.msra.mxu0 %v1702
    %v1704 = vand.u32 %v48, 4294901760
    %v1705 = vsub.f32 %v48, %v1704
    %v1706 = vand.u32 %v1705, 4294901760
    %1707 = vmatprep.subr.mxu0 %v1706
    %v1708 = vand.u32 %v47, 4294901760
    %v1709 = vsub.f32 %v47, %v1708
    %v1710 = vand.u32 %v1709, 4294901760
    %1711 = vmatpush1.msra.mxu0 %v1710
    %v1712 = vand.u32 %v46, 4294901760
    %v1713 = vsub.f32 %v46, %v1712
    %v1714 = vand.u32 %v1713, 4294901760
    %1715 = vmatprep.subr.mxu0 %v1714
    %v1716 = vand.u32 %v45, 4294901760
    %v1717 = vsub.f32 %v45, %v1716
    %v1718 = vand.u32 %v1717, 4294901760
    %1719 = vmatpush1.msra.mxu0 %v1718
    %v1720 = vand.u32 %v44, 4294901760
    %v1721 = vsub.f32 %v44, %v1720
    %v1722 = vand.u32 %v1721, 4294901760
    %1723 = vmatprep.subr.mxu0 %v1722
    %v1724 = vand.u32 %v43, 4294901760
    %v1725 = vsub.f32 %v43, %v1724
    %v1726 = vand.u32 %v1725, 4294901760
    %1727 = vmatpush1.msra.mxu0 %v1726
    %v1728 = vand.u32 %v42, 4294901760
    %v1729 = vsub.f32 %v42, %v1728
    %v1730 = vand.u32 %v1729, 4294901760
    %1731 = vmatprep.subr.mxu0 %v1730
    %v1732 = vand.u32 %v41, 4294901760
    %v1733 = vsub.f32 %v41, %v1732
    %v1734 = vand.u32 %v1733, 4294901760
    %1735 = vmatpush1.msra.mxu0 %v1734
    %v1736 = vand.u32 %v40, 4294901760
    %v1737 = vsub.f32 %v40, %v1736
    %v1738 = vand.u32 %v1737, 4294901760
    %1739 = vmatprep.subr.mxu0 %v1738
    %v1740 = vand.u32 %v39, 4294901760
    %v1741 = vsub.f32 %v39, %v1740
    %v1742 = vand.u32 %v1741, 4294901760
    %1743 = vmatpush1.msra.mxu0 %v1742
    %v1744 = vand.u32 %v38, 4294901760
    %v1745 = vsub.f32 %v38, %v1744
    %v1746 = vand.u32 %v1745, 4294901760
    %1747 = vmatprep.subr.mxu0 %v1746
    %v1748 = vand.u32 %v37, 4294901760
    %v1749 = vsub.f32 %v37, %v1748
    %v1750 = vand.u32 %v1749, 4294901760
    %1751 = vmatpush1.msra.mxu0 %v1750
    %v1752 = vand.u32 %v36, 4294901760
    %v1753 = vsub.f32 %v36, %v1752
    %v1754 = vand.u32 %v1753, 4294901760
    %1755 = vmatprep.subr.mxu0 %v1754
    %v1756 = vand.u32 %v35, 4294901760
    %v1757 = vsub.f32 %v35, %v1756
    %v1758 = vand.u32 %v1757, 4294901760
    %1759 = vmatpush1.msra.mxu0 %v1758
    %v1760 = vand.u32 %v34, 4294901760
    %v1761 = vsub.f32 %v34, %v1760
    %v1762 = vand.u32 %v1761, 4294901760
    %1763 = vmatprep.subr.mxu0 %v1762
    %v1764 = vand.u32 %v33, 4294901760
    %v1765 = vsub.f32 %v33, %v1764
    %v1766 = vand.u32 %v1765, 4294901760
    %1767 = vmatpush1.msra.mxu0 %v1766
    %v1768 = vand.u32 %v32, 4294901760
    %v1769 = vsub.f32 %v32, %v1768
    %v1770 = vand.u32 %v1769, 4294901760
    %1771 = vmatprep.subr.mxu0 %v1770
    %v1772 = vand.u32 %v31, 4294901760
    %v1773 = vsub.f32 %v31, %v1772
    %v1774 = vand.u32 %v1773, 4294901760
    %1775 = vmatpush1.msra.mxu0 %v1774
    %v1776 = vand.u32 %v30, 4294901760
    %v1777 = vsub.f32 %v30, %v1776
    %v1778 = vand.u32 %v1777, 4294901760
    %1779 = vmatprep.subr.mxu0 %v1778
    %v1780 = vand.u32 %v29, 4294901760
    %v1781 = vsub.f32 %v29, %v1780
    %v1782 = vand.u32 %v1781, 4294901760
    %1783 = vmatpush1.msra.mxu0 %v1782
    %v1784 = vand.u32 %v92, 4294901760
    %v1785 = vsub.f32 %v92, %v1784
    %v1786 = vand.u32 %v1785, 4294901760
    %1787 = vmatprep.subr.mxu0 %v1786
    %v1788 = vand.u32 %v91, 4294901760
    %v1789 = vsub.f32 %v91, %v1788
    %v1790 = vand.u32 %v1789, 4294901760
    %1791 = vmatpush2.msra.mxu0 %v1790
    %v1792 = vand.u32 %v90, 4294901760
    %v1793 = vsub.f32 %v90, %v1792
    %v1794 = vand.u32 %v1793, 4294901760
    %1795 = vmatprep.subr.mxu0 %v1794
    %v1796 = vand.u32 %v89, 4294901760
    %v1797 = vsub.f32 %v89, %v1796
    %v1798 = vand.u32 %v1797, 4294901760
    %1799 = vmatpush2.msra.mxu0 %v1798
    %v1800 = vand.u32 %v88, 4294901760
    %v1801 = vsub.f32 %v88, %v1800
    %v1802 = vand.u32 %v1801, 4294901760
    %1803 = vmatprep.subr.mxu0 %v1802
    %v1804 = vand.u32 %v87, 4294901760
    %v1805 = vsub.f32 %v87, %v1804
    %v1806 = vand.u32 %v1805, 4294901760
    %1807 = vmatpush2.msra.mxu0 %v1806
    %v1808 = vand.u32 %v86, 4294901760
    %v1809 = vsub.f32 %v86, %v1808
    %v1810 = vand.u32 %v1809, 4294901760
    %1811 = vmatprep.subr.mxu0 %v1810
    %v1812 = vand.u32 %v85, 4294901760
    %v1813 = vsub.f32 %v85, %v1812
    %v1814 = vand.u32 %v1813, 4294901760
    %1815 = vmatpush2.msra.mxu0 %v1814
    %v1816 = vand.u32 %v84, 4294901760
    %v1817 = vsub.f32 %v84, %v1816
    %v1818 = vand.u32 %v1817, 4294901760
    %1819 = vmatprep.subr.mxu0 %v1818
    %v1820 = vand.u32 %v83, 4294901760
    %v1821 = vsub.f32 %v83, %v1820
    %v1822 = vand.u32 %v1821, 4294901760
    %1823 = vmatpush2.msra.mxu0 %v1822
    %v1824 = vand.u32 %v82, 4294901760
    %v1825 = vsub.f32 %v82, %v1824
    %v1826 = vand.u32 %v1825, 4294901760
    %1827 = vmatprep.subr.mxu0 %v1826
    %v1828 = vand.u32 %v81, 4294901760
    %v1829 = vsub.f32 %v81, %v1828
    %v1830 = vand.u32 %v1829, 4294901760
    %1831 = vmatpush2.msra.mxu0 %v1830
    %v1832 = vand.u32 %v80, 4294901760
    %v1833 = vsub.f32 %v80, %v1832
    %v1834 = vand.u32 %v1833, 4294901760
    %1835 = vmatprep.subr.mxu0 %v1834
    %v1836 = vand.u32 %v79, 4294901760
    %v1837 = vsub.f32 %v79, %v1836
    %v1838 = vand.u32 %v1837, 4294901760
    %1839 = vmatpush2.msra.mxu0 %v1838
    %v1840 = vand.u32 %v78, 4294901760
    %v1841 = vsub.f32 %v78, %v1840
    %v1842 = vand.u32 %v1841, 4294901760
    %1843 = vmatprep.subr.mxu0 %v1842
    %v1844 = vand.u32 %v77, 4294901760
    %v1845 = vsub.f32 %v77, %v1844
    %v1846 = vand.u32 %v1845, 4294901760
    %1847 = vmatpush2.msra.mxu0 %v1846
    %v1848 = vand.u32 %v76, 4294901760
    %v1849 = vsub.f32 %v76, %v1848
    %v1850 = vand.u32 %v1849, 4294901760
    %1851 = vmatprep.subr.mxu0 %v1850
    %v1852 = vand.u32 %v75, 4294901760
    %v1853 = vsub.f32 %v75, %v1852
    %v1854 = vand.u32 %v1853, 4294901760
    %1855 = vmatpush2.msra.mxu0 %v1854
    %v1856 = vand.u32 %v74, 4294901760
    %v1857 = vsub.f32 %v74, %v1856
    %v1858 = vand.u32 %v1857, 4294901760
    %1859 = vmatprep.subr.mxu0 %v1858
    %v1860 = vand.u32 %v73, 4294901760
    %v1861 = vsub.f32 %v73, %v1860
    %v1862 = vand.u32 %v1861, 4294901760
    %1863 = vmatpush2.msra.mxu0 %v1862
    %v1864 = vand.u32 %v72, 4294901760
    %v1865 = vsub.f32 %v72, %v1864
    %v1866 = vand.u32 %v1865, 4294901760
    %1867 = vmatprep.subr.mxu0 %v1866
    %v1868 = vand.u32 %v71, 4294901760
    %v1869 = vsub.f32 %v71, %v1868
    %v1870 = vand.u32 %v1869, 4294901760
    %1871 = vmatpush2.msra.mxu0 %v1870
    %v1872 = vand.u32 %v70, 4294901760
    %v1873 = vsub.f32 %v70, %v1872
    %v1874 = vand.u32 %v1873, 4294901760
    %1875 = vmatprep.subr.mxu0 %v1874
    %v1876 = vand.u32 %v69, 4294901760
    %v1877 = vsub.f32 %v69, %v1876
    %v1878 = vand.u32 %v1877, 4294901760
    %1879 = vmatpush2.msra.mxu0 %v1878
    %v1880 = vand.u32 %v68, 4294901760
    %v1881 = vsub.f32 %v68, %v1880
    %v1882 = vand.u32 %v1881, 4294901760
    %1883 = vmatprep.subr.mxu0 %v1882
    %v1884 = vand.u32 %v67, 4294901760
    %v1885 = vsub.f32 %v67, %v1884
    %v1886 = vand.u32 %v1885, 4294901760
    %1887 = vmatpush2.msra.mxu0 %v1886
    %v1888 = vand.u32 %v66, 4294901760
    %v1889 = vsub.f32 %v66, %v1888
    %v1890 = vand.u32 %v1889, 4294901760
    %1891 = vmatprep.subr.mxu0 %v1890
    %v1892 = vand.u32 %v65, 4294901760
    %v1893 = vsub.f32 %v65, %v1892
    %v1894 = vand.u32 %v1893, 4294901760
    %1895 = vmatpush2.msra.mxu0 %v1894
    %v1896 = vand.u32 %v64, 4294901760
    %v1897 = vsub.f32 %v64, %v1896
    %v1898 = vand.u32 %v1897, 4294901760
    %1899 = vmatprep.subr.mxu0 %v1898
    %v1900 = vand.u32 %v63, 4294901760
    %v1901 = vsub.f32 %v63, %v1900
    %v1902 = vand.u32 %v1901, 4294901760
    %1903 = vmatpush2.msra.mxu0 %v1902
    %v1904 = vand.u32 %v62, 4294901760
    %v1905 = vsub.f32 %v62, %v1904
    %v1906 = vand.u32 %v1905, 4294901760
    %1907 = vmatprep.subr.mxu0 %v1906
    %v1908 = vand.u32 %v61, 4294901760
    %v1909 = vsub.f32 %v61, %v1908
    %v1910 = vand.u32 %v1909, 4294901760
    %1911 = vmatpush2.msra.mxu0 %v1910
    %v1912 = vand.u32 %v765, 4294901760
    %1913 = vmatprep.mubr.f32.mxu0 %v1912
    %v1914 = vand.u32 %v764, 4294901760
    %1915 = vmatmul.mubr.f32.gmra.mxu0 %v1914
    %v1916 = vpop.f32.mrf.mxu0
    %v1917 = vadd.f32 %v1652, %v1916
    %v1918 = vpop.f32.mrf.mxu0
    %v1919 = vadd.f32 %v1654, %v1918
    %1920 = vdwg.mxu0
    %v1921 = vand.u32 %v60, 4294901760
    %1922 = vmatprep.subr.mxu0 %v1921
    %v1923 = vand.u32 %v59, 4294901760
    %1924 = vmatpush1.msra.mxu0 %v1923
    %v1925 = vand.u32 %v58, 4294901760
    %1926 = vmatprep.subr.mxu0 %v1925
    %v1927 = vand.u32 %v57, 4294901760
    %1928 = vmatpush1.msra.mxu0 %v1927
    %v1929 = vand.u32 %v56, 4294901760
    %1930 = vmatprep.subr.mxu0 %v1929
    %v1931 = vand.u32 %v55, 4294901760
    %1932 = vmatpush1.msra.mxu0 %v1931
    %v1933 = vand.u32 %v54, 4294901760
    %1934 = vmatprep.subr.mxu0 %v1933
    %v1935 = vand.u32 %v53, 4294901760
    %1936 = vmatpush1.msra.mxu0 %v1935
    %v1937 = vand.u32 %v52, 4294901760
    %1938 = vmatprep.subr.mxu0 %v1937
    %v1939 = vand.u32 %v51, 4294901760
    %1940 = vmatpush1.msra.mxu0 %v1939
    %v1941 = vand.u32 %v50, 4294901760
    %1942 = vmatprep.subr.mxu0 %v1941
    %v1943 = vand.u32 %v49, 4294901760
    %1944 = vmatpush1.msra.mxu0 %v1943
    %v1945 = vand.u32 %v48, 4294901760
    %1946 = vmatprep.subr.mxu0 %v1945
    %v1947 = vand.u32 %v47, 4294901760
    %1948 = vmatpush1.msra.mxu0 %v1947
    %v1949 = vand.u32 %v46, 4294901760
    %1950 = vmatprep.subr.mxu0 %v1949
    %v1951 = vand.u32 %v45, 4294901760
    %1952 = vmatpush1.msra.mxu0 %v1951
    %v1953 = vand.u32 %v44, 4294901760
    %1954 = vmatprep.subr.mxu0 %v1953
    %v1955 = vand.u32 %v43, 4294901760
    %1956 = vmatpush1.msra.mxu0 %v1955
    %v1957 = vand.u32 %v42, 4294901760
    %1958 = vmatprep.subr.mxu0 %v1957
    %v1959 = vand.u32 %v41, 4294901760
    %1960 = vmatpush1.msra.mxu0 %v1959
    %v1961 = vand.u32 %v40, 4294901760
    %1962 = vmatprep.subr.mxu0 %v1961
    %v1963 = vand.u32 %v39, 4294901760
    %1964 = vmatpush1.msra.mxu0 %v1963
    %v1965 = vand.u32 %v38, 4294901760
    %1966 = vmatprep.subr.mxu0 %v1965
    %v1967 = vand.u32 %v37, 4294901760
    %1968 = vmatpush1.msra.mxu0 %v1967
    %v1969 = vand.u32 %v36, 4294901760
    %1970 = vmatprep.subr.mxu0 %v1969
    %v1971 = vand.u32 %v35, 4294901760
    %1972 = vmatpush1.msra.mxu0 %v1971
    %v1973 = vand.u32 %v34, 4294901760
    %1974 = vmatprep.subr.mxu0 %v1973
    %v1975 = vand.u32 %v33, 4294901760
    %1976 = vmatpush1.msra.mxu0 %v1975
    %v1977 = vand.u32 %v32, 4294901760
    %1978 = vmatprep.subr.mxu0 %v1977
    %v1979 = vand.u32 %v31, 4294901760
    %1980 = vmatpush1.msra.mxu0 %v1979
    %v1981 = vand.u32 %v30, 4294901760
    %1982 = vmatprep.subr.mxu0 %v1981
    %v1983 = vand.u32 %v29, 4294901760
    %1984 = vmatpush1.msra.mxu0 %v1983
    %v1985 = vand.u32 %v92, 4294901760
    %1986 = vmatprep.subr.mxu0 %v1985
    %v1987 = vand.u32 %v91, 4294901760
    %1988 = vmatpush2.msra.mxu0 %v1987
    %v1989 = vand.u32 %v90, 4294901760
    %1990 = vmatprep.subr.mxu0 %v1989
    %v1991 = vand.u32 %v89, 4294901760
    %1992 = vmatpush2.msra.mxu0 %v1991
    %v1993 = vand.u32 %v88, 4294901760
    %1994 = vmatprep.subr.mxu0 %v1993
    %v1995 = vand.u32 %v87, 4294901760
    %1996 = vmatpush2.msra.mxu0 %v1995
    %v1997 = vand.u32 %v86, 4294901760
    %1998 = vmatprep.subr.mxu0 %v1997
    %v1999 = vand.u32 %v85, 4294901760
    %2000 = vmatpush2.msra.mxu0 %v1999
    %v2001 = vand.u32 %v84, 4294901760
    %2002 = vmatprep.subr.mxu0 %v2001
    %v2003 = vand.u32 %v83, 4294901760
    %2004 = vmatpush2.msra.mxu0 %v2003
    %v2005 = vand.u32 %v82, 4294901760
    %2006 = vmatprep.subr.mxu0 %v2005
    %v2007 = vand.u32 %v81, 4294901760
    %2008 = vmatpush2.msra.mxu0 %v2007
    %v2009 = vand.u32 %v80, 4294901760
    %2010 = vmatprep.subr.mxu0 %v2009
    %v2011 = vand.u32 %v79, 4294901760
    %2012 = vmatpush2.msra.mxu0 %v2011
    %v2013 = vand.u32 %v78, 4294901760
    %2014 = vmatprep.subr.mxu0 %v2013
    %v2015 = vand.u32 %v77, 4294901760
    %2016 = vmatpush2.msra.mxu0 %v2015
    %v2017 = vand.u32 %v76, 4294901760
    %2018 = vmatprep.subr.mxu0 %v2017
    %v2019 = vand.u32 %v75, 4294901760
    %2020 = vmatpush2.msra.mxu0 %v2019
    %v2021 = vand.u32 %v74, 4294901760
    %2022 = vmatprep.subr.mxu0 %v2021
    %v2023 = vand.u32 %v73, 4294901760
    %2024 = vmatpush2.msra.mxu0 %v2023
    %v2025 = vand.u32 %v72, 4294901760
    %2026 = vmatprep.subr.mxu0 %v2025
    %v2027 = vand.u32 %v71, 4294901760
    %2028 = vmatpush2.msra.mxu0 %v2027
    %v2029 = vand.u32 %v70, 4294901760
    %2030 = vmatprep.subr.mxu0 %v2029
    %v2031 = vand.u32 %v69, 4294901760
    %2032 = vmatpush2.msra.mxu0 %v2031
    %v2033 = vand.u32 %v68, 4294901760
    %2034 = vmatprep.subr.mxu0 %v2033
    %v2035 = vand.u32 %v67, 4294901760
    %2036 = vmatpush2.msra.mxu0 %v2035
    %v2037 = vand.u32 %v66, 4294901760
    %2038 = vmatprep.subr.mxu0 %v2037
    %v2039 = vand.u32 %v65, 4294901760
    %2040 = vmatpush2.msra.mxu0 %v2039
    %v2041 = vand.u32 %v64, 4294901760
    %2042 = vmatprep.subr.mxu0 %v2041
    %v2043 = vand.u32 %v63, 4294901760
    %2044 = vmatpush2.msra.mxu0 %v2043
    %v2045 = vand.u32 %v62, 4294901760
    %2046 = vmatprep.subr.mxu0 %v2045
    %v2047 = vand.u32 %v61, 4294901760
    %2048 = vmatpush2.msra.mxu0 %v2047
    %v2049 = vand.u32 %v765, 4294901760
    %2050 = vmatprep.mubr.f32.mxu0 %v2049
    %v2051 = vand.u32 %v764, 4294901760
    %2052 = vmatmul.mubr.f32.gmra.mxu0 %v2051
    %v2053 = vpop.f32.mrf.mxu0
    %v2054 = vadd.f32 %v1917, %v2053
    %v2055 = vpop.f32.mrf.mxu0
    %v2056 = vadd.f32 %v1919, %v2055
    %2057 = vdwg.mxu0
    %v2058 = vadd.f32 %v2054, %v736
    %v2059 = vadd.f32 %v2056, %v738
    %v2060 = vtanh.pop %v2058
    %v2061 = vtanh.pop %v2059
    %v2062 = vlaneseq
    %v2063 = vshrl.u32 %v2062, 7
    %v2064 = vsub.s32 2, %v2063
    %v2065 = vrot.slane %v97, %v2064
    %v2066 = vlaneseq
    %v2067 = vshrl.u32 %v2066, 7
    %v2068 = vsub.s32 2, %v2067
    %v2069 = vrot.slane %v98, %v2068
    %v2070 = vand.u32 %v60, 4294901760
    %2071 = vmatprep.subr.mxu0 %v2070
    %v2072 = vand.u32 %v59, 4294901760
    %2073 = vmatpush1.msra.mxu0 %v2072
    %v2074 = vand.u32 %v58, 4294901760
    %2075 = vmatprep.subr.mxu0 %v2074
    %v2076 = vand.u32 %v57, 4294901760
    %2077 = vmatpush1.msra.mxu0 %v2076
    %v2078 = vand.u32 %v56, 4294901760
    %2079 = vmatprep.subr.mxu0 %v2078
    %v2080 = vand.u32 %v55, 4294901760
    %2081 = vmatpush1.msra.mxu0 %v2080
    %v2082 = vand.u32 %v54, 4294901760
    %2083 = vmatprep.subr.mxu0 %v2082
    %v2084 = vand.u32 %v53, 4294901760
    %2085 = vmatpush1.msra.mxu0 %v2084
    %v2086 = vand.u32 %v52, 4294901760
    %2087 = vmatprep.subr.mxu0 %v2086
    %v2088 = vand.u32 %v51, 4294901760
    %2089 = vmatpush1.msra.mxu0 %v2088
    %v2090 = vand.u32 %v50, 4294901760
    %2091 = vmatprep.subr.mxu0 %v2090
    %v2092 = vand.u32 %v49, 4294901760
    %2093 = vmatpush1.msra.mxu0 %v2092
    %v2094 = vand.u32 %v48, 4294901760
    %2095 = vmatprep.subr.mxu0 %v2094
    %v2096 = vand.u32 %v47, 4294901760
    %2097 = vmatpush1.msra.mxu0 %v2096
    %v2098 = vand.u32 %v46, 4294901760
    %2099 = vmatprep.subr.mxu0 %v2098
    %v2100 = vand.u32 %v45, 4294901760
    %2101 = vmatpush1.msra.mxu0 %v2100
    %v2102 = vand.u32 %v44, 4294901760
    %2103 = vmatprep.subr.mxu0 %v2102
    %v2104 = vand.u32 %v43, 4294901760
    %2105 = vmatpush1.msra.mxu0 %v2104
    %v2106 = vand.u32 %v42, 4294901760
    %2107 = vmatprep.subr.mxu0 %v2106
    %v2108 = vand.u32 %v41, 4294901760
    %2109 = vmatpush1.msra.mxu0 %v2108
    %v2110 = vand.u32 %v40, 4294901760
    %2111 = vmatprep.subr.mxu0 %v2110
    %v2112 = vand.u32 %v39, 4294901760
    %2113 = vmatpush1.msra.mxu0 %v2112
    %v2114 = vand.u32 %v38, 4294901760
    %2115 = vmatprep.subr.mxu0 %v2114
    %v2116 = vand.u32 %v37, 4294901760
    %2117 = vmatpush1.msra.mxu0 %v2116
    %v2118 = vand.u32 %v36, 4294901760
    %2119 = vmatprep.subr.mxu0 %v2118
    %v2120 = vand.u32 %v35, 4294901760
    %2121 = vmatpush1.msra.mxu0 %v2120
    %v2122 = vand.u32 %v34, 4294901760
    %2123 = vmatprep.subr.mxu0 %v2122
    %v2124 = vand.u32 %v33, 4294901760
    %2125 = vmatpush1.msra.mxu0 %v2124
    %v2126 = vand.u32 %v32, 4294901760
    %2127 = vmatprep.subr.mxu0 %v2126
    %v2128 = vand.u32 %v31, 4294901760
    %2129 = vmatpush1.msra.mxu0 %v2128
    %v2130 = vand.u32 %v30, 4294901760
    %2131 = vmatprep.subr.mxu0 %v2130
    %v2132 = vand.u32 %v29, 4294901760
    %2133 = vmatpush1.msra.mxu0 %v2132
    %v2134 = vand.u32 %v92, 4294901760
    %2135 = vmatprep.subr.mxu0 %v2134
    %v2136 = vand.u32 %v91, 4294901760
    %2137 = vmatpush2.msra.mxu0 %v2136
    %v2138 = vand.u32 %v90, 4294901760
    %2139 = vmatprep.subr.mxu0 %v2138
    %v2140 = vand.u32 %v89, 4294901760
    %2141 = vmatpush2.msra.mxu0 %v2140
    %v2142 = vand.u32 %v88, 4294901760
    %2143 = vmatprep.subr.mxu0 %v2142
    %v2144 = vand.u32 %v87, 4294901760
    %2145 = vmatpush2.msra.mxu0 %v2144
    %v2146 = vand.u32 %v86, 4294901760
    %2147 = vmatprep.subr.mxu0 %v2146
    %v2148 = vand.u32 %v85, 4294901760
    %2149 = vmatpush2.msra.mxu0 %v2148
    %v2150 = vand.u32 %v84, 4294901760
    %2151 = vmatprep.subr.mxu0 %v2150
    %v2152 = vand.u32 %v83, 4294901760
    %2153 = vmatpush2.msra.mxu0 %v2152
    %v2154 = vand.u32 %v82, 4294901760
    %2155 = vmatprep.subr.mxu0 %v2154
    %v2156 = vand.u32 %v81, 4294901760
    %2157 = vmatpush2.msra.mxu0 %v2156
    %v2158 = vand.u32 %v80, 4294901760
    %2159 = vmatprep.subr.mxu0 %v2158
    %v2160 = vand.u32 %v79, 4294901760
    %2161 = vmatpush2.msra.mxu0 %v2160
    %v2162 = vand.u32 %v78, 4294901760
    %2163 = vmatprep.subr.mxu0 %v2162
    %v2164 = vand.u32 %v77, 4294901760
    %2165 = vmatpush2.msra.mxu0 %v2164
    %v2166 = vand.u32 %v76, 4294901760
    %2167 = vmatprep.subr.mxu0 %v2166
    %v2168 = vand.u32 %v75, 4294901760
    %2169 = vmatpush2.msra.mxu0 %v2168
    %v2170 = vand.u32 %v74, 4294901760
    %2171 = vmatprep.subr.mxu0 %v2170
    %v2172 = vand.u32 %v73, 4294901760
    %2173 = vmatpush2.msra.mxu0 %v2172
    %v2174 = vand.u32 %v72, 4294901760
    %2175 = vmatprep.subr.mxu0 %v2174
    %v2176 = vand.u32 %v71, 4294901760
    %2177 = vmatpush2.msra.mxu0 %v2176
    %v2178 = vand.u32 %v70, 4294901760
    %2179 = vmatprep.subr.mxu0 %v2178
    %v2180 = vand.u32 %v69, 4294901760
    %2181 = vmatpush2.msra.mxu0 %v2180
    %v2182 = vand.u32 %v68, 4294901760
    %2183 = vmatprep.subr.mxu0 %v2182
    %v2184 = vand.u32 %v67, 4294901760
    %2185 = vmatpush2.msra.mxu0 %v2184
    %v2186 = vand.u32 %v66, 4294901760
    %2187 = vmatprep.subr.mxu0 %v2186
    %v2188 = vand.u32 %v65, 4294901760
    %2189 = vmatpush2.msra.mxu0 %v2188
    %v2190 = vand.u32 %v64, 4294901760
    %2191 = vmatprep.subr.mxu0 %v2190
    %v2192 = vand.u32 %v63, 4294901760
    %2193 = vmatpush2.msra.mxu0 %v2192
    %v2194 = vand.u32 %v62, 4294901760
    %2195 = vmatprep.subr.mxu0 %v2194
    %v2196 = vand.u32 %v61, 4294901760
    %2197 = vmatpush2.msra.mxu0 %v2196
    %v2198 = vand.u32 %v2061, 4294901760
    %v2199 = vsub.f32 %v2061, %v2198
    %v2200 = vand.u32 %v2199, 4294901760
    %v2201 = vsub.f32 %v2199, %v2200
    %v2202 = vand.u32 %v2201, 4294901760
    %2203 = vmatprep.mubr.f32.mxu0 %v2202
    %v2204 = vand.u32 %v2060, 4294901760
    %v2205 = vsub.f32 %v2060, %v2204
    %v2206 = vand.u32 %v2205, 4294901760
    %v2207 = vsub.f32 %v2205, %v2206
    %v2208 = vand.u32 %v2207, 4294901760
    %2209 = vmatmul.mubr.f32.gmra.mxu0 %v2208
    %v2210 = vpop.f32.mrf.mxu0
    %v2211 = vadd.f32 %v2065, %v2210
    %v2212 = vpop.f32.mrf.mxu0
    %v2213 = vadd.f32 %v2069, %v2212
    %2214 = vdwg.mxu0
    %v2215 = vand.u32 %v60, 4294901760
    %v2216 = vsub.f32 %v60, %v2215
    %v2217 = vand.u32 %v2216, 4294901760
    %v2218 = vsub.f32 %v2216, %v2217
    %v2219 = vand.u32 %v2218, 4294901760
    %2220 = vmatprep.subr.mxu0 %v2219
    %v2221 = vand.u32 %v59, 4294901760
    %v2222 = vsub.f32 %v59, %v2221
    %v2223 = vand.u32 %v2222, 4294901760
    %v2224 = vsub.f32 %v2222, %v2223
    %v2225 = vand.u32 %v2224, 4294901760
    %2226 = vmatpush1.msra.mxu0 %v2225
    %v2227 = vand.u32 %v58, 4294901760
    %v2228 = vsub.f32 %v58, %v2227
    %v2229 = vand.u32 %v2228, 4294901760
    %v2230 = vsub.f32 %v2228, %v2229
    %v2231 = vand.u32 %v2230, 4294901760
    %2232 = vmatprep.subr.mxu0 %v2231
    %v2233 = vand.u32 %v57, 4294901760
    %v2234 = vsub.f32 %v57, %v2233
    %v2235 = vand.u32 %v2234, 4294901760
    %v2236 = vsub.f32 %v2234, %v2235
    %v2237 = vand.u32 %v2236, 4294901760
    %2238 = vmatpush1.msra.mxu0 %v2237
    %v2239 = vand.u32 %v56, 4294901760
    %v2240 = vsub.f32 %v56, %v2239
    %v2241 = vand.u32 %v2240, 4294901760
    %v2242 = vsub.f32 %v2240, %v2241
    %v2243 = vand.u32 %v2242, 4294901760
    %2244 = vmatprep.subr.mxu0 %v2243
    %v2245 = vand.u32 %v55, 4294901760
    %v2246 = vsub.f32 %v55, %v2245
    %v2247 = vand.u32 %v2246, 4294901760
    %v2248 = vsub.f32 %v2246, %v2247
    %v2249 = vand.u32 %v2248, 4294901760
    %2250 = vmatpush1.msra.mxu0 %v2249
    %v2251 = vand.u32 %v54, 4294901760
    %v2252 = vsub.f32 %v54, %v2251
    %v2253 = vand.u32 %v2252, 4294901760
    %v2254 = vsub.f32 %v2252, %v2253
    %v2255 = vand.u32 %v2254, 4294901760
    %2256 = vmatprep.subr.mxu0 %v2255
    %v2257 = vand.u32 %v53, 4294901760
    %v2258 = vsub.f32 %v53, %v2257
    %v2259 = vand.u32 %v2258, 4294901760
    %v2260 = vsub.f32 %v2258, %v2259
    %v2261 = vand.u32 %v2260, 4294901760
    %2262 = vmatpush1.msra.mxu0 %v2261
    %v2263 = vand.u32 %v52, 4294901760
    %v2264 = vsub.f32 %v52, %v2263
    %v2265 = vand.u32 %v2264, 4294901760
    %v2266 = vsub.f32 %v2264, %v2265
    %v2267 = vand.u32 %v2266, 4294901760
    %2268 = vmatprep.subr.mxu0 %v2267
    %v2269 = vand.u32 %v51, 4294901760
    %v2270 = vsub.f32 %v51, %v2269
    %v2271 = vand.u32 %v2270, 4294901760
    %v2272 = vsub.f32 %v2270, %v2271
    %v2273 = vand.u32 %v2272, 4294901760
    %2274 = vmatpush1.msra.mxu0 %v2273
    %v2275 = vand.u32 %v50, 4294901760
    %v2276 = vsub.f32 %v50, %v2275
    %v2277 = vand.u32 %v2276, 4294901760
    %v2278 = vsub.f32 %v2276, %v2277
    %v2279 = vand.u32 %v2278, 4294901760
    %2280 = vmatprep.subr.mxu0 %v2279
    %v2281 = vand.u32 %v49, 4294901760
    %v2282 = vsub.f32 %v49, %v2281
    %v2283 = vand.u32 %v2282, 4294901760
    %v2284 = vsub.f32 %v2282, %v2283
    %v2285 = vand.u32 %v2284, 4294901760
    %2286 = vmatpush1.msra.mxu0 %v2285
    %v2287 = vand.u32 %v48, 4294901760
    %v2288 = vsub.f32 %v48, %v2287
    %v2289 = vand.u32 %v2288, 4294901760
    %v2290 = vsub.f32 %v2288, %v2289
    %v2291 = vand.u32 %v2290, 4294901760
    %2292 = vmatprep.subr.mxu0 %v2291
    %v2293 = vand.u32 %v47, 4294901760
    %v2294 = vsub.f32 %v47, %v2293
    %v2295 = vand.u32 %v2294, 4294901760
    %v2296 = vsub.f32 %v2294, %v2295
    %v2297 = vand.u32 %v2296, 4294901760
    %2298 = vmatpush1.msra.mxu0 %v2297
    %v2299 = vand.u32 %v46, 4294901760
    %v2300 = vsub.f32 %v46, %v2299
    %v2301 = vand.u32 %v2300, 4294901760
    %v2302 = vsub.f32 %v2300, %v2301
    %v2303 = vand.u32 %v2302, 4294901760
    %2304 = vmatprep.subr.mxu0 %v2303
    %v2305 = vand.u32 %v45, 4294901760
    %v2306 = vsub.f32 %v45, %v2305
    %v2307 = vand.u32 %v2306, 4294901760
    %v2308 = vsub.f32 %v2306, %v2307
    %v2309 = vand.u32 %v2308, 4294901760
    %2310 = vmatpush1.msra.mxu0 %v2309
    %v2311 = vand.u32 %v44, 4294901760
    %v2312 = vsub.f32 %v44, %v2311
    %v2313 = vand.u32 %v2312, 4294901760
    %v2314 = vsub.f32 %v2312, %v2313
    %v2315 = vand.u32 %v2314, 4294901760
    %2316 = vmatprep.subr.mxu0 %v2315
    %v2317 = vand.u32 %v43, 4294901760
    %v2318 = vsub.f32 %v43, %v2317
    %v2319 = vand.u32 %v2318, 4294901760
    %v2320 = vsub.f32 %v2318, %v2319
    %v2321 = vand.u32 %v2320, 4294901760
    %2322 = vmatpush1.msra.mxu0 %v2321
    %v2323 = vand.u32 %v42, 4294901760
    %v2324 = vsub.f32 %v42, %v2323
    %v2325 = vand.u32 %v2324, 4294901760
    %v2326 = vsub.f32 %v2324, %v2325
    %v2327 = vand.u32 %v2326, 4294901760
    %2328 = vmatprep.subr.mxu0 %v2327
    %v2329 = vand.u32 %v41, 4294901760
    %v2330 = vsub.f32 %v41, %v2329
    %v2331 = vand.u32 %v2330, 4294901760
    %v2332 = vsub.f32 %v2330, %v2331
    %v2333 = vand.u32 %v2332, 4294901760
    %2334 = vmatpush1.msra.mxu0 %v2333
    %v2335 = vand.u32 %v40, 4294901760
    %v2336 = vsub.f32 %v40, %v2335
    %v2337 = vand.u32 %v2336, 4294901760
    %v2338 = vsub.f32 %v2336, %v2337
    %v2339 = vand.u32 %v2338, 4294901760
    %2340 = vmatprep.subr.mxu0 %v2339
    %v2341 = vand.u32 %v39, 4294901760
    %v2342 = vsub.f32 %v39, %v2341
    %v2343 = vand.u32 %v2342, 4294901760
    %v2344 = vsub.f32 %v2342, %v2343
    %v2345 = vand.u32 %v2344, 4294901760
    %2346 = vmatpush1.msra.mxu0 %v2345
    %v2347 = vand.u32 %v38, 4294901760
    %v2348 = vsub.f32 %v38, %v2347
    %v2349 = vand.u32 %v2348, 4294901760
    %v2350 = vsub.f32 %v2348, %v2349
    %v2351 = vand.u32 %v2350, 4294901760
    %2352 = vmatprep.subr.mxu0 %v2351
    %v2353 = vand.u32 %v37, 4294901760
    %v2354 = vsub.f32 %v37, %v2353
    %v2355 = vand.u32 %v2354, 4294901760
    %v2356 = vsub.f32 %v2354, %v2355
    %v2357 = vand.u32 %v2356, 4294901760
    %2358 = vmatpush1.msra.mxu0 %v2357
    %v2359 = vand.u32 %v36, 4294901760
    %v2360 = vsub.f32 %v36, %v2359
    %v2361 = vand.u32 %v2360, 4294901760
    %v2362 = vsub.f32 %v2360, %v2361
    %v2363 = vand.u32 %v2362, 4294901760
    %2364 = vmatprep.subr.mxu0 %v2363
    %v2365 = vand.u32 %v35, 4294901760
    %v2366 = vsub.f32 %v35, %v2365
    %v2367 = vand.u32 %v2366, 4294901760
    %v2368 = vsub.f32 %v2366, %v2367
    %v2369 = vand.u32 %v2368, 4294901760
    %2370 = vmatpush1.msra.mxu0 %v2369
    %v2371 = vand.u32 %v34, 4294901760
    %v2372 = vsub.f32 %v34, %v2371
    %v2373 = vand.u32 %v2372, 4294901760
    %v2374 = vsub.f32 %v2372, %v2373
    %v2375 = vand.u32 %v2374, 4294901760
    %2376 = vmatprep.subr.mxu0 %v2375
    %v2377 = vand.u32 %v33, 4294901760
    %v2378 = vsub.f32 %v33, %v2377
    %v2379 = vand.u32 %v2378, 4294901760
    %v2380 = vsub.f32 %v2378, %v2379
    %v2381 = vand.u32 %v2380, 4294901760
    %2382 = vmatpush1.msra.mxu0 %v2381
    %v2383 = vand.u32 %v32, 4294901760
    %v2384 = vsub.f32 %v32, %v2383
    %v2385 = vand.u32 %v2384, 4294901760
    %v2386 = vsub.f32 %v2384, %v2385
    %v2387 = vand.u32 %v2386, 4294901760
    %2388 = vmatprep.subr.mxu0 %v2387
    %v2389 = vand.u32 %v31, 4294901760
    %v2390 = vsub.f32 %v31, %v2389
    %v2391 = vand.u32 %v2390, 4294901760
    %v2392 = vsub.f32 %v2390, %v2391
    %v2393 = vand.u32 %v2392, 4294901760
    %2394 = vmatpush1.msra.mxu0 %v2393
    %v2395 = vand.u32 %v30, 4294901760
    %v2396 = vsub.f32 %v30, %v2395
    %v2397 = vand.u32 %v2396, 4294901760
    %v2398 = vsub.f32 %v2396, %v2397
    %v2399 = vand.u32 %v2398, 4294901760
    %2400 = vmatprep.subr.mxu0 %v2399
    %v2401 = vand.u32 %v29, 4294901760
    %v2402 = vsub.f32 %v29, %v2401
    %v2403 = vand.u32 %v2402, 4294901760
    %v2404 = vsub.f32 %v2402, %v2403
    %v2405 = vand.u32 %v2404, 4294901760
    %2406 = vmatpush1.msra.mxu0 %v2405
    %v2407 = vand.u32 %v92, 4294901760
    %v2408 = vsub.f32 %v92, %v2407
    %v2409 = vand.u32 %v2408, 4294901760
    %v2410 = vsub.f32 %v2408, %v2409
    %v2411 = vand.u32 %v2410, 4294901760
    %2412 = vmatprep.subr.mxu0 %v2411
    %v2413 = vand.u32 %v91, 4294901760
    %v2414 = vsub.f32 %v91, %v2413
    %v2415 = vand.u32 %v2414, 4294901760
    %v2416 = vsub.f32 %v2414, %v2415
    %v2417 = vand.u32 %v2416, 4294901760
    %2418 = vmatpush2.msra.mxu0 %v2417
    %v2419 = vand.u32 %v90, 4294901760
    %v2420 = vsub.f32 %v90, %v2419
    %v2421 = vand.u32 %v2420, 4294901760
    %v2422 = vsub.f32 %v2420, %v2421
    %v2423 = vand.u32 %v2422, 4294901760
    %2424 = vmatprep.subr.mxu0 %v2423
    %v2425 = vand.u32 %v89, 4294901760
    %v2426 = vsub.f32 %v89, %v2425
    %v2427 = vand.u32 %v2426, 4294901760
    %v2428 = vsub.f32 %v2426, %v2427
    %v2429 = vand.u32 %v2428, 4294901760
    %2430 = vmatpush2.msra.mxu0 %v2429
    %v2431 = vand.u32 %v88, 4294901760
    %v2432 = vsub.f32 %v88, %v2431
    %v2433 = vand.u32 %v2432, 4294901760
    %v2434 = vsub.f32 %v2432, %v2433
    %v2435 = vand.u32 %v2434, 4294901760
    %2436 = vmatprep.subr.mxu0 %v2435
    %v2437 = vand.u32 %v87, 4294901760
    %v2438 = vsub.f32 %v87, %v2437
    %v2439 = vand.u32 %v2438, 4294901760
    %v2440 = vsub.f32 %v2438, %v2439
    %v2441 = vand.u32 %v2440, 4294901760
    %2442 = vmatpush2.msra.mxu0 %v2441
    %v2443 = vand.u32 %v86, 4294901760
    %v2444 = vsub.f32 %v86, %v2443
    %v2445 = vand.u32 %v2444, 4294901760
    %v2446 = vsub.f32 %v2444, %v2445
    %v2447 = vand.u32 %v2446, 4294901760
    %2448 = vmatprep.subr.mxu0 %v2447
    %v2449 = vand.u32 %v85, 4294901760
    %v2450 = vsub.f32 %v85, %v2449
    %v2451 = vand.u32 %v2450, 4294901760
    %v2452 = vsub.f32 %v2450, %v2451
    %v2453 = vand.u32 %v2452, 4294901760
    %2454 = vmatpush2.msra.mxu0 %v2453
    %v2455 = vand.u32 %v84, 4294901760
    %v2456 = vsub.f32 %v84, %v2455
    %v2457 = vand.u32 %v2456, 4294901760
    %v2458 = vsub.f32 %v2456, %v2457
    %v2459 = vand.u32 %v2458, 4294901760
    %2460 = vmatprep.subr.mxu0 %v2459
    %v2461 = vand.u32 %v83, 4294901760
    %v2462 = vsub.f32 %v83, %v2461
    %v2463 = vand.u32 %v2462, 4294901760
    %v2464 = vsub.f32 %v2462, %v2463
    %v2465 = vand.u32 %v2464, 4294901760
    %2466 = vmatpush2.msra.mxu0 %v2465
    %v2467 = vand.u32 %v82, 4294901760
    %v2468 = vsub.f32 %v82, %v2467
    %v2469 = vand.u32 %v2468, 4294901760
    %v2470 = vsub.f32 %v2468, %v2469
    %v2471 = vand.u32 %v2470, 4294901760
    %2472 = vmatprep.subr.mxu0 %v2471
    %v2473 = vand.u32 %v81, 4294901760
    %v2474 = vsub.f32 %v81, %v2473
    %v2475 = vand.u32 %v2474, 4294901760
    %v2476 = vsub.f32 %v2474, %v2475
    %v2477 = vand.u32 %v2476, 4294901760
    %2478 = vmatpush2.msra.mxu0 %v2477
    %v2479 = vand.u32 %v80, 4294901760
    %v2480 = vsub.f32 %v80, %v2479
    %v2481 = vand.u32 %v2480, 4294901760
    %v2482 = vsub.f32 %v2480, %v2481
    %v2483 = vand.u32 %v2482, 4294901760
    %2484 = vmatprep.subr.mxu0 %v2483
    %v2485 = vand.u32 %v79, 4294901760
    %v2486 = vsub.f32 %v79, %v2485
    %v2487 = vand.u32 %v2486, 4294901760
    %v2488 = vsub.f32 %v2486, %v2487
    %v2489 = vand.u32 %v2488, 4294901760
    %2490 = vmatpush2.msra.mxu0 %v2489
    %v2491 = vand.u32 %v78, 4294901760
    %v2492 = vsub.f32 %v78, %v2491
    %v2493 = vand.u32 %v2492, 4294901760
    %v2494 = vsub.f32 %v2492, %v2493
    %v2495 = vand.u32 %v2494, 4294901760
    %2496 = vmatprep.subr.mxu0 %v2495
    %v2497 = vand.u32 %v77, 4294901760
    %v2498 = vsub.f32 %v77, %v2497
    %v2499 = vand.u32 %v2498, 4294901760
    %v2500 = vsub.f32 %v2498, %v2499
    %v2501 = vand.u32 %v2500, 4294901760
    %2502 = vmatpush2.msra.mxu0 %v2501
    %v2503 = vand.u32 %v76, 4294901760
    %v2504 = vsub.f32 %v76, %v2503
    %v2505 = vand.u32 %v2504, 4294901760
    %v2506 = vsub.f32 %v2504, %v2505
    %v2507 = vand.u32 %v2506, 4294901760
    %2508 = vmatprep.subr.mxu0 %v2507
    %v2509 = vand.u32 %v75, 4294901760
    %v2510 = vsub.f32 %v75, %v2509
    %v2511 = vand.u32 %v2510, 4294901760
    %v2512 = vsub.f32 %v2510, %v2511
    %v2513 = vand.u32 %v2512, 4294901760
    %2514 = vmatpush2.msra.mxu0 %v2513
    %v2515 = vand.u32 %v74, 4294901760
    %v2516 = vsub.f32 %v74, %v2515
    %v2517 = vand.u32 %v2516, 4294901760
    %v2518 = vsub.f32 %v2516, %v2517
    %v2519 = vand.u32 %v2518, 4294901760
    %2520 = vmatprep.subr.mxu0 %v2519
    %v2521 = vand.u32 %v73, 4294901760
    %v2522 = vsub.f32 %v73, %v2521
    %v2523 = vand.u32 %v2522, 4294901760
    %v2524 = vsub.f32 %v2522, %v2523
    %v2525 = vand.u32 %v2524, 4294901760
    %2526 = vmatpush2.msra.mxu0 %v2525
    %v2527 = vand.u32 %v72, 4294901760
    %v2528 = vsub.f32 %v72, %v2527
    %v2529 = vand.u32 %v2528, 4294901760
    %v2530 = vsub.f32 %v2528, %v2529
    %v2531 = vand.u32 %v2530, 4294901760
    %2532 = vmatprep.subr.mxu0 %v2531
    %v2533 = vand.u32 %v71, 4294901760
    %v2534 = vsub.f32 %v71, %v2533
    %v2535 = vand.u32 %v2534, 4294901760
    %v2536 = vsub.f32 %v2534, %v2535
    %v2537 = vand.u32 %v2536, 4294901760
    %2538 = vmatpush2.msra.mxu0 %v2537
    %v2539 = vand.u32 %v70, 4294901760
    %v2540 = vsub.f32 %v70, %v2539
    %v2541 = vand.u32 %v2540, 4294901760
    %v2542 = vsub.f32 %v2540, %v2541
    %v2543 = vand.u32 %v2542, 4294901760
    %2544 = vmatprep.subr.mxu0 %v2543
    %v2545 = vand.u32 %v69, 4294901760
    %v2546 = vsub.f32 %v69, %v2545
    %v2547 = vand.u32 %v2546, 4294901760
    %v2548 = vsub.f32 %v2546, %v2547
    %v2549 = vand.u32 %v2548, 4294901760
    %2550 = vmatpush2.msra.mxu0 %v2549
    %v2551 = vand.u32 %v68, 4294901760
    %v2552 = vsub.f32 %v68, %v2551
    %v2553 = vand.u32 %v2552, 4294901760
    %v2554 = vsub.f32 %v2552, %v2553
    %v2555 = vand.u32 %v2554, 4294901760
    %2556 = vmatprep.subr.mxu0 %v2555
    %v2557 = vand.u32 %v67, 4294901760
    %v2558 = vsub.f32 %v67, %v2557
    %v2559 = vand.u32 %v2558, 4294901760
    %v2560 = vsub.f32 %v2558, %v2559
    %v2561 = vand.u32 %v2560, 4294901760
    %2562 = vmatpush2.msra.mxu0 %v2561
    %v2563 = vand.u32 %v66, 4294901760
    %v2564 = vsub.f32 %v66, %v2563
    %v2565 = vand.u32 %v2564, 4294901760
    %v2566 = vsub.f32 %v2564, %v2565
    %v2567 = vand.u32 %v2566, 4294901760
    %2568 = vmatprep.subr.mxu0 %v2567
    %v2569 = vand.u32 %v65, 4294901760
    %v2570 = vsub.f32 %v65, %v2569
    %v2571 = vand.u32 %v2570, 4294901760
    %v2572 = vsub.f32 %v2570, %v2571
    %v2573 = vand.u32 %v2572, 4294901760
    %2574 = vmatpush2.msra.mxu0 %v2573
    %v2575 = vand.u32 %v64, 4294901760
    %v2576 = vsub.f32 %v64, %v2575
    %v2577 = vand.u32 %v2576, 4294901760
    %v2578 = vsub.f32 %v2576, %v2577
    %v2579 = vand.u32 %v2578, 4294901760
    %2580 = vmatprep.subr.mxu0 %v2579
    %v2581 = vand.u32 %v63, 4294901760
    %v2582 = vsub.f32 %v63, %v2581
    %v2583 = vand.u32 %v2582, 4294901760
    %v2584 = vsub.f32 %v2582, %v2583
    %v2585 = vand.u32 %v2584, 4294901760
    %2586 = vmatpush2.msra.mxu0 %v2585
    %v2587 = vand.u32 %v62, 4294901760
    %v2588 = vsub.f32 %v62, %v2587
    %v2589 = vand.u32 %v2588, 4294901760
    %v2590 = vsub.f32 %v2588, %v2589
    %v2591 = vand.u32 %v2590, 4294901760
    %2592 = vmatprep.subr.mxu0 %v2591
    %v2593 = vand.u32 %v61, 4294901760
    %v2594 = vsub.f32 %v61, %v2593
    %v2595 = vand.u32 %v2594, 4294901760
    %v2596 = vsub.f32 %v2594, %v2595
    %v2597 = vand.u32 %v2596, 4294901760
    %2598 = vmatpush2.msra.mxu0 %v2597
    %v2599 = vand.u32 %v2061, 4294901760
    %2600 = vmatprep.mubr.f32.mxu0 %v2599
    %v2601 = vand.u32 %v2060, 4294901760
    %2602 = vmatmul.mubr.f32.gmra.mxu0 %v2601
    %v2603 = vpop.f32.mrf.mxu0
    %v2604 = vadd.f32 %v2211, %v2603
    %v2605 = vpop.f32.mrf.mxu0
    %v2606 = vadd.f32 %v2213, %v2605
    %2607 = vdwg.mxu0
    %v2608 = vand.u32 %v60, 4294901760
    %v2609 = vsub.f32 %v60, %v2608
    %2610 = vmatprep.subr.mxu0 %v2609
    %v2611 = vand.u32 %v59, 4294901760
    %v2612 = vsub.f32 %v59, %v2611
    %2613 = vmatpush1.msra.mxu0 %v2612
    %v2614 = vand.u32 %v58, 4294901760
    %v2615 = vsub.f32 %v58, %v2614
    %2616 = vmatprep.subr.mxu0 %v2615
    %v2617 = vand.u32 %v57, 4294901760
    %v2618 = vsub.f32 %v57, %v2617
    %2619 = vmatpush1.msra.mxu0 %v2618
    %v2620 = vand.u32 %v56, 4294901760
    %v2621 = vsub.f32 %v56, %v2620
    %2622 = vmatprep.subr.mxu0 %v2621
    %v2623 = vand.u32 %v55, 4294901760
    %v2624 = vsub.f32 %v55, %v2623
    %2625 = vmatpush1.msra.mxu0 %v2624
    %v2626 = vand.u32 %v54, 4294901760
    %v2627 = vsub.f32 %v54, %v2626
    %2628 = vmatprep.subr.mxu0 %v2627
    %v2629 = vand.u32 %v53, 4294901760
    %v2630 = vsub.f32 %v53, %v2629
    %2631 = vmatpush1.msra.mxu0 %v2630
    %v2632 = vand.u32 %v52, 4294901760
    %v2633 = vsub.f32 %v52, %v2632
    %2634 = vmatprep.subr.mxu0 %v2633
    %v2635 = vand.u32 %v51, 4294901760
    %v2636 = vsub.f32 %v51, %v2635
    %2637 = vmatpush1.msra.mxu0 %v2636
    %v2638 = vand.u32 %v50, 4294901760
    %v2639 = vsub.f32 %v50, %v2638
    %2640 = vmatprep.subr.mxu0 %v2639
    %v2641 = vand.u32 %v49, 4294901760
    %v2642 = vsub.f32 %v49, %v2641
    %2643 = vmatpush1.msra.mxu0 %v2642
    %v2644 = vand.u32 %v48, 4294901760
    %v2645 = vsub.f32 %v48, %v2644
    %2646 = vmatprep.subr.mxu0 %v2645
    %v2647 = vand.u32 %v47, 4294901760
    %v2648 = vsub.f32 %v47, %v2647
    %2649 = vmatpush1.msra.mxu0 %v2648
    %v2650 = vand.u32 %v46, 4294901760
    %v2651 = vsub.f32 %v46, %v2650
    %2652 = vmatprep.subr.mxu0 %v2651
    %v2653 = vand.u32 %v45, 4294901760
    %v2654 = vsub.f32 %v45, %v2653
    %2655 = vmatpush1.msra.mxu0 %v2654
    %v2656 = vand.u32 %v44, 4294901760
    %v2657 = vsub.f32 %v44, %v2656
    %2658 = vmatprep.subr.mxu0 %v2657
    %v2659 = vand.u32 %v43, 4294901760
    %v2660 = vsub.f32 %v43, %v2659
    %2661 = vmatpush1.msra.mxu0 %v2660
    %v2662 = vand.u32 %v42, 4294901760
    %v2663 = vsub.f32 %v42, %v2662
    %2664 = vmatprep.subr.mxu0 %v2663
    %v2665 = vand.u32 %v41, 4294901760
    %v2666 = vsub.f32 %v41, %v2665
    %2667 = vmatpush1.msra.mxu0 %v2666
    %v2668 = vand.u32 %v40, 4294901760
    %v2669 = vsub.f32 %v40, %v2668
    %2670 = vmatprep.subr.mxu0 %v2669
    %v2671 = vand.u32 %v39, 4294901760
    %v2672 = vsub.f32 %v39, %v2671
    %2673 = vmatpush1.msra.mxu0 %v2672
    %v2674 = vand.u32 %v38, 4294901760
    %v2675 = vsub.f32 %v38, %v2674
    %2676 = vmatprep.subr.mxu0 %v2675
    %v2677 = vand.u32 %v37, 4294901760
    %v2678 = vsub.f32 %v37, %v2677
    %2679 = vmatpush1.msra.mxu0 %v2678
    %v2680 = vand.u32 %v36, 4294901760
    %v2681 = vsub.f32 %v36, %v2680
    %2682 = vmatprep.subr.mxu0 %v2681
    %v2683 = vand.u32 %v35, 4294901760
    %v2684 = vsub.f32 %v35, %v2683
    %2685 = vmatpush1.msra.mxu0 %v2684
    %v2686 = vand.u32 %v34, 4294901760
    %v2687 = vsub.f32 %v34, %v2686
    %2688 = vmatprep.subr.mxu0 %v2687
    %v2689 = vand.u32 %v33, 4294901760
    %v2690 = vsub.f32 %v33, %v2689
    %2691 = vmatpush1.msra.mxu0 %v2690
    %v2692 = vand.u32 %v32, 4294901760
    %v2693 = vsub.f32 %v32, %v2692
    %2694 = vmatprep.subr.mxu0 %v2693
    %v2695 = vand.u32 %v31, 4294901760
    %v2696 = vsub.f32 %v31, %v2695
    %2697 = vmatpush1.msra.mxu0 %v2696
    %v2698 = vand.u32 %v30, 4294901760
    %v2699 = vsub.f32 %v30, %v2698
    %2700 = vmatprep.subr.mxu0 %v2699
    %v2701 = vand.u32 %v29, 4294901760
    %v2702 = vsub.f32 %v29, %v2701
    %2703 = vmatpush1.msra.mxu0 %v2702
    %v2704 = vand.u32 %v92, 4294901760
    %v2705 = vsub.f32 %v92, %v2704
    %2706 = vmatprep.subr.mxu0 %v2705
    %v2707 = vand.u32 %v91, 4294901760
    %v2708 = vsub.f32 %v91, %v2707
    %2709 = vmatpush2.msra.mxu0 %v2708
    %v2710 = vand.u32 %v90, 4294901760
    %v2711 = vsub.f32 %v90, %v2710
    %2712 = vmatprep.subr.mxu0 %v2711
    %v2713 = vand.u32 %v89, 4294901760
    %v2714 = vsub.f32 %v89, %v2713
    %2715 = vmatpush2.msra.mxu0 %v2714
    %v2716 = vand.u32 %v88, 4294901760
    %v2717 = vsub.f32 %v88, %v2716
    %2718 = vmatprep.subr.mxu0 %v2717
    %v2719 = vand.u32 %v87, 4294901760
    %v2720 = vsub.f32 %v87, %v2719
    %2721 = vmatpush2.msra.mxu0 %v2720
    %v2722 = vand.u32 %v86, 4294901760
    %v2723 = vsub.f32 %v86, %v2722
    %2724 = vmatprep.subr.mxu0 %v2723
    %v2725 = vand.u32 %v85, 4294901760
    %v2726 = vsub.f32 %v85, %v2725
    %2727 = vmatpush2.msra.mxu0 %v2726
    %v2728 = vand.u32 %v84, 4294901760
    %v2729 = vsub.f32 %v84, %v2728
    %2730 = vmatprep.subr.mxu0 %v2729
    %v2731 = vand.u32 %v83, 4294901760
    %v2732 = vsub.f32 %v83, %v2731
    %2733 = vmatpush2.msra.mxu0 %v2732
    %v2734 = vand.u32 %v82, 4294901760
    %v2735 = vsub.f32 %v82, %v2734
    %2736 = vmatprep.subr.mxu0 %v2735
    %v2737 = vand.u32 %v81, 4294901760
    %v2738 = vsub.f32 %v81, %v2737
    %2739 = vmatpush2.msra.mxu0 %v2738
    %v2740 = vand.u32 %v80, 4294901760
    %v2741 = vsub.f32 %v80, %v2740
    %2742 = vmatprep.subr.mxu0 %v2741
    %v2743 = vand.u32 %v79, 4294901760
    %v2744 = vsub.f32 %v79, %v2743
    %2745 = vmatpush2.msra.mxu0 %v2744
    %v2746 = vand.u32 %v78, 4294901760
    %v2747 = vsub.f32 %v78, %v2746
    %2748 = vmatprep.subr.mxu0 %v2747
    %v2749 = vand.u32 %v77, 4294901760
    %v2750 = vsub.f32 %v77, %v2749
    %2751 = vmatpush2.msra.mxu0 %v2750
    %v2752 = vand.u32 %v76, 4294901760
    %v2753 = vsub.f32 %v76, %v2752
    %2754 = vmatprep.subr.mxu0 %v2753
    %v2755 = vand.u32 %v75, 4294901760
    %v2756 = vsub.f32 %v75, %v2755
    %2757 = vmatpush2.msra.mxu0 %v2756
    %v2758 = vand.u32 %v74, 4294901760
    %v2759 = vsub.f32 %v74, %v2758
    %2760 = vmatprep.subr.mxu0 %v2759
    %v2761 = vand.u32 %v73, 4294901760
    %v2762 = vsub.f32 %v73, %v2761
    %2763 = vmatpush2.msra.mxu0 %v2762
    %v2764 = vand.u32 %v72, 4294901760
    %v2765 = vsub.f32 %v72, %v2764
    %2766 = vmatprep.subr.mxu0 %v2765
    %v2767 = vand.u32 %v71, 4294901760
    %v2768 = vsub.f32 %v71, %v2767
    %2769 = vmatpush2.msra.mxu0 %v2768
    %v2770 = vand.u32 %v70, 4294901760
    %v2771 = vsub.f32 %v70, %v2770
    %2772 = vmatprep.subr.mxu0 %v2771
    %v2773 = vand.u32 %v69, 4294901760
    %v2774 = vsub.f32 %v69, %v2773
    %2775 = vmatpush2.msra.mxu0 %v2774
    %v2776 = vand.u32 %v68, 4294901760
    %v2777 = vsub.f32 %v68, %v2776
    %2778 = vmatprep.subr.mxu0 %v2777
    %v2779 = vand.u32 %v67, 4294901760
    %v2780 = vsub.f32 %v67, %v2779
    %2781 = vmatpush2.msra.mxu0 %v2780
    %v2782 = vand.u32 %v66, 4294901760
    %v2783 = vsub.f32 %v66, %v2782
    %2784 = vmatprep.subr.mxu0 %v2783
    %v2785 = vand.u32 %v65, 4294901760
    %v2786 = vsub.f32 %v65, %v2785
    %2787 = vmatpush2.msra.mxu0 %v2786
    %v2788 = vand.u32 %v64, 4294901760
    %v2789 = vsub.f32 %v64, %v2788
    %2790 = vmatprep.subr.mxu0 %v2789
    %v2791 = vand.u32 %v63, 4294901760
    %v2792 = vsub.f32 %v63, %v2791
    %2793 = vmatpush2.msra.mxu0 %v2792
    %v2794 = vand.u32 %v62, 4294901760
    %v2795 = vsub.f32 %v62, %v2794
    %2796 = vmatprep.subr.mxu0 %v2795
    %v2797 = vand.u32 %v61, 4294901760
    %v2798 = vsub.f32 %v61, %v2797
    %2799 = vmatpush2.msra.mxu0 %v2798
    %v2800 = vand.u32 %v2061, 4294901760
    %v2801 = vsub.f32 %v2061, %v2800
    %2802 = vmatprep.mubr.f32.mxu0 %v2801
    %v2803 = vand.u32 %v2060, 4294901760
    %v2804 = vsub.f32 %v2060, %v2803
    %2805 = vmatmul.mubr.f32.gmra.mxu0 %v2804
    %v2806 = vpop.f32.mrf.mxu0
    %v2807 = vadd.f32 %v2604, %v2806
    %v2808 = vpop.f32.mrf.mxu0
    %v2809 = vadd.f32 %v2606, %v2808
    %2810 = vdwg.mxu0
    %v2811 = vand.u32 %v60, 4294901760
    %2812 = vmatprep.subr.mxu0 %v2811
    %v2813 = vand.u32 %v59, 4294901760
    %2814 = vmatpush1.msra.mxu0 %v2813
    %v2815 = vand.u32 %v58, 4294901760
    %2816 = vmatprep.subr.mxu0 %v2815
    %v2817 = vand.u32 %v57, 4294901760
    %2818 = vmatpush1.msra.mxu0 %v2817
    %v2819 = vand.u32 %v56, 4294901760
    %2820 = vmatprep.subr.mxu0 %v2819
    %v2821 = vand.u32 %v55, 4294901760
    %2822 = vmatpush1.msra.mxu0 %v2821
    %v2823 = vand.u32 %v54, 4294901760
    %2824 = vmatprep.subr.mxu0 %v2823
    %v2825 = vand.u32 %v53, 4294901760
    %2826 = vmatpush1.msra.mxu0 %v2825
    %v2827 = vand.u32 %v52, 4294901760
    %2828 = vmatprep.subr.mxu0 %v2827
    %v2829 = vand.u32 %v51, 4294901760
    %2830 = vmatpush1.msra.mxu0 %v2829
    %v2831 = vand.u32 %v50, 4294901760
    %2832 = vmatprep.subr.mxu0 %v2831
    %v2833 = vand.u32 %v49, 4294901760
    %2834 = vmatpush1.msra.mxu0 %v2833
    %v2835 = vand.u32 %v48, 4294901760
    %2836 = vmatprep.subr.mxu0 %v2835
    %v2837 = vand.u32 %v47, 4294901760
    %2838 = vmatpush1.msra.mxu0 %v2837
    %v2839 = vand.u32 %v46, 4294901760
    %2840 = vmatprep.subr.mxu0 %v2839
    %v2841 = vand.u32 %v45, 4294901760
    %2842 = vmatpush1.msra.mxu0 %v2841
    %v2843 = vand.u32 %v44, 4294901760
    %2844 = vmatprep.subr.mxu0 %v2843
    %v2845 = vand.u32 %v43, 4294901760
    %2846 = vmatpush1.msra.mxu0 %v2845
    %v2847 = vand.u32 %v42, 4294901760
    %2848 = vmatprep.subr.mxu0 %v2847
    %v2849 = vand.u32 %v41, 4294901760
    %2850 = vmatpush1.msra.mxu0 %v2849
    %v2851 = vand.u32 %v40, 4294901760
    %2852 = vmatprep.subr.mxu0 %v2851
    %v2853 = vand.u32 %v39, 4294901760
    %2854 = vmatpush1.msra.mxu0 %v2853
    %v2855 = vand.u32 %v38, 4294901760
    %2856 = vmatprep.subr.mxu0 %v2855
    %v2857 = vand.u32 %v37, 4294901760
    %2858 = vmatpush1.msra.mxu0 %v2857
    %v2859 = vand.u32 %v36, 4294901760
    %2860 = vmatprep.subr.mxu0 %v2859
    %v2861 = vand.u32 %v35, 4294901760
    %2862 = vmatpush1.msra.mxu0 %v2861
    %v2863 = vand.u32 %v34, 4294901760
    %2864 = vmatprep.subr.mxu0 %v2863
    %v2865 = vand.u32 %v33, 4294901760
    %2866 = vmatpush1.msra.mxu0 %v2865
    %v2867 = vand.u32 %v32, 4294901760
    %2868 = vmatprep.subr.mxu0 %v2867
    %v2869 = vand.u32 %v31, 4294901760
    %2870 = vmatpush1.msra.mxu0 %v2869
    %v2871 = vand.u32 %v30, 4294901760
    %2872 = vmatprep.subr.mxu0 %v2871
    %v2873 = vand.u32 %v29, 4294901760
    %2874 = vmatpush1.msra.mxu0 %v2873
    %v2875 = vand.u32 %v92, 4294901760
    %2876 = vmatprep.subr.mxu0 %v2875
    %v2877 = vand.u32 %v91, 4294901760
    %2878 = vmatpush2.msra.mxu0 %v2877
    %v2879 = vand.u32 %v90, 4294901760
    %2880 = vmatprep.subr.mxu0 %v2879
    %v2881 = vand.u32 %v89, 4294901760
    %2882 = vmatpush2.msra.mxu0 %v2881
    %v2883 = vand.u32 %v88, 4294901760
    %2884 = vmatprep.subr.mxu0 %v2883
    %v2885 = vand.u32 %v87, 4294901760
    %2886 = vmatpush2.msra.mxu0 %v2885
    %v2887 = vand.u32 %v86, 4294901760
    %2888 = vmatprep.subr.mxu0 %v2887
    %v2889 = vand.u32 %v85, 4294901760
    %2890 = vmatpush2.msra.mxu0 %v2889
    %v2891 = vand.u32 %v84, 4294901760
    %2892 = vmatprep.subr.mxu0 %v2891
    %v2893 = vand.u32 %v83, 4294901760
    %2894 = vmatpush2.msra.mxu0 %v2893
    %v2895 = vand.u32 %v82, 4294901760
    %2896 = vmatprep.subr.mxu0 %v2895
    %v2897 = vand.u32 %v81, 4294901760
    %2898 = vmatpush2.msra.mxu0 %v2897
    %v2899 = vand.u32 %v80, 4294901760
    %2900 = vmatprep.subr.mxu0 %v2899
    %v2901 = vand.u32 %v79, 4294901760
    %2902 = vmatpush2.msra.mxu0 %v2901
    %v2903 = vand.u32 %v78, 4294901760
    %2904 = vmatprep.subr.mxu0 %v2903
    %v2905 = vand.u32 %v77, 4294901760
    %2906 = vmatpush2.msra.mxu0 %v2905
    %v2907 = vand.u32 %v76, 4294901760
    %2908 = vmatprep.subr.mxu0 %v2907
    %v2909 = vand.u32 %v75, 4294901760
    %2910 = vmatpush2.msra.mxu0 %v2909
    %v2911 = vand.u32 %v74, 4294901760
    %2912 = vmatprep.subr.mxu0 %v2911
    %v2913 = vand.u32 %v73, 4294901760
    %2914 = vmatpush2.msra.mxu0 %v2913
    %v2915 = vand.u32 %v72, 4294901760
    %2916 = vmatprep.subr.mxu0 %v2915
    %v2917 = vand.u32 %v71, 4294901760
    %2918 = vmatpush2.msra.mxu0 %v2917
    %v2919 = vand.u32 %v70, 4294901760
    %2920 = vmatprep.subr.mxu0 %v2919
    %v2921 = vand.u32 %v69, 4294901760
    %2922 = vmatpush2.msra.mxu0 %v2921
    %v2923 = vand.u32 %v68, 4294901760
    %2924 = vmatprep.subr.mxu0 %v2923
    %v2925 = vand.u32 %v67, 4294901760
    %2926 = vmatpush2.msra.mxu0 %v2925
    %v2927 = vand.u32 %v66, 4294901760
    %2928 = vmatprep.subr.mxu0 %v2927
    %v2929 = vand.u32 %v65, 4294901760
    %2930 = vmatpush2.msra.mxu0 %v2929
    %v2931 = vand.u32 %v64, 4294901760
    %2932 = vmatprep.subr.mxu0 %v2931
    %v2933 = vand.u32 %v63, 4294901760
    %2934 = vmatpush2.msra.mxu0 %v2933
    %v2935 = vand.u32 %v62, 4294901760
    %2936 = vmatprep.subr.mxu0 %v2935
    %v2937 = vand.u32 %v61, 4294901760
    %2938 = vmatpush2.msra.mxu0 %v2937
    %v2939 = vand.u32 %v2061, 4294901760
    %v2940 = vsub.f32 %v2061, %v2939
    %v2941 = vand.u32 %v2940, 4294901760
    %2942 = vmatprep.mubr.f32.mxu0 %v2941
    %v2943 = vand.u32 %v2060, 4294901760
    %v2944 = vsub.f32 %v2060, %v2943
    %v2945 = vand.u32 %v2944, 4294901760
    %2946 = vmatmul.mubr.f32.gmra.mxu0 %v2945
    %v2947 = vpop.f32.mrf.mxu0
    %v2948 = vadd.f32 %v2807, %v2947
    %v2949 = vpop.f32.mrf.mxu0
    %v2950 = vadd.f32 %v2809, %v2949
    %2951 = vdwg.mxu0
    %v2952 = vand.u32 %v60, 4294901760
    %v2953 = vsub.f32 %v60, %v2952
    %v2954 = vand.u32 %v2953, 4294901760
    %2955 = vmatprep.subr.mxu0 %v2954
    %v2956 = vand.u32 %v59, 4294901760
    %v2957 = vsub.f32 %v59, %v2956
    %v2958 = vand.u32 %v2957, 4294901760
    %2959 = vmatpush1.msra.mxu0 %v2958
    %v2960 = vand.u32 %v58, 4294901760
    %v2961 = vsub.f32 %v58, %v2960
    %v2962 = vand.u32 %v2961, 4294901760
    %2963 = vmatprep.subr.mxu0 %v2962
    %v2964 = vand.u32 %v57, 4294901760
    %v2965 = vsub.f32 %v57, %v2964
    %v2966 = vand.u32 %v2965, 4294901760
    %2967 = vmatpush1.msra.mxu0 %v2966
    %v2968 = vand.u32 %v56, 4294901760
    %v2969 = vsub.f32 %v56, %v2968
    %v2970 = vand.u32 %v2969, 4294901760
    %2971 = vmatprep.subr.mxu0 %v2970
    %v2972 = vand.u32 %v55, 4294901760
    %v2973 = vsub.f32 %v55, %v2972
    %v2974 = vand.u32 %v2973, 4294901760
    %2975 = vmatpush1.msra.mxu0 %v2974
    %v2976 = vand.u32 %v54, 4294901760
    %v2977 = vsub.f32 %v54, %v2976
    %v2978 = vand.u32 %v2977, 4294901760
    %2979 = vmatprep.subr.mxu0 %v2978
    %v2980 = vand.u32 %v53, 4294901760
    %v2981 = vsub.f32 %v53, %v2980
    %v2982 = vand.u32 %v2981, 4294901760
    %2983 = vmatpush1.msra.mxu0 %v2982
    %v2984 = vand.u32 %v52, 4294901760
    %v2985 = vsub.f32 %v52, %v2984
    %v2986 = vand.u32 %v2985, 4294901760
    %2987 = vmatprep.subr.mxu0 %v2986
    %v2988 = vand.u32 %v51, 4294901760
    %v2989 = vsub.f32 %v51, %v2988
    %v2990 = vand.u32 %v2989, 4294901760
    %2991 = vmatpush1.msra.mxu0 %v2990
    %v2992 = vand.u32 %v50, 4294901760
    %v2993 = vsub.f32 %v50, %v2992
    %v2994 = vand.u32 %v2993, 4294901760
    %2995 = vmatprep.subr.mxu0 %v2994
    %v2996 = vand.u32 %v49, 4294901760
    %v2997 = vsub.f32 %v49, %v2996
    %v2998 = vand.u32 %v2997, 4294901760
    %2999 = vmatpush1.msra.mxu0 %v2998
    %v3000 = vand.u32 %v48, 4294901760
    %v3001 = vsub.f32 %v48, %v3000
    %v3002 = vand.u32 %v3001, 4294901760
    %3003 = vmatprep.subr.mxu0 %v3002
    %v3004 = vand.u32 %v47, 4294901760
    %v3005 = vsub.f32 %v47, %v3004
    %v3006 = vand.u32 %v3005, 4294901760
    %3007 = vmatpush1.msra.mxu0 %v3006
    %v3008 = vand.u32 %v46, 4294901760
    %v3009 = vsub.f32 %v46, %v3008
    %v3010 = vand.u32 %v3009, 4294901760
    %3011 = vmatprep.subr.mxu0 %v3010
    %v3012 = vand.u32 %v45, 4294901760
    %v3013 = vsub.f32 %v45, %v3012
    %v3014 = vand.u32 %v3013, 4294901760
    %3015 = vmatpush1.msra.mxu0 %v3014
    %v3016 = vand.u32 %v44, 4294901760
    %v3017 = vsub.f32 %v44, %v3016
    %v3018 = vand.u32 %v3017, 4294901760
    %3019 = vmatprep.subr.mxu0 %v3018
    %v3020 = vand.u32 %v43, 4294901760
    %v3021 = vsub.f32 %v43, %v3020
    %v3022 = vand.u32 %v3021, 4294901760
    %3023 = vmatpush1.msra.mxu0 %v3022
    %v3024 = vand.u32 %v42, 4294901760
    %v3025 = vsub.f32 %v42, %v3024
    %v3026 = vand.u32 %v3025, 4294901760
    %3027 = vmatprep.subr.mxu0 %v3026
    %v3028 = vand.u32 %v41, 4294901760
    %v3029 = vsub.f32 %v41, %v3028
    %v3030 = vand.u32 %v3029, 4294901760
    %3031 = vmatpush1.msra.mxu0 %v3030
    %v3032 = vand.u32 %v40, 4294901760
    %v3033 = vsub.f32 %v40, %v3032
    %v3034 = vand.u32 %v3033, 4294901760
    %3035 = vmatprep.subr.mxu0 %v3034
    %v3036 = vand.u32 %v39, 4294901760
    %v3037 = vsub.f32 %v39, %v3036
    %v3038 = vand.u32 %v3037, 4294901760
    %3039 = vmatpush1.msra.mxu0 %v3038
    %v3040 = vand.u32 %v38, 4294901760
    %v3041 = vsub.f32 %v38, %v3040
    %v3042 = vand.u32 %v3041, 4294901760
    %3043 = vmatprep.subr.mxu0 %v3042
    %v3044 = vand.u32 %v37, 4294901760
    %v3045 = vsub.f32 %v37, %v3044
    %v3046 = vand.u32 %v3045, 4294901760
    %3047 = vmatpush1.msra.mxu0 %v3046
    %v3048 = vand.u32 %v36, 4294901760
    %v3049 = vsub.f32 %v36, %v3048
    %v3050 = vand.u32 %v3049, 4294901760
    %3051 = vmatprep.subr.mxu0 %v3050
    %v3052 = vand.u32 %v35, 4294901760
    %v3053 = vsub.f32 %v35, %v3052
    %v3054 = vand.u32 %v3053, 4294901760
    %3055 = vmatpush1.msra.mxu0 %v3054
    %v3056 = vand.u32 %v34, 4294901760
    %v3057 = vsub.f32 %v34, %v3056
    %v3058 = vand.u32 %v3057, 4294901760
    %3059 = vmatprep.subr.mxu0 %v3058
    %v3060 = vand.u32 %v33, 4294901760
    %v3061 = vsub.f32 %v33, %v3060
    %v3062 = vand.u32 %v3061, 4294901760
    %3063 = vmatpush1.msra.mxu0 %v3062
    %v3064 = vand.u32 %v32, 4294901760
    %v3065 = vsub.f32 %v32, %v3064
    %v3066 = vand.u32 %v3065, 4294901760
    %3067 = vmatprep.subr.mxu0 %v3066
    %v3068 = vand.u32 %v31, 4294901760
    %v3069 = vsub.f32 %v31, %v3068
    %v3070 = vand.u32 %v3069, 4294901760
    %3071 = vmatpush1.msra.mxu0 %v3070
    %v3072 = vand.u32 %v30, 4294901760
    %v3073 = vsub.f32 %v30, %v3072
    %v3074 = vand.u32 %v3073, 4294901760
    %3075 = vmatprep.subr.mxu0 %v3074
    %v3076 = vand.u32 %v29, 4294901760
    %v3077 = vsub.f32 %v29, %v3076
    %v3078 = vand.u32 %v3077, 4294901760
    %3079 = vmatpush1.msra.mxu0 %v3078
    %v3080 = vand.u32 %v92, 4294901760
    %v3081 = vsub.f32 %v92, %v3080
    %v3082 = vand.u32 %v3081, 4294901760
    %3083 = vmatprep.subr.mxu0 %v3082
    %v3084 = vand.u32 %v91, 4294901760
    %v3085 = vsub.f32 %v91, %v3084
    %v3086 = vand.u32 %v3085, 4294901760
    %3087 = vmatpush2.msra.mxu0 %v3086
    %v3088 = vand.u32 %v90, 4294901760
    %v3089 = vsub.f32 %v90, %v3088
    %v3090 = vand.u32 %v3089, 4294901760
    %3091 = vmatprep.subr.mxu0 %v3090
    %v3092 = vand.u32 %v89, 4294901760
    %v3093 = vsub.f32 %v89, %v3092
    %v3094 = vand.u32 %v3093, 4294901760
    %3095 = vmatpush2.msra.mxu0 %v3094
    %v3096 = vand.u32 %v88, 4294901760
    %v3097 = vsub.f32 %v88, %v3096
    %v3098 = vand.u32 %v3097, 4294901760
    %3099 = vmatprep.subr.mxu0 %v3098
    %v3100 = vand.u32 %v87, 4294901760
    %v3101 = vsub.f32 %v87, %v3100
    %v3102 = vand.u32 %v3101, 4294901760
    %3103 = vmatpush2.msra.mxu0 %v3102
    %v3104 = vand.u32 %v86, 4294901760
    %v3105 = vsub.f32 %v86, %v3104
    %v3106 = vand.u32 %v3105, 4294901760
    %3107 = vmatprep.subr.mxu0 %v3106
    %v3108 = vand.u32 %v85, 4294901760
    %v3109 = vsub.f32 %v85, %v3108
    %v3110 = vand.u32 %v3109, 4294901760
    %3111 = vmatpush2.msra.mxu0 %v3110
    %v3112 = vand.u32 %v84, 4294901760
    %v3113 = vsub.f32 %v84, %v3112
    %v3114 = vand.u32 %v3113, 4294901760
    %3115 = vmatprep.subr.mxu0 %v3114
    %v3116 = vand.u32 %v83, 4294901760
    %v3117 = vsub.f32 %v83, %v3116
    %v3118 = vand.u32 %v3117, 4294901760
    %3119 = vmatpush2.msra.mxu0 %v3118
    %v3120 = vand.u32 %v82, 4294901760
    %v3121 = vsub.f32 %v82, %v3120
    %v3122 = vand.u32 %v3121, 4294901760
    %3123 = vmatprep.subr.mxu0 %v3122
    %v3124 = vand.u32 %v81, 4294901760
    %v3125 = vsub.f32 %v81, %v3124
    %v3126 = vand.u32 %v3125, 4294901760
    %3127 = vmatpush2.msra.mxu0 %v3126
    %v3128 = vand.u32 %v80, 4294901760
    %v3129 = vsub.f32 %v80, %v3128
    %v3130 = vand.u32 %v3129, 4294901760
    %3131 = vmatprep.subr.mxu0 %v3130
    %v3132 = vand.u32 %v79, 4294901760
    %v3133 = vsub.f32 %v79, %v3132
    %v3134 = vand.u32 %v3133, 4294901760
    %3135 = vmatpush2.msra.mxu0 %v3134
    %v3136 = vand.u32 %v78, 4294901760
    %v3137 = vsub.f32 %v78, %v3136
    %v3138 = vand.u32 %v3137, 4294901760
    %3139 = vmatprep.subr.mxu0 %v3138
    %v3140 = vand.u32 %v77, 4294901760
    %v3141 = vsub.f32 %v77, %v3140
    %v3142 = vand.u32 %v3141, 4294901760
    %3143 = vmatpush2.msra.mxu0 %v3142
    %v3144 = vand.u32 %v76, 4294901760
    %v3145 = vsub.f32 %v76, %v3144
    %v3146 = vand.u32 %v3145, 4294901760
    %3147 = vmatprep.subr.mxu0 %v3146
    %v3148 = vand.u32 %v75, 4294901760
    %v3149 = vsub.f32 %v75, %v3148
    %v3150 = vand.u32 %v3149, 4294901760
    %3151 = vmatpush2.msra.mxu0 %v3150
    %v3152 = vand.u32 %v74, 4294901760
    %v3153 = vsub.f32 %v74, %v3152
    %v3154 = vand.u32 %v3153, 4294901760
    %3155 = vmatprep.subr.mxu0 %v3154
    %v3156 = vand.u32 %v73, 4294901760
    %v3157 = vsub.f32 %v73, %v3156
    %v3158 = vand.u32 %v3157, 4294901760
    %3159 = vmatpush2.msra.mxu0 %v3158
    %v3160 = vand.u32 %v72, 4294901760
    %v3161 = vsub.f32 %v72, %v3160
    %v3162 = vand.u32 %v3161, 4294901760
    %3163 = vmatprep.subr.mxu0 %v3162
    %v3164 = vand.u32 %v71, 4294901760
    %v3165 = vsub.f32 %v71, %v3164
    %v3166 = vand.u32 %v3165, 4294901760
    %3167 = vmatpush2.msra.mxu0 %v3166
    %v3168 = vand.u32 %v70, 4294901760
    %v3169 = vsub.f32 %v70, %v3168
    %v3170 = vand.u32 %v3169, 4294901760
    %3171 = vmatprep.subr.mxu0 %v3170
    %v3172 = vand.u32 %v69, 4294901760
    %v3173 = vsub.f32 %v69, %v3172
    %v3174 = vand.u32 %v3173, 4294901760
    %3175 = vmatpush2.msra.mxu0 %v3174
    %v3176 = vand.u32 %v68, 4294901760
    %v3177 = vsub.f32 %v68, %v3176
    %v3178 = vand.u32 %v3177, 4294901760
    %3179 = vmatprep.subr.mxu0 %v3178
    %v3180 = vand.u32 %v67, 4294901760
    %v3181 = vsub.f32 %v67, %v3180
    %v3182 = vand.u32 %v3181, 4294901760
    %3183 = vmatpush2.msra.mxu0 %v3182
    %v3184 = vand.u32 %v66, 4294901760
    %v3185 = vsub.f32 %v66, %v3184
    %v3186 = vand.u32 %v3185, 4294901760
    %3187 = vmatprep.subr.mxu0 %v3186
    %v3188 = vand.u32 %v65, 4294901760
    %v3189 = vsub.f32 %v65, %v3188
    %v3190 = vand.u32 %v3189, 4294901760
    %3191 = vmatpush2.msra.mxu0 %v3190
    %v3192 = vand.u32 %v64, 4294901760
    %v3193 = vsub.f32 %v64, %v3192
    %v3194 = vand.u32 %v3193, 4294901760
    %3195 = vmatprep.subr.mxu0 %v3194
    %v3196 = vand.u32 %v63, 4294901760
    %v3197 = vsub.f32 %v63, %v3196
    %v3198 = vand.u32 %v3197, 4294901760
    %3199 = vmatpush2.msra.mxu0 %v3198
    %v3200 = vand.u32 %v62, 4294901760
    %v3201 = vsub.f32 %v62, %v3200
    %v3202 = vand.u32 %v3201, 4294901760
    %3203 = vmatprep.subr.mxu0 %v3202
    %v3204 = vand.u32 %v61, 4294901760
    %v3205 = vsub.f32 %v61, %v3204
    %v3206 = vand.u32 %v3205, 4294901760
    %3207 = vmatpush2.msra.mxu0 %v3206
    %v3208 = vand.u32 %v2061, 4294901760
    %3209 = vmatprep.mubr.f32.mxu0 %v3208
    %v3210 = vand.u32 %v2060, 4294901760
    %3211 = vmatmul.mubr.f32.gmra.mxu0 %v3210
    %v3212 = vpop.f32.mrf.mxu0
    %v3213 = vadd.f32 %v2948, %v3212
    %v3214 = vpop.f32.mrf.mxu0
    %v3215 = vadd.f32 %v2950, %v3214
    %3216 = vdwg.mxu0
    %v3217 = vand.u32 %v60, 4294901760
    %3218 = vmatprep.subr.mxu0 %v3217
    %v3219 = vand.u32 %v59, 4294901760
    %3220 = vmatpush1.msra.mxu0 %v3219
    %v3221 = vand.u32 %v58, 4294901760
    %3222 = vmatprep.subr.mxu0 %v3221
    %v3223 = vand.u32 %v57, 4294901760
    %3224 = vmatpush1.msra.mxu0 %v3223
    %v3225 = vand.u32 %v56, 4294901760
    %3226 = vmatprep.subr.mxu0 %v3225
    %v3227 = vand.u32 %v55, 4294901760
    %3228 = vmatpush1.msra.mxu0 %v3227
    %v3229 = vand.u32 %v54, 4294901760
    %3230 = vmatprep.subr.mxu0 %v3229
    %v3231 = vand.u32 %v53, 4294901760
    %3232 = vmatpush1.msra.mxu0 %v3231
    %v3233 = vand.u32 %v52, 4294901760
    %3234 = vmatprep.subr.mxu0 %v3233
    %v3235 = vand.u32 %v51, 4294901760
    %3236 = vmatpush1.msra.mxu0 %v3235
    %v3237 = vand.u32 %v50, 4294901760
    %3238 = vmatprep.subr.mxu0 %v3237
    %v3239 = vand.u32 %v49, 4294901760
    %3240 = vmatpush1.msra.mxu0 %v3239
    %v3241 = vand.u32 %v48, 4294901760
    %3242 = vmatprep.subr.mxu0 %v3241
    %v3243 = vand.u32 %v47, 4294901760
    %3244 = vmatpush1.msra.mxu0 %v3243
    %v3245 = vand.u32 %v46, 4294901760
    %3246 = vmatprep.subr.mxu0 %v3245
    %v3247 = vand.u32 %v45, 4294901760
    %3248 = vmatpush1.msra.mxu0 %v3247
    %v3249 = vand.u32 %v44, 4294901760
    %3250 = vmatprep.subr.mxu0 %v3249
    %v3251 = vand.u32 %v43, 4294901760
    %3252 = vmatpush1.msra.mxu0 %v3251
    %v3253 = vand.u32 %v42, 4294901760
    %3254 = vmatprep.subr.mxu0 %v3253
    %v3255 = vand.u32 %v41, 4294901760
    %3256 = vmatpush1.msra.mxu0 %v3255
    %v3257 = vand.u32 %v40, 4294901760
    %3258 = vmatprep.subr.mxu0 %v3257
    %v3259 = vand.u32 %v39, 4294901760
    %3260 = vmatpush1.msra.mxu0 %v3259
    %v3261 = vand.u32 %v38, 4294901760
    %3262 = vmatprep.subr.mxu0 %v3261
    %v3263 = vand.u32 %v37, 4294901760
    %3264 = vmatpush1.msra.mxu0 %v3263
    %v3265 = vand.u32 %v36, 4294901760
    %3266 = vmatprep.subr.mxu0 %v3265
    %v3267 = vand.u32 %v35, 4294901760
    %3268 = vmatpush1.msra.mxu0 %v3267
    %v3269 = vand.u32 %v34, 4294901760
    %3270 = vmatprep.subr.mxu0 %v3269
    %v3271 = vand.u32 %v33, 4294901760
    %3272 = vmatpush1.msra.mxu0 %v3271
    %v3273 = vand.u32 %v32, 4294901760
    %3274 = vmatprep.subr.mxu0 %v3273
    %v3275 = vand.u32 %v31, 4294901760
    %3276 = vmatpush1.msra.mxu0 %v3275
    %v3277 = vand.u32 %v30, 4294901760
    %3278 = vmatprep.subr.mxu0 %v3277
    %v3279 = vand.u32 %v29, 4294901760
    %3280 = vmatpush1.msra.mxu0 %v3279
    %v3281 = vand.u32 %v92, 4294901760
    %3282 = vmatprep.subr.mxu0 %v3281
    %v3283 = vand.u32 %v91, 4294901760
    %3284 = vmatpush2.msra.mxu0 %v3283
    %v3285 = vand.u32 %v90, 4294901760
    %3286 = vmatprep.subr.mxu0 %v3285
    %v3287 = vand.u32 %v89, 4294901760
    %3288 = vmatpush2.msra.mxu0 %v3287
    %v3289 = vand.u32 %v88, 4294901760
    %3290 = vmatprep.subr.mxu0 %v3289
    %v3291 = vand.u32 %v87, 4294901760
    %3292 = vmatpush2.msra.mxu0 %v3291
    %v3293 = vand.u32 %v86, 4294901760
    %3294 = vmatprep.subr.mxu0 %v3293
    %v3295 = vand.u32 %v85, 4294901760
    %3296 = vmatpush2.msra.mxu0 %v3295
    %v3297 = vand.u32 %v84, 4294901760
    %3298 = vmatprep.subr.mxu0 %v3297
    %v3299 = vand.u32 %v83, 4294901760
    %3300 = vmatpush2.msra.mxu0 %v3299
    %v3301 = vand.u32 %v82, 4294901760
    %3302 = vmatprep.subr.mxu0 %v3301
    %v3303 = vand.u32 %v81, 4294901760
    %3304 = vmatpush2.msra.mxu0 %v3303
    %v3305 = vand.u32 %v80, 4294901760
    %3306 = vmatprep.subr.mxu0 %v3305
    %v3307 = vand.u32 %v79, 4294901760
    %3308 = vmatpush2.msra.mxu0 %v3307
    %v3309 = vand.u32 %v78, 4294901760
    %3310 = vmatprep.subr.mxu0 %v3309
    %v3311 = vand.u32 %v77, 4294901760
    %3312 = vmatpush2.msra.mxu0 %v3311
    %v3313 = vand.u32 %v76, 4294901760
    %3314 = vmatprep.subr.mxu0 %v3313
    %v3315 = vand.u32 %v75, 4294901760
    %3316 = vmatpush2.msra.mxu0 %v3315
    %v3317 = vand.u32 %v74, 4294901760
    %3318 = vmatprep.subr.mxu0 %v3317
    %v3319 = vand.u32 %v73, 4294901760
    %3320 = vmatpush2.msra.mxu0 %v3319
    %v3321 = vand.u32 %v72, 4294901760
    %3322 = vmatprep.subr.mxu0 %v3321
    %v3323 = vand.u32 %v71, 4294901760
    %3324 = vmatpush2.msra.mxu0 %v3323
    %v3325 = vand.u32 %v70, 4294901760
    %3326 = vmatprep.subr.mxu0 %v3325
    %v3327 = vand.u32 %v69, 4294901760
    %3328 = vmatpush2.msra.mxu0 %v3327
    %v3329 = vand.u32 %v68, 4294901760
    %3330 = vmatprep.subr.mxu0 %v3329
    %v3331 = vand.u32 %v67, 4294901760
    %3332 = vmatpush2.msra.mxu0 %v3331
    %v3333 = vand.u32 %v66, 4294901760
    %3334 = vmatprep.subr.mxu0 %v3333
    %v3335 = vand.u32 %v65, 4294901760
    %3336 = vmatpush2.msra.mxu0 %v3335
    %v3337 = vand.u32 %v64, 4294901760
    %3338 = vmatprep.subr.mxu0 %v3337
    %v3339 = vand.u32 %v63, 4294901760
    %3340 = vmatpush2.msra.mxu0 %v3339
    %v3341 = vand.u32 %v62, 4294901760
    %3342 = vmatprep.subr.mxu0 %v3341
    %v3343 = vand.u32 %v61, 4294901760
    %3344 = vmatpush2.msra.mxu0 %v3343
    %v3345 = vand.u32 %v2061, 4294901760
    %3346 = vmatprep.mubr.f32.mxu0 %v3345
    %v3347 = vand.u32 %v2060, 4294901760
    %3348 = vmatmul.mubr.f32.gmra.mxu0 %v3347
    %v3349 = vpop.f32.mrf.mxu0
    %v3350 = vadd.f32 %v3213, %v3349
    %v3351 = vpop.f32.mrf.mxu0
    %v3352 = vadd.f32 %v3215, %v3351
    %3353 = vdwg.mxu0
    %v3354 = vadd.f32 %v3350, %v743
    %v3355 = vadd.f32 %v3352, %v745
    %v3356 = vtanh.pop %v3354
    %v3357 = vtanh.pop %v3355
    %v3358 = vlaneseq
    %v3359 = vshrl.u32 %v3358, 7
    %v3360 = vsub.s32 3, %v3359
    %v3361 = vrot.slane %v97, %v3360
    %v3362 = vlaneseq
    %v3363 = vshrl.u32 %v3362, 7
    %v3364 = vsub.s32 3, %v3363
    %v3365 = vrot.slane %v98, %v3364
    %v3366 = vand.u32 %v60, 4294901760
    %3367 = vmatprep.subr.mxu0 %v3366
    %v3368 = vand.u32 %v59, 4294901760
    %3369 = vmatpush1.msra.mxu0 %v3368
    %v3370 = vand.u32 %v58, 4294901760
    %3371 = vmatprep.subr.mxu0 %v3370
    %v3372 = vand.u32 %v57, 4294901760
    %3373 = vmatpush1.msra.mxu0 %v3372
    %v3374 = vand.u32 %v56, 4294901760
    %3375 = vmatprep.subr.mxu0 %v3374
    %v3376 = vand.u32 %v55, 4294901760
    %3377 = vmatpush1.msra.mxu0 %v3376
    %v3378 = vand.u32 %v54, 4294901760
    %3379 = vmatprep.subr.mxu0 %v3378
    %v3380 = vand.u32 %v53, 4294901760
    %3381 = vmatpush1.msra.mxu0 %v3380
    %v3382 = vand.u32 %v52, 4294901760
    %3383 = vmatprep.subr.mxu0 %v3382
    %v3384 = vand.u32 %v51, 4294901760
    %3385 = vmatpush1.msra.mxu0 %v3384
    %v3386 = vand.u32 %v50, 4294901760
    %3387 = vmatprep.subr.mxu0 %v3386
    %v3388 = vand.u32 %v49, 4294901760
    %3389 = vmatpush1.msra.mxu0 %v3388
    %v3390 = vand.u32 %v48, 4294901760
    %3391 = vmatprep.subr.mxu0 %v3390
    %v3392 = vand.u32 %v47, 4294901760
    %3393 = vmatpush1.msra.mxu0 %v3392
    %v3394 = vand.u32 %v46, 4294901760
    %3395 = vmatprep.subr.mxu0 %v3394
    %v3396 = vand.u32 %v45, 4294901760
    %3397 = vmatpush1.msra.mxu0 %v3396
    %v3398 = vand.u32 %v44, 4294901760
    %3399 = vmatprep.subr.mxu0 %v3398
    %v3400 = vand.u32 %v43, 4294901760
    %3401 = vmatpush1.msra.mxu0 %v3400
    %v3402 = vand.u32 %v42, 4294901760
    %3403 = vmatprep.subr.mxu0 %v3402
    %v3404 = vand.u32 %v41, 4294901760
    %3405 = vmatpush1.msra.mxu0 %v3404
    %v3406 = vand.u32 %v40, 4294901760
    %3407 = vmatprep.subr.mxu0 %v3406
    %v3408 = vand.u32 %v39, 4294901760
    %3409 = vmatpush1.msra.mxu0 %v3408
    %v3410 = vand.u32 %v38, 4294901760
    %3411 = vmatprep.subr.mxu0 %v3410
    %v3412 = vand.u32 %v37, 4294901760
    %3413 = vmatpush1.msra.mxu0 %v3412
    %v3414 = vand.u32 %v36, 4294901760
    %3415 = vmatprep.subr.mxu0 %v3414
    %v3416 = vand.u32 %v35, 4294901760
    %3417 = vmatpush1.msra.mxu0 %v3416
    %v3418 = vand.u32 %v34, 4294901760
    %3419 = vmatprep.subr.mxu0 %v3418
    %v3420 = vand.u32 %v33, 4294901760
    %3421 = vmatpush1.msra.mxu0 %v3420
    %v3422 = vand.u32 %v32, 4294901760
    %3423 = vmatprep.subr.mxu0 %v3422
    %v3424 = vand.u32 %v31, 4294901760
    %3425 = vmatpush1.msra.mxu0 %v3424
    %v3426 = vand.u32 %v30, 4294901760
    %3427 = vmatprep.subr.mxu0 %v3426
    %v3428 = vand.u32 %v29, 4294901760
    %3429 = vmatpush1.msra.mxu0 %v3428
    %v3430 = vand.u32 %v92, 4294901760
    %3431 = vmatprep.subr.mxu0 %v3430
    %v3432 = vand.u32 %v91, 4294901760
    %3433 = vmatpush2.msra.mxu0 %v3432
    %v3434 = vand.u32 %v90, 4294901760
    %3435 = vmatprep.subr.mxu0 %v3434
    %v3436 = vand.u32 %v89, 4294901760
    %3437 = vmatpush2.msra.mxu0 %v3436
    %v3438 = vand.u32 %v88, 4294901760
    %3439 = vmatprep.subr.mxu0 %v3438
    %v3440 = vand.u32 %v87, 4294901760
    %3441 = vmatpush2.msra.mxu0 %v3440
    %v3442 = vand.u32 %v86, 4294901760
    %3443 = vmatprep.subr.mxu0 %v3442
    %v3444 = vand.u32 %v85, 4294901760
    %3445 = vmatpush2.msra.mxu0 %v3444
    %v3446 = vand.u32 %v84, 4294901760
    %3447 = vmatprep.subr.mxu0 %v3446
    %v3448 = vand.u32 %v83, 4294901760
    %3449 = vmatpush2.msra.mxu0 %v3448
    %v3450 = vand.u32 %v82, 4294901760
    %3451 = vmatprep.subr.mxu0 %v3450
    %v3452 = vand.u32 %v81, 4294901760
    %3453 = vmatpush2.msra.mxu0 %v3452
    %v3454 = vand.u32 %v80, 4294901760
    %3455 = vmatprep.subr.mxu0 %v3454
    %v3456 = vand.u32 %v79, 4294901760
    %3457 = vmatpush2.msra.mxu0 %v3456
    %v3458 = vand.u32 %v78, 4294901760
    %3459 = vmatprep.subr.mxu0 %v3458
    %v3460 = vand.u32 %v77, 4294901760
    %3461 = vmatpush2.msra.mxu0 %v3460
    %v3462 = vand.u32 %v76, 4294901760
    %3463 = vmatprep.subr.mxu0 %v3462
    %v3464 = vand.u32 %v75, 4294901760
    %3465 = vmatpush2.msra.mxu0 %v3464
    %v3466 = vand.u32 %v74, 4294901760
    %3467 = vmatprep.subr.mxu0 %v3466
    %v3468 = vand.u32 %v73, 4294901760
    %3469 = vmatpush2.msra.mxu0 %v3468
    %v3470 = vand.u32 %v72, 4294901760
    %3471 = vmatprep.subr.mxu0 %v3470
    %v3472 = vand.u32 %v71, 4294901760
    %3473 = vmatpush2.msra.mxu0 %v3472
    %v3474 = vand.u32 %v70, 4294901760
    %3475 = vmatprep.subr.mxu0 %v3474
    %v3476 = vand.u32 %v69, 4294901760
    %3477 = vmatpush2.msra.mxu0 %v3476
    %v3478 = vand.u32 %v68, 4294901760
    %3479 = vmatprep.subr.mxu0 %v3478
    %v3480 = vand.u32 %v67, 4294901760
    %3481 = vmatpush2.msra.mxu0 %v3480
    %v3482 = vand.u32 %v66, 4294901760
    %3483 = vmatprep.subr.mxu0 %v3482
    %v3484 = vand.u32 %v65, 4294901760
    %3485 = vmatpush2.msra.mxu0 %v3484
    %v3486 = vand.u32 %v64, 4294901760
    %3487 = vmatprep.subr.mxu0 %v3486
    %v3488 = vand.u32 %v63, 4294901760
    %3489 = vmatpush2.msra.mxu0 %v3488
    %v3490 = vand.u32 %v62, 4294901760
    %3491 = vmatprep.subr.mxu0 %v3490
    %v3492 = vand.u32 %v61, 4294901760
    %3493 = vmatpush2.msra.mxu0 %v3492
    %v3494 = vand.u32 %v3357, 4294901760
    %v3495 = vsub.f32 %v3357, %v3494
    %v3496 = vand.u32 %v3495, 4294901760
    %v3497 = vsub.f32 %v3495, %v3496
    %v3498 = vand.u32 %v3497, 4294901760
    %3499 = vmatprep.mubr.f32.mxu0 %v3498
    %v3500 = vand.u32 %v3356, 4294901760
    %v3501 = vsub.f32 %v3356, %v3500
    %v3502 = vand.u32 %v3501, 4294901760
    %v3503 = vsub.f32 %v3501, %v3502
    %v3504 = vand.u32 %v3503, 4294901760
    %3505 = vmatmul.mubr.f32.gmra.mxu0 %v3504
    %v3506 = vpop.f32.mrf.mxu0
    %v3507 = vadd.f32 %v3361, %v3506
    %v3508 = vpop.f32.mrf.mxu0
    %v3509 = vadd.f32 %v3365, %v3508
    %3510 = vdwg.mxu0
    %v3511 = vand.u32 %v60, 4294901760
    %v3512 = vsub.f32 %v60, %v3511
    %v3513 = vand.u32 %v3512, 4294901760
    %v3514 = vsub.f32 %v3512, %v3513
    %v3515 = vand.u32 %v3514, 4294901760
    %3516 = vmatprep.subr.mxu0 %v3515
    %v3517 = vand.u32 %v59, 4294901760
    %v3518 = vsub.f32 %v59, %v3517
    %v3519 = vand.u32 %v3518, 4294901760
    %v3520 = vsub.f32 %v3518, %v3519
    %v3521 = vand.u32 %v3520, 4294901760
    %3522 = vmatpush1.msra.mxu0 %v3521
    %v3523 = vand.u32 %v58, 4294901760
    %v3524 = vsub.f32 %v58, %v3523
    %v3525 = vand.u32 %v3524, 4294901760
    %v3526 = vsub.f32 %v3524, %v3525
    %v3527 = vand.u32 %v3526, 4294901760
    %3528 = vmatprep.subr.mxu0 %v3527
    %v3529 = vand.u32 %v57, 4294901760
    %v3530 = vsub.f32 %v57, %v3529
    %v3531 = vand.u32 %v3530, 4294901760
    %v3532 = vsub.f32 %v3530, %v3531
    %v3533 = vand.u32 %v3532, 4294901760
    %3534 = vmatpush1.msra.mxu0 %v3533
    %v3535 = vand.u32 %v56, 4294901760
    %v3536 = vsub.f32 %v56, %v3535
    %v3537 = vand.u32 %v3536, 4294901760
    %v3538 = vsub.f32 %v3536, %v3537
    %v3539 = vand.u32 %v3538, 4294901760
    %3540 = vmatprep.subr.mxu0 %v3539
    %v3541 = vand.u32 %v55, 4294901760
    %v3542 = vsub.f32 %v55, %v3541
    %v3543 = vand.u32 %v3542, 4294901760
    %v3544 = vsub.f32 %v3542, %v3543
    %v3545 = vand.u32 %v3544, 4294901760
    %3546 = vmatpush1.msra.mxu0 %v3545
    %v3547 = vand.u32 %v54, 4294901760
    %v3548 = vsub.f32 %v54, %v3547
    %v3549 = vand.u32 %v3548, 4294901760
    %v3550 = vsub.f32 %v3548, %v3549
    %v3551 = vand.u32 %v3550, 4294901760
    %3552 = vmatprep.subr.mxu0 %v3551
    %v3553 = vand.u32 %v53, 4294901760
    %v3554 = vsub.f32 %v53, %v3553
    %v3555 = vand.u32 %v3554, 4294901760
    %v3556 = vsub.f32 %v3554, %v3555
    %v3557 = vand.u32 %v3556, 4294901760
    %3558 = vmatpush1.msra.mxu0 %v3557
    %v3559 = vand.u32 %v52, 4294901760
    %v3560 = vsub.f32 %v52, %v3559
    %v3561 = vand.u32 %v3560, 4294901760
    %v3562 = vsub.f32 %v3560, %v3561
    %v3563 = vand.u32 %v3562, 4294901760
    %3564 = vmatprep.subr.mxu0 %v3563
    %v3565 = vand.u32 %v51, 4294901760
    %v3566 = vsub.f32 %v51, %v3565
    %v3567 = vand.u32 %v3566, 4294901760
    %v3568 = vsub.f32 %v3566, %v3567
    %v3569 = vand.u32 %v3568, 4294901760
    %3570 = vmatpush1.msra.mxu0 %v3569
    %v3571 = vand.u32 %v50, 4294901760
    %v3572 = vsub.f32 %v50, %v3571
    %v3573 = vand.u32 %v3572, 4294901760
    %v3574 = vsub.f32 %v3572, %v3573
    %v3575 = vand.u32 %v3574, 4294901760
    %3576 = vmatprep.subr.mxu0 %v3575
    %v3577 = vand.u32 %v49, 4294901760
    %v3578 = vsub.f32 %v49, %v3577
    %v3579 = vand.u32 %v3578, 4294901760
    %v3580 = vsub.f32 %v3578, %v3579
    %v3581 = vand.u32 %v3580, 4294901760
    %3582 = vmatpush1.msra.mxu0 %v3581
    %v3583 = vand.u32 %v48, 4294901760
    %v3584 = vsub.f32 %v48, %v3583
    %v3585 = vand.u32 %v3584, 4294901760
    %v3586 = vsub.f32 %v3584, %v3585
    %v3587 = vand.u32 %v3586, 4294901760
    %3588 = vmatprep.subr.mxu0 %v3587
    %v3589 = vand.u32 %v47, 4294901760
    %v3590 = vsub.f32 %v47, %v3589
    %v3591 = vand.u32 %v3590, 4294901760
    %v3592 = vsub.f32 %v3590, %v3591
    %v3593 = vand.u32 %v3592, 4294901760
    %3594 = vmatpush1.msra.mxu0 %v3593
    %v3595 = vand.u32 %v46, 4294901760
    %v3596 = vsub.f32 %v46, %v3595
    %v3597 = vand.u32 %v3596, 4294901760
    %v3598 = vsub.f32 %v3596, %v3597
    %v3599 = vand.u32 %v3598, 4294901760
    %3600 = vmatprep.subr.mxu0 %v3599
    %v3601 = vand.u32 %v45, 4294901760
    %v3602 = vsub.f32 %v45, %v3601
    %v3603 = vand.u32 %v3602, 4294901760
    %v3604 = vsub.f32 %v3602, %v3603
    %v3605 = vand.u32 %v3604, 4294901760
    %3606 = vmatpush1.msra.mxu0 %v3605
    %v3607 = vand.u32 %v44, 4294901760
    %v3608 = vsub.f32 %v44, %v3607
    %v3609 = vand.u32 %v3608, 4294901760
    %v3610 = vsub.f32 %v3608, %v3609
    %v3611 = vand.u32 %v3610, 4294901760
    %3612 = vmatprep.subr.mxu0 %v3611
    %v3613 = vand.u32 %v43, 4294901760
    %v3614 = vsub.f32 %v43, %v3613
    %v3615 = vand.u32 %v3614, 4294901760
    %v3616 = vsub.f32 %v3614, %v3615
    %v3617 = vand.u32 %v3616, 4294901760
    %3618 = vmatpush1.msra.mxu0 %v3617
    %v3619 = vand.u32 %v42, 4294901760
    %v3620 = vsub.f32 %v42, %v3619
    %v3621 = vand.u32 %v3620, 4294901760
    %v3622 = vsub.f32 %v3620, %v3621
    %v3623 = vand.u32 %v3622, 4294901760
    %3624 = vmatprep.subr.mxu0 %v3623
    %v3625 = vand.u32 %v41, 4294901760
    %v3626 = vsub.f32 %v41, %v3625
    %v3627 = vand.u32 %v3626, 4294901760
    %v3628 = vsub.f32 %v3626, %v3627
    %v3629 = vand.u32 %v3628, 4294901760
    %3630 = vmatpush1.msra.mxu0 %v3629
    %v3631 = vand.u32 %v40, 4294901760
    %v3632 = vsub.f32 %v40, %v3631
    %v3633 = vand.u32 %v3632, 4294901760
    %v3634 = vsub.f32 %v3632, %v3633
    %v3635 = vand.u32 %v3634, 4294901760
    %3636 = vmatprep.subr.mxu0 %v3635
    %v3637 = vand.u32 %v39, 4294901760
    %v3638 = vsub.f32 %v39, %v3637
    %v3639 = vand.u32 %v3638, 4294901760
    %v3640 = vsub.f32 %v3638, %v3639
    %v3641 = vand.u32 %v3640, 4294901760
    %3642 = vmatpush1.msra.mxu0 %v3641
    %v3643 = vand.u32 %v38, 4294901760
    %v3644 = vsub.f32 %v38, %v3643
    %v3645 = vand.u32 %v3644, 4294901760
    %v3646 = vsub.f32 %v3644, %v3645
    %v3647 = vand.u32 %v3646, 4294901760
    %3648 = vmatprep.subr.mxu0 %v3647
    %v3649 = vand.u32 %v37, 4294901760
    %v3650 = vsub.f32 %v37, %v3649
    %v3651 = vand.u32 %v3650, 4294901760
    %v3652 = vsub.f32 %v3650, %v3651
    %v3653 = vand.u32 %v3652, 4294901760
    %3654 = vmatpush1.msra.mxu0 %v3653
    %v3655 = vand.u32 %v36, 4294901760
    %v3656 = vsub.f32 %v36, %v3655
    %v3657 = vand.u32 %v3656, 4294901760
    %v3658 = vsub.f32 %v3656, %v3657
    %v3659 = vand.u32 %v3658, 4294901760
    %3660 = vmatprep.subr.mxu0 %v3659
    %v3661 = vand.u32 %v35, 4294901760
    %v3662 = vsub.f32 %v35, %v3661
    %v3663 = vand.u32 %v3662, 4294901760
    %v3664 = vsub.f32 %v3662, %v3663
    %v3665 = vand.u32 %v3664, 4294901760
    %3666 = vmatpush1.msra.mxu0 %v3665
    %v3667 = vand.u32 %v34, 4294901760
    %v3668 = vsub.f32 %v34, %v3667
    %v3669 = vand.u32 %v3668, 4294901760
    %v3670 = vsub.f32 %v3668, %v3669
    %v3671 = vand.u32 %v3670, 4294901760
    %3672 = vmatprep.subr.mxu0 %v3671
    %v3673 = vand.u32 %v33, 4294901760
    %v3674 = vsub.f32 %v33, %v3673
    %v3675 = vand.u32 %v3674, 4294901760
    %v3676 = vsub.f32 %v3674, %v3675
    %v3677 = vand.u32 %v3676, 4294901760
    %3678 = vmatpush1.msra.mxu0 %v3677
    %v3679 = vand.u32 %v32, 4294901760
    %v3680 = vsub.f32 %v32, %v3679
    %v3681 = vand.u32 %v3680, 4294901760
    %v3682 = vsub.f32 %v3680, %v3681
    %v3683 = vand.u32 %v3682, 4294901760
    %3684 = vmatprep.subr.mxu0 %v3683
    %v3685 = vand.u32 %v31, 4294901760
    %v3686 = vsub.f32 %v31, %v3685
    %v3687 = vand.u32 %v3686, 4294901760
    %v3688 = vsub.f32 %v3686, %v3687
    %v3689 = vand.u32 %v3688, 4294901760
    %3690 = vmatpush1.msra.mxu0 %v3689
    %v3691 = vand.u32 %v30, 4294901760
    %v3692 = vsub.f32 %v30, %v3691
    %v3693 = vand.u32 %v3692, 4294901760
    %v3694 = vsub.f32 %v3692, %v3693
    %v3695 = vand.u32 %v3694, 4294901760
    %3696 = vmatprep.subr.mxu0 %v3695
    %v3697 = vand.u32 %v29, 4294901760
    %v3698 = vsub.f32 %v29, %v3697
    %v3699 = vand.u32 %v3698, 4294901760
    %v3700 = vsub.f32 %v3698, %v3699
    %v3701 = vand.u32 %v3700, 4294901760
    %3702 = vmatpush1.msra.mxu0 %v3701
    %v3703 = vand.u32 %v92, 4294901760
    %v3704 = vsub.f32 %v92, %v3703
    %v3705 = vand.u32 %v3704, 4294901760
    %v3706 = vsub.f32 %v3704, %v3705
    %v3707 = vand.u32 %v3706, 4294901760
    %3708 = vmatprep.subr.mxu0 %v3707
    %v3709 = vand.u32 %v91, 4294901760
    %v3710 = vsub.f32 %v91, %v3709
    %v3711 = vand.u32 %v3710, 4294901760
    %v3712 = vsub.f32 %v3710, %v3711
    %v3713 = vand.u32 %v3712, 4294901760
    %3714 = vmatpush2.msra.mxu0 %v3713
    %v3715 = vand.u32 %v90, 4294901760
    %v3716 = vsub.f32 %v90, %v3715
    %v3717 = vand.u32 %v3716, 4294901760
    %v3718 = vsub.f32 %v3716, %v3717
    %v3719 = vand.u32 %v3718, 4294901760
    %3720 = vmatprep.subr.mxu0 %v3719
    %v3721 = vand.u32 %v89, 4294901760
    %v3722 = vsub.f32 %v89, %v3721
    %v3723 = vand.u32 %v3722, 4294901760
    %v3724 = vsub.f32 %v3722, %v3723
    %v3725 = vand.u32 %v3724, 4294901760
    %3726 = vmatpush2.msra.mxu0 %v3725
    %v3727 = vand.u32 %v88, 4294901760
    %v3728 = vsub.f32 %v88, %v3727
    %v3729 = vand.u32 %v3728, 4294901760
    %v3730 = vsub.f32 %v3728, %v3729
    %v3731 = vand.u32 %v3730, 4294901760
    %3732 = vmatprep.subr.mxu0 %v3731
    %v3733 = vand.u32 %v87, 4294901760
    %v3734 = vsub.f32 %v87, %v3733
    %v3735 = vand.u32 %v3734, 4294901760
    %v3736 = vsub.f32 %v3734, %v3735
    %v3737 = vand.u32 %v3736, 4294901760
    %3738 = vmatpush2.msra.mxu0 %v3737
    %v3739 = vand.u32 %v86, 4294901760
    %v3740 = vsub.f32 %v86, %v3739
    %v3741 = vand.u32 %v3740, 4294901760
    %v3742 = vsub.f32 %v3740, %v3741
    %v3743 = vand.u32 %v3742, 4294901760
    %3744 = vmatprep.subr.mxu0 %v3743
    %v3745 = vand.u32 %v85, 4294901760
    %v3746 = vsub.f32 %v85, %v3745
    %v3747 = vand.u32 %v3746, 4294901760
    %v3748 = vsub.f32 %v3746, %v3747
    %v3749 = vand.u32 %v3748, 4294901760
    %3750 = vmatpush2.msra.mxu0 %v3749
    %v3751 = vand.u32 %v84, 4294901760
    %v3752 = vsub.f32 %v84, %v3751
    %v3753 = vand.u32 %v3752, 4294901760
    %v3754 = vsub.f32 %v3752, %v3753
    %v3755 = vand.u32 %v3754, 4294901760
    %3756 = vmatprep.subr.mxu0 %v3755
    %v3757 = vand.u32 %v83, 4294901760
    %v3758 = vsub.f32 %v83, %v3757
    %v3759 = vand.u32 %v3758, 4294901760
    %v3760 = vsub.f32 %v3758, %v3759
    %v3761 = vand.u32 %v3760, 4294901760
    %3762 = vmatpush2.msra.mxu0 %v3761
    %v3763 = vand.u32 %v82, 4294901760
    %v3764 = vsub.f32 %v82, %v3763
    %v3765 = vand.u32 %v3764, 4294901760
    %v3766 = vsub.f32 %v3764, %v3765
    %v3767 = vand.u32 %v3766, 4294901760
    %3768 = vmatprep.subr.mxu0 %v3767
    %v3769 = vand.u32 %v81, 4294901760
    %v3770 = vsub.f32 %v81, %v3769
    %v3771 = vand.u32 %v3770, 4294901760
    %v3772 = vsub.f32 %v3770, %v3771
    %v3773 = vand.u32 %v3772, 4294901760
    %3774 = vmatpush2.msra.mxu0 %v3773
    %v3775 = vand.u32 %v80, 4294901760
    %v3776 = vsub.f32 %v80, %v3775
    %v3777 = vand.u32 %v3776, 4294901760
    %v3778 = vsub.f32 %v3776, %v3777
    %v3779 = vand.u32 %v3778, 4294901760
    %3780 = vmatprep.subr.mxu0 %v3779
    %v3781 = vand.u32 %v79, 4294901760
    %v3782 = vsub.f32 %v79, %v3781
    %v3783 = vand.u32 %v3782, 4294901760
    %v3784 = vsub.f32 %v3782, %v3783
    %v3785 = vand.u32 %v3784, 4294901760
    %3786 = vmatpush2.msra.mxu0 %v3785
    %v3787 = vand.u32 %v78, 4294901760
    %v3788 = vsub.f32 %v78, %v3787
    %v3789 = vand.u32 %v3788, 4294901760
    %v3790 = vsub.f32 %v3788, %v3789
    %v3791 = vand.u32 %v3790, 4294901760
    %3792 = vmatprep.subr.mxu0 %v3791
    %v3793 = vand.u32 %v77, 4294901760
    %v3794 = vsub.f32 %v77, %v3793
    %v3795 = vand.u32 %v3794, 4294901760
    %v3796 = vsub.f32 %v3794, %v3795
    %v3797 = vand.u32 %v3796, 4294901760
    %3798 = vmatpush2.msra.mxu0 %v3797
    %v3799 = vand.u32 %v76, 4294901760
    %v3800 = vsub.f32 %v76, %v3799
    %v3801 = vand.u32 %v3800, 4294901760
    %v3802 = vsub.f32 %v3800, %v3801
    %v3803 = vand.u32 %v3802, 4294901760
    %3804 = vmatprep.subr.mxu0 %v3803
    %v3805 = vand.u32 %v75, 4294901760
    %v3806 = vsub.f32 %v75, %v3805
    %v3807 = vand.u32 %v3806, 4294901760
    %v3808 = vsub.f32 %v3806, %v3807
    %v3809 = vand.u32 %v3808, 4294901760
    %3810 = vmatpush2.msra.mxu0 %v3809
    %v3811 = vand.u32 %v74, 4294901760
    %v3812 = vsub.f32 %v74, %v3811
    %v3813 = vand.u32 %v3812, 4294901760
    %v3814 = vsub.f32 %v3812, %v3813
    %v3815 = vand.u32 %v3814, 4294901760
    %3816 = vmatprep.subr.mxu0 %v3815
    %v3817 = vand.u32 %v73, 4294901760
    %v3818 = vsub.f32 %v73, %v3817
    %v3819 = vand.u32 %v3818, 4294901760
    %v3820 = vsub.f32 %v3818, %v3819
    %v3821 = vand.u32 %v3820, 4294901760
    %3822 = vmatpush2.msra.mxu0 %v3821
    %v3823 = vand.u32 %v72, 4294901760
    %v3824 = vsub.f32 %v72, %v3823
    %v3825 = vand.u32 %v3824, 4294901760
    %v3826 = vsub.f32 %v3824, %v3825
    %v3827 = vand.u32 %v3826, 4294901760
    %3828 = vmatprep.subr.mxu0 %v3827
    %v3829 = vand.u32 %v71, 4294901760
    %v3830 = vsub.f32 %v71, %v3829
    %v3831 = vand.u32 %v3830, 4294901760
    %v3832 = vsub.f32 %v3830, %v3831
    %v3833 = vand.u32 %v3832, 4294901760
    %3834 = vmatpush2.msra.mxu0 %v3833
    %v3835 = vand.u32 %v70, 4294901760
    %v3836 = vsub.f32 %v70, %v3835
    %v3837 = vand.u32 %v3836, 4294901760
    %v3838 = vsub.f32 %v3836, %v3837
    %v3839 = vand.u32 %v3838, 4294901760
    %3840 = vmatprep.subr.mxu0 %v3839
    %v3841 = vand.u32 %v69, 4294901760
    %v3842 = vsub.f32 %v69, %v3841
    %v3843 = vand.u32 %v3842, 4294901760
    %v3844 = vsub.f32 %v3842, %v3843
    %v3845 = vand.u32 %v3844, 4294901760
    %3846 = vmatpush2.msra.mxu0 %v3845
    %v3847 = vand.u32 %v68, 4294901760
    %v3848 = vsub.f32 %v68, %v3847
    %v3849 = vand.u32 %v3848, 4294901760
    %v3850 = vsub.f32 %v3848, %v3849
    %v3851 = vand.u32 %v3850, 4294901760
    %3852 = vmatprep.subr.mxu0 %v3851
    %v3853 = vand.u32 %v67, 4294901760
    %v3854 = vsub.f32 %v67, %v3853
    %v3855 = vand.u32 %v3854, 4294901760
    %v3856 = vsub.f32 %v3854, %v3855
    %v3857 = vand.u32 %v3856, 4294901760
    %3858 = vmatpush2.msra.mxu0 %v3857
    %v3859 = vand.u32 %v66, 4294901760
    %v3860 = vsub.f32 %v66, %v3859
    %v3861 = vand.u32 %v3860, 4294901760
    %v3862 = vsub.f32 %v3860, %v3861
    %v3863 = vand.u32 %v3862, 4294901760
    %3864 = vmatprep.subr.mxu0 %v3863
    %v3865 = vand.u32 %v65, 4294901760
    %v3866 = vsub.f32 %v65, %v3865
    %v3867 = vand.u32 %v3866, 4294901760
    %v3868 = vsub.f32 %v3866, %v3867
    %v3869 = vand.u32 %v3868, 4294901760
    %3870 = vmatpush2.msra.mxu0 %v3869
    %v3871 = vand.u32 %v64, 4294901760
    %v3872 = vsub.f32 %v64, %v3871
    %v3873 = vand.u32 %v3872, 4294901760
    %v3874 = vsub.f32 %v3872, %v3873
    %v3875 = vand.u32 %v3874, 4294901760
    %3876 = vmatprep.subr.mxu0 %v3875
    %v3877 = vand.u32 %v63, 4294901760
    %v3878 = vsub.f32 %v63, %v3877
    %v3879 = vand.u32 %v3878, 4294901760
    %v3880 = vsub.f32 %v3878, %v3879
    %v3881 = vand.u32 %v3880, 4294901760
    %3882 = vmatpush2.msra.mxu0 %v3881
    %v3883 = vand.u32 %v62, 4294901760
    %v3884 = vsub.f32 %v62, %v3883
    %v3885 = vand.u32 %v3884, 4294901760
    %v3886 = vsub.f32 %v3884, %v3885
    %v3887 = vand.u32 %v3886, 4294901760
    %3888 = vmatprep.subr.mxu0 %v3887
    %v3889 = vand.u32 %v61, 4294901760
    %v3890 = vsub.f32 %v61, %v3889
    %v3891 = vand.u32 %v3890, 4294901760
    %v3892 = vsub.f32 %v3890, %v3891
    %v3893 = vand.u32 %v3892, 4294901760
    %3894 = vmatpush2.msra.mxu0 %v3893
    %v3895 = vand.u32 %v3357, 4294901760
    %3896 = vmatprep.mubr.f32.mxu0 %v3895
    %v3897 = vand.u32 %v3356, 4294901760
    %3898 = vmatmul.mubr.f32.gmra.mxu0 %v3897
    %v3899 = vpop.f32.mrf.mxu0
    %v3900 = vadd.f32 %v3507, %v3899
    %v3901 = vpop.f32.mrf.mxu0
    %v3902 = vadd.f32 %v3509, %v3901
    %3903 = vdwg.mxu0
    %v3904 = vand.u32 %v60, 4294901760
    %v3905 = vsub.f32 %v60, %v3904
    %3906 = vmatprep.subr.mxu0 %v3905
    %v3907 = vand.u32 %v59, 4294901760
    %v3908 = vsub.f32 %v59, %v3907
    %3909 = vmatpush1.msra.mxu0 %v3908
    %v3910 = vand.u32 %v58, 4294901760
    %v3911 = vsub.f32 %v58, %v3910
    %3912 = vmatprep.subr.mxu0 %v3911
    %v3913 = vand.u32 %v57, 4294901760
    %v3914 = vsub.f32 %v57, %v3913
    %3915 = vmatpush1.msra.mxu0 %v3914
    %v3916 = vand.u32 %v56, 4294901760
    %v3917 = vsub.f32 %v56, %v3916
    %3918 = vmatprep.subr.mxu0 %v3917
    %v3919 = vand.u32 %v55, 4294901760
    %v3920 = vsub.f32 %v55, %v3919
    %3921 = vmatpush1.msra.mxu0 %v3920
    %v3922 = vand.u32 %v54, 4294901760
    %v3923 = vsub.f32 %v54, %v3922
    %3924 = vmatprep.subr.mxu0 %v3923
    %v3925 = vand.u32 %v53, 4294901760
    %v3926 = vsub.f32 %v53, %v3925
    %3927 = vmatpush1.msra.mxu0 %v3926
    %v3928 = vand.u32 %v52, 4294901760
    %v3929 = vsub.f32 %v52, %v3928
    %3930 = vmatprep.subr.mxu0 %v3929
    %v3931 = vand.u32 %v51, 4294901760
    %v3932 = vsub.f32 %v51, %v3931
    %3933 = vmatpush1.msra.mxu0 %v3932
    %v3934 = vand.u32 %v50, 4294901760
    %v3935 = vsub.f32 %v50, %v3934
    %3936 = vmatprep.subr.mxu0 %v3935
    %v3937 = vand.u32 %v49, 4294901760
    %v3938 = vsub.f32 %v49, %v3937
    %3939 = vmatpush1.msra.mxu0 %v3938
    %v3940 = vand.u32 %v48, 4294901760
    %v3941 = vsub.f32 %v48, %v3940
    %3942 = vmatprep.subr.mxu0 %v3941
    %v3943 = vand.u32 %v47, 4294901760
    %v3944 = vsub.f32 %v47, %v3943
    %3945 = vmatpush1.msra.mxu0 %v3944
    %v3946 = vand.u32 %v46, 4294901760
    %v3947 = vsub.f32 %v46, %v3946
    %3948 = vmatprep.subr.mxu0 %v3947
    %v3949 = vand.u32 %v45, 4294901760
    %v3950 = vsub.f32 %v45, %v3949
    %3951 = vmatpush1.msra.mxu0 %v3950
    %v3952 = vand.u32 %v44, 4294901760
    %v3953 = vsub.f32 %v44, %v3952
    %3954 = vmatprep.subr.mxu0 %v3953
    %v3955 = vand.u32 %v43, 4294901760
    %v3956 = vsub.f32 %v43, %v3955
    %3957 = vmatpush1.msra.mxu0 %v3956
    %v3958 = vand.u32 %v42, 4294901760
    %v3959 = vsub.f32 %v42, %v3958
    %3960 = vmatprep.subr.mxu0 %v3959
    %v3961 = vand.u32 %v41, 4294901760
    %v3962 = vsub.f32 %v41, %v3961
    %3963 = vmatpush1.msra.mxu0 %v3962
    %v3964 = vand.u32 %v40, 4294901760
    %v3965 = vsub.f32 %v40, %v3964
    %3966 = vmatprep.subr.mxu0 %v3965
    %v3967 = vand.u32 %v39, 4294901760
    %v3968 = vsub.f32 %v39, %v3967
    %3969 = vmatpush1.msra.mxu0 %v3968
    %v3970 = vand.u32 %v38, 4294901760
    %v3971 = vsub.f32 %v38, %v3970
    %3972 = vmatprep.subr.mxu0 %v3971
    %v3973 = vand.u32 %v37, 4294901760
    %v3974 = vsub.f32 %v37, %v3973
    %3975 = vmatpush1.msra.mxu0 %v3974
    %v3976 = vand.u32 %v36, 4294901760
    %v3977 = vsub.f32 %v36, %v3976
    %3978 = vmatprep.subr.mxu0 %v3977
    %v3979 = vand.u32 %v35, 4294901760
    %v3980 = vsub.f32 %v35, %v3979
    %3981 = vmatpush1.msra.mxu0 %v3980
    %v3982 = vand.u32 %v34, 4294901760
    %v3983 = vsub.f32 %v34, %v3982
    %3984 = vmatprep.subr.mxu0 %v3983
    %v3985 = vand.u32 %v33, 4294901760
    %v3986 = vsub.f32 %v33, %v3985
    %3987 = vmatpush1.msra.mxu0 %v3986
    %v3988 = vand.u32 %v32, 4294901760
    %v3989 = vsub.f32 %v32, %v3988
    %3990 = vmatprep.subr.mxu0 %v3989
    %v3991 = vand.u32 %v31, 4294901760
    %v3992 = vsub.f32 %v31, %v3991
    %3993 = vmatpush1.msra.mxu0 %v3992
    %v3994 = vand.u32 %v30, 4294901760
    %v3995 = vsub.f32 %v30, %v3994
    %3996 = vmatprep.subr.mxu0 %v3995
    %v3997 = vand.u32 %v29, 4294901760
    %v3998 = vsub.f32 %v29, %v3997
    %3999 = vmatpush1.msra.mxu0 %v3998
    %v4000 = vand.u32 %v92, 4294901760
    %v4001 = vsub.f32 %v92, %v4000
    %4002 = vmatprep.subr.mxu0 %v4001
    %v4003 = vand.u32 %v91, 4294901760
    %v4004 = vsub.f32 %v91, %v4003
    %4005 = vmatpush2.msra.mxu0 %v4004
    %v4006 = vand.u32 %v90, 4294901760
    %v4007 = vsub.f32 %v90, %v4006
    %4008 = vmatprep.subr.mxu0 %v4007
    %v4009 = vand.u32 %v89, 4294901760
    %v4010 = vsub.f32 %v89, %v4009
    %4011 = vmatpush2.msra.mxu0 %v4010
    %v4012 = vand.u32 %v88, 4294901760
    %v4013 = vsub.f32 %v88, %v4012
    %4014 = vmatprep.subr.mxu0 %v4013
    %v4015 = vand.u32 %v87, 4294901760
    %v4016 = vsub.f32 %v87, %v4015
    %4017 = vmatpush2.msra.mxu0 %v4016
    %v4018 = vand.u32 %v86, 4294901760
    %v4019 = vsub.f32 %v86, %v4018
    %4020 = vmatprep.subr.mxu0 %v4019
    %v4021 = vand.u32 %v85, 4294901760
    %v4022 = vsub.f32 %v85, %v4021
    %4023 = vmatpush2.msra.mxu0 %v4022
    %v4024 = vand.u32 %v84, 4294901760
    %v4025 = vsub.f32 %v84, %v4024
    %4026 = vmatprep.subr.mxu0 %v4025
    %v4027 = vand.u32 %v83, 4294901760
    %v4028 = vsub.f32 %v83, %v4027
    %4029 = vmatpush2.msra.mxu0 %v4028
    %v4030 = vand.u32 %v82, 4294901760
    %v4031 = vsub.f32 %v82, %v4030
    %4032 = vmatprep.subr.mxu0 %v4031
    %v4033 = vand.u32 %v81, 4294901760
    %v4034 = vsub.f32 %v81, %v4033
    %4035 = vmatpush2.msra.mxu0 %v4034
    %v4036 = vand.u32 %v80, 4294901760
    %v4037 = vsub.f32 %v80, %v4036
    %4038 = vmatprep.subr.mxu0 %v4037
    %v4039 = vand.u32 %v79, 4294901760
    %v4040 = vsub.f32 %v79, %v4039
    %4041 = vmatpush2.msra.mxu0 %v4040
    %v4042 = vand.u32 %v78, 4294901760
    %v4043 = vsub.f32 %v78, %v4042
    %4044 = vmatprep.subr.mxu0 %v4043
    %v4045 = vand.u32 %v77, 4294901760
    %v4046 = vsub.f32 %v77, %v4045
    %4047 = vmatpush2.msra.mxu0 %v4046
    %v4048 = vand.u32 %v76, 4294901760
    %v4049 = vsub.f32 %v76, %v4048
    %4050 = vmatprep.subr.mxu0 %v4049
    %v4051 = vand.u32 %v75, 4294901760
    %v4052 = vsub.f32 %v75, %v4051
    %4053 = vmatpush2.msra.mxu0 %v4052
    %v4054 = vand.u32 %v74, 4294901760
    %v4055 = vsub.f32 %v74, %v4054
    %4056 = vmatprep.subr.mxu0 %v4055
    %v4057 = vand.u32 %v73, 4294901760
    %v4058 = vsub.f32 %v73, %v4057
    %4059 = vmatpush2.msra.mxu0 %v4058
    %v4060 = vand.u32 %v72, 4294901760
    %v4061 = vsub.f32 %v72, %v4060
    %4062 = vmatprep.subr.mxu0 %v4061
    %v4063 = vand.u32 %v71, 4294901760
    %v4064 = vsub.f32 %v71, %v4063
    %4065 = vmatpush2.msra.mxu0 %v4064
    %v4066 = vand.u32 %v70, 4294901760
    %v4067 = vsub.f32 %v70, %v4066
    %4068 = vmatprep.subr.mxu0 %v4067
    %v4069 = vand.u32 %v69, 4294901760
    %v4070 = vsub.f32 %v69, %v4069
    %4071 = vmatpush2.msra.mxu0 %v4070
    %v4072 = vand.u32 %v68, 4294901760
    %v4073 = vsub.f32 %v68, %v4072
    %4074 = vmatprep.subr.mxu0 %v4073
    %v4075 = vand.u32 %v67, 4294901760
    %v4076 = vsub.f32 %v67, %v4075
    %4077 = vmatpush2.msra.mxu0 %v4076
    %v4078 = vand.u32 %v66, 4294901760
    %v4079 = vsub.f32 %v66, %v4078
    %4080 = vmatprep.subr.mxu0 %v4079
    %v4081 = vand.u32 %v65, 4294901760
    %v4082 = vsub.f32 %v65, %v4081
    %4083 = vmatpush2.msra.mxu0 %v4082
    %v4084 = vand.u32 %v64, 4294901760
    %v4085 = vsub.f32 %v64, %v4084
    %4086 = vmatprep.subr.mxu0 %v4085
    %v4087 = vand.u32 %v63, 4294901760
    %v4088 = vsub.f32 %v63, %v4087
    %4089 = vmatpush2.msra.mxu0 %v4088
    %v4090 = vand.u32 %v62, 4294901760
    %v4091 = vsub.f32 %v62, %v4090
    %4092 = vmatprep.subr.mxu0 %v4091
    %v4093 = vand.u32 %v61, 4294901760
    %v4094 = vsub.f32 %v61, %v4093
    %4095 = vmatpush2.msra.mxu0 %v4094
    %v4096 = vand.u32 %v3357, 4294901760
    %v4097 = vsub.f32 %v3357, %v4096
    %4098 = vmatprep.mubr.f32.mxu0 %v4097
    %v4099 = vand.u32 %v3356, 4294901760
    %v4100 = vsub.f32 %v3356, %v4099
    %4101 = vmatmul.mubr.f32.gmra.mxu0 %v4100
    %v4102 = vpop.f32.mrf.mxu0
    %v4103 = vadd.f32 %v3900, %v4102
    %v4104 = vpop.f32.mrf.mxu0
    %v4105 = vadd.f32 %v3902, %v4104
    %4106 = vdwg.mxu0
    %v4107 = vand.u32 %v60, 4294901760
    %4108 = vmatprep.subr.mxu0 %v4107
    %v4109 = vand.u32 %v59, 4294901760
    %4110 = vmatpush1.msra.mxu0 %v4109
    %v4111 = vand.u32 %v58, 4294901760
    %4112 = vmatprep.subr.mxu0 %v4111
    %v4113 = vand.u32 %v57, 4294901760
    %4114 = vmatpush1.msra.mxu0 %v4113
    %v4115 = vand.u32 %v56, 4294901760
    %4116 = vmatprep.subr.mxu0 %v4115
    %v4117 = vand.u32 %v55, 4294901760
    %4118 = vmatpush1.msra.mxu0 %v4117
    %v4119 = vand.u32 %v54, 4294901760
    %4120 = vmatprep.subr.mxu0 %v4119
    %v4121 = vand.u32 %v53, 4294901760
    %4122 = vmatpush1.msra.mxu0 %v4121
    %v4123 = vand.u32 %v52, 4294901760
    %4124 = vmatprep.subr.mxu0 %v4123
    %v4125 = vand.u32 %v51, 4294901760
    %4126 = vmatpush1.msra.mxu0 %v4125
    %v4127 = vand.u32 %v50, 4294901760
    %4128 = vmatprep.subr.mxu0 %v4127
    %v4129 = vand.u32 %v49, 4294901760
    %4130 = vmatpush1.msra.mxu0 %v4129
    %v4131 = vand.u32 %v48, 4294901760
    %4132 = vmatprep.subr.mxu0 %v4131
    %v4133 = vand.u32 %v47, 4294901760
    %4134 = vmatpush1.msra.mxu0 %v4133
    %v4135 = vand.u32 %v46, 4294901760
    %4136 = vmatprep.subr.mxu0 %v4135
    %v4137 = vand.u32 %v45, 4294901760
    %4138 = vmatpush1.msra.mxu0 %v4137
    %v4139 = vand.u32 %v44, 4294901760
    %4140 = vmatprep.subr.mxu0 %v4139
    %v4141 = vand.u32 %v43, 4294901760
    %4142 = vmatpush1.msra.mxu0 %v4141
    %v4143 = vand.u32 %v42, 4294901760
    %4144 = vmatprep.subr.mxu0 %v4143
    %v4145 = vand.u32 %v41, 4294901760
    %4146 = vmatpush1.msra.mxu0 %v4145
    %v4147 = vand.u32 %v40, 4294901760
    %4148 = vmatprep.subr.mxu0 %v4147
    %v4149 = vand.u32 %v39, 4294901760
    %4150 = vmatpush1.msra.mxu0 %v4149
    %v4151 = vand.u32 %v38, 4294901760
    %4152 = vmatprep.subr.mxu0 %v4151
    %v4153 = vand.u32 %v37, 4294901760
    %4154 = vmatpush1.msra.mxu0 %v4153
    %v4155 = vand.u32 %v36, 4294901760
    %4156 = vmatprep.subr.mxu0 %v4155
    %v4157 = vand.u32 %v35, 4294901760
    %4158 = vmatpush1.msra.mxu0 %v4157
    %v4159 = vand.u32 %v34, 4294901760
    %4160 = vmatprep.subr.mxu0 %v4159
    %v4161 = vand.u32 %v33, 4294901760
    %4162 = vmatpush1.msra.mxu0 %v4161
    %v4163 = vand.u32 %v32, 4294901760
    %4164 = vmatprep.subr.mxu0 %v4163
    %v4165 = vand.u32 %v31, 4294901760
    %4166 = vmatpush1.msra.mxu0 %v4165
    %v4167 = vand.u32 %v30, 4294901760
    %4168 = vmatprep.subr.mxu0 %v4167
    %v4169 = vand.u32 %v29, 4294901760
    %4170 = vmatpush1.msra.mxu0 %v4169
    %v4171 = vand.u32 %v92, 4294901760
    %4172 = vmatprep.subr.mxu0 %v4171
    %v4173 = vand.u32 %v91, 4294901760
    %4174 = vmatpush2.msra.mxu0 %v4173
    %v4175 = vand.u32 %v90, 4294901760
    %4176 = vmatprep.subr.mxu0 %v4175
    %v4177 = vand.u32 %v89, 4294901760
    %4178 = vmatpush2.msra.mxu0 %v4177
    %v4179 = vand.u32 %v88, 4294901760
    %4180 = vmatprep.subr.mxu0 %v4179
    %v4181 = vand.u32 %v87, 4294901760
    %4182 = vmatpush2.msra.mxu0 %v4181
    %v4183 = vand.u32 %v86, 4294901760
    %4184 = vmatprep.subr.mxu0 %v4183
    %v4185 = vand.u32 %v85, 4294901760
    %4186 = vmatpush2.msra.mxu0 %v4185
    %v4187 = vand.u32 %v84, 4294901760
    %4188 = vmatprep.subr.mxu0 %v4187
    %v4189 = vand.u32 %v83, 4294901760
    %4190 = vmatpush2.msra.mxu0 %v4189
    %v4191 = vand.u32 %v82, 4294901760
    %4192 = vmatprep.subr.mxu0 %v4191
    %v4193 = vand.u32 %v81, 4294901760
    %4194 = vmatpush2.msra.mxu0 %v4193
    %v4195 = vand.u32 %v80, 4294901760
    %4196 = vmatprep.subr.mxu0 %v4195
    %v4197 = vand.u32 %v79, 4294901760
    %4198 = vmatpush2.msra.mxu0 %v4197
    %v4199 = vand.u32 %v78, 4294901760
    %4200 = vmatprep.subr.mxu0 %v4199
    %v4201 = vand.u32 %v77, 4294901760
    %4202 = vmatpush2.msra.mxu0 %v4201
    %v4203 = vand.u32 %v76, 4294901760
    %4204 = vmatprep.subr.mxu0 %v4203
    %v4205 = vand.u32 %v75, 4294901760
    %4206 = vmatpush2.msra.mxu0 %v4205
    %v4207 = vand.u32 %v74, 4294901760
    %4208 = vmatprep.subr.mxu0 %v4207
    %v4209 = vand.u32 %v73, 4294901760
    %4210 = vmatpush2.msra.mxu0 %v4209
    %v4211 = vand.u32 %v72, 4294901760
    %4212 = vmatprep.subr.mxu0 %v4211
    %v4213 = vand.u32 %v71, 4294901760
    %4214 = vmatpush2.msra.mxu0 %v4213
    %v4215 = vand.u32 %v70, 4294901760
    %4216 = vmatprep.subr.mxu0 %v4215
    %v4217 = vand.u32 %v69, 4294901760
    %4218 = vmatpush2.msra.mxu0 %v4217
    %v4219 = vand.u32 %v68, 4294901760
    %4220 = vmatprep.subr.mxu0 %v4219
    %v4221 = vand.u32 %v67, 4294901760
    %4222 = vmatpush2.msra.mxu0 %v4221
    %v4223 = vand.u32 %v66, 4294901760
    %4224 = vmatprep.subr.mxu0 %v4223
    %v4225 = vand.u32 %v65, 4294901760
    %4226 = vmatpush2.msra.mxu0 %v4225
    %v4227 = vand.u32 %v64, 4294901760
    %4228 = vmatprep.subr.mxu0 %v4227
    %v4229 = vand.u32 %v63, 4294901760
    %4230 = vmatpush2.msra.mxu0 %v4229
    %v4231 = vand.u32 %v62, 4294901760
    %4232 = vmatprep.subr.mxu0 %v4231
    %v4233 = vand.u32 %v61, 4294901760
    %4234 = vmatpush2.msra.mxu0 %v4233
    %v4235 = vand.u32 %v3357, 4294901760
    %v4236 = vsub.f32 %v3357, %v4235
    %v4237 = vand.u32 %v4236, 4294901760
    %4238 = vmatprep.mubr.f32.mxu0 %v4237
    %v4239 = vand.u32 %v3356, 4294901760
    %v4240 = vsub.f32 %v3356, %v4239
    %v4241 = vand.u32 %v4240, 4294901760
    %4242 = vmatmul.mubr.f32.gmra.mxu0 %v4241
    %v4243 = vpop.f32.mrf.mxu0
    %v4244 = vadd.f32 %v4103, %v4243
    %v4245 = vpop.f32.mrf.mxu0
    %v4246 = vadd.f32 %v4105, %v4245
    %4247 = vdwg.mxu0
    %v4248 = vand.u32 %v60, 4294901760
    %v4249 = vsub.f32 %v60, %v4248
    %v4250 = vand.u32 %v4249, 4294901760
    %4251 = vmatprep.subr.mxu0 %v4250
    %v4252 = vand.u32 %v59, 4294901760
    %v4253 = vsub.f32 %v59, %v4252
    %v4254 = vand.u32 %v4253, 4294901760
    %4255 = vmatpush1.msra.mxu0 %v4254
    %v4256 = vand.u32 %v58, 4294901760
    %v4257 = vsub.f32 %v58, %v4256
    %v4258 = vand.u32 %v4257, 4294901760
    %4259 = vmatprep.subr.mxu0 %v4258
    %v4260 = vand.u32 %v57, 4294901760
    %v4261 = vsub.f32 %v57, %v4260
    %v4262 = vand.u32 %v4261, 4294901760
    %4263 = vmatpush1.msra.mxu0 %v4262
    %v4264 = vand.u32 %v56, 4294901760
    %v4265 = vsub.f32 %v56, %v4264
    %v4266 = vand.u32 %v4265, 4294901760
    %4267 = vmatprep.subr.mxu0 %v4266
    %v4268 = vand.u32 %v55, 4294901760
    %v4269 = vsub.f32 %v55, %v4268
    %v4270 = vand.u32 %v4269, 4294901760
    %4271 = vmatpush1.msra.mxu0 %v4270
    %v4272 = vand.u32 %v54, 4294901760
    %v4273 = vsub.f32 %v54, %v4272
    %v4274 = vand.u32 %v4273, 4294901760
    %4275 = vmatprep.subr.mxu0 %v4274
    %v4276 = vand.u32 %v53, 4294901760
    %v4277 = vsub.f32 %v53, %v4276
    %v4278 = vand.u32 %v4277, 4294901760
    %4279 = vmatpush1.msra.mxu0 %v4278
    %v4280 = vand.u32 %v52, 4294901760
    %v4281 = vsub.f32 %v52, %v4280
    %v4282 = vand.u32 %v4281, 4294901760
    %4283 = vmatprep.subr.mxu0 %v4282
    %v4284 = vand.u32 %v51, 4294901760
    %v4285 = vsub.f32 %v51, %v4284
    %v4286 = vand.u32 %v4285, 4294901760
    %4287 = vmatpush1.msra.mxu0 %v4286
    %v4288 = vand.u32 %v50, 4294901760
    %v4289 = vsub.f32 %v50, %v4288
    %v4290 = vand.u32 %v4289, 4294901760
    %4291 = vmatprep.subr.mxu0 %v4290
    %v4292 = vand.u32 %v49, 4294901760
    %v4293 = vsub.f32 %v49, %v4292
    %v4294 = vand.u32 %v4293, 4294901760
    %4295 = vmatpush1.msra.mxu0 %v4294
    %v4296 = vand.u32 %v48, 4294901760
    %v4297 = vsub.f32 %v48, %v4296
    %v4298 = vand.u32 %v4297, 4294901760
    %4299 = vmatprep.subr.mxu0 %v4298
    %v4300 = vand.u32 %v47, 4294901760
    %v4301 = vsub.f32 %v47, %v4300
    %v4302 = vand.u32 %v4301, 4294901760
    %4303 = vmatpush1.msra.mxu0 %v4302
    %v4304 = vand.u32 %v46, 4294901760
    %v4305 = vsub.f32 %v46, %v4304
    %v4306 = vand.u32 %v4305, 4294901760
    %4307 = vmatprep.subr.mxu0 %v4306
    %v4308 = vand.u32 %v45, 4294901760
    %v4309 = vsub.f32 %v45, %v4308
    %v4310 = vand.u32 %v4309, 4294901760
    %4311 = vmatpush1.msra.mxu0 %v4310
    %v4312 = vand.u32 %v44, 4294901760
    %v4313 = vsub.f32 %v44, %v4312
    %v4314 = vand.u32 %v4313, 4294901760
    %4315 = vmatprep.subr.mxu0 %v4314
    %v4316 = vand.u32 %v43, 4294901760
    %v4317 = vsub.f32 %v43, %v4316
    %v4318 = vand.u32 %v4317, 4294901760
    %4319 = vmatpush1.msra.mxu0 %v4318
    %v4320 = vand.u32 %v42, 4294901760
    %v4321 = vsub.f32 %v42, %v4320
    %v4322 = vand.u32 %v4321, 4294901760
    %4323 = vmatprep.subr.mxu0 %v4322
    %v4324 = vand.u32 %v41, 4294901760
    %v4325 = vsub.f32 %v41, %v4324
    %v4326 = vand.u32 %v4325, 4294901760
    %4327 = vmatpush1.msra.mxu0 %v4326
    %v4328 = vand.u32 %v40, 4294901760
    %v4329 = vsub.f32 %v40, %v4328
    %v4330 = vand.u32 %v4329, 4294901760
    %4331 = vmatprep.subr.mxu0 %v4330
    %v4332 = vand.u32 %v39, 4294901760
    %v4333 = vsub.f32 %v39, %v4332
    %v4334 = vand.u32 %v4333, 4294901760
    %4335 = vmatpush1.msra.mxu0 %v4334
    %v4336 = vand.u32 %v38, 4294901760
    %v4337 = vsub.f32 %v38, %v4336
    %v4338 = vand.u32 %v4337, 4294901760
    %4339 = vmatprep.subr.mxu0 %v4338
    %v4340 = vand.u32 %v37, 4294901760
    %v4341 = vsub.f32 %v37, %v4340
    %v4342 = vand.u32 %v4341, 4294901760
    %4343 = vmatpush1.msra.mxu0 %v4342
    %v4344 = vand.u32 %v36, 4294901760
    %v4345 = vsub.f32 %v36, %v4344
    %v4346 = vand.u32 %v4345, 4294901760
    %4347 = vmatprep.subr.mxu0 %v4346
    %v4348 = vand.u32 %v35, 4294901760
    %v4349 = vsub.f32 %v35, %v4348
    %v4350 = vand.u32 %v4349, 4294901760
    %4351 = vmatpush1.msra.mxu0 %v4350
    %v4352 = vand.u32 %v34, 4294901760
    %v4353 = vsub.f32 %v34, %v4352
    %v4354 = vand.u32 %v4353, 4294901760
    %4355 = vmatprep.subr.mxu0 %v4354
    %v4356 = vand.u32 %v33, 4294901760
    %v4357 = vsub.f32 %v33, %v4356
    %v4358 = vand.u32 %v4357, 4294901760
    %4359 = vmatpush1.msra.mxu0 %v4358
    %v4360 = vand.u32 %v32, 4294901760
    %v4361 = vsub.f32 %v32, %v4360
    %v4362 = vand.u32 %v4361, 4294901760
    %4363 = vmatprep.subr.mxu0 %v4362
    %v4364 = vand.u32 %v31, 4294901760
    %v4365 = vsub.f32 %v31, %v4364
    %v4366 = vand.u32 %v4365, 4294901760
    %4367 = vmatpush1.msra.mxu0 %v4366
    %v4368 = vand.u32 %v30, 4294901760
    %v4369 = vsub.f32 %v30, %v4368
    %v4370 = vand.u32 %v4369, 4294901760
    %4371 = vmatprep.subr.mxu0 %v4370
    %v4372 = vand.u32 %v29, 4294901760
    %v4373 = vsub.f32 %v29, %v4372
    %v4374 = vand.u32 %v4373, 4294901760
    %4375 = vmatpush1.msra.mxu0 %v4374
    %v4376 = vand.u32 %v92, 4294901760
    %v4377 = vsub.f32 %v92, %v4376
    %v4378 = vand.u32 %v4377, 4294901760
    %4379 = vmatprep.subr.mxu0 %v4378
    %v4380 = vand.u32 %v91, 4294901760
    %v4381 = vsub.f32 %v91, %v4380
    %v4382 = vand.u32 %v4381, 4294901760
    %4383 = vmatpush2.msra.mxu0 %v4382
    %v4384 = vand.u32 %v90, 4294901760
    %v4385 = vsub.f32 %v90, %v4384
    %v4386 = vand.u32 %v4385, 4294901760
    %4387 = vmatprep.subr.mxu0 %v4386
    %v4388 = vand.u32 %v89, 4294901760
    %v4389 = vsub.f32 %v89, %v4388
    %v4390 = vand.u32 %v4389, 4294901760
    %4391 = vmatpush2.msra.mxu0 %v4390
    %v4392 = vand.u32 %v88, 4294901760
    %v4393 = vsub.f32 %v88, %v4392
    %v4394 = vand.u32 %v4393, 4294901760
    %4395 = vmatprep.subr.mxu0 %v4394
    %v4396 = vand.u32 %v87, 4294901760
    %v4397 = vsub.f32 %v87, %v4396
    %v4398 = vand.u32 %v4397, 4294901760
    %4399 = vmatpush2.msra.mxu0 %v4398
    %v4400 = vand.u32 %v86, 4294901760
    %v4401 = vsub.f32 %v86, %v4400
    %v4402 = vand.u32 %v4401, 4294901760
    %4403 = vmatprep.subr.mxu0 %v4402
    %v4404 = vand.u32 %v85, 4294901760
    %v4405 = vsub.f32 %v85, %v4404
    %v4406 = vand.u32 %v4405, 4294901760
    %4407 = vmatpush2.msra.mxu0 %v4406
    %v4408 = vand.u32 %v84, 4294901760
    %v4409 = vsub.f32 %v84, %v4408
    %v4410 = vand.u32 %v4409, 4294901760
    %4411 = vmatprep.subr.mxu0 %v4410
    %v4412 = vand.u32 %v83, 4294901760
    %v4413 = vsub.f32 %v83, %v4412
    %v4414 = vand.u32 %v4413, 4294901760
    %4415 = vmatpush2.msra.mxu0 %v4414
    %v4416 = vand.u32 %v82, 4294901760
    %v4417 = vsub.f32 %v82, %v4416
    %v4418 = vand.u32 %v4417, 4294901760
    %4419 = vmatprep.subr.mxu0 %v4418
    %v4420 = vand.u32 %v81, 4294901760
    %v4421 = vsub.f32 %v81, %v4420
    %v4422 = vand.u32 %v4421, 4294901760
    %4423 = vmatpush2.msra.mxu0 %v4422
    %v4424 = vand.u32 %v80, 4294901760
    %v4425 = vsub.f32 %v80, %v4424
    %v4426 = vand.u32 %v4425, 4294901760
    %4427 = vmatprep.subr.mxu0 %v4426
    %v4428 = vand.u32 %v79, 4294901760
    %v4429 = vsub.f32 %v79, %v4428
    %v4430 = vand.u32 %v4429, 4294901760
    %4431 = vmatpush2.msra.mxu0 %v4430
    %v4432 = vand.u32 %v78, 4294901760
    %v4433 = vsub.f32 %v78, %v4432
    %v4434 = vand.u32 %v4433, 4294901760
    %4435 = vmatprep.subr.mxu0 %v4434
    %v4436 = vand.u32 %v77, 4294901760
    %v4437 = vsub.f32 %v77, %v4436
    %v4438 = vand.u32 %v4437, 4294901760
    %4439 = vmatpush2.msra.mxu0 %v4438
    %v4440 = vand.u32 %v76, 4294901760
    %v4441 = vsub.f32 %v76, %v4440
    %v4442 = vand.u32 %v4441, 4294901760
    %4443 = vmatprep.subr.mxu0 %v4442
    %v4444 = vand.u32 %v75, 4294901760
    %v4445 = vsub.f32 %v75, %v4444
    %v4446 = vand.u32 %v4445, 4294901760
    %4447 = vmatpush2.msra.mxu0 %v4446
    %v4448 = vand.u32 %v74, 4294901760
    %v4449 = vsub.f32 %v74, %v4448
    %v4450 = vand.u32 %v4449, 4294901760
    %4451 = vmatprep.subr.mxu0 %v4450
    %v4452 = vand.u32 %v73, 4294901760
    %v4453 = vsub.f32 %v73, %v4452
    %v4454 = vand.u32 %v4453, 4294901760
    %4455 = vmatpush2.msra.mxu0 %v4454
    %v4456 = vand.u32 %v72, 4294901760
    %v4457 = vsub.f32 %v72, %v4456
    %v4458 = vand.u32 %v4457, 4294901760
    %4459 = vmatprep.subr.mxu0 %v4458
    %v4460 = vand.u32 %v71, 4294901760
    %v4461 = vsub.f32 %v71, %v4460
    %v4462 = vand.u32 %v4461, 4294901760
    %4463 = vmatpush2.msra.mxu0 %v4462
    %v4464 = vand.u32 %v70, 4294901760
    %v4465 = vsub.f32 %v70, %v4464
    %v4466 = vand.u32 %v4465, 4294901760
    %4467 = vmatprep.subr.mxu0 %v4466
    %v4468 = vand.u32 %v69, 4294901760
    %v4469 = vsub.f32 %v69, %v4468
    %v4470 = vand.u32 %v4469, 4294901760
    %4471 = vmatpush2.msra.mxu0 %v4470
    %v4472 = vand.u32 %v68, 4294901760
    %v4473 = vsub.f32 %v68, %v4472
    %v4474 = vand.u32 %v4473, 4294901760
    %4475 = vmatprep.subr.mxu0 %v4474
    %v4476 = vand.u32 %v67, 4294901760
    %v4477 = vsub.f32 %v67, %v4476
    %v4478 = vand.u32 %v4477, 4294901760
    %4479 = vmatpush2.msra.mxu0 %v4478
    %v4480 = vand.u32 %v66, 4294901760
    %v4481 = vsub.f32 %v66, %v4480
    %v4482 = vand.u32 %v4481, 4294901760
    %4483 = vmatprep.subr.mxu0 %v4482
    %v4484 = vand.u32 %v65, 4294901760
    %v4485 = vsub.f32 %v65, %v4484
    %v4486 = vand.u32 %v4485, 4294901760
    %4487 = vmatpush2.msra.mxu0 %v4486
    %v4488 = vand.u32 %v64, 4294901760
    %v4489 = vsub.f32 %v64, %v4488
    %v4490 = vand.u32 %v4489, 4294901760
    %4491 = vmatprep.subr.mxu0 %v4490
    %v4492 = vand.u32 %v63, 4294901760
    %v4493 = vsub.f32 %v63, %v4492
    %v4494 = vand.u32 %v4493, 4294901760
    %4495 = vmatpush2.msra.mxu0 %v4494
    %v4496 = vand.u32 %v62, 4294901760
    %v4497 = vsub.f32 %v62, %v4496
    %v4498 = vand.u32 %v4497, 4294901760
    %4499 = vmatprep.subr.mxu0 %v4498
    %v4500 = vand.u32 %v61, 4294901760
    %v4501 = vsub.f32 %v61, %v4500
    %v4502 = vand.u32 %v4501, 4294901760
    %4503 = vmatpush2.msra.mxu0 %v4502
    %v4504 = vand.u32 %v3357, 4294901760
    %4505 = vmatprep.mubr.f32.mxu0 %v4504
    %v4506 = vand.u32 %v3356, 4294901760
    %4507 = vmatmul.mubr.f32.gmra.mxu0 %v4506
    %v4508 = vpop.f32.mrf.mxu0
    %v4509 = vadd.f32 %v4244, %v4508
    %v4510 = vpop.f32.mrf.mxu0
    %v4511 = vadd.f32 %v4246, %v4510
    %4512 = vdwg.mxu0
    %v4513 = vand.u32 %v60, 4294901760
    %4514 = vmatprep.subr.mxu0 %v4513
    %v4515 = vand.u32 %v59, 4294901760
    %4516 = vmatpush1.msra.mxu0 %v4515
    %v4517 = vand.u32 %v58, 4294901760
    %4518 = vmatprep.subr.mxu0 %v4517
    %v4519 = vand.u32 %v57, 4294901760
    %4520 = vmatpush1.msra.mxu0 %v4519
    %v4521 = vand.u32 %v56, 4294901760
    %4522 = vmatprep.subr.mxu0 %v4521
    %v4523 = vand.u32 %v55, 4294901760
    %4524 = vmatpush1.msra.mxu0 %v4523
    %v4525 = vand.u32 %v54, 4294901760
    %4526 = vmatprep.subr.mxu0 %v4525
    %v4527 = vand.u32 %v53, 4294901760
    %4528 = vmatpush1.msra.mxu0 %v4527
    %v4529 = vand.u32 %v52, 4294901760
    %4530 = vmatprep.subr.mxu0 %v4529
    %v4531 = vand.u32 %v51, 4294901760
    %4532 = vmatpush1.msra.mxu0 %v4531
    %v4533 = vand.u32 %v50, 4294901760
    %4534 = vmatprep.subr.mxu0 %v4533
    %v4535 = vand.u32 %v49, 4294901760
    %4536 = vmatpush1.msra.mxu0 %v4535
    %v4537 = vand.u32 %v48, 4294901760
    %4538 = vmatprep.subr.mxu0 %v4537
    %v4539 = vand.u32 %v47, 4294901760
    %4540 = vmatpush1.msra.mxu0 %v4539
    %v4541 = vand.u32 %v46, 4294901760
    %4542 = vmatprep.subr.mxu0 %v4541
    %v4543 = vand.u32 %v45, 4294901760
    %4544 = vmatpush1.msra.mxu0 %v4543
    %v4545 = vand.u32 %v44, 4294901760
    %4546 = vmatprep.subr.mxu0 %v4545
    %v4547 = vand.u32 %v43, 4294901760
    %4548 = vmatpush1.msra.mxu0 %v4547
    %v4549 = vand.u32 %v42, 4294901760
    %4550 = vmatprep.subr.mxu0 %v4549
    %v4551 = vand.u32 %v41, 4294901760
    %4552 = vmatpush1.msra.mxu0 %v4551
    %v4553 = vand.u32 %v40, 4294901760
    %4554 = vmatprep.subr.mxu0 %v4553
    %v4555 = vand.u32 %v39, 4294901760
    %4556 = vmatpush1.msra.mxu0 %v4555
    %v4557 = vand.u32 %v38, 4294901760
    %4558 = vmatprep.subr.mxu0 %v4557
    %v4559 = vand.u32 %v37, 4294901760
    %4560 = vmatpush1.msra.mxu0 %v4559
    %v4561 = vand.u32 %v36, 4294901760
    %4562 = vmatprep.subr.mxu0 %v4561
    %v4563 = vand.u32 %v35, 4294901760
    %4564 = vmatpush1.msra.mxu0 %v4563
    %v4565 = vand.u32 %v34, 4294901760
    %4566 = vmatprep.subr.mxu0 %v4565
    %v4567 = vand.u32 %v33, 4294901760
    %4568 = vmatpush1.msra.mxu0 %v4567
    %v4569 = vand.u32 %v32, 4294901760
    %4570 = vmatprep.subr.mxu0 %v4569
    %v4571 = vand.u32 %v31, 4294901760
    %4572 = vmatpush1.msra.mxu0 %v4571
    %v4573 = vand.u32 %v30, 4294901760
    %4574 = vmatprep.subr.mxu0 %v4573
    %v4575 = vand.u32 %v29, 4294901760
    %4576 = vmatpush1.msra.mxu0 %v4575
    %v4577 = vand.u32 %v92, 4294901760
    %4578 = vmatprep.subr.mxu0 %v4577
    %v4579 = vand.u32 %v91, 4294901760
    %4580 = vmatpush2.msra.mxu0 %v4579
    %v4581 = vand.u32 %v90, 4294901760
    %4582 = vmatprep.subr.mxu0 %v4581
    %v4583 = vand.u32 %v89, 4294901760
    %4584 = vmatpush2.msra.mxu0 %v4583
    %v4585 = vand.u32 %v88, 4294901760
    %4586 = vmatprep.subr.mxu0 %v4585
    %v4587 = vand.u32 %v87, 4294901760
    %4588 = vmatpush2.msra.mxu0 %v4587
    %v4589 = vand.u32 %v86, 4294901760
    %4590 = vmatprep.subr.mxu0 %v4589
    %v4591 = vand.u32 %v85, 4294901760
    %4592 = vmatpush2.msra.mxu0 %v4591
    %v4593 = vand.u32 %v84, 4294901760
    %4594 = vmatprep.subr.mxu0 %v4593
    %v4595 = vand.u32 %v83, 4294901760
    %4596 = vmatpush2.msra.mxu0 %v4595
    %v4597 = vand.u32 %v82, 4294901760
    %4598 = vmatprep.subr.mxu0 %v4597
    %v4599 = vand.u32 %v81, 4294901760
    %4600 = vmatpush2.msra.mxu0 %v4599
    %v4601 = vand.u32 %v80, 4294901760
    %4602 = vmatprep.subr.mxu0 %v4601
    %v4603 = vand.u32 %v79, 4294901760
    %4604 = vmatpush2.msra.mxu0 %v4603
    %v4605 = vand.u32 %v78, 4294901760
    %4606 = vmatprep.subr.mxu0 %v4605
    %v4607 = vand.u32 %v77, 4294901760
    %4608 = vmatpush2.msra.mxu0 %v4607
    %v4609 = vand.u32 %v76, 4294901760
    %4610 = vmatprep.subr.mxu0 %v4609
    %v4611 = vand.u32 %v75, 4294901760
    %4612 = vmatpush2.msra.mxu0 %v4611
    %v4613 = vand.u32 %v74, 4294901760
    %4614 = vmatprep.subr.mxu0 %v4613
    %v4615 = vand.u32 %v73, 4294901760
    %4616 = vmatpush2.msra.mxu0 %v4615
    %v4617 = vand.u32 %v72, 4294901760
    %4618 = vmatprep.subr.mxu0 %v4617
    %v4619 = vand.u32 %v71, 4294901760
    %4620 = vmatpush2.msra.mxu0 %v4619
    %v4621 = vand.u32 %v70, 4294901760
    %4622 = vmatprep.subr.mxu0 %v4621
    %v4623 = vand.u32 %v69, 4294901760
    %4624 = vmatpush2.msra.mxu0 %v4623
    %v4625 = vand.u32 %v68, 4294901760
    %4626 = vmatprep.subr.mxu0 %v4625
    %v4627 = vand.u32 %v67, 4294901760
    %4628 = vmatpush2.msra.mxu0 %v4627
    %v4629 = vand.u32 %v66, 4294901760
    %4630 = vmatprep.subr.mxu0 %v4629
    %v4631 = vand.u32 %v65, 4294901760
    %4632 = vmatpush2.msra.mxu0 %v4631
    %v4633 = vand.u32 %v64, 4294901760
    %4634 = vmatprep.subr.mxu0 %v4633
    %v4635 = vand.u32 %v63, 4294901760
    %4636 = vmatpush2.msra.mxu0 %v4635
    %v4637 = vand.u32 %v62, 4294901760
    %4638 = vmatprep.subr.mxu0 %v4637
    %v4639 = vand.u32 %v61, 4294901760
    %4640 = vmatpush2.msra.mxu0 %v4639
    %v4641 = vand.u32 %v3357, 4294901760
    %4642 = vmatprep.mubr.f32.mxu0 %v4641
    %v4643 = vand.u32 %v3356, 4294901760
    %4644 = vmatmul.mubr.f32.gmra.mxu0 %v4643
    %v4645 = vpop.f32.mrf.mxu0
    %v4646 = vadd.f32 %v4509, %v4645
    %v4647 = vpop.f32.mrf.mxu0
    %v4648 = vadd.f32 %v4511, %v4647
    %4649 = vdwg.mxu0
    %v4650 = vadd.f32 %v4646, %v750
    %v4651 = vadd.f32 %v4648, %v752
    %v4652 = vtanh.pop %v4650
    %v4653 = vtanh.pop %v4651
    %v4654 = vlaneseq
    %v4655 = vshrl.u32 %v4654, 7
    %v4656 = vsub.s32 4, %v4655
    %v4657 = vrot.slane %v97, %v4656
    %v4658 = vlaneseq
    %v4659 = vshrl.u32 %v4658, 7
    %v4660 = vsub.s32 4, %v4659
    %v4661 = vrot.slane %v98, %v4660
    %v4662 = vand.u32 %v60, 4294901760
    %4663 = vmatprep.subr.mxu0 %v4662
    %v4664 = vand.u32 %v59, 4294901760
    %4665 = vmatpush1.msra.mxu0 %v4664
    %v4666 = vand.u32 %v58, 4294901760
    %4667 = vmatprep.subr.mxu0 %v4666
    %v4668 = vand.u32 %v57, 4294901760
    %4669 = vmatpush1.msra.mxu0 %v4668
    %v4670 = vand.u32 %v56, 4294901760
    %4671 = vmatprep.subr.mxu0 %v4670
    %v4672 = vand.u32 %v55, 4294901760
    %4673 = vmatpush1.msra.mxu0 %v4672
    %v4674 = vand.u32 %v54, 4294901760
    %4675 = vmatprep.subr.mxu0 %v4674
    %v4676 = vand.u32 %v53, 4294901760
    %4677 = vmatpush1.msra.mxu0 %v4676
    %v4678 = vand.u32 %v52, 4294901760
    %4679 = vmatprep.subr.mxu0 %v4678
    %v4680 = vand.u32 %v51, 4294901760
    %4681 = vmatpush1.msra.mxu0 %v4680
    %v4682 = vand.u32 %v50, 4294901760
    %4683 = vmatprep.subr.mxu0 %v4682
    %v4684 = vand.u32 %v49, 4294901760
    %4685 = vmatpush1.msra.mxu0 %v4684
    %v4686 = vand.u32 %v48, 4294901760
    %4687 = vmatprep.subr.mxu0 %v4686
    %v4688 = vand.u32 %v47, 4294901760
    %4689 = vmatpush1.msra.mxu0 %v4688
    %v4690 = vand.u32 %v46, 4294901760
    %4691 = vmatprep.subr.mxu0 %v4690
    %v4692 = vand.u32 %v45, 4294901760
    %4693 = vmatpush1.msra.mxu0 %v4692
    %v4694 = vand.u32 %v44, 4294901760
    %4695 = vmatprep.subr.mxu0 %v4694
    %v4696 = vand.u32 %v43, 4294901760
    %4697 = vmatpush1.msra.mxu0 %v4696
    %v4698 = vand.u32 %v42, 4294901760
    %4699 = vmatprep.subr.mxu0 %v4698
    %v4700 = vand.u32 %v41, 4294901760
    %4701 = vmatpush1.msra.mxu0 %v4700
    %v4702 = vand.u32 %v40, 4294901760
    %4703 = vmatprep.subr.mxu0 %v4702
    %v4704 = vand.u32 %v39, 4294901760
    %4705 = vmatpush1.msra.mxu0 %v4704
    %v4706 = vand.u32 %v38, 4294901760
    %4707 = vmatprep.subr.mxu0 %v4706
    %v4708 = vand.u32 %v37, 4294901760
    %4709 = vmatpush1.msra.mxu0 %v4708
    %v4710 = vand.u32 %v36, 4294901760
    %4711 = vmatprep.subr.mxu0 %v4710
    %v4712 = vand.u32 %v35, 4294901760
    %4713 = vmatpush1.msra.mxu0 %v4712
    %v4714 = vand.u32 %v34, 4294901760
    %4715 = vmatprep.subr.mxu0 %v4714
    %v4716 = vand.u32 %v33, 4294901760
    %4717 = vmatpush1.msra.mxu0 %v4716
    %v4718 = vand.u32 %v32, 4294901760
    %4719 = vmatprep.subr.mxu0 %v4718
    %v4720 = vand.u32 %v31, 4294901760
    %4721 = vmatpush1.msra.mxu0 %v4720
    %v4722 = vand.u32 %v30, 4294901760
    %4723 = vmatprep.subr.mxu0 %v4722
    %v4724 = vand.u32 %v29, 4294901760
    %4725 = vmatpush1.msra.mxu0 %v4724
    %v4726 = vand.u32 %v92, 4294901760
    %4727 = vmatprep.subr.mxu0 %v4726
    %v4728 = vand.u32 %v91, 4294901760
    %4729 = vmatpush2.msra.mxu0 %v4728
    %v4730 = vand.u32 %v90, 4294901760
    %4731 = vmatprep.subr.mxu0 %v4730
    %v4732 = vand.u32 %v89, 4294901760
    %4733 = vmatpush2.msra.mxu0 %v4732
    %v4734 = vand.u32 %v88, 4294901760
    %4735 = vmatprep.subr.mxu0 %v4734
    %v4736 = vand.u32 %v87, 4294901760
    %4737 = vmatpush2.msra.mxu0 %v4736
    %v4738 = vand.u32 %v86, 4294901760
    %4739 = vmatprep.subr.mxu0 %v4738
    %v4740 = vand.u32 %v85, 4294901760
    %4741 = vmatpush2.msra.mxu0 %v4740
    %v4742 = vand.u32 %v84, 4294901760
    %4743 = vmatprep.subr.mxu0 %v4742
    %v4744 = vand.u32 %v83, 4294901760
    %4745 = vmatpush2.msra.mxu0 %v4744
    %v4746 = vand.u32 %v82, 4294901760
    %4747 = vmatprep.subr.mxu0 %v4746
    %v4748 = vand.u32 %v81, 4294901760
    %4749 = vmatpush2.msra.mxu0 %v4748
    %v4750 = vand.u32 %v80, 4294901760
    %4751 = vmatprep.subr.mxu0 %v4750
    %v4752 = vand.u32 %v79, 4294901760
    %4753 = vmatpush2.msra.mxu0 %v4752
    %v4754 = vand.u32 %v78, 4294901760
    %4755 = vmatprep.subr.mxu0 %v4754
    %v4756 = vand.u32 %v77, 4294901760
    %4757 = vmatpush2.msra.mxu0 %v4756
    %v4758 = vand.u32 %v76, 4294901760
    %4759 = vmatprep.subr.mxu0 %v4758
    %v4760 = vand.u32 %v75, 4294901760
    %4761 = vmatpush2.msra.mxu0 %v4760
    %v4762 = vand.u32 %v74, 4294901760
    %4763 = vmatprep.subr.mxu0 %v4762
    %v4764 = vand.u32 %v73, 4294901760
    %4765 = vmatpush2.msra.mxu0 %v4764
    %v4766 = vand.u32 %v72, 4294901760
    %4767 = vmatprep.subr.mxu0 %v4766
    %v4768 = vand.u32 %v71, 4294901760
    %4769 = vmatpush2.msra.mxu0 %v4768
    %v4770 = vand.u32 %v70, 4294901760
    %4771 = vmatprep.subr.mxu0 %v4770
    %v4772 = vand.u32 %v69, 4294901760
    %4773 = vmatpush2.msra.mxu0 %v4772
    %v4774 = vand.u32 %v68, 4294901760
    %4775 = vmatprep.subr.mxu0 %v4774
    %v4776 = vand.u32 %v67, 4294901760
    %4777 = vmatpush2.msra.mxu0 %v4776
    %v4778 = vand.u32 %v66, 4294901760
    %4779 = vmatprep.subr.mxu0 %v4778
    %v4780 = vand.u32 %v65, 4294901760
    %4781 = vmatpush2.msra.mxu0 %v4780
    %v4782 = vand.u32 %v64, 4294901760
    %4783 = vmatprep.subr.mxu0 %v4782
    %v4784 = vand.u32 %v63, 4294901760
    %4785 = vmatpush2.msra.mxu0 %v4784
    %v4786 = vand.u32 %v62, 4294901760
    %4787 = vmatprep.subr.mxu0 %v4786
    %v4788 = vand.u32 %v61, 4294901760
    %4789 = vmatpush2.msra.mxu0 %v4788
    %v4790 = vand.u32 %v4653, 4294901760
    %v4791 = vsub.f32 %v4653, %v4790
    %v4792 = vand.u32 %v4791, 4294901760
    %v4793 = vsub.f32 %v4791, %v4792
    %v4794 = vand.u32 %v4793, 4294901760
    %4795 = vmatprep.mubr.f32.mxu0 %v4794
    %v4796 = vand.u32 %v4652, 4294901760
    %v4797 = vsub.f32 %v4652, %v4796
    %v4798 = vand.u32 %v4797, 4294901760
    %v4799 = vsub.f32 %v4797, %v4798
    %v4800 = vand.u32 %v4799, 4294901760
    %4801 = vmatmul.mubr.f32.gmra.mxu0 %v4800
    %v4802 = vpop.f32.mrf.mxu0
    %v4803 = vadd.f32 %v4657, %v4802
    %v4804 = vpop.f32.mrf.mxu0
    %v4805 = vadd.f32 %v4661, %v4804
    %4806 = vdwg.mxu0
    %v4807 = vand.u32 %v60, 4294901760
    %v4808 = vsub.f32 %v60, %v4807
    %v4809 = vand.u32 %v4808, 4294901760
    %v4810 = vsub.f32 %v4808, %v4809
    %v4811 = vand.u32 %v4810, 4294901760
    %4812 = vmatprep.subr.mxu0 %v4811
    %v4813 = vand.u32 %v59, 4294901760
    %v4814 = vsub.f32 %v59, %v4813
    %v4815 = vand.u32 %v4814, 4294901760
    %v4816 = vsub.f32 %v4814, %v4815
    %v4817 = vand.u32 %v4816, 4294901760
    %4818 = vmatpush1.msra.mxu0 %v4817
    %v4819 = vand.u32 %v58, 4294901760
    %v4820 = vsub.f32 %v58, %v4819
    %v4821 = vand.u32 %v4820, 4294901760
    %v4822 = vsub.f32 %v4820, %v4821
    %v4823 = vand.u32 %v4822, 4294901760
    %4824 = vmatprep.subr.mxu0 %v4823
    %v4825 = vand.u32 %v57, 4294901760
    %v4826 = vsub.f32 %v57, %v4825
    %v4827 = vand.u32 %v4826, 4294901760
    %v4828 = vsub.f32 %v4826, %v4827
    %v4829 = vand.u32 %v4828, 4294901760
    %4830 = vmatpush1.msra.mxu0 %v4829
    %v4831 = vand.u32 %v56, 4294901760
    %v4832 = vsub.f32 %v56, %v4831
    %v4833 = vand.u32 %v4832, 4294901760
    %v4834 = vsub.f32 %v4832, %v4833
    %v4835 = vand.u32 %v4834, 4294901760
    %4836 = vmatprep.subr.mxu0 %v4835
    %v4837 = vand.u32 %v55, 4294901760
    %v4838 = vsub.f32 %v55, %v4837
    %v4839 = vand.u32 %v4838, 4294901760
    %v4840 = vsub.f32 %v4838, %v4839
    %v4841 = vand.u32 %v4840, 4294901760
    %4842 = vmatpush1.msra.mxu0 %v4841
    %v4843 = vand.u32 %v54, 4294901760
    %v4844 = vsub.f32 %v54, %v4843
    %v4845 = vand.u32 %v4844, 4294901760
    %v4846 = vsub.f32 %v4844, %v4845
    %v4847 = vand.u32 %v4846, 4294901760
    %4848 = vmatprep.subr.mxu0 %v4847
    %v4849 = vand.u32 %v53, 4294901760
    %v4850 = vsub.f32 %v53, %v4849
    %v4851 = vand.u32 %v4850, 4294901760
    %v4852 = vsub.f32 %v4850, %v4851
    %v4853 = vand.u32 %v4852, 4294901760
    %4854 = vmatpush1.msra.mxu0 %v4853
    %v4855 = vand.u32 %v52, 4294901760
    %v4856 = vsub.f32 %v52, %v4855
    %v4857 = vand.u32 %v4856, 4294901760
    %v4858 = vsub.f32 %v4856, %v4857
    %v4859 = vand.u32 %v4858, 4294901760
    %4860 = vmatprep.subr.mxu0 %v4859
    %v4861 = vand.u32 %v51, 4294901760
    %v4862 = vsub.f32 %v51, %v4861
    %v4863 = vand.u32 %v4862, 4294901760
    %v4864 = vsub.f32 %v4862, %v4863
    %v4865 = vand.u32 %v4864, 4294901760
    %4866 = vmatpush1.msra.mxu0 %v4865
    %v4867 = vand.u32 %v50, 4294901760
    %v4868 = vsub.f32 %v50, %v4867
    %v4869 = vand.u32 %v4868, 4294901760
    %v4870 = vsub.f32 %v4868, %v4869
    %v4871 = vand.u32 %v4870, 4294901760
    %4872 = vmatprep.subr.mxu0 %v4871
    %v4873 = vand.u32 %v49, 4294901760
    %v4874 = vsub.f32 %v49, %v4873
    %v4875 = vand.u32 %v4874, 4294901760
    %v4876 = vsub.f32 %v4874, %v4875
    %v4877 = vand.u32 %v4876, 4294901760
    %4878 = vmatpush1.msra.mxu0 %v4877
    %v4879 = vand.u32 %v48, 4294901760
    %v4880 = vsub.f32 %v48, %v4879
    %v4881 = vand.u32 %v4880, 4294901760
    %v4882 = vsub.f32 %v4880, %v4881
    %v4883 = vand.u32 %v4882, 4294901760
    %4884 = vmatprep.subr.mxu0 %v4883
    %v4885 = vand.u32 %v47, 4294901760
    %v4886 = vsub.f32 %v47, %v4885
    %v4887 = vand.u32 %v4886, 4294901760
    %v4888 = vsub.f32 %v4886, %v4887
    %v4889 = vand.u32 %v4888, 4294901760
    %4890 = vmatpush1.msra.mxu0 %v4889
    %v4891 = vand.u32 %v46, 4294901760
    %v4892 = vsub.f32 %v46, %v4891
    %v4893 = vand.u32 %v4892, 4294901760
    %v4894 = vsub.f32 %v4892, %v4893
    %v4895 = vand.u32 %v4894, 4294901760
    %4896 = vmatprep.subr.mxu0 %v4895
    %v4897 = vand.u32 %v45, 4294901760
    %v4898 = vsub.f32 %v45, %v4897
    %v4899 = vand.u32 %v4898, 4294901760
    %v4900 = vsub.f32 %v4898, %v4899
    %v4901 = vand.u32 %v4900, 4294901760
    %4902 = vmatpush1.msra.mxu0 %v4901
    %v4903 = vand.u32 %v44, 4294901760
    %v4904 = vsub.f32 %v44, %v4903
    %v4905 = vand.u32 %v4904, 4294901760
    %v4906 = vsub.f32 %v4904, %v4905
    %v4907 = vand.u32 %v4906, 4294901760
    %4908 = vmatprep.subr.mxu0 %v4907
    %v4909 = vand.u32 %v43, 4294901760
    %v4910 = vsub.f32 %v43, %v4909
    %v4911 = vand.u32 %v4910, 4294901760
    %v4912 = vsub.f32 %v4910, %v4911
    %v4913 = vand.u32 %v4912, 4294901760
    %4914 = vmatpush1.msra.mxu0 %v4913
    %v4915 = vand.u32 %v42, 4294901760
    %v4916 = vsub.f32 %v42, %v4915
    %v4917 = vand.u32 %v4916, 4294901760
    %v4918 = vsub.f32 %v4916, %v4917
    %v4919 = vand.u32 %v4918, 4294901760
    %4920 = vmatprep.subr.mxu0 %v4919
    %v4921 = vand.u32 %v41, 4294901760
    %v4922 = vsub.f32 %v41, %v4921
    %v4923 = vand.u32 %v4922, 4294901760
    %v4924 = vsub.f32 %v4922, %v4923
    %v4925 = vand.u32 %v4924, 4294901760
    %4926 = vmatpush1.msra.mxu0 %v4925
    %v4927 = vand.u32 %v40, 4294901760
    %v4928 = vsub.f32 %v40, %v4927
    %v4929 = vand.u32 %v4928, 4294901760
    %v4930 = vsub.f32 %v4928, %v4929
    %v4931 = vand.u32 %v4930, 4294901760
    %4932 = vmatprep.subr.mxu0 %v4931
    %v4933 = vand.u32 %v39, 4294901760
    %v4934 = vsub.f32 %v39, %v4933
    %v4935 = vand.u32 %v4934, 4294901760
    %v4936 = vsub.f32 %v4934, %v4935
    %v4937 = vand.u32 %v4936, 4294901760
    %4938 = vmatpush1.msra.mxu0 %v4937
    %v4939 = vand.u32 %v38, 4294901760
    %v4940 = vsub.f32 %v38, %v4939
    %v4941 = vand.u32 %v4940, 4294901760
    %v4942 = vsub.f32 %v4940, %v4941
    %v4943 = vand.u32 %v4942, 4294901760
    %4944 = vmatprep.subr.mxu0 %v4943
    %v4945 = vand.u32 %v37, 4294901760
    %v4946 = vsub.f32 %v37, %v4945
    %v4947 = vand.u32 %v4946, 4294901760
    %v4948 = vsub.f32 %v4946, %v4947
    %v4949 = vand.u32 %v4948, 4294901760
    %4950 = vmatpush1.msra.mxu0 %v4949
    %v4951 = vand.u32 %v36, 4294901760
    %v4952 = vsub.f32 %v36, %v4951
    %v4953 = vand.u32 %v4952, 4294901760
    %v4954 = vsub.f32 %v4952, %v4953
    %v4955 = vand.u32 %v4954, 4294901760
    %4956 = vmatprep.subr.mxu0 %v4955
    %v4957 = vand.u32 %v35, 4294901760
    %v4958 = vsub.f32 %v35, %v4957
    %v4959 = vand.u32 %v4958, 4294901760
    %v4960 = vsub.f32 %v4958, %v4959
    %v4961 = vand.u32 %v4960, 4294901760
    %4962 = vmatpush1.msra.mxu0 %v4961
    %v4963 = vand.u32 %v34, 4294901760
    %v4964 = vsub.f32 %v34, %v4963
    %v4965 = vand.u32 %v4964, 4294901760
    %v4966 = vsub.f32 %v4964, %v4965
    %v4967 = vand.u32 %v4966, 4294901760
    %4968 = vmatprep.subr.mxu0 %v4967
    %v4969 = vand.u32 %v33, 4294901760
    %v4970 = vsub.f32 %v33, %v4969
    %v4971 = vand.u32 %v4970, 4294901760
    %v4972 = vsub.f32 %v4970, %v4971
    %v4973 = vand.u32 %v4972, 4294901760
    %4974 = vmatpush1.msra.mxu0 %v4973
    %v4975 = vand.u32 %v32, 4294901760
    %v4976 = vsub.f32 %v32, %v4975
    %v4977 = vand.u32 %v4976, 4294901760
    %v4978 = vsub.f32 %v4976, %v4977
    %v4979 = vand.u32 %v4978, 4294901760
    %4980 = vmatprep.subr.mxu0 %v4979
    %v4981 = vand.u32 %v31, 4294901760
    %v4982 = vsub.f32 %v31, %v4981
    %v4983 = vand.u32 %v4982, 4294901760
    %v4984 = vsub.f32 %v4982, %v4983
    %v4985 = vand.u32 %v4984, 4294901760
    %4986 = vmatpush1.msra.mxu0 %v4985
    %v4987 = vand.u32 %v30, 4294901760
    %v4988 = vsub.f32 %v30, %v4987
    %v4989 = vand.u32 %v4988, 4294901760
    %v4990 = vsub.f32 %v4988, %v4989
    %v4991 = vand.u32 %v4990, 4294901760
    %4992 = vmatprep.subr.mxu0 %v4991
    %v4993 = vand.u32 %v29, 4294901760
    %v4994 = vsub.f32 %v29, %v4993
    %v4995 = vand.u32 %v4994, 4294901760
    %v4996 = vsub.f32 %v4994, %v4995
    %v4997 = vand.u32 %v4996, 4294901760
    %4998 = vmatpush1.msra.mxu0 %v4997
    %v4999 = vand.u32 %v92, 4294901760
    %v5000 = vsub.f32 %v92, %v4999
    %v5001 = vand.u32 %v5000, 4294901760
    %v5002 = vsub.f32 %v5000, %v5001
    %v5003 = vand.u32 %v5002, 4294901760
    %5004 = vmatprep.subr.mxu0 %v5003
    %v5005 = vand.u32 %v91, 4294901760
    %v5006 = vsub.f32 %v91, %v5005
    %v5007 = vand.u32 %v5006, 4294901760
    %v5008 = vsub.f32 %v5006, %v5007
    %v5009 = vand.u32 %v5008, 4294901760
    %5010 = vmatpush2.msra.mxu0 %v5009
    %v5011 = vand.u32 %v90, 4294901760
    %v5012 = vsub.f32 %v90, %v5011
    %v5013 = vand.u32 %v5012, 4294901760
    %v5014 = vsub.f32 %v5012, %v5013
    %v5015 = vand.u32 %v5014, 4294901760
    %5016 = vmatprep.subr.mxu0 %v5015
    %v5017 = vand.u32 %v89, 4294901760
    %v5018 = vsub.f32 %v89, %v5017
    %v5019 = vand.u32 %v5018, 4294901760
    %v5020 = vsub.f32 %v5018, %v5019
    %v5021 = vand.u32 %v5020, 4294901760
    %5022 = vmatpush2.msra.mxu0 %v5021
    %v5023 = vand.u32 %v88, 4294901760
    %v5024 = vsub.f32 %v88, %v5023
    %v5025 = vand.u32 %v5024, 4294901760
    %v5026 = vsub.f32 %v5024, %v5025
    %v5027 = vand.u32 %v5026, 4294901760
    %5028 = vmatprep.subr.mxu0 %v5027
    %v5029 = vand.u32 %v87, 4294901760
    %v5030 = vsub.f32 %v87, %v5029
    %v5031 = vand.u32 %v5030, 4294901760
    %v5032 = vsub.f32 %v5030, %v5031
    %v5033 = vand.u32 %v5032, 4294901760
    %5034 = vmatpush2.msra.mxu0 %v5033
    %v5035 = vand.u32 %v86, 4294901760
    %v5036 = vsub.f32 %v86, %v5035
    %v5037 = vand.u32 %v5036, 4294901760
    %v5038 = vsub.f32 %v5036, %v5037
    %v5039 = vand.u32 %v5038, 4294901760
    %5040 = vmatprep.subr.mxu0 %v5039
    %v5041 = vand.u32 %v85, 4294901760
    %v5042 = vsub.f32 %v85, %v5041
    %v5043 = vand.u32 %v5042, 4294901760
    %v5044 = vsub.f32 %v5042, %v5043
    %v5045 = vand.u32 %v5044, 4294901760
    %5046 = vmatpush2.msra.mxu0 %v5045
    %v5047 = vand.u32 %v84, 4294901760
    %v5048 = vsub.f32 %v84, %v5047
    %v5049 = vand.u32 %v5048, 4294901760
    %v5050 = vsub.f32 %v5048, %v5049
    %v5051 = vand.u32 %v5050, 4294901760
    %5052 = vmatprep.subr.mxu0 %v5051
    %v5053 = vand.u32 %v83, 4294901760
    %v5054 = vsub.f32 %v83, %v5053
    %v5055 = vand.u32 %v5054, 4294901760
    %v5056 = vsub.f32 %v5054, %v5055
    %v5057 = vand.u32 %v5056, 4294901760
    %5058 = vmatpush2.msra.mxu0 %v5057
    %v5059 = vand.u32 %v82, 4294901760
    %v5060 = vsub.f32 %v82, %v5059
    %v5061 = vand.u32 %v5060, 4294901760
    %v5062 = vsub.f32 %v5060, %v5061
    %v5063 = vand.u32 %v5062, 4294901760
    %5064 = vmatprep.subr.mxu0 %v5063
    %v5065 = vand.u32 %v81, 4294901760
    %v5066 = vsub.f32 %v81, %v5065
    %v5067 = vand.u32 %v5066, 4294901760
    %v5068 = vsub.f32 %v5066, %v5067
    %v5069 = vand.u32 %v5068, 4294901760
    %5070 = vmatpush2.msra.mxu0 %v5069
    %v5071 = vand.u32 %v80, 4294901760
    %v5072 = vsub.f32 %v80, %v5071
    %v5073 = vand.u32 %v5072, 4294901760
    %v5074 = vsub.f32 %v5072, %v5073
    %v5075 = vand.u32 %v5074, 4294901760
    %5076 = vmatprep.subr.mxu0 %v5075
    %v5077 = vand.u32 %v79, 4294901760
    %v5078 = vsub.f32 %v79, %v5077
    %v5079 = vand.u32 %v5078, 4294901760
    %v5080 = vsub.f32 %v5078, %v5079
    %v5081 = vand.u32 %v5080, 4294901760
    %5082 = vmatpush2.msra.mxu0 %v5081
    %v5083 = vand.u32 %v78, 4294901760
    %v5084 = vsub.f32 %v78, %v5083
    %v5085 = vand.u32 %v5084, 4294901760
    %v5086 = vsub.f32 %v5084, %v5085
    %v5087 = vand.u32 %v5086, 4294901760
    %5088 = vmatprep.subr.mxu0 %v5087
    %v5089 = vand.u32 %v77, 4294901760
    %v5090 = vsub.f32 %v77, %v5089
    %v5091 = vand.u32 %v5090, 4294901760
    %v5092 = vsub.f32 %v5090, %v5091
    %v5093 = vand.u32 %v5092, 4294901760
    %5094 = vmatpush2.msra.mxu0 %v5093
    %v5095 = vand.u32 %v76, 4294901760
    %v5096 = vsub.f32 %v76, %v5095
    %v5097 = vand.u32 %v5096, 4294901760
    %v5098 = vsub.f32 %v5096, %v5097
    %v5099 = vand.u32 %v5098, 4294901760
    %5100 = vmatprep.subr.mxu0 %v5099
    %v5101 = vand.u32 %v75, 4294901760
    %v5102 = vsub.f32 %v75, %v5101
    %v5103 = vand.u32 %v5102, 4294901760
    %v5104 = vsub.f32 %v5102, %v5103
    %v5105 = vand.u32 %v5104, 4294901760
    %5106 = vmatpush2.msra.mxu0 %v5105
    %v5107 = vand.u32 %v74, 4294901760
    %v5108 = vsub.f32 %v74, %v5107
    %v5109 = vand.u32 %v5108, 4294901760
    %v5110 = vsub.f32 %v5108, %v5109
    %v5111 = vand.u32 %v5110, 4294901760
    %5112 = vmatprep.subr.mxu0 %v5111
    %v5113 = vand.u32 %v73, 4294901760
    %v5114 = vsub.f32 %v73, %v5113
    %v5115 = vand.u32 %v5114, 4294901760
    %v5116 = vsub.f32 %v5114, %v5115
    %v5117 = vand.u32 %v5116, 4294901760
    %5118 = vmatpush2.msra.mxu0 %v5117
    %v5119 = vand.u32 %v72, 4294901760
    %v5120 = vsub.f32 %v72, %v5119
    %v5121 = vand.u32 %v5120, 4294901760
    %v5122 = vsub.f32 %v5120, %v5121
    %v5123 = vand.u32 %v5122, 4294901760
    %5124 = vmatprep.subr.mxu0 %v5123
    %v5125 = vand.u32 %v71, 4294901760
    %v5126 = vsub.f32 %v71, %v5125
    %v5127 = vand.u32 %v5126, 4294901760
    %v5128 = vsub.f32 %v5126, %v5127
    %v5129 = vand.u32 %v5128, 4294901760
    %5130 = vmatpush2.msra.mxu0 %v5129
    %v5131 = vand.u32 %v70, 4294901760
    %v5132 = vsub.f32 %v70, %v5131
    %v5133 = vand.u32 %v5132, 4294901760
    %v5134 = vsub.f32 %v5132, %v5133
    %v5135 = vand.u32 %v5134, 4294901760
    %5136 = vmatprep.subr.mxu0 %v5135
    %v5137 = vand.u32 %v69, 4294901760
    %v5138 = vsub.f32 %v69, %v5137
    %v5139 = vand.u32 %v5138, 4294901760
    %v5140 = vsub.f32 %v5138, %v5139
    %v5141 = vand.u32 %v5140, 4294901760
    %5142 = vmatpush2.msra.mxu0 %v5141
    %v5143 = vand.u32 %v68, 4294901760
    %v5144 = vsub.f32 %v68, %v5143
    %v5145 = vand.u32 %v5144, 4294901760
    %v5146 = vsub.f32 %v5144, %v5145
    %v5147 = vand.u32 %v5146, 4294901760
    %5148 = vmatprep.subr.mxu0 %v5147
    %v5149 = vand.u32 %v67, 4294901760
    %v5150 = vsub.f32 %v67, %v5149
    %v5151 = vand.u32 %v5150, 4294901760
    %v5152 = vsub.f32 %v5150, %v5151
    %v5153 = vand.u32 %v5152, 4294901760
    %5154 = vmatpush2.msra.mxu0 %v5153
    %v5155 = vand.u32 %v66, 4294901760
    %v5156 = vsub.f32 %v66, %v5155
    %v5157 = vand.u32 %v5156, 4294901760
    %v5158 = vsub.f32 %v5156, %v5157
    %v5159 = vand.u32 %v5158, 4294901760
    %5160 = vmatprep.subr.mxu0 %v5159
    %v5161 = vand.u32 %v65, 4294901760
    %v5162 = vsub.f32 %v65, %v5161
    %v5163 = vand.u32 %v5162, 4294901760
    %v5164 = vsub.f32 %v5162, %v5163
    %v5165 = vand.u32 %v5164, 4294901760
    %5166 = vmatpush2.msra.mxu0 %v5165
    %v5167 = vand.u32 %v64, 4294901760
    %v5168 = vsub.f32 %v64, %v5167
    %v5169 = vand.u32 %v5168, 4294901760
    %v5170 = vsub.f32 %v5168, %v5169
    %v5171 = vand.u32 %v5170, 4294901760
    %5172 = vmatprep.subr.mxu0 %v5171
    %v5173 = vand.u32 %v63, 4294901760
    %v5174 = vsub.f32 %v63, %v5173
    %v5175 = vand.u32 %v5174, 4294901760
    %v5176 = vsub.f32 %v5174, %v5175
    %v5177 = vand.u32 %v5176, 4294901760
    %5178 = vmatpush2.msra.mxu0 %v5177
    %v5179 = vand.u32 %v62, 4294901760
    %v5180 = vsub.f32 %v62, %v5179
    %v5181 = vand.u32 %v5180, 4294901760
    %v5182 = vsub.f32 %v5180, %v5181
    %v5183 = vand.u32 %v5182, 4294901760
    %5184 = vmatprep.subr.mxu0 %v5183
    %v5185 = vand.u32 %v61, 4294901760
    %v5186 = vsub.f32 %v61, %v5185
    %v5187 = vand.u32 %v5186, 4294901760
    %v5188 = vsub.f32 %v5186, %v5187
    %v5189 = vand.u32 %v5188, 4294901760
    %5190 = vmatpush2.msra.mxu0 %v5189
    %v5191 = vand.u32 %v4653, 4294901760
    %5192 = vmatprep.mubr.f32.mxu0 %v5191
    %v5193 = vand.u32 %v4652, 4294901760
    %5194 = vmatmul.mubr.f32.gmra.mxu0 %v5193
    %v5195 = vpop.f32.mrf.mxu0
    %v5196 = vadd.f32 %v4803, %v5195
    %v5197 = vpop.f32.mrf.mxu0
    %v5198 = vadd.f32 %v4805, %v5197
    %5199 = vdwg.mxu0
    %v5200 = vand.u32 %v60, 4294901760
    %v5201 = vsub.f32 %v60, %v5200
    %5202 = vmatprep.subr.mxu0 %v5201
    %v5203 = vand.u32 %v59, 4294901760
    %v5204 = vsub.f32 %v59, %v5203
    %5205 = vmatpush1.msra.mxu0 %v5204
    %v5206 = vand.u32 %v58, 4294901760
    %v5207 = vsub.f32 %v58, %v5206
    %5208 = vmatprep.subr.mxu0 %v5207
    %v5209 = vand.u32 %v57, 4294901760
    %v5210 = vsub.f32 %v57, %v5209
    %5211 = vmatpush1.msra.mxu0 %v5210
    %v5212 = vand.u32 %v56, 4294901760
    %v5213 = vsub.f32 %v56, %v5212
    %5214 = vmatprep.subr.mxu0 %v5213
    %v5215 = vand.u32 %v55, 4294901760
    %v5216 = vsub.f32 %v55, %v5215
    %5217 = vmatpush1.msra.mxu0 %v5216
    %v5218 = vand.u32 %v54, 4294901760
    %v5219 = vsub.f32 %v54, %v5218
    %5220 = vmatprep.subr.mxu0 %v5219
    %v5221 = vand.u32 %v53, 4294901760
    %v5222 = vsub.f32 %v53, %v5221
    %5223 = vmatpush1.msra.mxu0 %v5222
    %v5224 = vand.u32 %v52, 4294901760
    %v5225 = vsub.f32 %v52, %v5224
    %5226 = vmatprep.subr.mxu0 %v5225
    %v5227 = vand.u32 %v51, 4294901760
    %v5228 = vsub.f32 %v51, %v5227
    %5229 = vmatpush1.msra.mxu0 %v5228
    %v5230 = vand.u32 %v50, 4294901760
    %v5231 = vsub.f32 %v50, %v5230
    %5232 = vmatprep.subr.mxu0 %v5231
    %v5233 = vand.u32 %v49, 4294901760
    %v5234 = vsub.f32 %v49, %v5233
    %5235 = vmatpush1.msra.mxu0 %v5234
    %v5236 = vand.u32 %v48, 4294901760
    %v5237 = vsub.f32 %v48, %v5236
    %5238 = vmatprep.subr.mxu0 %v5237
    %v5239 = vand.u32 %v47, 4294901760
    %v5240 = vsub.f32 %v47, %v5239
    %5241 = vmatpush1.msra.mxu0 %v5240
    %v5242 = vand.u32 %v46, 4294901760
    %v5243 = vsub.f32 %v46, %v5242
    %5244 = vmatprep.subr.mxu0 %v5243
    %v5245 = vand.u32 %v45, 4294901760
    %v5246 = vsub.f32 %v45, %v5245
    %5247 = vmatpush1.msra.mxu0 %v5246
    %v5248 = vand.u32 %v44, 4294901760
    %v5249 = vsub.f32 %v44, %v5248
    %5250 = vmatprep.subr.mxu0 %v5249
    %v5251 = vand.u32 %v43, 4294901760
    %v5252 = vsub.f32 %v43, %v5251
    %5253 = vmatpush1.msra.mxu0 %v5252
    %v5254 = vand.u32 %v42, 4294901760
    %v5255 = vsub.f32 %v42, %v5254
    %5256 = vmatprep.subr.mxu0 %v5255
    %v5257 = vand.u32 %v41, 4294901760
    %v5258 = vsub.f32 %v41, %v5257
    %5259 = vmatpush1.msra.mxu0 %v5258
    %v5260 = vand.u32 %v40, 4294901760
    %v5261 = vsub.f32 %v40, %v5260
    %5262 = vmatprep.subr.mxu0 %v5261
    %v5263 = vand.u32 %v39, 4294901760
    %v5264 = vsub.f32 %v39, %v5263
    %5265 = vmatpush1.msra.mxu0 %v5264
    %v5266 = vand.u32 %v38, 4294901760
    %v5267 = vsub.f32 %v38, %v5266
    %5268 = vmatprep.subr.mxu0 %v5267
    %v5269 = vand.u32 %v37, 4294901760
    %v5270 = vsub.f32 %v37, %v5269
    %5271 = vmatpush1.msra.mxu0 %v5270
    %v5272 = vand.u32 %v36, 4294901760
    %v5273 = vsub.f32 %v36, %v5272
    %5274 = vmatprep.subr.mxu0 %v5273
    %v5275 = vand.u32 %v35, 4294901760
    %v5276 = vsub.f32 %v35, %v5275
    %5277 = vmatpush1.msra.mxu0 %v5276
    %v5278 = vand.u32 %v34, 4294901760
    %v5279 = vsub.f32 %v34, %v5278
    %5280 = vmatprep.subr.mxu0 %v5279
    %v5281 = vand.u32 %v33, 4294901760
    %v5282 = vsub.f32 %v33, %v5281
    %5283 = vmatpush1.msra.mxu0 %v5282
    %v5284 = vand.u32 %v32, 4294901760
    %v5285 = vsub.f32 %v32, %v5284
    %5286 = vmatprep.subr.mxu0 %v5285
    %v5287 = vand.u32 %v31, 4294901760
    %v5288 = vsub.f32 %v31, %v5287
    %5289 = vmatpush1.msra.mxu0 %v5288
    %v5290 = vand.u32 %v30, 4294901760
    %v5291 = vsub.f32 %v30, %v5290
    %5292 = vmatprep.subr.mxu0 %v5291
    %v5293 = vand.u32 %v29, 4294901760
    %v5294 = vsub.f32 %v29, %v5293
    %5295 = vmatpush1.msra.mxu0 %v5294
    %v5296 = vand.u32 %v92, 4294901760
    %v5297 = vsub.f32 %v92, %v5296
    %5298 = vmatprep.subr.mxu0 %v5297
    %v5299 = vand.u32 %v91, 4294901760
    %v5300 = vsub.f32 %v91, %v5299
    %5301 = vmatpush2.msra.mxu0 %v5300
    %v5302 = vand.u32 %v90, 4294901760
    %v5303 = vsub.f32 %v90, %v5302
    %5304 = vmatprep.subr.mxu0 %v5303
    %v5305 = vand.u32 %v89, 4294901760
    %v5306 = vsub.f32 %v89, %v5305
    %5307 = vmatpush2.msra.mxu0 %v5306
    %v5308 = vand.u32 %v88, 4294901760
    %v5309 = vsub.f32 %v88, %v5308
    %5310 = vmatprep.subr.mxu0 %v5309
    %v5311 = vand.u32 %v87, 4294901760
    %v5312 = vsub.f32 %v87, %v5311
    %5313 = vmatpush2.msra.mxu0 %v5312
    %v5314 = vand.u32 %v86, 4294901760
    %v5315 = vsub.f32 %v86, %v5314
    %5316 = vmatprep.subr.mxu0 %v5315
    %v5317 = vand.u32 %v85, 4294901760
    %v5318 = vsub.f32 %v85, %v5317
    %5319 = vmatpush2.msra.mxu0 %v5318
    %v5320 = vand.u32 %v84, 4294901760
    %v5321 = vsub.f32 %v84, %v5320
    %5322 = vmatprep.subr.mxu0 %v5321
    %v5323 = vand.u32 %v83, 4294901760
    %v5324 = vsub.f32 %v83, %v5323
    %5325 = vmatpush2.msra.mxu0 %v5324
    %v5326 = vand.u32 %v82, 4294901760
    %v5327 = vsub.f32 %v82, %v5326
    %5328 = vmatprep.subr.mxu0 %v5327
    %v5329 = vand.u32 %v81, 4294901760
    %v5330 = vsub.f32 %v81, %v5329
    %5331 = vmatpush2.msra.mxu0 %v5330
    %v5332 = vand.u32 %v80, 4294901760
    %v5333 = vsub.f32 %v80, %v5332
    %5334 = vmatprep.subr.mxu0 %v5333
    %v5335 = vand.u32 %v79, 4294901760
    %v5336 = vsub.f32 %v79, %v5335
    %5337 = vmatpush2.msra.mxu0 %v5336
    %v5338 = vand.u32 %v78, 4294901760
    %v5339 = vsub.f32 %v78, %v5338
    %5340 = vmatprep.subr.mxu0 %v5339
    %v5341 = vand.u32 %v77, 4294901760
    %v5342 = vsub.f32 %v77, %v5341
    %5343 = vmatpush2.msra.mxu0 %v5342
    %v5344 = vand.u32 %v76, 4294901760
    %v5345 = vsub.f32 %v76, %v5344
    %5346 = vmatprep.subr.mxu0 %v5345
    %v5347 = vand.u32 %v75, 4294901760
    %v5348 = vsub.f32 %v75, %v5347
    %5349 = vmatpush2.msra.mxu0 %v5348
    %v5350 = vand.u32 %v74, 4294901760
    %v5351 = vsub.f32 %v74, %v5350
    %5352 = vmatprep.subr.mxu0 %v5351
    %v5353 = vand.u32 %v73, 4294901760
    %v5354 = vsub.f32 %v73, %v5353
    %5355 = vmatpush2.msra.mxu0 %v5354
    %v5356 = vand.u32 %v72, 4294901760
    %v5357 = vsub.f32 %v72, %v5356
    %5358 = vmatprep.subr.mxu0 %v5357
    %v5359 = vand.u32 %v71, 4294901760
    %v5360 = vsub.f32 %v71, %v5359
    %5361 = vmatpush2.msra.mxu0 %v5360
    %v5362 = vand.u32 %v70, 4294901760
    %v5363 = vsub.f32 %v70, %v5362
    %5364 = vmatprep.subr.mxu0 %v5363
    %v5365 = vand.u32 %v69, 4294901760
    %v5366 = vsub.f32 %v69, %v5365
    %5367 = vmatpush2.msra.mxu0 %v5366
    %v5368 = vand.u32 %v68, 4294901760
    %v5369 = vsub.f32 %v68, %v5368
    %5370 = vmatprep.subr.mxu0 %v5369
    %v5371 = vand.u32 %v67, 4294901760
    %v5372 = vsub.f32 %v67, %v5371
    %5373 = vmatpush2.msra.mxu0 %v5372
    %v5374 = vand.u32 %v66, 4294901760
    %v5375 = vsub.f32 %v66, %v5374
    %5376 = vmatprep.subr.mxu0 %v5375
    %v5377 = vand.u32 %v65, 4294901760
    %v5378 = vsub.f32 %v65, %v5377
    %5379 = vmatpush2.msra.mxu0 %v5378
    %v5380 = vand.u32 %v64, 4294901760
    %v5381 = vsub.f32 %v64, %v5380
    %5382 = vmatprep.subr.mxu0 %v5381
    %v5383 = vand.u32 %v63, 4294901760
    %v5384 = vsub.f32 %v63, %v5383
    %5385 = vmatpush2.msra.mxu0 %v5384
    %v5386 = vand.u32 %v62, 4294901760
    %v5387 = vsub.f32 %v62, %v5386
    %5388 = vmatprep.subr.mxu0 %v5387
    %v5389 = vand.u32 %v61, 4294901760
    %v5390 = vsub.f32 %v61, %v5389
    %5391 = vmatpush2.msra.mxu0 %v5390
    %v5392 = vand.u32 %v4653, 4294901760
    %v5393 = vsub.f32 %v4653, %v5392
    %5394 = vmatprep.mubr.f32.mxu0 %v5393
    %v5395 = vand.u32 %v4652, 4294901760
    %v5396 = vsub.f32 %v4652, %v5395
    %5397 = vmatmul.mubr.f32.gmra.mxu0 %v5396
    %v5398 = vpop.f32.mrf.mxu0
    %v5399 = vadd.f32 %v5196, %v5398
    %v5400 = vpop.f32.mrf.mxu0
    %v5401 = vadd.f32 %v5198, %v5400
    %5402 = vdwg.mxu0
    %v5403 = vand.u32 %v60, 4294901760
    %5404 = vmatprep.subr.mxu0 %v5403
    %v5405 = vand.u32 %v59, 4294901760
    %5406 = vmatpush1.msra.mxu0 %v5405
    %v5407 = vand.u32 %v58, 4294901760
    %5408 = vmatprep.subr.mxu0 %v5407
    %v5409 = vand.u32 %v57, 4294901760
    %5410 = vmatpush1.msra.mxu0 %v5409
    %v5411 = vand.u32 %v56, 4294901760
    %5412 = vmatprep.subr.mxu0 %v5411
    %v5413 = vand.u32 %v55, 4294901760
    %5414 = vmatpush1.msra.mxu0 %v5413
    %v5415 = vand.u32 %v54, 4294901760
    %5416 = vmatprep.subr.mxu0 %v5415
    %v5417 = vand.u32 %v53, 4294901760
    %5418 = vmatpush1.msra.mxu0 %v5417
    %v5419 = vand.u32 %v52, 4294901760
    %5420 = vmatprep.subr.mxu0 %v5419
    %v5421 = vand.u32 %v51, 4294901760
    %5422 = vmatpush1.msra.mxu0 %v5421
    %v5423 = vand.u32 %v50, 4294901760
    %5424 = vmatprep.subr.mxu0 %v5423
    %v5425 = vand.u32 %v49, 4294901760
    %5426 = vmatpush1.msra.mxu0 %v5425
    %v5427 = vand.u32 %v48, 4294901760
    %5428 = vmatprep.subr.mxu0 %v5427
    %v5429 = vand.u32 %v47, 4294901760
    %5430 = vmatpush1.msra.mxu0 %v5429
    %v5431 = vand.u32 %v46, 4294901760
    %5432 = vmatprep.subr.mxu0 %v5431
    %v5433 = vand.u32 %v45, 4294901760
    %5434 = vmatpush1.msra.mxu0 %v5433
    %v5435 = vand.u32 %v44, 4294901760
    %5436 = vmatprep.subr.mxu0 %v5435
    %v5437 = vand.u32 %v43, 4294901760
    %5438 = vmatpush1.msra.mxu0 %v5437
    %v5439 = vand.u32 %v42, 4294901760
    %5440 = vmatprep.subr.mxu0 %v5439
    %v5441 = vand.u32 %v41, 4294901760
    %5442 = vmatpush1.msra.mxu0 %v5441
    %v5443 = vand.u32 %v40, 4294901760
    %5444 = vmatprep.subr.mxu0 %v5443
    %v5445 = vand.u32 %v39, 4294901760
    %5446 = vmatpush1.msra.mxu0 %v5445
    %v5447 = vand.u32 %v38, 4294901760
    %5448 = vmatprep.subr.mxu0 %v5447
    %v5449 = vand.u32 %v37, 4294901760
    %5450 = vmatpush1.msra.mxu0 %v5449
    %v5451 = vand.u32 %v36, 4294901760
    %5452 = vmatprep.subr.mxu0 %v5451
    %v5453 = vand.u32 %v35, 4294901760
    %5454 = vmatpush1.msra.mxu0 %v5453
    %v5455 = vand.u32 %v34, 4294901760
    %5456 = vmatprep.subr.mxu0 %v5455
    %v5457 = vand.u32 %v33, 4294901760
    %5458 = vmatpush1.msra.mxu0 %v5457
    %v5459 = vand.u32 %v32, 4294901760
    %5460 = vmatprep.subr.mxu0 %v5459
    %v5461 = vand.u32 %v31, 4294901760
    %5462 = vmatpush1.msra.mxu0 %v5461
    %v5463 = vand.u32 %v30, 4294901760
    %5464 = vmatprep.subr.mxu0 %v5463
    %v5465 = vand.u32 %v29, 4294901760
    %5466 = vmatpush1.msra.mxu0 %v5465
    %v5467 = vand.u32 %v92, 4294901760
    %5468 = vmatprep.subr.mxu0 %v5467
    %v5469 = vand.u32 %v91, 4294901760
    %5470 = vmatpush2.msra.mxu0 %v5469
    %v5471 = vand.u32 %v90, 4294901760
    %5472 = vmatprep.subr.mxu0 %v5471
    %v5473 = vand.u32 %v89, 4294901760
    %5474 = vmatpush2.msra.mxu0 %v5473
    %v5475 = vand.u32 %v88, 4294901760
    %5476 = vmatprep.subr.mxu0 %v5475
    %v5477 = vand.u32 %v87, 4294901760
    %5478 = vmatpush2.msra.mxu0 %v5477
    %v5479 = vand.u32 %v86, 4294901760
    %5480 = vmatprep.subr.mxu0 %v5479
    %v5481 = vand.u32 %v85, 4294901760
    %5482 = vmatpush2.msra.mxu0 %v5481
    %v5483 = vand.u32 %v84, 4294901760
    %5484 = vmatprep.subr.mxu0 %v5483
    %v5485 = vand.u32 %v83, 4294901760
    %5486 = vmatpush2.msra.mxu0 %v5485
    %v5487 = vand.u32 %v82, 4294901760
    %5488 = vmatprep.subr.mxu0 %v5487
    %v5489 = vand.u32 %v81, 4294901760
    %5490 = vmatpush2.msra.mxu0 %v5489
    %v5491 = vand.u32 %v80, 4294901760
    %5492 = vmatprep.subr.mxu0 %v5491
    %v5493 = vand.u32 %v79, 4294901760
    %5494 = vmatpush2.msra.mxu0 %v5493
    %v5495 = vand.u32 %v78, 4294901760
    %5496 = vmatprep.subr.mxu0 %v5495
    %v5497 = vand.u32 %v77, 4294901760
    %5498 = vmatpush2.msra.mxu0 %v5497
    %v5499 = vand.u32 %v76, 4294901760
    %5500 = vmatprep.subr.mxu0 %v5499
    %v5501 = vand.u32 %v75, 4294901760
    %5502 = vmatpush2.msra.mxu0 %v5501
    %v5503 = vand.u32 %v74, 4294901760
    %5504 = vmatprep.subr.mxu0 %v5503
    %v5505 = vand.u32 %v73, 4294901760
    %5506 = vmatpush2.msra.mxu0 %v5505
    %v5507 = vand.u32 %v72, 4294901760
    %5508 = vmatprep.subr.mxu0 %v5507
    %v5509 = vand.u32 %v71, 4294901760
    %5510 = vmatpush2.msra.mxu0 %v5509
    %v5511 = vand.u32 %v70, 4294901760
    %5512 = vmatprep.subr.mxu0 %v5511
    %v5513 = vand.u32 %v69, 4294901760
    %5514 = vmatpush2.msra.mxu0 %v5513
    %v5515 = vand.u32 %v68, 4294901760
    %5516 = vmatprep.subr.mxu0 %v5515
    %v5517 = vand.u32 %v67, 4294901760
    %5518 = vmatpush2.msra.mxu0 %v5517
    %v5519 = vand.u32 %v66, 4294901760
    %5520 = vmatprep.subr.mxu0 %v5519
    %v5521 = vand.u32 %v65, 4294901760
    %5522 = vmatpush2.msra.mxu0 %v5521
    %v5523 = vand.u32 %v64, 4294901760
    %5524 = vmatprep.subr.mxu0 %v5523
    %v5525 = vand.u32 %v63, 4294901760
    %5526 = vmatpush2.msra.mxu0 %v5525
    %v5527 = vand.u32 %v62, 4294901760
    %5528 = vmatprep.subr.mxu0 %v5527
    %v5529 = vand.u32 %v61, 4294901760
    %5530 = vmatpush2.msra.mxu0 %v5529
    %v5531 = vand.u32 %v4653, 4294901760
    %v5532 = vsub.f32 %v4653, %v5531
    %v5533 = vand.u32 %v5532, 4294901760
    %5534 = vmatprep.mubr.f32.mxu0 %v5533
    %v5535 = vand.u32 %v4652, 4294901760
    %v5536 = vsub.f32 %v4652, %v5535
    %v5537 = vand.u32 %v5536, 4294901760
    %5538 = vmatmul.mubr.f32.gmra.mxu0 %v5537
    %v5539 = vpop.f32.mrf.mxu0
    %v5540 = vadd.f32 %v5399, %v5539
    %v5541 = vpop.f32.mrf.mxu0
    %v5542 = vadd.f32 %v5401, %v5541
    %5543 = vdwg.mxu0
    %v5544 = vand.u32 %v60, 4294901760
    %v5545 = vsub.f32 %v60, %v5544
    %v5546 = vand.u32 %v5545, 4294901760
    %5547 = vmatprep.subr.mxu0 %v5546
    %v5548 = vand.u32 %v59, 4294901760
    %v5549 = vsub.f32 %v59, %v5548
    %v5550 = vand.u32 %v5549, 4294901760
    %5551 = vmatpush1.msra.mxu0 %v5550
    %v5552 = vand.u32 %v58, 4294901760
    %v5553 = vsub.f32 %v58, %v5552
    %v5554 = vand.u32 %v5553, 4294901760
    %5555 = vmatprep.subr.mxu0 %v5554
    %v5556 = vand.u32 %v57, 4294901760
    %v5557 = vsub.f32 %v57, %v5556
    %v5558 = vand.u32 %v5557, 4294901760
    %5559 = vmatpush1.msra.mxu0 %v5558
    %v5560 = vand.u32 %v56, 4294901760
    %v5561 = vsub.f32 %v56, %v5560
    %v5562 = vand.u32 %v5561, 4294901760
    %5563 = vmatprep.subr.mxu0 %v5562
    %v5564 = vand.u32 %v55, 4294901760
    %v5565 = vsub.f32 %v55, %v5564
    %v5566 = vand.u32 %v5565, 4294901760
    %5567 = vmatpush1.msra.mxu0 %v5566
    %v5568 = vand.u32 %v54, 4294901760
    %v5569 = vsub.f32 %v54, %v5568
    %v5570 = vand.u32 %v5569, 4294901760
    %5571 = vmatprep.subr.mxu0 %v5570
    %v5572 = vand.u32 %v53, 4294901760
    %v5573 = vsub.f32 %v53, %v5572
    %v5574 = vand.u32 %v5573, 4294901760
    %5575 = vmatpush1.msra.mxu0 %v5574
    %v5576 = vand.u32 %v52, 4294901760
    %v5577 = vsub.f32 %v52, %v5576
    %v5578 = vand.u32 %v5577, 4294901760
    %5579 = vmatprep.subr.mxu0 %v5578
    %v5580 = vand.u32 %v51, 4294901760
    %v5581 = vsub.f32 %v51, %v5580
    %v5582 = vand.u32 %v5581, 4294901760
    %5583 = vmatpush1.msra.mxu0 %v5582
    %v5584 = vand.u32 %v50, 4294901760
    %v5585 = vsub.f32 %v50, %v5584
    %v5586 = vand.u32 %v5585, 4294901760
    %5587 = vmatprep.subr.mxu0 %v5586
    %v5588 = vand.u32 %v49, 4294901760
    %v5589 = vsub.f32 %v49, %v5588
    %v5590 = vand.u32 %v5589, 4294901760
    %5591 = vmatpush1.msra.mxu0 %v5590
    %v5592 = vand.u32 %v48, 4294901760
    %v5593 = vsub.f32 %v48, %v5592
    %v5594 = vand.u32 %v5593, 4294901760
    %5595 = vmatprep.subr.mxu0 %v5594
    %v5596 = vand.u32 %v47, 4294901760
    %v5597 = vsub.f32 %v47, %v5596
    %v5598 = vand.u32 %v5597, 4294901760
    %5599 = vmatpush1.msra.mxu0 %v5598
    %v5600 = vand.u32 %v46, 4294901760
    %v5601 = vsub.f32 %v46, %v5600
    %v5602 = vand.u32 %v5601, 4294901760
    %5603 = vmatprep.subr.mxu0 %v5602
    %v5604 = vand.u32 %v45, 4294901760
    %v5605 = vsub.f32 %v45, %v5604
    %v5606 = vand.u32 %v5605, 4294901760
    %5607 = vmatpush1.msra.mxu0 %v5606
    %v5608 = vand.u32 %v44, 4294901760
    %v5609 = vsub.f32 %v44, %v5608
    %v5610 = vand.u32 %v5609, 4294901760
    %5611 = vmatprep.subr.mxu0 %v5610
    %v5612 = vand.u32 %v43, 4294901760
    %v5613 = vsub.f32 %v43, %v5612
    %v5614 = vand.u32 %v5613, 4294901760
    %5615 = vmatpush1.msra.mxu0 %v5614
    %v5616 = vand.u32 %v42, 4294901760
    %v5617 = vsub.f32 %v42, %v5616
    %v5618 = vand.u32 %v5617, 4294901760
    %5619 = vmatprep.subr.mxu0 %v5618
    %v5620 = vand.u32 %v41, 4294901760
    %v5621 = vsub.f32 %v41, %v5620
    %v5622 = vand.u32 %v5621, 4294901760
    %5623 = vmatpush1.msra.mxu0 %v5622
    %v5624 = vand.u32 %v40, 4294901760
    %v5625 = vsub.f32 %v40, %v5624
    %v5626 = vand.u32 %v5625, 4294901760
    %5627 = vmatprep.subr.mxu0 %v5626
    %v5628 = vand.u32 %v39, 4294901760
    %v5629 = vsub.f32 %v39, %v5628
    %v5630 = vand.u32 %v5629, 4294901760
    %5631 = vmatpush1.msra.mxu0 %v5630
    %v5632 = vand.u32 %v38, 4294901760
    %v5633 = vsub.f32 %v38, %v5632
    %v5634 = vand.u32 %v5633, 4294901760
    %5635 = vmatprep.subr.mxu0 %v5634
    %v5636 = vand.u32 %v37, 4294901760
    %v5637 = vsub.f32 %v37, %v5636
    %v5638 = vand.u32 %v5637, 4294901760
    %5639 = vmatpush1.msra.mxu0 %v5638
    %v5640 = vand.u32 %v36, 4294901760
    %v5641 = vsub.f32 %v36, %v5640
    %v5642 = vand.u32 %v5641, 4294901760
    %5643 = vmatprep.subr.mxu0 %v5642
    %v5644 = vand.u32 %v35, 4294901760
    %v5645 = vsub.f32 %v35, %v5644
    %v5646 = vand.u32 %v5645, 4294901760
    %5647 = vmatpush1.msra.mxu0 %v5646
    %v5648 = vand.u32 %v34, 4294901760
    %v5649 = vsub.f32 %v34, %v5648
    %v5650 = vand.u32 %v5649, 4294901760
    %5651 = vmatprep.subr.mxu0 %v5650
    %v5652 = vand.u32 %v33, 4294901760
    %v5653 = vsub.f32 %v33, %v5652
    %v5654 = vand.u32 %v5653, 4294901760
    %5655 = vmatpush1.msra.mxu0 %v5654
    %v5656 = vand.u32 %v32, 4294901760
    %v5657 = vsub.f32 %v32, %v5656
    %v5658 = vand.u32 %v5657, 4294901760
    %5659 = vmatprep.subr.mxu0 %v5658
    %v5660 = vand.u32 %v31, 4294901760
    %v5661 = vsub.f32 %v31, %v5660
    %v5662 = vand.u32 %v5661, 4294901760
    %5663 = vmatpush1.msra.mxu0 %v5662
    %v5664 = vand.u32 %v30, 4294901760
    %v5665 = vsub.f32 %v30, %v5664
    %v5666 = vand.u32 %v5665, 4294901760
    %5667 = vmatprep.subr.mxu0 %v5666
    %v5668 = vand.u32 %v29, 4294901760
    %v5669 = vsub.f32 %v29, %v5668
    %v5670 = vand.u32 %v5669, 4294901760
    %5671 = vmatpush1.msra.mxu0 %v5670
    %v5672 = vand.u32 %v92, 4294901760
    %v5673 = vsub.f32 %v92, %v5672
    %v5674 = vand.u32 %v5673, 4294901760
    %5675 = vmatprep.subr.mxu0 %v5674
    %v5676 = vand.u32 %v91, 4294901760
    %v5677 = vsub.f32 %v91, %v5676
    %v5678 = vand.u32 %v5677, 4294901760
    %5679 = vmatpush2.msra.mxu0 %v5678
    %v5680 = vand.u32 %v90, 4294901760
    %v5681 = vsub.f32 %v90, %v5680
    %v5682 = vand.u32 %v5681, 4294901760
    %5683 = vmatprep.subr.mxu0 %v5682
    %v5684 = vand.u32 %v89, 4294901760
    %v5685 = vsub.f32 %v89, %v5684
    %v5686 = vand.u32 %v5685, 4294901760
    %5687 = vmatpush2.msra.mxu0 %v5686
    %v5688 = vand.u32 %v88, 4294901760
    %v5689 = vsub.f32 %v88, %v5688
    %v5690 = vand.u32 %v5689, 4294901760
    %5691 = vmatprep.subr.mxu0 %v5690
    %v5692 = vand.u32 %v87, 4294901760
    %v5693 = vsub.f32 %v87, %v5692
    %v5694 = vand.u32 %v5693, 4294901760
    %5695 = vmatpush2.msra.mxu0 %v5694
    %v5696 = vand.u32 %v86, 4294901760
    %v5697 = vsub.f32 %v86, %v5696
    %v5698 = vand.u32 %v5697, 4294901760
    %5699 = vmatprep.subr.mxu0 %v5698
    %v5700 = vand.u32 %v85, 4294901760
    %v5701 = vsub.f32 %v85, %v5700
    %v5702 = vand.u32 %v5701, 4294901760
    %5703 = vmatpush2.msra.mxu0 %v5702
    %v5704 = vand.u32 %v84, 4294901760
    %v5705 = vsub.f32 %v84, %v5704
    %v5706 = vand.u32 %v5705, 4294901760
    %5707 = vmatprep.subr.mxu0 %v5706
    %v5708 = vand.u32 %v83, 4294901760
    %v5709 = vsub.f32 %v83, %v5708
    %v5710 = vand.u32 %v5709, 4294901760
    %5711 = vmatpush2.msra.mxu0 %v5710
    %v5712 = vand.u32 %v82, 4294901760
    %v5713 = vsub.f32 %v82, %v5712
    %v5714 = vand.u32 %v5713, 4294901760
    %5715 = vmatprep.subr.mxu0 %v5714
    %v5716 = vand.u32 %v81, 4294901760
    %v5717 = vsub.f32 %v81, %v5716
    %v5718 = vand.u32 %v5717, 4294901760
    %5719 = vmatpush2.msra.mxu0 %v5718
    %v5720 = vand.u32 %v80, 4294901760
    %v5721 = vsub.f32 %v80, %v5720
    %v5722 = vand.u32 %v5721, 4294901760
    %5723 = vmatprep.subr.mxu0 %v5722
    %v5724 = vand.u32 %v79, 4294901760
    %v5725 = vsub.f32 %v79, %v5724
    %v5726 = vand.u32 %v5725, 4294901760
    %5727 = vmatpush2.msra.mxu0 %v5726
    %v5728 = vand.u32 %v78, 4294901760
    %v5729 = vsub.f32 %v78, %v5728
    %v5730 = vand.u32 %v5729, 4294901760
    %5731 = vmatprep.subr.mxu0 %v5730
    %v5732 = vand.u32 %v77, 4294901760
    %v5733 = vsub.f32 %v77, %v5732
    %v5734 = vand.u32 %v5733, 4294901760
    %5735 = vmatpush2.msra.mxu0 %v5734
    %v5736 = vand.u32 %v76, 4294901760
    %v5737 = vsub.f32 %v76, %v5736
    %v5738 = vand.u32 %v5737, 4294901760
    %5739 = vmatprep.subr.mxu0 %v5738
    %v5740 = vand.u32 %v75, 4294901760
    %v5741 = vsub.f32 %v75, %v5740
    %v5742 = vand.u32 %v5741, 4294901760
    %5743 = vmatpush2.msra.mxu0 %v5742
    %v5744 = vand.u32 %v74, 4294901760
    %v5745 = vsub.f32 %v74, %v5744
    %v5746 = vand.u32 %v5745, 4294901760
    %5747 = vmatprep.subr.mxu0 %v5746
    %v5748 = vand.u32 %v73, 4294901760
    %v5749 = vsub.f32 %v73, %v5748
    %v5750 = vand.u32 %v5749, 4294901760
    %5751 = vmatpush2.msra.mxu0 %v5750
    %v5752 = vand.u32 %v72, 4294901760
    %v5753 = vsub.f32 %v72, %v5752
    %v5754 = vand.u32 %v5753, 4294901760
    %5755 = vmatprep.subr.mxu0 %v5754
    %v5756 = vand.u32 %v71, 4294901760
    %v5757 = vsub.f32 %v71, %v5756
    %v5758 = vand.u32 %v5757, 4294901760
    %5759 = vmatpush2.msra.mxu0 %v5758
    %v5760 = vand.u32 %v70, 4294901760
    %v5761 = vsub.f32 %v70, %v5760
    %v5762 = vand.u32 %v5761, 4294901760
    %5763 = vmatprep.subr.mxu0 %v5762
    %v5764 = vand.u32 %v69, 4294901760
    %v5765 = vsub.f32 %v69, %v5764
    %v5766 = vand.u32 %v5765, 4294901760
    %5767 = vmatpush2.msra.mxu0 %v5766
    %v5768 = vand.u32 %v68, 4294901760
    %v5769 = vsub.f32 %v68, %v5768
    %v5770 = vand.u32 %v5769, 4294901760
    %5771 = vmatprep.subr.mxu0 %v5770
    %v5772 = vand.u32 %v67, 4294901760
    %v5773 = vsub.f32 %v67, %v5772
    %v5774 = vand.u32 %v5773, 4294901760
    %5775 = vmatpush2.msra.mxu0 %v5774
    %v5776 = vand.u32 %v66, 4294901760
    %v5777 = vsub.f32 %v66, %v5776
    %v5778 = vand.u32 %v5777, 4294901760
    %5779 = vmatprep.subr.mxu0 %v5778
    %v5780 = vand.u32 %v65, 4294901760
    %v5781 = vsub.f32 %v65, %v5780
    %v5782 = vand.u32 %v5781, 4294901760
    %5783 = vmatpush2.msra.mxu0 %v5782
    %v5784 = vand.u32 %v64, 4294901760
    %v5785 = vsub.f32 %v64, %v5784
    %v5786 = vand.u32 %v5785, 4294901760
    %5787 = vmatprep.subr.mxu0 %v5786
    %v5788 = vand.u32 %v63, 4294901760
    %v5789 = vsub.f32 %v63, %v5788
    %v5790 = vand.u32 %v5789, 4294901760
    %5791 = vmatpush2.msra.mxu0 %v5790
    %v5792 = vand.u32 %v62, 4294901760
    %v5793 = vsub.f32 %v62, %v5792
    %v5794 = vand.u32 %v5793, 4294901760
    %5795 = vmatprep.subr.mxu0 %v5794
    %v5796 = vand.u32 %v61, 4294901760
    %v5797 = vsub.f32 %v61, %v5796
    %v5798 = vand.u32 %v5797, 4294901760
    %5799 = vmatpush2.msra.mxu0 %v5798
    %v5800 = vand.u32 %v4653, 4294901760
    %5801 = vmatprep.mubr.f32.mxu0 %v5800
    %v5802 = vand.u32 %v4652, 4294901760
    %5803 = vmatmul.mubr.f32.gmra.mxu0 %v5802
    %v5804 = vpop.f32.mrf.mxu0
    %v5805 = vadd.f32 %v5540, %v5804
    %v5806 = vpop.f32.mrf.mxu0
    %v5807 = vadd.f32 %v5542, %v5806
    %5808 = vdwg.mxu0
    %v5809 = vand.u32 %v60, 4294901760
    %5810 = vmatprep.subr.mxu0 %v5809
    %v5811 = vand.u32 %v59, 4294901760
    %5812 = vmatpush1.msra.mxu0 %v5811
    %v5813 = vand.u32 %v58, 4294901760
    %5814 = vmatprep.subr.mxu0 %v5813
    %v5815 = vand.u32 %v57, 4294901760
    %5816 = vmatpush1.msra.mxu0 %v5815
    %v5817 = vand.u32 %v56, 4294901760
    %5818 = vmatprep.subr.mxu0 %v5817
    %v5819 = vand.u32 %v55, 4294901760
    %5820 = vmatpush1.msra.mxu0 %v5819
    %v5821 = vand.u32 %v54, 4294901760
    %5822 = vmatprep.subr.mxu0 %v5821
    %v5823 = vand.u32 %v53, 4294901760
    %5824 = vmatpush1.msra.mxu0 %v5823
    %v5825 = vand.u32 %v52, 4294901760
    %5826 = vmatprep.subr.mxu0 %v5825
    %v5827 = vand.u32 %v51, 4294901760
    %5828 = vmatpush1.msra.mxu0 %v5827
    %v5829 = vand.u32 %v50, 4294901760
    %5830 = vmatprep.subr.mxu0 %v5829
    %v5831 = vand.u32 %v49, 4294901760
    %5832 = vmatpush1.msra.mxu0 %v5831
    %v5833 = vand.u32 %v48, 4294901760
    %5834 = vmatprep.subr.mxu0 %v5833
    %v5835 = vand.u32 %v47, 4294901760
    %5836 = vmatpush1.msra.mxu0 %v5835
    %v5837 = vand.u32 %v46, 4294901760
    %5838 = vmatprep.subr.mxu0 %v5837
    %v5839 = vand.u32 %v45, 4294901760
    %5840 = vmatpush1.msra.mxu0 %v5839
    %v5841 = vand.u32 %v44, 4294901760
    %5842 = vmatprep.subr.mxu0 %v5841
    %v5843 = vand.u32 %v43, 4294901760
    %5844 = vmatpush1.msra.mxu0 %v5843
    %v5845 = vand.u32 %v42, 4294901760
    %5846 = vmatprep.subr.mxu0 %v5845
    %v5847 = vand.u32 %v41, 4294901760
    %5848 = vmatpush1.msra.mxu0 %v5847
    %v5849 = vand.u32 %v40, 4294901760
    %5850 = vmatprep.subr.mxu0 %v5849
    %v5851 = vand.u32 %v39, 4294901760
    %5852 = vmatpush1.msra.mxu0 %v5851
    %v5853 = vand.u32 %v38, 4294901760
    %5854 = vmatprep.subr.mxu0 %v5853
    %v5855 = vand.u32 %v37, 4294901760
    %5856 = vmatpush1.msra.mxu0 %v5855
    %v5857 = vand.u32 %v36, 4294901760
    %5858 = vmatprep.subr.mxu0 %v5857
    %v5859 = vand.u32 %v35, 4294901760
    %5860 = vmatpush1.msra.mxu0 %v5859
    %v5861 = vand.u32 %v34, 4294901760
    %5862 = vmatprep.subr.mxu0 %v5861
    %v5863 = vand.u32 %v33, 4294901760
    %5864 = vmatpush1.msra.mxu0 %v5863
    %v5865 = vand.u32 %v32, 4294901760
    %5866 = vmatprep.subr.mxu0 %v5865
    %v5867 = vand.u32 %v31, 4294901760
    %5868 = vmatpush1.msra.mxu0 %v5867
    %v5869 = vand.u32 %v30, 4294901760
    %5870 = vmatprep.subr.mxu0 %v5869
    %v5871 = vand.u32 %v29, 4294901760
    %5872 = vmatpush1.msra.mxu0 %v5871
    %v5873 = vand.u32 %v92, 4294901760
    %5874 = vmatprep.subr.mxu0 %v5873
    %v5875 = vand.u32 %v91, 4294901760
    %5876 = vmatpush2.msra.mxu0 %v5875
    %v5877 = vand.u32 %v90, 4294901760
    %5878 = vmatprep.subr.mxu0 %v5877
    %v5879 = vand.u32 %v89, 4294901760
    %5880 = vmatpush2.msra.mxu0 %v5879
    %v5881 = vand.u32 %v88, 4294901760
    %5882 = vmatprep.subr.mxu0 %v5881
    %v5883 = vand.u32 %v87, 4294901760
    %5884 = vmatpush2.msra.mxu0 %v5883
    %v5885 = vand.u32 %v86, 4294901760
    %5886 = vmatprep.subr.mxu0 %v5885
    %v5887 = vand.u32 %v85, 4294901760
    %5888 = vmatpush2.msra.mxu0 %v5887
    %v5889 = vand.u32 %v84, 4294901760
    %5890 = vmatprep.subr.mxu0 %v5889
    %v5891 = vand.u32 %v83, 4294901760
    %5892 = vmatpush2.msra.mxu0 %v5891
    %v5893 = vand.u32 %v82, 4294901760
    %5894 = vmatprep.subr.mxu0 %v5893
    %v5895 = vand.u32 %v81, 4294901760
    %5896 = vmatpush2.msra.mxu0 %v5895
    %v5897 = vand.u32 %v80, 4294901760
    %5898 = vmatprep.subr.mxu0 %v5897
    %v5899 = vand.u32 %v79, 4294901760
    %5900 = vmatpush2.msra.mxu0 %v5899
    %v5901 = vand.u32 %v78, 4294901760
    %5902 = vmatprep.subr.mxu0 %v5901
    %v5903 = vand.u32 %v77, 4294901760
    %5904 = vmatpush2.msra.mxu0 %v5903
    %v5905 = vand.u32 %v76, 4294901760
    %5906 = vmatprep.subr.mxu0 %v5905
    %v5907 = vand.u32 %v75, 4294901760
    %5908 = vmatpush2.msra.mxu0 %v5907
    %v5909 = vand.u32 %v74, 4294901760
    %5910 = vmatprep.subr.mxu0 %v5909
    %v5911 = vand.u32 %v73, 4294901760
    %5912 = vmatpush2.msra.mxu0 %v5911
    %v5913 = vand.u32 %v72, 4294901760
    %5914 = vmatprep.subr.mxu0 %v5913
    %v5915 = vand.u32 %v71, 4294901760
    %5916 = vmatpush2.msra.mxu0 %v5915
    %v5917 = vand.u32 %v70, 4294901760
    %5918 = vmatprep.subr.mxu0 %v5917
    %v5919 = vand.u32 %v69, 4294901760
    %5920 = vmatpush2.msra.mxu0 %v5919
    %v5921 = vand.u32 %v68, 4294901760
    %5922 = vmatprep.subr.mxu0 %v5921
    %v5923 = vand.u32 %v67, 4294901760
    %5924 = vmatpush2.msra.mxu0 %v5923
    %v5925 = vand.u32 %v66, 4294901760
    %5926 = vmatprep.subr.mxu0 %v5925
    %v5927 = vand.u32 %v65, 4294901760
    %5928 = vmatpush2.msra.mxu0 %v5927
    %v5929 = vand.u32 %v64, 4294901760
    %5930 = vmatprep.subr.mxu0 %v5929
    %v5931 = vand.u32 %v63, 4294901760
    %5932 = vmatpush2.msra.mxu0 %v5931
    %v5933 = vand.u32 %v62, 4294901760
    %5934 = vmatprep.subr.mxu0 %v5933
    %v5935 = vand.u32 %v61, 4294901760
    %5936 = vmatpush2.msra.mxu0 %v5935
    %v5937 = vand.u32 %v4653, 4294901760
    %5938 = vmatprep.mubr.f32.mxu0 %v5937
    %v5939 = vand.u32 %v4652, 4294901760
    %5940 = vmatmul.mubr.f32.gmra.mxu0 %v5939
    %v5941 = vpop.f32.mrf.mxu0
    %v5942 = vadd.f32 %v5805, %v5941
    %v5943 = vpop.f32.mrf.mxu0
    %v5944 = vadd.f32 %v5807, %v5943
    %5945 = vdwg.mxu0
    %v5946 = vtanh.pop %v5942
    %v5947 = vtanh.pop %v5944
    %v5948 = vlaneseq
    %v5949 = vshrl.u32 %v5948, 7
    %v5950 = vsub.s32 5, %v5949
    %v5951 = vrot.slane %v97, %v5950
    %v5952 = vlaneseq
    %v5953 = vshrl.u32 %v5952, 7
    %v5954 = vsub.s32 5, %v5953
    %v5955 = vrot.slane %v98, %v5954
    %v5956 = vand.u32 %v60, 4294901760
    %5957 = vmatprep.subr.mxu0 %v5956
    %v5958 = vand.u32 %v59, 4294901760
    %5959 = vmatpush1.msra.mxu0 %v5958
    %v5960 = vand.u32 %v58, 4294901760
    %5961 = vmatprep.subr.mxu0 %v5960
    %v5962 = vand.u32 %v57, 4294901760
    %5963 = vmatpush1.msra.mxu0 %v5962
    %v5964 = vand.u32 %v56, 4294901760
    %5965 = vmatprep.subr.mxu0 %v5964
    %v5966 = vand.u32 %v55, 4294901760
    %5967 = vmatpush1.msra.mxu0 %v5966
    %v5968 = vand.u32 %v54, 4294901760
    %5969 = vmatprep.subr.mxu0 %v5968
    %v5970 = vand.u32 %v53, 4294901760
    %5971 = vmatpush1.msra.mxu0 %v5970
    %v5972 = vand.u32 %v52, 4294901760
    %5973 = vmatprep.subr.mxu0 %v5972
    %v5974 = vand.u32 %v51, 4294901760
    %5975 = vmatpush1.msra.mxu0 %v5974
    %v5976 = vand.u32 %v50, 4294901760
    %5977 = vmatprep.subr.mxu0 %v5976
    %v5978 = vand.u32 %v49, 4294901760
    %5979 = vmatpush1.msra.mxu0 %v5978
    %v5980 = vand.u32 %v48, 4294901760
    %5981 = vmatprep.subr.mxu0 %v5980
    %v5982 = vand.u32 %v47, 4294901760
    %5983 = vmatpush1.msra.mxu0 %v5982
    %v5984 = vand.u32 %v46, 4294901760
    %5985 = vmatprep.subr.mxu0 %v5984
    %v5986 = vand.u32 %v45, 4294901760
    %5987 = vmatpush1.msra.mxu0 %v5986
    %v5988 = vand.u32 %v44, 4294901760
    %5989 = vmatprep.subr.mxu0 %v5988
    %v5990 = vand.u32 %v43, 4294901760
    %5991 = vmatpush1.msra.mxu0 %v5990
    %v5992 = vand.u32 %v42, 4294901760
    %5993 = vmatprep.subr.mxu0 %v5992
    %v5994 = vand.u32 %v41, 4294901760
    %5995 = vmatpush1.msra.mxu0 %v5994
    %v5996 = vand.u32 %v40, 4294901760
    %5997 = vmatprep.subr.mxu0 %v5996
    %v5998 = vand.u32 %v39, 4294901760
    %5999 = vmatpush1.msra.mxu0 %v5998
    %v6000 = vand.u32 %v38, 4294901760
    %6001 = vmatprep.subr.mxu0 %v6000
    %v6002 = vand.u32 %v37, 4294901760
    %6003 = vmatpush1.msra.mxu0 %v6002
    %v6004 = vand.u32 %v36, 4294901760
    %6005 = vmatprep.subr.mxu0 %v6004
    %v6006 = vand.u32 %v35, 4294901760
    %6007 = vmatpush1.msra.mxu0 %v6006
    %v6008 = vand.u32 %v34, 4294901760
    %6009 = vmatprep.subr.mxu0 %v6008
    %v6010 = vand.u32 %v33, 4294901760
    %6011 = vmatpush1.msra.mxu0 %v6010
    %v6012 = vand.u32 %v32, 4294901760
    %6013 = vmatprep.subr.mxu0 %v6012
    %v6014 = vand.u32 %v31, 4294901760
    %6015 = vmatpush1.msra.mxu0 %v6014
    %v6016 = vand.u32 %v30, 4294901760
    %6017 = vmatprep.subr.mxu0 %v6016
    %v6018 = vand.u32 %v29, 4294901760
    %6019 = vmatpush1.msra.mxu0 %v6018
    %v6020 = vand.u32 %v92, 4294901760
    %6021 = vmatprep.subr.mxu0 %v6020
    %v6022 = vand.u32 %v91, 4294901760
    %6023 = vmatpush2.msra.mxu0 %v6022
    %v6024 = vand.u32 %v90, 4294901760
    %6025 = vmatprep.subr.mxu0 %v6024
    %v6026 = vand.u32 %v89, 4294901760
    %6027 = vmatpush2.msra.mxu0 %v6026
    %v6028 = vand.u32 %v88, 4294901760
    %6029 = vmatprep.subr.mxu0 %v6028
    %v6030 = vand.u32 %v87, 4294901760
    %6031 = vmatpush2.msra.mxu0 %v6030
    %v6032 = vand.u32 %v86, 4294901760
    %6033 = vmatprep.subr.mxu0 %v6032
    %v6034 = vand.u32 %v85, 4294901760
    %6035 = vmatpush2.msra.mxu0 %v6034
    %v6036 = vand.u32 %v84, 4294901760
    %6037 = vmatprep.subr.mxu0 %v6036
    %v6038 = vand.u32 %v83, 4294901760
    %6039 = vmatpush2.msra.mxu0 %v6038
    %v6040 = vand.u32 %v82, 4294901760
    %6041 = vmatprep.subr.mxu0 %v6040
    %v6042 = vand.u32 %v81, 4294901760
    %6043 = vmatpush2.msra.mxu0 %v6042
    %v6044 = vand.u32 %v80, 4294901760
    %6045 = vmatprep.subr.mxu0 %v6044
    %v6046 = vand.u32 %v79, 4294901760
    %6047 = vmatpush2.msra.mxu0 %v6046
    %v6048 = vand.u32 %v78, 4294901760
    %6049 = vmatprep.subr.mxu0 %v6048
    %v6050 = vand.u32 %v77, 4294901760
    %6051 = vmatpush2.msra.mxu0 %v6050
    %v6052 = vand.u32 %v76, 4294901760
    %6053 = vmatprep.subr.mxu0 %v6052
    %v6054 = vand.u32 %v75, 4294901760
    %6055 = vmatpush2.msra.mxu0 %v6054
    %v6056 = vand.u32 %v74, 4294901760
    %6057 = vmatprep.subr.mxu0 %v6056
    %v6058 = vand.u32 %v73, 4294901760
    %6059 = vmatpush2.msra.mxu0 %v6058
    %v6060 = vand.u32 %v72, 4294901760
    %6061 = vmatprep.subr.mxu0 %v6060
    %v6062 = vand.u32 %v71, 4294901760
    %6063 = vmatpush2.msra.mxu0 %v6062
    %v6064 = vand.u32 %v70, 4294901760
    %6065 = vmatprep.subr.mxu0 %v6064
    %v6066 = vand.u32 %v69, 4294901760
    %6067 = vmatpush2.msra.mxu0 %v6066
    %v6068 = vand.u32 %v68, 4294901760
    %6069 = vmatprep.subr.mxu0 %v6068
    %v6070 = vand.u32 %v67, 4294901760
    %6071 = vmatpush2.msra.mxu0 %v6070
    %v6072 = vand.u32 %v66, 4294901760
    %6073 = vmatprep.subr.mxu0 %v6072
    %v6074 = vand.u32 %v65, 4294901760
    %6075 = vmatpush2.msra.mxu0 %v6074
    %v6076 = vand.u32 %v64, 4294901760
    %6077 = vmatprep.subr.mxu0 %v6076
    %v6078 = vand.u32 %v63, 4294901760
    %6079 = vmatpush2.msra.mxu0 %v6078
    %v6080 = vand.u32 %v62, 4294901760
    %6081 = vmatprep.subr.mxu0 %v6080
    %v6082 = vand.u32 %v61, 4294901760
    %6083 = vmatpush2.msra.mxu0 %v6082
    %v6084 = vand.u32 %v5947, 4294901760
    %v6085 = vsub.f32 %v5947, %v6084
    %v6086 = vand.u32 %v6085, 4294901760
    %v6087 = vsub.f32 %v6085, %v6086
    %v6088 = vand.u32 %v6087, 4294901760
    %6089 = vmatprep.mubr.f32.mxu0 %v6088
    %v6090 = vand.u32 %v5946, 4294901760
    %v6091 = vsub.f32 %v5946, %v6090
    %v6092 = vand.u32 %v6091, 4294901760
    %v6093 = vsub.f32 %v6091, %v6092
    %v6094 = vand.u32 %v6093, 4294901760
    %6095 = vmatmul.mubr.f32.gmra.mxu0 %v6094
    %v6096 = vpop.f32.mrf.mxu0
    %v6097 = vadd.f32 %v5951, %v6096
    %v6098 = vpop.f32.mrf.mxu0
    %v6099 = vadd.f32 %v5955, %v6098
    %6100 = vdwg.mxu0
    %v6101 = vand.u32 %v60, 4294901760
    %v6102 = vsub.f32 %v60, %v6101
    %v6103 = vand.u32 %v6102, 4294901760
    %v6104 = vsub.f32 %v6102, %v6103
    %v6105 = vand.u32 %v6104, 4294901760
    %6106 = vmatprep.subr.mxu0 %v6105
    %v6107 = vand.u32 %v59, 4294901760
    %v6108 = vsub.f32 %v59, %v6107
    %v6109 = vand.u32 %v6108, 4294901760
    %v6110 = vsub.f32 %v6108, %v6109
    %v6111 = vand.u32 %v6110, 4294901760
    %6112 = vmatpush1.msra.mxu0 %v6111
    %v6113 = vand.u32 %v58, 4294901760
    %v6114 = vsub.f32 %v58, %v6113
    %v6115 = vand.u32 %v6114, 4294901760
    %v6116 = vsub.f32 %v6114, %v6115
    %v6117 = vand.u32 %v6116, 4294901760
    %6118 = vmatprep.subr.mxu0 %v6117
    %v6119 = vand.u32 %v57, 4294901760
    %v6120 = vsub.f32 %v57, %v6119
    %v6121 = vand.u32 %v6120, 4294901760
    %v6122 = vsub.f32 %v6120, %v6121
    %v6123 = vand.u32 %v6122, 4294901760
    %6124 = vmatpush1.msra.mxu0 %v6123
    %v6125 = vand.u32 %v56, 4294901760
    %v6126 = vsub.f32 %v56, %v6125
    %v6127 = vand.u32 %v6126, 4294901760
    %v6128 = vsub.f32 %v6126, %v6127
    %v6129 = vand.u32 %v6128, 4294901760
    %6130 = vmatprep.subr.mxu0 %v6129
    %v6131 = vand.u32 %v55, 4294901760
    %v6132 = vsub.f32 %v55, %v6131
    %v6133 = vand.u32 %v6132, 4294901760
    %v6134 = vsub.f32 %v6132, %v6133
    %v6135 = vand.u32 %v6134, 4294901760
    %6136 = vmatpush1.msra.mxu0 %v6135
    %v6137 = vand.u32 %v54, 4294901760
    %v6138 = vsub.f32 %v54, %v6137
    %v6139 = vand.u32 %v6138, 4294901760
    %v6140 = vsub.f32 %v6138, %v6139
    %v6141 = vand.u32 %v6140, 4294901760
    %6142 = vmatprep.subr.mxu0 %v6141
    %v6143 = vand.u32 %v53, 4294901760
    %v6144 = vsub.f32 %v53, %v6143
    %v6145 = vand.u32 %v6144, 4294901760
    %v6146 = vsub.f32 %v6144, %v6145
    %v6147 = vand.u32 %v6146, 4294901760
    %6148 = vmatpush1.msra.mxu0 %v6147
    %v6149 = vand.u32 %v52, 4294901760
    %v6150 = vsub.f32 %v52, %v6149
    %v6151 = vand.u32 %v6150, 4294901760
    %v6152 = vsub.f32 %v6150, %v6151
    %v6153 = vand.u32 %v6152, 4294901760
    %6154 = vmatprep.subr.mxu0 %v6153
    %v6155 = vand.u32 %v51, 4294901760
    %v6156 = vsub.f32 %v51, %v6155
    %v6157 = vand.u32 %v6156, 4294901760
    %v6158 = vsub.f32 %v6156, %v6157
    %v6159 = vand.u32 %v6158, 4294901760
    %6160 = vmatpush1.msra.mxu0 %v6159
    %v6161 = vand.u32 %v50, 4294901760
    %v6162 = vsub.f32 %v50, %v6161
    %v6163 = vand.u32 %v6162, 4294901760
    %v6164 = vsub.f32 %v6162, %v6163
    %v6165 = vand.u32 %v6164, 4294901760
    %6166 = vmatprep.subr.mxu0 %v6165
    %v6167 = vand.u32 %v49, 4294901760
    %v6168 = vsub.f32 %v49, %v6167
    %v6169 = vand.u32 %v6168, 4294901760
    %v6170 = vsub.f32 %v6168, %v6169
    %v6171 = vand.u32 %v6170, 4294901760
    %6172 = vmatpush1.msra.mxu0 %v6171
    %v6173 = vand.u32 %v48, 4294901760
    %v6174 = vsub.f32 %v48, %v6173
    %v6175 = vand.u32 %v6174, 4294901760
    %v6176 = vsub.f32 %v6174, %v6175
    %v6177 = vand.u32 %v6176, 4294901760
    %6178 = vmatprep.subr.mxu0 %v6177
    %v6179 = vand.u32 %v47, 4294901760
    %v6180 = vsub.f32 %v47, %v6179
    %v6181 = vand.u32 %v6180, 4294901760
    %v6182 = vsub.f32 %v6180, %v6181
    %v6183 = vand.u32 %v6182, 4294901760
    %6184 = vmatpush1.msra.mxu0 %v6183
    %v6185 = vand.u32 %v46, 4294901760
    %v6186 = vsub.f32 %v46, %v6185
    %v6187 = vand.u32 %v6186, 4294901760
    %v6188 = vsub.f32 %v6186, %v6187
    %v6189 = vand.u32 %v6188, 4294901760
    %6190 = vmatprep.subr.mxu0 %v6189
    %v6191 = vand.u32 %v45, 4294901760
    %v6192 = vsub.f32 %v45, %v6191
    %v6193 = vand.u32 %v6192, 4294901760
    %v6194 = vsub.f32 %v6192, %v6193
    %v6195 = vand.u32 %v6194, 4294901760
    %6196 = vmatpush1.msra.mxu0 %v6195
    %v6197 = vand.u32 %v44, 4294901760
    %v6198 = vsub.f32 %v44, %v6197
    %v6199 = vand.u32 %v6198, 4294901760
    %v6200 = vsub.f32 %v6198, %v6199
    %v6201 = vand.u32 %v6200, 4294901760
    %6202 = vmatprep.subr.mxu0 %v6201
    %v6203 = vand.u32 %v43, 4294901760
    %v6204 = vsub.f32 %v43, %v6203
    %v6205 = vand.u32 %v6204, 4294901760
    %v6206 = vsub.f32 %v6204, %v6205
    %v6207 = vand.u32 %v6206, 4294901760
    %6208 = vmatpush1.msra.mxu0 %v6207
    %v6209 = vand.u32 %v42, 4294901760
    %v6210 = vsub.f32 %v42, %v6209
    %v6211 = vand.u32 %v6210, 4294901760
    %v6212 = vsub.f32 %v6210, %v6211
    %v6213 = vand.u32 %v6212, 4294901760
    %6214 = vmatprep.subr.mxu0 %v6213
    %v6215 = vand.u32 %v41, 4294901760
    %v6216 = vsub.f32 %v41, %v6215
    %v6217 = vand.u32 %v6216, 4294901760
    %v6218 = vsub.f32 %v6216, %v6217
    %v6219 = vand.u32 %v6218, 4294901760
    %6220 = vmatpush1.msra.mxu0 %v6219
    %v6221 = vand.u32 %v40, 4294901760
    %v6222 = vsub.f32 %v40, %v6221
    %v6223 = vand.u32 %v6222, 4294901760
    %v6224 = vsub.f32 %v6222, %v6223
    %v6225 = vand.u32 %v6224, 4294901760
    %6226 = vmatprep.subr.mxu0 %v6225
    %v6227 = vand.u32 %v39, 4294901760
    %v6228 = vsub.f32 %v39, %v6227
    %v6229 = vand.u32 %v6228, 4294901760
    %v6230 = vsub.f32 %v6228, %v6229
    %v6231 = vand.u32 %v6230, 4294901760
    %6232 = vmatpush1.msra.mxu0 %v6231
    %v6233 = vand.u32 %v38, 4294901760
    %v6234 = vsub.f32 %v38, %v6233
    %v6235 = vand.u32 %v6234, 4294901760
    %v6236 = vsub.f32 %v6234, %v6235
    %v6237 = vand.u32 %v6236, 4294901760
    %6238 = vmatprep.subr.mxu0 %v6237
    %v6239 = vand.u32 %v37, 4294901760
    %v6240 = vsub.f32 %v37, %v6239
    %v6241 = vand.u32 %v6240, 4294901760
    %v6242 = vsub.f32 %v6240, %v6241
    %v6243 = vand.u32 %v6242, 4294901760
    %6244 = vmatpush1.msra.mxu0 %v6243
    %v6245 = vand.u32 %v36, 4294901760
    %v6246 = vsub.f32 %v36, %v6245
    %v6247 = vand.u32 %v6246, 4294901760
    %v6248 = vsub.f32 %v6246, %v6247
    %v6249 = vand.u32 %v6248, 4294901760
    %6250 = vmatprep.subr.mxu0 %v6249
    %v6251 = vand.u32 %v35, 4294901760
    %v6252 = vsub.f32 %v35, %v6251
    %v6253 = vand.u32 %v6252, 4294901760
    %v6254 = vsub.f32 %v6252, %v6253
    %v6255 = vand.u32 %v6254, 4294901760
    %6256 = vmatpush1.msra.mxu0 %v6255
    %v6257 = vand.u32 %v34, 4294901760
    %v6258 = vsub.f32 %v34, %v6257
    %v6259 = vand.u32 %v6258, 4294901760
    %v6260 = vsub.f32 %v6258, %v6259
    %v6261 = vand.u32 %v6260, 4294901760
    %6262 = vmatprep.subr.mxu0 %v6261
    %v6263 = vand.u32 %v33, 4294901760
    %v6264 = vsub.f32 %v33, %v6263
    %v6265 = vand.u32 %v6264, 4294901760
    %v6266 = vsub.f32 %v6264, %v6265
    %v6267 = vand.u32 %v6266, 4294901760
    %6268 = vmatpush1.msra.mxu0 %v6267
    %v6269 = vand.u32 %v32, 4294901760
    %v6270 = vsub.f32 %v32, %v6269
    %v6271 = vand.u32 %v6270, 4294901760
    %v6272 = vsub.f32 %v6270, %v6271
    %v6273 = vand.u32 %v6272, 4294901760
    %6274 = vmatprep.subr.mxu0 %v6273
    %v6275 = vand.u32 %v31, 4294901760
    %v6276 = vsub.f32 %v31, %v6275
    %v6277 = vand.u32 %v6276, 4294901760
    %v6278 = vsub.f32 %v6276, %v6277
    %v6279 = vand.u32 %v6278, 4294901760
    %6280 = vmatpush1.msra.mxu0 %v6279
    %v6281 = vand.u32 %v30, 4294901760
    %v6282 = vsub.f32 %v30, %v6281
    %v6283 = vand.u32 %v6282, 4294901760
    %v6284 = vsub.f32 %v6282, %v6283
    %v6285 = vand.u32 %v6284, 4294901760
    %6286 = vmatprep.subr.mxu0 %v6285
    %v6287 = vand.u32 %v29, 4294901760
    %v6288 = vsub.f32 %v29, %v6287
    %v6289 = vand.u32 %v6288, 4294901760
    %v6290 = vsub.f32 %v6288, %v6289
    %v6291 = vand.u32 %v6290, 4294901760
    %6292 = vmatpush1.msra.mxu0 %v6291
    %v6293 = vand.u32 %v92, 4294901760
    %v6294 = vsub.f32 %v92, %v6293
    %v6295 = vand.u32 %v6294, 4294901760
    %v6296 = vsub.f32 %v6294, %v6295
    %v6297 = vand.u32 %v6296, 4294901760
    %6298 = vmatprep.subr.mxu0 %v6297
    %v6299 = vand.u32 %v91, 4294901760
    %v6300 = vsub.f32 %v91, %v6299
    %v6301 = vand.u32 %v6300, 4294901760
    %v6302 = vsub.f32 %v6300, %v6301
    %v6303 = vand.u32 %v6302, 4294901760
    %6304 = vmatpush2.msra.mxu0 %v6303
    %v6305 = vand.u32 %v90, 4294901760
    %v6306 = vsub.f32 %v90, %v6305
    %v6307 = vand.u32 %v6306, 4294901760
    %v6308 = vsub.f32 %v6306, %v6307
    %v6309 = vand.u32 %v6308, 4294901760
    %6310 = vmatprep.subr.mxu0 %v6309
    %v6311 = vand.u32 %v89, 4294901760
    %v6312 = vsub.f32 %v89, %v6311
    %v6313 = vand.u32 %v6312, 4294901760
    %v6314 = vsub.f32 %v6312, %v6313
    %v6315 = vand.u32 %v6314, 4294901760
    %6316 = vmatpush2.msra.mxu0 %v6315
    %v6317 = vand.u32 %v88, 4294901760
    %v6318 = vsub.f32 %v88, %v6317
    %v6319 = vand.u32 %v6318, 4294901760
    %v6320 = vsub.f32 %v6318, %v6319
    %v6321 = vand.u32 %v6320, 4294901760
    %6322 = vmatprep.subr.mxu0 %v6321
    %v6323 = vand.u32 %v87, 4294901760
    %v6324 = vsub.f32 %v87, %v6323
    %v6325 = vand.u32 %v6324, 4294901760
    %v6326 = vsub.f32 %v6324, %v6325
    %v6327 = vand.u32 %v6326, 4294901760
    %6328 = vmatpush2.msra.mxu0 %v6327
    %v6329 = vand.u32 %v86, 4294901760
    %v6330 = vsub.f32 %v86, %v6329
    %v6331 = vand.u32 %v6330, 4294901760
    %v6332 = vsub.f32 %v6330, %v6331
    %v6333 = vand.u32 %v6332, 4294901760
    %6334 = vmatprep.subr.mxu0 %v6333
    %v6335 = vand.u32 %v85, 4294901760
    %v6336 = vsub.f32 %v85, %v6335
    %v6337 = vand.u32 %v6336, 4294901760
    %v6338 = vsub.f32 %v6336, %v6337
    %v6339 = vand.u32 %v6338, 4294901760
    %6340 = vmatpush2.msra.mxu0 %v6339
    %v6341 = vand.u32 %v84, 4294901760
    %v6342 = vsub.f32 %v84, %v6341
    %v6343 = vand.u32 %v6342, 4294901760
    %v6344 = vsub.f32 %v6342, %v6343
    %v6345 = vand.u32 %v6344, 4294901760
    %6346 = vmatprep.subr.mxu0 %v6345
    %v6347 = vand.u32 %v83, 4294901760
    %v6348 = vsub.f32 %v83, %v6347
    %v6349 = vand.u32 %v6348, 4294901760
    %v6350 = vsub.f32 %v6348, %v6349
    %v6351 = vand.u32 %v6350, 4294901760
    %6352 = vmatpush2.msra.mxu0 %v6351
    %v6353 = vand.u32 %v82, 4294901760
    %v6354 = vsub.f32 %v82, %v6353
    %v6355 = vand.u32 %v6354, 4294901760
    %v6356 = vsub.f32 %v6354, %v6355
    %v6357 = vand.u32 %v6356, 4294901760
    %6358 = vmatprep.subr.mxu0 %v6357
    %v6359 = vand.u32 %v81, 4294901760
    %v6360 = vsub.f32 %v81, %v6359
    %v6361 = vand.u32 %v6360, 4294901760
    %v6362 = vsub.f32 %v6360, %v6361
    %v6363 = vand.u32 %v6362, 4294901760
    %6364 = vmatpush2.msra.mxu0 %v6363
    %v6365 = vand.u32 %v80, 4294901760
    %v6366 = vsub.f32 %v80, %v6365
    %v6367 = vand.u32 %v6366, 4294901760
    %v6368 = vsub.f32 %v6366, %v6367
    %v6369 = vand.u32 %v6368, 4294901760
    %6370 = vmatprep.subr.mxu0 %v6369
    %v6371 = vand.u32 %v79, 4294901760
    %v6372 = vsub.f32 %v79, %v6371
    %v6373 = vand.u32 %v6372, 4294901760
    %v6374 = vsub.f32 %v6372, %v6373
    %v6375 = vand.u32 %v6374, 4294901760
    %6376 = vmatpush2.msra.mxu0 %v6375
    %v6377 = vand.u32 %v78, 4294901760
    %v6378 = vsub.f32 %v78, %v6377
    %v6379 = vand.u32 %v6378, 4294901760
    %v6380 = vsub.f32 %v6378, %v6379
    %v6381 = vand.u32 %v6380, 4294901760
    %6382 = vmatprep.subr.mxu0 %v6381
    %v6383 = vand.u32 %v77, 4294901760
    %v6384 = vsub.f32 %v77, %v6383
    %v6385 = vand.u32 %v6384, 4294901760
    %v6386 = vsub.f32 %v6384, %v6385
    %v6387 = vand.u32 %v6386, 4294901760
    %6388 = vmatpush2.msra.mxu0 %v6387
    %v6389 = vand.u32 %v76, 4294901760
    %v6390 = vsub.f32 %v76, %v6389
    %v6391 = vand.u32 %v6390, 4294901760
    %v6392 = vsub.f32 %v6390, %v6391
    %v6393 = vand.u32 %v6392, 4294901760
    %6394 = vmatprep.subr.mxu0 %v6393
    %v6395 = vand.u32 %v75, 4294901760
    %v6396 = vsub.f32 %v75, %v6395
    %v6397 = vand.u32 %v6396, 4294901760
    %v6398 = vsub.f32 %v6396, %v6397
    %v6399 = vand.u32 %v6398, 4294901760
    %6400 = vmatpush2.msra.mxu0 %v6399
    %v6401 = vand.u32 %v74, 4294901760
    %v6402 = vsub.f32 %v74, %v6401
    %v6403 = vand.u32 %v6402, 4294901760
    %v6404 = vsub.f32 %v6402, %v6403
    %v6405 = vand.u32 %v6404, 4294901760
    %6406 = vmatprep.subr.mxu0 %v6405
    %v6407 = vand.u32 %v73, 4294901760
    %v6408 = vsub.f32 %v73, %v6407
    %v6409 = vand.u32 %v6408, 4294901760
    %v6410 = vsub.f32 %v6408, %v6409
    %v6411 = vand.u32 %v6410, 4294901760
    %6412 = vmatpush2.msra.mxu0 %v6411
    %v6413 = vand.u32 %v72, 4294901760
    %v6414 = vsub.f32 %v72, %v6413
    %v6415 = vand.u32 %v6414, 4294901760
    %v6416 = vsub.f32 %v6414, %v6415
    %v6417 = vand.u32 %v6416, 4294901760
    %6418 = vmatprep.subr.mxu0 %v6417
    %v6419 = vand.u32 %v71, 4294901760
    %v6420 = vsub.f32 %v71, %v6419
    %v6421 = vand.u32 %v6420, 4294901760
    %v6422 = vsub.f32 %v6420, %v6421
    %v6423 = vand.u32 %v6422, 4294901760
    %6424 = vmatpush2.msra.mxu0 %v6423
    %v6425 = vand.u32 %v70, 4294901760
    %v6426 = vsub.f32 %v70, %v6425
    %v6427 = vand.u32 %v6426, 4294901760
    %v6428 = vsub.f32 %v6426, %v6427
    %v6429 = vand.u32 %v6428, 4294901760
    %6430 = vmatprep.subr.mxu0 %v6429
    %v6431 = vand.u32 %v69, 4294901760
    %v6432 = vsub.f32 %v69, %v6431
    %v6433 = vand.u32 %v6432, 4294901760
    %v6434 = vsub.f32 %v6432, %v6433
    %v6435 = vand.u32 %v6434, 4294901760
    %6436 = vmatpush2.msra.mxu0 %v6435
    %v6437 = vand.u32 %v68, 4294901760
    %v6438 = vsub.f32 %v68, %v6437
    %v6439 = vand.u32 %v6438, 4294901760
    %v6440 = vsub.f32 %v6438, %v6439
    %v6441 = vand.u32 %v6440, 4294901760
    %6442 = vmatprep.subr.mxu0 %v6441
    %v6443 = vand.u32 %v67, 4294901760
    %v6444 = vsub.f32 %v67, %v6443
    %v6445 = vand.u32 %v6444, 4294901760
    %v6446 = vsub.f32 %v6444, %v6445
    %v6447 = vand.u32 %v6446, 4294901760
    %6448 = vmatpush2.msra.mxu0 %v6447
    %v6449 = vand.u32 %v66, 4294901760
    %v6450 = vsub.f32 %v66, %v6449
    %v6451 = vand.u32 %v6450, 4294901760
    %v6452 = vsub.f32 %v6450, %v6451
    %v6453 = vand.u32 %v6452, 4294901760
    %6454 = vmatprep.subr.mxu0 %v6453
    %v6455 = vand.u32 %v65, 4294901760
    %v6456 = vsub.f32 %v65, %v6455
    %v6457 = vand.u32 %v6456, 4294901760
    %v6458 = vsub.f32 %v6456, %v6457
    %v6459 = vand.u32 %v6458, 4294901760
    %6460 = vmatpush2.msra.mxu0 %v6459
    %v6461 = vand.u32 %v64, 4294901760
    %v6462 = vsub.f32 %v64, %v6461
    %v6463 = vand.u32 %v6462, 4294901760
    %v6464 = vsub.f32 %v6462, %v6463
    %v6465 = vand.u32 %v6464, 4294901760
    %6466 = vmatprep.subr.mxu0 %v6465
    %v6467 = vand.u32 %v63, 4294901760
    %v6468 = vsub.f32 %v63, %v6467
    %v6469 = vand.u32 %v6468, 4294901760
    %v6470 = vsub.f32 %v6468, %v6469
    %v6471 = vand.u32 %v6470, 4294901760
    %6472 = vmatpush2.msra.mxu0 %v6471
    %v6473 = vand.u32 %v62, 4294901760
    %v6474 = vsub.f32 %v62, %v6473
    %v6475 = vand.u32 %v6474, 4294901760
    %v6476 = vsub.f32 %v6474, %v6475
    %v6477 = vand.u32 %v6476, 4294901760
    %6478 = vmatprep.subr.mxu0 %v6477
    %v6479 = vand.u32 %v61, 4294901760
    %v6480 = vsub.f32 %v61, %v6479
    %v6481 = vand.u32 %v6480, 4294901760
    %v6482 = vsub.f32 %v6480, %v6481
    %v6483 = vand.u32 %v6482, 4294901760
    %6484 = vmatpush2.msra.mxu0 %v6483
    %v6485 = vand.u32 %v5947, 4294901760
    %6486 = vmatprep.mubr.f32.mxu0 %v6485
    %v6487 = vand.u32 %v5946, 4294901760
    %6488 = vmatmul.mubr.f32.gmra.mxu0 %v6487
    %v6489 = vpop.f32.mrf.mxu0
    %v6490 = vadd.f32 %v6097, %v6489
    %v6491 = vpop.f32.mrf.mxu0
    %v6492 = vadd.f32 %v6099, %v6491
    %6493 = vdwg.mxu0
    %v6494 = vand.u32 %v60, 4294901760
    %v6495 = vsub.f32 %v60, %v6494
    %6496 = vmatprep.subr.mxu0 %v6495
    %v6497 = vand.u32 %v59, 4294901760
    %v6498 = vsub.f32 %v59, %v6497
    %6499 = vmatpush1.msra.mxu0 %v6498
    %v6500 = vand.u32 %v58, 4294901760
    %v6501 = vsub.f32 %v58, %v6500
    %6502 = vmatprep.subr.mxu0 %v6501
    %v6503 = vand.u32 %v57, 4294901760
    %v6504 = vsub.f32 %v57, %v6503
    %6505 = vmatpush1.msra.mxu0 %v6504
    %v6506 = vand.u32 %v56, 4294901760
    %v6507 = vsub.f32 %v56, %v6506
    %6508 = vmatprep.subr.mxu0 %v6507
    %v6509 = vand.u32 %v55, 4294901760
    %v6510 = vsub.f32 %v55, %v6509
    %6511 = vmatpush1.msra.mxu0 %v6510
    %v6512 = vand.u32 %v54, 4294901760
    %v6513 = vsub.f32 %v54, %v6512
    %6514 = vmatprep.subr.mxu0 %v6513
    %v6515 = vand.u32 %v53, 4294901760
    %v6516 = vsub.f32 %v53, %v6515
    %6517 = vmatpush1.msra.mxu0 %v6516
    %v6518 = vand.u32 %v52, 4294901760
    %v6519 = vsub.f32 %v52, %v6518
    %6520 = vmatprep.subr.mxu0 %v6519
    %v6521 = vand.u32 %v51, 4294901760
    %v6522 = vsub.f32 %v51, %v6521
    %6523 = vmatpush1.msra.mxu0 %v6522
    %v6524 = vand.u32 %v50, 4294901760
    %v6525 = vsub.f32 %v50, %v6524
    %6526 = vmatprep.subr.mxu0 %v6525
    %v6527 = vand.u32 %v49, 4294901760
    %v6528 = vsub.f32 %v49, %v6527
    %6529 = vmatpush1.msra.mxu0 %v6528
    %v6530 = vand.u32 %v48, 4294901760
    %v6531 = vsub.f32 %v48, %v6530
    %6532 = vmatprep.subr.mxu0 %v6531
    %v6533 = vand.u32 %v47, 4294901760
    %v6534 = vsub.f32 %v47, %v6533
    %6535 = vmatpush1.msra.mxu0 %v6534
    %v6536 = vand.u32 %v46, 4294901760
    %v6537 = vsub.f32 %v46, %v6536
    %6538 = vmatprep.subr.mxu0 %v6537
    %v6539 = vand.u32 %v45, 4294901760
    %v6540 = vsub.f32 %v45, %v6539
    %6541 = vmatpush1.msra.mxu0 %v6540
    %v6542 = vand.u32 %v44, 4294901760
    %v6543 = vsub.f32 %v44, %v6542
    %6544 = vmatprep.subr.mxu0 %v6543
    %v6545 = vand.u32 %v43, 4294901760
    %v6546 = vsub.f32 %v43, %v6545
    %6547 = vmatpush1.msra.mxu0 %v6546
    %v6548 = vand.u32 %v42, 4294901760
    %v6549 = vsub.f32 %v42, %v6548
    %6550 = vmatprep.subr.mxu0 %v6549
    %v6551 = vand.u32 %v41, 4294901760
    %v6552 = vsub.f32 %v41, %v6551
    %6553 = vmatpush1.msra.mxu0 %v6552
    %v6554 = vand.u32 %v40, 4294901760
    %v6555 = vsub.f32 %v40, %v6554
    %6556 = vmatprep.subr.mxu0 %v6555
    %v6557 = vand.u32 %v39, 4294901760
    %v6558 = vsub.f32 %v39, %v6557
    %6559 = vmatpush1.msra.mxu0 %v6558
    %v6560 = vand.u32 %v38, 4294901760
    %v6561 = vsub.f32 %v38, %v6560
    %6562 = vmatprep.subr.mxu0 %v6561
    %v6563 = vand.u32 %v37, 4294901760
    %v6564 = vsub.f32 %v37, %v6563
    %6565 = vmatpush1.msra.mxu0 %v6564
    %v6566 = vand.u32 %v36, 4294901760
    %v6567 = vsub.f32 %v36, %v6566
    %6568 = vmatprep.subr.mxu0 %v6567
    %v6569 = vand.u32 %v35, 4294901760
    %v6570 = vsub.f32 %v35, %v6569
    %6571 = vmatpush1.msra.mxu0 %v6570
    %v6572 = vand.u32 %v34, 4294901760
    %v6573 = vsub.f32 %v34, %v6572
    %6574 = vmatprep.subr.mxu0 %v6573
    %v6575 = vand.u32 %v33, 4294901760
    %v6576 = vsub.f32 %v33, %v6575
    %6577 = vmatpush1.msra.mxu0 %v6576
    %v6578 = vand.u32 %v32, 4294901760
    %v6579 = vsub.f32 %v32, %v6578
    %6580 = vmatprep.subr.mxu0 %v6579
    %v6581 = vand.u32 %v31, 4294901760
    %v6582 = vsub.f32 %v31, %v6581
    %6583 = vmatpush1.msra.mxu0 %v6582
    %v6584 = vand.u32 %v30, 4294901760
    %v6585 = vsub.f32 %v30, %v6584
    %6586 = vmatprep.subr.mxu0 %v6585
    %v6587 = vand.u32 %v29, 4294901760
    %v6588 = vsub.f32 %v29, %v6587
    %6589 = vmatpush1.msra.mxu0 %v6588
    %v6590 = vand.u32 %v92, 4294901760
    %v6591 = vsub.f32 %v92, %v6590
    %6592 = vmatprep.subr.mxu0 %v6591
    %v6593 = vand.u32 %v91, 4294901760
    %v6594 = vsub.f32 %v91, %v6593
    %6595 = vmatpush2.msra.mxu0 %v6594
    %v6596 = vand.u32 %v90, 4294901760
    %v6597 = vsub.f32 %v90, %v6596
    %6598 = vmatprep.subr.mxu0 %v6597
    %v6599 = vand.u32 %v89, 4294901760
    %v6600 = vsub.f32 %v89, %v6599
    %6601 = vmatpush2.msra.mxu0 %v6600
    %v6602 = vand.u32 %v88, 4294901760
    %v6603 = vsub.f32 %v88, %v6602
    %6604 = vmatprep.subr.mxu0 %v6603
    %v6605 = vand.u32 %v87, 4294901760
    %v6606 = vsub.f32 %v87, %v6605
    %6607 = vmatpush2.msra.mxu0 %v6606
    %v6608 = vand.u32 %v86, 4294901760
    %v6609 = vsub.f32 %v86, %v6608
    %6610 = vmatprep.subr.mxu0 %v6609
    %v6611 = vand.u32 %v85, 4294901760
    %v6612 = vsub.f32 %v85, %v6611
    %6613 = vmatpush2.msra.mxu0 %v6612
    %v6614 = vand.u32 %v84, 4294901760
    %v6615 = vsub.f32 %v84, %v6614
    %6616 = vmatprep.subr.mxu0 %v6615
    %v6617 = vand.u32 %v83, 4294901760
    %v6618 = vsub.f32 %v83, %v6617
    %6619 = vmatpush2.msra.mxu0 %v6618
    %v6620 = vand.u32 %v82, 4294901760
    %v6621 = vsub.f32 %v82, %v6620
    %6622 = vmatprep.subr.mxu0 %v6621
    %v6623 = vand.u32 %v81, 4294901760
    %v6624 = vsub.f32 %v81, %v6623
    %6625 = vmatpush2.msra.mxu0 %v6624
    %v6626 = vand.u32 %v80, 4294901760
    %v6627 = vsub.f32 %v80, %v6626
    %6628 = vmatprep.subr.mxu0 %v6627
    %v6629 = vand.u32 %v79, 4294901760
    %v6630 = vsub.f32 %v79, %v6629
    %6631 = vmatpush2.msra.mxu0 %v6630
    %v6632 = vand.u32 %v78, 4294901760
    %v6633 = vsub.f32 %v78, %v6632
    %6634 = vmatprep.subr.mxu0 %v6633
    %v6635 = vand.u32 %v77, 4294901760
    %v6636 = vsub.f32 %v77, %v6635
    %6637 = vmatpush2.msra.mxu0 %v6636
    %v6638 = vand.u32 %v76, 4294901760
    %v6639 = vsub.f32 %v76, %v6638
    %6640 = vmatprep.subr.mxu0 %v6639
    %v6641 = vand.u32 %v75, 4294901760
    %v6642 = vsub.f32 %v75, %v6641
    %6643 = vmatpush2.msra.mxu0 %v6642
    %v6644 = vand.u32 %v74, 4294901760
    %v6645 = vsub.f32 %v74, %v6644
    %6646 = vmatprep.subr.mxu0 %v6645
    %v6647 = vand.u32 %v73, 4294901760
    %v6648 = vsub.f32 %v73, %v6647
    %6649 = vmatpush2.msra.mxu0 %v6648
    %v6650 = vand.u32 %v72, 4294901760
    %v6651 = vsub.f32 %v72, %v6650
    %6652 = vmatprep.subr.mxu0 %v6651
    %v6653 = vand.u32 %v71, 4294901760
    %v6654 = vsub.f32 %v71, %v6653
    %6655 = vmatpush2.msra.mxu0 %v6654
    %v6656 = vand.u32 %v70, 4294901760
    %v6657 = vsub.f32 %v70, %v6656
    %6658 = vmatprep.subr.mxu0 %v6657
    %v6659 = vand.u32 %v69, 4294901760
    %v6660 = vsub.f32 %v69, %v6659
    %6661 = vmatpush2.msra.mxu0 %v6660
    %v6662 = vand.u32 %v68, 4294901760
    %v6663 = vsub.f32 %v68, %v6662
    %6664 = vmatprep.subr.mxu0 %v6663
    %v6665 = vand.u32 %v67, 4294901760
    %v6666 = vsub.f32 %v67, %v6665
    %6667 = vmatpush2.msra.mxu0 %v6666
    %v6668 = vand.u32 %v66, 4294901760
    %v6669 = vsub.f32 %v66, %v6668
    %6670 = vmatprep.subr.mxu0 %v6669
    %v6671 = vand.u32 %v65, 4294901760
    %v6672 = vsub.f32 %v65, %v6671
    %6673 = vmatpush2.msra.mxu0 %v6672
    %v6674 = vand.u32 %v64, 4294901760
    %v6675 = vsub.f32 %v64, %v6674
    %6676 = vmatprep.subr.mxu0 %v6675
    %v6677 = vand.u32 %v63, 4294901760
    %v6678 = vsub.f32 %v63, %v6677
    %6679 = vmatpush2.msra.mxu0 %v6678
    %v6680 = vand.u32 %v62, 4294901760
    %v6681 = vsub.f32 %v62, %v6680
    %6682 = vmatprep.subr.mxu0 %v6681
    %v6683 = vand.u32 %v61, 4294901760
    %v6684 = vsub.f32 %v61, %v6683
    %6685 = vmatpush2.msra.mxu0 %v6684
    %v6686 = vand.u32 %v5947, 4294901760
    %v6687 = vsub.f32 %v5947, %v6686
    %6688 = vmatprep.mubr.f32.mxu0 %v6687
    %v6689 = vand.u32 %v5946, 4294901760
    %v6690 = vsub.f32 %v5946, %v6689
    %6691 = vmatmul.mubr.f32.gmra.mxu0 %v6690
    %v6692 = vpop.f32.mrf.mxu0
    %v6693 = vadd.f32 %v6490, %v6692
    %v6694 = vpop.f32.mrf.mxu0
    %v6695 = vadd.f32 %v6492, %v6694
    %6696 = vdwg.mxu0
    %v6697 = vand.u32 %v60, 4294901760
    %6698 = vmatprep.subr.mxu0 %v6697
    %v6699 = vand.u32 %v59, 4294901760
    %6700 = vmatpush1.msra.mxu0 %v6699
    %v6701 = vand.u32 %v58, 4294901760
    %6702 = vmatprep.subr.mxu0 %v6701
    %v6703 = vand.u32 %v57, 4294901760
    %6704 = vmatpush1.msra.mxu0 %v6703
    %v6705 = vand.u32 %v56, 4294901760
    %6706 = vmatprep.subr.mxu0 %v6705
    %v6707 = vand.u32 %v55, 4294901760
    %6708 = vmatpush1.msra.mxu0 %v6707
    %v6709 = vand.u32 %v54, 4294901760
    %6710 = vmatprep.subr.mxu0 %v6709
    %v6711 = vand.u32 %v53, 4294901760
    %6712 = vmatpush1.msra.mxu0 %v6711
    %v6713 = vand.u32 %v52, 4294901760
    %6714 = vmatprep.subr.mxu0 %v6713
    %v6715 = vand.u32 %v51, 4294901760
    %6716 = vmatpush1.msra.mxu0 %v6715
    %v6717 = vand.u32 %v50, 4294901760
    %6718 = vmatprep.subr.mxu0 %v6717
    %v6719 = vand.u32 %v49, 4294901760
    %6720 = vmatpush1.msra.mxu0 %v6719
    %v6721 = vand.u32 %v48, 4294901760
    %6722 = vmatprep.subr.mxu0 %v6721
    %v6723 = vand.u32 %v47, 4294901760
    %6724 = vmatpush1.msra.mxu0 %v6723
    %v6725 = vand.u32 %v46, 4294901760
    %6726 = vmatprep.subr.mxu0 %v6725
    %v6727 = vand.u32 %v45, 4294901760
    %6728 = vmatpush1.msra.mxu0 %v6727
    %v6729 = vand.u32 %v44, 4294901760
    %6730 = vmatprep.subr.mxu0 %v6729
    %v6731 = vand.u32 %v43, 4294901760
    %6732 = vmatpush1.msra.mxu0 %v6731
    %v6733 = vand.u32 %v42, 4294901760
    %6734 = vmatprep.subr.mxu0 %v6733
    %v6735 = vand.u32 %v41, 4294901760
    %6736 = vmatpush1.msra.mxu0 %v6735
    %v6737 = vand.u32 %v40, 4294901760
    %6738 = vmatprep.subr.mxu0 %v6737
    %v6739 = vand.u32 %v39, 4294901760
    %6740 = vmatpush1.msra.mxu0 %v6739
    %v6741 = vand.u32 %v38, 4294901760
    %6742 = vmatprep.subr.mxu0 %v6741
    %v6743 = vand.u32 %v37, 4294901760
    %6744 = vmatpush1.msra.mxu0 %v6743
    %v6745 = vand.u32 %v36, 4294901760
    %6746 = vmatprep.subr.mxu0 %v6745
    %v6747 = vand.u32 %v35, 4294901760
    %6748 = vmatpush1.msra.mxu0 %v6747
    %v6749 = vand.u32 %v34, 4294901760
    %6750 = vmatprep.subr.mxu0 %v6749
    %v6751 = vand.u32 %v33, 4294901760
    %6752 = vmatpush1.msra.mxu0 %v6751
    %v6753 = vand.u32 %v32, 4294901760
    %6754 = vmatprep.subr.mxu0 %v6753
    %v6755 = vand.u32 %v31, 4294901760
    %6756 = vmatpush1.msra.mxu0 %v6755
    %v6757 = vand.u32 %v30, 4294901760
    %6758 = vmatprep.subr.mxu0 %v6757
    %v6759 = vand.u32 %v29, 4294901760
    %6760 = vmatpush1.msra.mxu0 %v6759
    %v6761 = vand.u32 %v92, 4294901760
    %6762 = vmatprep.subr.mxu0 %v6761
    %v6763 = vand.u32 %v91, 4294901760
    %6764 = vmatpush2.msra.mxu0 %v6763
    %v6765 = vand.u32 %v90, 4294901760
    %6766 = vmatprep.subr.mxu0 %v6765
    %v6767 = vand.u32 %v89, 4294901760
    %6768 = vmatpush2.msra.mxu0 %v6767
    %v6769 = vand.u32 %v88, 4294901760
    %6770 = vmatprep.subr.mxu0 %v6769
    %v6771 = vand.u32 %v87, 4294901760
    %6772 = vmatpush2.msra.mxu0 %v6771
    %v6773 = vand.u32 %v86, 4294901760
    %6774 = vmatprep.subr.mxu0 %v6773
    %v6775 = vand.u32 %v85, 4294901760
    %6776 = vmatpush2.msra.mxu0 %v6775
    %v6777 = vand.u32 %v84, 4294901760
    %6778 = vmatprep.subr.mxu0 %v6777
    %v6779 = vand.u32 %v83, 4294901760
    %6780 = vmatpush2.msra.mxu0 %v6779
    %v6781 = vand.u32 %v82, 4294901760
    %6782 = vmatprep.subr.mxu0 %v6781
    %v6783 = vand.u32 %v81, 4294901760
    %6784 = vmatpush2.msra.mxu0 %v6783
    %v6785 = vand.u32 %v80, 4294901760
    %6786 = vmatprep.subr.mxu0 %v6785
    %v6787 = vand.u32 %v79, 4294901760
    %6788 = vmatpush2.msra.mxu0 %v6787
    %v6789 = vand.u32 %v78, 4294901760
    %6790 = vmatprep.subr.mxu0 %v6789
    %v6791 = vand.u32 %v77, 4294901760
    %6792 = vmatpush2.msra.mxu0 %v6791
    %v6793 = vand.u32 %v76, 4294901760
    %6794 = vmatprep.subr.mxu0 %v6793
    %v6795 = vand.u32 %v75, 4294901760
    %6796 = vmatpush2.msra.mxu0 %v6795
    %v6797 = vand.u32 %v74, 4294901760
    %6798 = vmatprep.subr.mxu0 %v6797
    %v6799 = vand.u32 %v73, 4294901760
    %6800 = vmatpush2.msra.mxu0 %v6799
    %v6801 = vand.u32 %v72, 4294901760
    %6802 = vmatprep.subr.mxu0 %v6801
    %v6803 = vand.u32 %v71, 4294901760
    %6804 = vmatpush2.msra.mxu0 %v6803
    %v6805 = vand.u32 %v70, 4294901760
    %6806 = vmatprep.subr.mxu0 %v6805
    %v6807 = vand.u32 %v69, 4294901760
    %6808 = vmatpush2.msra.mxu0 %v6807
    %v6809 = vand.u32 %v68, 4294901760
    %6810 = vmatprep.subr.mxu0 %v6809
    %v6811 = vand.u32 %v67, 4294901760
    %6812 = vmatpush2.msra.mxu0 %v6811
    %v6813 = vand.u32 %v66, 4294901760
    %6814 = vmatprep.subr.mxu0 %v6813
    %v6815 = vand.u32 %v65, 4294901760
    %6816 = vmatpush2.msra.mxu0 %v6815
    %v6817 = vand.u32 %v64, 4294901760
    %6818 = vmatprep.subr.mxu0 %v6817
    %v6819 = vand.u32 %v63, 4294901760
    %6820 = vmatpush2.msra.mxu0 %v6819
    %v6821 = vand.u32 %v62, 4294901760
    %6822 = vmatprep.subr.mxu0 %v6821
    %v6823 = vand.u32 %v61, 4294901760
    %6824 = vmatpush2.msra.mxu0 %v6823
    %v6825 = vand.u32 %v5947, 4294901760
    %v6826 = vsub.f32 %v5947, %v6825
    %v6827 = vand.u32 %v6826, 4294901760
    %6828 = vmatprep.mubr.f32.mxu0 %v6827
    %v6829 = vand.u32 %v5946, 4294901760
    %v6830 = vsub.f32 %v5946, %v6829
    %v6831 = vand.u32 %v6830, 4294901760
    %6832 = vmatmul.mubr.f32.gmra.mxu0 %v6831
    %v6833 = vpop.f32.mrf.mxu0
    %v6834 = vadd.f32 %v6693, %v6833
    %v6835 = vpop.f32.mrf.mxu0
    %v6836 = vadd.f32 %v6695, %v6835
    %6837 = vdwg.mxu0
    %v6838 = vand.u32 %v60, 4294901760
    %v6839 = vsub.f32 %v60, %v6838
    %v6840 = vand.u32 %v6839, 4294901760
    %6841 = vmatprep.subr.mxu0 %v6840
    %v6842 = vand.u32 %v59, 4294901760
    %v6843 = vsub.f32 %v59, %v6842
    %v6844 = vand.u32 %v6843, 4294901760
    %6845 = vmatpush1.msra.mxu0 %v6844
    %v6846 = vand.u32 %v58, 4294901760
    %v6847 = vsub.f32 %v58, %v6846
    %v6848 = vand.u32 %v6847, 4294901760
    %6849 = vmatprep.subr.mxu0 %v6848
    %v6850 = vand.u32 %v57, 4294901760
    %v6851 = vsub.f32 %v57, %v6850
    %v6852 = vand.u32 %v6851, 4294901760
    %6853 = vmatpush1.msra.mxu0 %v6852
    %v6854 = vand.u32 %v56, 4294901760
    %v6855 = vsub.f32 %v56, %v6854
    %v6856 = vand.u32 %v6855, 4294901760
    %6857 = vmatprep.subr.mxu0 %v6856
    %v6858 = vand.u32 %v55, 4294901760
    %v6859 = vsub.f32 %v55, %v6858
    %v6860 = vand.u32 %v6859, 4294901760
    %6861 = vmatpush1.msra.mxu0 %v6860
    %v6862 = vand.u32 %v54, 4294901760
    %v6863 = vsub.f32 %v54, %v6862
    %v6864 = vand.u32 %v6863, 4294901760
    %6865 = vmatprep.subr.mxu0 %v6864
    %v6866 = vand.u32 %v53, 4294901760
    %v6867 = vsub.f32 %v53, %v6866
    %v6868 = vand.u32 %v6867, 4294901760
    %6869 = vmatpush1.msra.mxu0 %v6868
    %v6870 = vand.u32 %v52, 4294901760
    %v6871 = vsub.f32 %v52, %v6870
    %v6872 = vand.u32 %v6871, 4294901760
    %6873 = vmatprep.subr.mxu0 %v6872
    %v6874 = vand.u32 %v51, 4294901760
    %v6875 = vsub.f32 %v51, %v6874
    %v6876 = vand.u32 %v6875, 4294901760
    %6877 = vmatpush1.msra.mxu0 %v6876
    %v6878 = vand.u32 %v50, 4294901760
    %v6879 = vsub.f32 %v50, %v6878
    %v6880 = vand.u32 %v6879, 4294901760
    %6881 = vmatprep.subr.mxu0 %v6880
    %v6882 = vand.u32 %v49, 4294901760
    %v6883 = vsub.f32 %v49, %v6882
    %v6884 = vand.u32 %v6883, 4294901760
    %6885 = vmatpush1.msra.mxu0 %v6884
    %v6886 = vand.u32 %v48, 4294901760
    %v6887 = vsub.f32 %v48, %v6886
    %v6888 = vand.u32 %v6887, 4294901760
    %6889 = vmatprep.subr.mxu0 %v6888
    %v6890 = vand.u32 %v47, 4294901760
    %v6891 = vsub.f32 %v47, %v6890
    %v6892 = vand.u32 %v6891, 4294901760
    %6893 = vmatpush1.msra.mxu0 %v6892
    %v6894 = vand.u32 %v46, 4294901760
    %v6895 = vsub.f32 %v46, %v6894
    %v6896 = vand.u32 %v6895, 4294901760
    %6897 = vmatprep.subr.mxu0 %v6896
    %v6898 = vand.u32 %v45, 4294901760
    %v6899 = vsub.f32 %v45, %v6898
    %v6900 = vand.u32 %v6899, 4294901760
    %6901 = vmatpush1.msra.mxu0 %v6900
    %v6902 = vand.u32 %v44, 4294901760
    %v6903 = vsub.f32 %v44, %v6902
    %v6904 = vand.u32 %v6903, 4294901760
    %6905 = vmatprep.subr.mxu0 %v6904
    %v6906 = vand.u32 %v43, 4294901760
    %v6907 = vsub.f32 %v43, %v6906
    %v6908 = vand.u32 %v6907, 4294901760
    %6909 = vmatpush1.msra.mxu0 %v6908
    %v6910 = vand.u32 %v42, 4294901760
    %v6911 = vsub.f32 %v42, %v6910
    %v6912 = vand.u32 %v6911, 4294901760
    %6913 = vmatprep.subr.mxu0 %v6912
    %v6914 = vand.u32 %v41, 4294901760
    %v6915 = vsub.f32 %v41, %v6914
    %v6916 = vand.u32 %v6915, 4294901760
    %6917 = vmatpush1.msra.mxu0 %v6916
    %v6918 = vand.u32 %v40, 4294901760
    %v6919 = vsub.f32 %v40, %v6918
    %v6920 = vand.u32 %v6919, 4294901760
    %6921 = vmatprep.subr.mxu0 %v6920
    %v6922 = vand.u32 %v39, 4294901760
    %v6923 = vsub.f32 %v39, %v6922
    %v6924 = vand.u32 %v6923, 4294901760
    %6925 = vmatpush1.msra.mxu0 %v6924
    %v6926 = vand.u32 %v38, 4294901760
    %v6927 = vsub.f32 %v38, %v6926
    %v6928 = vand.u32 %v6927, 4294901760
    %6929 = vmatprep.subr.mxu0 %v6928
    %v6930 = vand.u32 %v37, 4294901760
    %v6931 = vsub.f32 %v37, %v6930
    %v6932 = vand.u32 %v6931, 4294901760
    %6933 = vmatpush1.msra.mxu0 %v6932
    %v6934 = vand.u32 %v36, 4294901760
    %v6935 = vsub.f32 %v36, %v6934
    %v6936 = vand.u32 %v6935, 4294901760
    %6937 = vmatprep.subr.mxu0 %v6936
    %v6938 = vand.u32 %v35, 4294901760
    %v6939 = vsub.f32 %v35, %v6938
    %v6940 = vand.u32 %v6939, 4294901760
    %6941 = vmatpush1.msra.mxu0 %v6940
    %v6942 = vand.u32 %v34, 4294901760
    %v6943 = vsub.f32 %v34, %v6942
    %v6944 = vand.u32 %v6943, 4294901760
    %6945 = vmatprep.subr.mxu0 %v6944
    %v6946 = vand.u32 %v33, 4294901760
    %v6947 = vsub.f32 %v33, %v6946
    %v6948 = vand.u32 %v6947, 4294901760
    %6949 = vmatpush1.msra.mxu0 %v6948
    %v6950 = vand.u32 %v32, 4294901760
    %v6951 = vsub.f32 %v32, %v6950
    %v6952 = vand.u32 %v6951, 4294901760
    %6953 = vmatprep.subr.mxu0 %v6952
    %v6954 = vand.u32 %v31, 4294901760
    %v6955 = vsub.f32 %v31, %v6954
    %v6956 = vand.u32 %v6955, 4294901760
    %6957 = vmatpush1.msra.mxu0 %v6956
    %v6958 = vand.u32 %v30, 4294901760
    %v6959 = vsub.f32 %v30, %v6958
    %v6960 = vand.u32 %v6959, 4294901760
    %6961 = vmatprep.subr.mxu0 %v6960
    %v6962 = vand.u32 %v29, 4294901760
    %v6963 = vsub.f32 %v29, %v6962
    %v6964 = vand.u32 %v6963, 4294901760
    %6965 = vmatpush1.msra.mxu0 %v6964
    %v6966 = vand.u32 %v92, 4294901760
    %v6967 = vsub.f32 %v92, %v6966
    %v6968 = vand.u32 %v6967, 4294901760
    %6969 = vmatprep.subr.mxu0 %v6968
    %v6970 = vand.u32 %v91, 4294901760
    %v6971 = vsub.f32 %v91, %v6970
    %v6972 = vand.u32 %v6971, 4294901760
    %6973 = vmatpush2.msra.mxu0 %v6972
    %v6974 = vand.u32 %v90, 4294901760
    %v6975 = vsub.f32 %v90, %v6974
    %v6976 = vand.u32 %v6975, 4294901760
    %6977 = vmatprep.subr.mxu0 %v6976
    %v6978 = vand.u32 %v89, 4294901760
    %v6979 = vsub.f32 %v89, %v6978
    %v6980 = vand.u32 %v6979, 4294901760
    %6981 = vmatpush2.msra.mxu0 %v6980
    %v6982 = vand.u32 %v88, 4294901760
    %v6983 = vsub.f32 %v88, %v6982
    %v6984 = vand.u32 %v6983, 4294901760
    %6985 = vmatprep.subr.mxu0 %v6984
    %v6986 = vand.u32 %v87, 4294901760
    %v6987 = vsub.f32 %v87, %v6986
    %v6988 = vand.u32 %v6987, 4294901760
    %6989 = vmatpush2.msra.mxu0 %v6988
    %v6990 = vand.u32 %v86, 4294901760
    %v6991 = vsub.f32 %v86, %v6990
    %v6992 = vand.u32 %v6991, 4294901760
    %6993 = vmatprep.subr.mxu0 %v6992
    %v6994 = vand.u32 %v85, 4294901760
    %v6995 = vsub.f32 %v85, %v6994
    %v6996 = vand.u32 %v6995, 4294901760
    %6997 = vmatpush2.msra.mxu0 %v6996
    %v6998 = vand.u32 %v84, 4294901760
    %v6999 = vsub.f32 %v84, %v6998
    %v7000 = vand.u32 %v6999, 4294901760
    %7001 = vmatprep.subr.mxu0 %v7000
    %v7002 = vand.u32 %v83, 4294901760
    %v7003 = vsub.f32 %v83, %v7002
    %v7004 = vand.u32 %v7003, 4294901760
    %7005 = vmatpush2.msra.mxu0 %v7004
    %v7006 = vand.u32 %v82, 4294901760
    %v7007 = vsub.f32 %v82, %v7006
    %v7008 = vand.u32 %v7007, 4294901760
    %7009 = vmatprep.subr.mxu0 %v7008
    %v7010 = vand.u32 %v81, 4294901760
    %v7011 = vsub.f32 %v81, %v7010
    %v7012 = vand.u32 %v7011, 4294901760
    %7013 = vmatpush2.msra.mxu0 %v7012
    %v7014 = vand.u32 %v80, 4294901760
    %v7015 = vsub.f32 %v80, %v7014
    %v7016 = vand.u32 %v7015, 4294901760
    %7017 = vmatprep.subr.mxu0 %v7016
    %v7018 = vand.u32 %v79, 4294901760
    %v7019 = vsub.f32 %v79, %v7018
    %v7020 = vand.u32 %v7019, 4294901760
    %7021 = vmatpush2.msra.mxu0 %v7020
    %v7022 = vand.u32 %v78, 4294901760
    %v7023 = vsub.f32 %v78, %v7022
    %v7024 = vand.u32 %v7023, 4294901760
    %7025 = vmatprep.subr.mxu0 %v7024
    %v7026 = vand.u32 %v77, 4294901760
    %v7027 = vsub.f32 %v77, %v7026
    %v7028 = vand.u32 %v7027, 4294901760
    %7029 = vmatpush2.msra.mxu0 %v7028
    %v7030 = vand.u32 %v76, 4294901760
    %v7031 = vsub.f32 %v76, %v7030
    %v7032 = vand.u32 %v7031, 4294901760
    %7033 = vmatprep.subr.mxu0 %v7032
    %v7034 = vand.u32 %v75, 4294901760
    %v7035 = vsub.f32 %v75, %v7034
    %v7036 = vand.u32 %v7035, 4294901760
    %7037 = vmatpush2.msra.mxu0 %v7036
    %v7038 = vand.u32 %v74, 4294901760
    %v7039 = vsub.f32 %v74, %v7038
    %v7040 = vand.u32 %v7039, 4294901760
    %7041 = vmatprep.subr.mxu0 %v7040
    %v7042 = vand.u32 %v73, 4294901760
    %v7043 = vsub.f32 %v73, %v7042
    %v7044 = vand.u32 %v7043, 4294901760
    %7045 = vmatpush2.msra.mxu0 %v7044
    %v7046 = vand.u32 %v72, 4294901760
    %v7047 = vsub.f32 %v72, %v7046
    %v7048 = vand.u32 %v7047, 4294901760
    %7049 = vmatprep.subr.mxu0 %v7048
    %v7050 = vand.u32 %v71, 4294901760
    %v7051 = vsub.f32 %v71, %v7050
    %v7052 = vand.u32 %v7051, 4294901760
    %7053 = vmatpush2.msra.mxu0 %v7052
    %v7054 = vand.u32 %v70, 4294901760
    %v7055 = vsub.f32 %v70, %v7054
    %v7056 = vand.u32 %v7055, 4294901760
    %7057 = vmatprep.subr.mxu0 %v7056
    %v7058 = vand.u32 %v69, 4294901760
    %v7059 = vsub.f32 %v69, %v7058
    %v7060 = vand.u32 %v7059, 4294901760
    %7061 = vmatpush2.msra.mxu0 %v7060
    %v7062 = vand.u32 %v68, 4294901760
    %v7063 = vsub.f32 %v68, %v7062
    %v7064 = vand.u32 %v7063, 4294901760
    %7065 = vmatprep.subr.mxu0 %v7064
    %v7066 = vand.u32 %v67, 4294901760
    %v7067 = vsub.f32 %v67, %v7066
    %v7068 = vand.u32 %v7067, 4294901760
    %7069 = vmatpush2.msra.mxu0 %v7068
    %v7070 = vand.u32 %v66, 4294901760
    %v7071 = vsub.f32 %v66, %v7070
    %v7072 = vand.u32 %v7071, 4294901760
    %7073 = vmatprep.subr.mxu0 %v7072
    %v7074 = vand.u32 %v65, 4294901760
    %v7075 = vsub.f32 %v65, %v7074
    %v7076 = vand.u32 %v7075, 4294901760
    %7077 = vmatpush2.msra.mxu0 %v7076
    %v7078 = vand.u32 %v64, 4294901760
    %v7079 = vsub.f32 %v64, %v7078
    %v7080 = vand.u32 %v7079, 4294901760
    %7081 = vmatprep.subr.mxu0 %v7080
    %v7082 = vand.u32 %v63, 4294901760
    %v7083 = vsub.f32 %v63, %v7082
    %v7084 = vand.u32 %v7083, 4294901760
    %7085 = vmatpush2.msra.mxu0 %v7084
    %v7086 = vand.u32 %v62, 4294901760
    %v7087 = vsub.f32 %v62, %v7086
    %v7088 = vand.u32 %v7087, 4294901760
    %7089 = vmatprep.subr.mxu0 %v7088
    %v7090 = vand.u32 %v61, 4294901760
    %v7091 = vsub.f32 %v61, %v7090
    %v7092 = vand.u32 %v7091, 4294901760
    %7093 = vmatpush2.msra.mxu0 %v7092
    %v7094 = vand.u32 %v5947, 4294901760
    %7095 = vmatprep.mubr.f32.mxu0 %v7094
    %v7096 = vand.u32 %v5946, 4294901760
    %7097 = vmatmul.mubr.f32.gmra.mxu0 %v7096
    %v7098 = vpop.f32.mrf.mxu0
    %v7099 = vadd.f32 %v6834, %v7098
    %v7100 = vpop.f32.mrf.mxu0
    %v7101 = vadd.f32 %v6836, %v7100
    %7102 = vdwg.mxu0
    %v7103 = vand.u32 %v60, 4294901760
    %7104 = vmatprep.subr.mxu0 %v7103
    %v7105 = vand.u32 %v59, 4294901760
    %7106 = vmatpush1.msra.mxu0 %v7105
    %v7107 = vand.u32 %v58, 4294901760
    %7108 = vmatprep.subr.mxu0 %v7107
    %v7109 = vand.u32 %v57, 4294901760
    %7110 = vmatpush1.msra.mxu0 %v7109
    %v7111 = vand.u32 %v56, 4294901760
    %7112 = vmatprep.subr.mxu0 %v7111
    %v7113 = vand.u32 %v55, 4294901760
    %7114 = vmatpush1.msra.mxu0 %v7113
    %v7115 = vand.u32 %v54, 4294901760
    %7116 = vmatprep.subr.mxu0 %v7115
    %v7117 = vand.u32 %v53, 4294901760
    %7118 = vmatpush1.msra.mxu0 %v7117
    %v7119 = vand.u32 %v52, 4294901760
    %7120 = vmatprep.subr.mxu0 %v7119
    %v7121 = vand.u32 %v51, 4294901760
    %7122 = vmatpush1.msra.mxu0 %v7121
    %v7123 = vand.u32 %v50, 4294901760
    %7124 = vmatprep.subr.mxu0 %v7123
    %v7125 = vand.u32 %v49, 4294901760
    %7126 = vmatpush1.msra.mxu0 %v7125
    %v7127 = vand.u32 %v48, 4294901760
    %7128 = vmatprep.subr.mxu0 %v7127
    %v7129 = vand.u32 %v47, 4294901760
    %7130 = vmatpush1.msra.mxu0 %v7129
    %v7131 = vand.u32 %v46, 4294901760
    %7132 = vmatprep.subr.mxu0 %v7131
    %v7133 = vand.u32 %v45, 4294901760
    %7134 = vmatpush1.msra.mxu0 %v7133
    %v7135 = vand.u32 %v44, 4294901760
    %7136 = vmatprep.subr.mxu0 %v7135
    %v7137 = vand.u32 %v43, 4294901760
    %7138 = vmatpush1.msra.mxu0 %v7137
    %v7139 = vand.u32 %v42, 4294901760
    %7140 = vmatprep.subr.mxu0 %v7139
    %v7141 = vand.u32 %v41, 4294901760
    %7142 = vmatpush1.msra.mxu0 %v7141
    %v7143 = vand.u32 %v40, 4294901760
    %7144 = vmatprep.subr.mxu0 %v7143
    %v7145 = vand.u32 %v39, 4294901760
    %7146 = vmatpush1.msra.mxu0 %v7145
    %v7147 = vand.u32 %v38, 4294901760
    %7148 = vmatprep.subr.mxu0 %v7147
    %v7149 = vand.u32 %v37, 4294901760
    %7150 = vmatpush1.msra.mxu0 %v7149
    %v7151 = vand.u32 %v36, 4294901760
    %7152 = vmatprep.subr.mxu0 %v7151
    %v7153 = vand.u32 %v35, 4294901760
    %7154 = vmatpush1.msra.mxu0 %v7153
    %v7155 = vand.u32 %v34, 4294901760
    %7156 = vmatprep.subr.mxu0 %v7155
    %v7157 = vand.u32 %v33, 4294901760
    %7158 = vmatpush1.msra.mxu0 %v7157
    %v7159 = vand.u32 %v32, 4294901760
    %7160 = vmatprep.subr.mxu0 %v7159
    %v7161 = vand.u32 %v31, 4294901760
    %7162 = vmatpush1.msra.mxu0 %v7161
    %v7163 = vand.u32 %v30, 4294901760
    %7164 = vmatprep.subr.mxu0 %v7163
    %v7165 = vand.u32 %v29, 4294901760
    %7166 = vmatpush1.msra.mxu0 %v7165
    %v7167 = vand.u32 %v92, 4294901760
    %7168 = vmatprep.subr.mxu0 %v7167
    %v7169 = vand.u32 %v91, 4294901760
    %7170 = vmatpush2.msra.mxu0 %v7169
    %v7171 = vand.u32 %v90, 4294901760
    %7172 = vmatprep.subr.mxu0 %v7171
    %v7173 = vand.u32 %v89, 4294901760
    %7174 = vmatpush2.msra.mxu0 %v7173
    %v7175 = vand.u32 %v88, 4294901760
    %7176 = vmatprep.subr.mxu0 %v7175
    %v7177 = vand.u32 %v87, 4294901760
    %7178 = vmatpush2.msra.mxu0 %v7177
    %v7179 = vand.u32 %v86, 4294901760
    %7180 = vmatprep.subr.mxu0 %v7179
    %v7181 = vand.u32 %v85, 4294901760
    %7182 = vmatpush2.msra.mxu0 %v7181
    %v7183 = vand.u32 %v84, 4294901760
    %7184 = vmatprep.subr.mxu0 %v7183
    %v7185 = vand.u32 %v83, 4294901760
    %7186 = vmatpush2.msra.mxu0 %v7185
    %v7187 = vand.u32 %v82, 4294901760
    %7188 = vmatprep.subr.mxu0 %v7187
    %v7189 = vand.u32 %v81, 4294901760
    %7190 = vmatpush2.msra.mxu0 %v7189
    %v7191 = vand.u32 %v80, 4294901760
    %7192 = vmatprep.subr.mxu0 %v7191
    %v7193 = vand.u32 %v79, 4294901760
    %7194 = vmatpush2.msra.mxu0 %v7193
    %v7195 = vand.u32 %v78, 4294901760
    %7196 = vmatprep.subr.mxu0 %v7195
    %v7197 = vand.u32 %v77, 4294901760
    %7198 = vmatpush2.msra.mxu0 %v7197
    %v7199 = vand.u32 %v76, 4294901760
    %7200 = vmatprep.subr.mxu0 %v7199
    %v7201 = vand.u32 %v75, 4294901760
    %7202 = vmatpush2.msra.mxu0 %v7201
    %v7203 = vand.u32 %v74, 4294901760
    %7204 = vmatprep.subr.mxu0 %v7203
    %v7205 = vand.u32 %v73, 4294901760
    %7206 = vmatpush2.msra.mxu0 %v7205
    %v7207 = vand.u32 %v72, 4294901760
    %7208 = vmatprep.subr.mxu0 %v7207
    %v7209 = vand.u32 %v71, 4294901760
    %7210 = vmatpush2.msra.mxu0 %v7209
    %v7211 = vand.u32 %v70, 4294901760
    %7212 = vmatprep.subr.mxu0 %v7211
    %v7213 = vand.u32 %v69, 4294901760
    %7214 = vmatpush2.msra.mxu0 %v7213
    %v7215 = vand.u32 %v68, 4294901760
    %7216 = vmatprep.subr.mxu0 %v7215
    %v7217 = vand.u32 %v67, 4294901760
    %7218 = vmatpush2.msra.mxu0 %v7217
    %v7219 = vand.u32 %v66, 4294901760
    %7220 = vmatprep.subr.mxu0 %v7219
    %v7221 = vand.u32 %v65, 4294901760
    %7222 = vmatpush2.msra.mxu0 %v7221
    %v7223 = vand.u32 %v64, 4294901760
    %7224 = vmatprep.subr.mxu0 %v7223
    %v7225 = vand.u32 %v63, 4294901760
    %7226 = vmatpush2.msra.mxu0 %v7225
    %v7227 = vand.u32 %v62, 4294901760
    %7228 = vmatprep.subr.mxu0 %v7227
    %v7229 = vand.u32 %v61, 4294901760
    %7230 = vmatpush2.msra.mxu0 %v7229
    %v7231 = vand.u32 %v5947, 4294901760
    %7232 = vmatprep.mubr.f32.mxu0 %v7231
    %v7233 = vand.u32 %v5946, 4294901760
    %7234 = vmatmul.mubr.f32.gmra.mxu0 %v7233
    %v7235 = vpop.f32.mrf.mxu0
    %v7236 = vadd.f32 %v7099, %v7235
    %v7237 = vpop.f32.mrf.mxu0
    %v7238 = vadd.f32 %v7101, %v7237
    %7239 = vdwg.mxu0
    %v7240 = vtanh.pop %v7236
    %v7241 = vtanh.pop %v7238
    %v7242 = vlaneseq
    %v7243 = vshrl.u32 %v7242, 7
    %v7244 = vsub.s32 6, %v7243
    %v7245 = vrot.slane %v97, %v7244
    %v7246 = vlaneseq
    %v7247 = vshrl.u32 %v7246, 7
    %v7248 = vsub.s32 6, %v7247
    %v7249 = vrot.slane %v98, %v7248
    %v7250 = vand.u32 %v60, 4294901760
    %7251 = vmatprep.subr.mxu0 %v7250
    %v7252 = vand.u32 %v59, 4294901760
    %7253 = vmatpush1.msra.mxu0 %v7252
    %v7254 = vand.u32 %v58, 4294901760
    %7255 = vmatprep.subr.mxu0 %v7254
    %v7256 = vand.u32 %v57, 4294901760
    %7257 = vmatpush1.msra.mxu0 %v7256
    %v7258 = vand.u32 %v56, 4294901760
    %7259 = vmatprep.subr.mxu0 %v7258
    %v7260 = vand.u32 %v55, 4294901760
    %7261 = vmatpush1.msra.mxu0 %v7260
    %v7262 = vand.u32 %v54, 4294901760
    %7263 = vmatprep.subr.mxu0 %v7262
    %v7264 = vand.u32 %v53, 4294901760
    %7265 = vmatpush1.msra.mxu0 %v7264
    %v7266 = vand.u32 %v52, 4294901760
    %7267 = vmatprep.subr.mxu0 %v7266
    %v7268 = vand.u32 %v51, 4294901760
    %7269 = vmatpush1.msra.mxu0 %v7268
    %v7270 = vand.u32 %v50, 4294901760
    %7271 = vmatprep.subr.mxu0 %v7270
    %v7272 = vand.u32 %v49, 4294901760
    %7273 = vmatpush1.msra.mxu0 %v7272
    %v7274 = vand.u32 %v48, 4294901760
    %7275 = vmatprep.subr.mxu0 %v7274
    %v7276 = vand.u32 %v47, 4294901760
    %7277 = vmatpush1.msra.mxu0 %v7276
    %v7278 = vand.u32 %v46, 4294901760
    %7279 = vmatprep.subr.mxu0 %v7278
    %v7280 = vand.u32 %v45, 4294901760
    %7281 = vmatpush1.msra.mxu0 %v7280
    %v7282 = vand.u32 %v44, 4294901760
    %7283 = vmatprep.subr.mxu0 %v7282
    %v7284 = vand.u32 %v43, 4294901760
    %7285 = vmatpush1.msra.mxu0 %v7284
    %v7286 = vand.u32 %v42, 4294901760
    %7287 = vmatprep.subr.mxu0 %v7286
    %v7288 = vand.u32 %v41, 4294901760
    %7289 = vmatpush1.msra.mxu0 %v7288
    %v7290 = vand.u32 %v40, 4294901760
    %7291 = vmatprep.subr.mxu0 %v7290
    %v7292 = vand.u32 %v39, 4294901760
    %7293 = vmatpush1.msra.mxu0 %v7292
    %v7294 = vand.u32 %v38, 4294901760
    %7295 = vmatprep.subr.mxu0 %v7294
    %v7296 = vand.u32 %v37, 4294901760
    %7297 = vmatpush1.msra.mxu0 %v7296
    %v7298 = vand.u32 %v36, 4294901760
    %7299 = vmatprep.subr.mxu0 %v7298
    %v7300 = vand.u32 %v35, 4294901760
    %7301 = vmatpush1.msra.mxu0 %v7300
    %v7302 = vand.u32 %v34, 4294901760
    %7303 = vmatprep.subr.mxu0 %v7302
    %v7304 = vand.u32 %v33, 4294901760
    %7305 = vmatpush1.msra.mxu0 %v7304
    %v7306 = vand.u32 %v32, 4294901760
    %7307 = vmatprep.subr.mxu0 %v7306
    %v7308 = vand.u32 %v31, 4294901760
    %7309 = vmatpush1.msra.mxu0 %v7308
    %v7310 = vand.u32 %v30, 4294901760
    %7311 = vmatprep.subr.mxu0 %v7310
    %v7312 = vand.u32 %v29, 4294901760
    %7313 = vmatpush1.msra.mxu0 %v7312
    %v7314 = vand.u32 %v92, 4294901760
    %7315 = vmatprep.subr.mxu0 %v7314
    %v7316 = vand.u32 %v91, 4294901760
    %7317 = vmatpush2.msra.mxu0 %v7316
    %v7318 = vand.u32 %v90, 4294901760
    %7319 = vmatprep.subr.mxu0 %v7318
    %v7320 = vand.u32 %v89, 4294901760
    %7321 = vmatpush2.msra.mxu0 %v7320
    %v7322 = vand.u32 %v88, 4294901760
    %7323 = vmatprep.subr.mxu0 %v7322
    %v7324 = vand.u32 %v87, 4294901760
    %7325 = vmatpush2.msra.mxu0 %v7324
    %v7326 = vand.u32 %v86, 4294901760
    %7327 = vmatprep.subr.mxu0 %v7326
    %v7328 = vand.u32 %v85, 4294901760
    %7329 = vmatpush2.msra.mxu0 %v7328
    %v7330 = vand.u32 %v84, 4294901760
    %7331 = vmatprep.subr.mxu0 %v7330
    %v7332 = vand.u32 %v83, 4294901760
    %7333 = vmatpush2.msra.mxu0 %v7332
    %v7334 = vand.u32 %v82, 4294901760
    %7335 = vmatprep.subr.mxu0 %v7334
    %v7336 = vand.u32 %v81, 4294901760
    %7337 = vmatpush2.msra.mxu0 %v7336
    %v7338 = vand.u32 %v80, 4294901760
    %7339 = vmatprep.subr.mxu0 %v7338
    %v7340 = vand.u32 %v79, 4294901760
    %7341 = vmatpush2.msra.mxu0 %v7340
    %v7342 = vand.u32 %v78, 4294901760
    %7343 = vmatprep.subr.mxu0 %v7342
    %v7344 = vand.u32 %v77, 4294901760
    %7345 = vmatpush2.msra.mxu0 %v7344
    %v7346 = vand.u32 %v76, 4294901760
    %7347 = vmatprep.subr.mxu0 %v7346
    %v7348 = vand.u32 %v75, 4294901760
    %7349 = vmatpush2.msra.mxu0 %v7348
    %v7350 = vand.u32 %v74, 4294901760
    %7351 = vmatprep.subr.mxu0 %v7350
    %v7352 = vand.u32 %v73, 4294901760
    %7353 = vmatpush2.msra.mxu0 %v7352
    %v7354 = vand.u32 %v72, 4294901760
    %7355 = vmatprep.subr.mxu0 %v7354
    %v7356 = vand.u32 %v71, 4294901760
    %7357 = vmatpush2.msra.mxu0 %v7356
    %v7358 = vand.u32 %v70, 4294901760
    %7359 = vmatprep.subr.mxu0 %v7358
    %v7360 = vand.u32 %v69, 4294901760
    %7361 = vmatpush2.msra.mxu0 %v7360
    %v7362 = vand.u32 %v68, 4294901760
    %7363 = vmatprep.subr.mxu0 %v7362
    %v7364 = vand.u32 %v67, 4294901760
    %7365 = vmatpush2.msra.mxu0 %v7364
    %v7366 = vand.u32 %v66, 4294901760
    %7367 = vmatprep.subr.mxu0 %v7366
    %v7368 = vand.u32 %v65, 4294901760
    %7369 = vmatpush2.msra.mxu0 %v7368
    %v7370 = vand.u32 %v64, 4294901760
    %7371 = vmatprep.subr.mxu0 %v7370
    %v7372 = vand.u32 %v63, 4294901760
    %7373 = vmatpush2.msra.mxu0 %v7372
    %v7374 = vand.u32 %v62, 4294901760
    %7375 = vmatprep.subr.mxu0 %v7374
    %v7376 = vand.u32 %v61, 4294901760
    %7377 = vmatpush2.msra.mxu0 %v7376
    %v7378 = vand.u32 %v7241, 4294901760
    %v7379 = vsub.f32 %v7241, %v7378
    %v7380 = vand.u32 %v7379, 4294901760
    %v7381 = vsub.f32 %v7379, %v7380
    %v7382 = vand.u32 %v7381, 4294901760
    %7383 = vmatprep.mubr.f32.mxu0 %v7382
    %v7384 = vand.u32 %v7240, 4294901760
    %v7385 = vsub.f32 %v7240, %v7384
    %v7386 = vand.u32 %v7385, 4294901760
    %v7387 = vsub.f32 %v7385, %v7386
    %v7388 = vand.u32 %v7387, 4294901760
    %7389 = vmatmul.mubr.f32.gmra.mxu0 %v7388
    %v7390 = vpop.f32.mrf.mxu0
    %v7391 = vadd.f32 %v7245, %v7390
    %v7392 = vpop.f32.mrf.mxu0
    %v7393 = vadd.f32 %v7249, %v7392
    %7394 = vdwg.mxu0
    %v7395 = vand.u32 %v60, 4294901760
    %v7396 = vsub.f32 %v60, %v7395
    %v7397 = vand.u32 %v7396, 4294901760
    %v7398 = vsub.f32 %v7396, %v7397
    %v7399 = vand.u32 %v7398, 4294901760
    %7400 = vmatprep.subr.mxu0 %v7399
    %v7401 = vand.u32 %v59, 4294901760
    %v7402 = vsub.f32 %v59, %v7401
    %v7403 = vand.u32 %v7402, 4294901760
    %v7404 = vsub.f32 %v7402, %v7403
    %v7405 = vand.u32 %v7404, 4294901760
    %7406 = vmatpush1.msra.mxu0 %v7405
    %v7407 = vand.u32 %v58, 4294901760
    %v7408 = vsub.f32 %v58, %v7407
    %v7409 = vand.u32 %v7408, 4294901760
    %v7410 = vsub.f32 %v7408, %v7409
    %v7411 = vand.u32 %v7410, 4294901760
    %7412 = vmatprep.subr.mxu0 %v7411
    %v7413 = vand.u32 %v57, 4294901760
    %v7414 = vsub.f32 %v57, %v7413
    %v7415 = vand.u32 %v7414, 4294901760
    %v7416 = vsub.f32 %v7414, %v7415
    %v7417 = vand.u32 %v7416, 4294901760
    %7418 = vmatpush1.msra.mxu0 %v7417
    %v7419 = vand.u32 %v56, 4294901760
    %v7420 = vsub.f32 %v56, %v7419
    %v7421 = vand.u32 %v7420, 4294901760
    %v7422 = vsub.f32 %v7420, %v7421
    %v7423 = vand.u32 %v7422, 4294901760
    %7424 = vmatprep.subr.mxu0 %v7423
    %v7425 = vand.u32 %v55, 4294901760
    %v7426 = vsub.f32 %v55, %v7425
    %v7427 = vand.u32 %v7426, 4294901760
    %v7428 = vsub.f32 %v7426, %v7427
    %v7429 = vand.u32 %v7428, 4294901760
    %7430 = vmatpush1.msra.mxu0 %v7429
    %v7431 = vand.u32 %v54, 4294901760
    %v7432 = vsub.f32 %v54, %v7431
    %v7433 = vand.u32 %v7432, 4294901760
    %v7434 = vsub.f32 %v7432, %v7433
    %v7435 = vand.u32 %v7434, 4294901760
    %7436 = vmatprep.subr.mxu0 %v7435
    %v7437 = vand.u32 %v53, 4294901760
    %v7438 = vsub.f32 %v53, %v7437
    %v7439 = vand.u32 %v7438, 4294901760
    %v7440 = vsub.f32 %v7438, %v7439
    %v7441 = vand.u32 %v7440, 4294901760
    %7442 = vmatpush1.msra.mxu0 %v7441
    %v7443 = vand.u32 %v52, 4294901760
    %v7444 = vsub.f32 %v52, %v7443
    %v7445 = vand.u32 %v7444, 4294901760
    %v7446 = vsub.f32 %v7444, %v7445
    %v7447 = vand.u32 %v7446, 4294901760
    %7448 = vmatprep.subr.mxu0 %v7447
    %v7449 = vand.u32 %v51, 4294901760
    %v7450 = vsub.f32 %v51, %v7449
    %v7451 = vand.u32 %v7450, 4294901760
    %v7452 = vsub.f32 %v7450, %v7451
    %v7453 = vand.u32 %v7452, 4294901760
    %7454 = vmatpush1.msra.mxu0 %v7453
    %v7455 = vand.u32 %v50, 4294901760
    %v7456 = vsub.f32 %v50, %v7455
    %v7457 = vand.u32 %v7456, 4294901760
    %v7458 = vsub.f32 %v7456, %v7457
    %v7459 = vand.u32 %v7458, 4294901760
    %7460 = vmatprep.subr.mxu0 %v7459
    %v7461 = vand.u32 %v49, 4294901760
    %v7462 = vsub.f32 %v49, %v7461
    %v7463 = vand.u32 %v7462, 4294901760
    %v7464 = vsub.f32 %v7462, %v7463
    %v7465 = vand.u32 %v7464, 4294901760
    %7466 = vmatpush1.msra.mxu0 %v7465
    %v7467 = vand.u32 %v48, 4294901760
    %v7468 = vsub.f32 %v48, %v7467
    %v7469 = vand.u32 %v7468, 4294901760
    %v7470 = vsub.f32 %v7468, %v7469
    %v7471 = vand.u32 %v7470, 4294901760
    %7472 = vmatprep.subr.mxu0 %v7471
    %v7473 = vand.u32 %v47, 4294901760
    %v7474 = vsub.f32 %v47, %v7473
    %v7475 = vand.u32 %v7474, 4294901760
    %v7476 = vsub.f32 %v7474, %v7475
    %v7477 = vand.u32 %v7476, 4294901760
    %7478 = vmatpush1.msra.mxu0 %v7477
    %v7479 = vand.u32 %v46, 4294901760
    %v7480 = vsub.f32 %v46, %v7479
    %v7481 = vand.u32 %v7480, 4294901760
    %v7482 = vsub.f32 %v7480, %v7481
    %v7483 = vand.u32 %v7482, 4294901760
    %7484 = vmatprep.subr.mxu0 %v7483
    %v7485 = vand.u32 %v45, 4294901760
    %v7486 = vsub.f32 %v45, %v7485
    %v7487 = vand.u32 %v7486, 4294901760
    %v7488 = vsub.f32 %v7486, %v7487
    %v7489 = vand.u32 %v7488, 4294901760
    %7490 = vmatpush1.msra.mxu0 %v7489
    %v7491 = vand.u32 %v44, 4294901760
    %v7492 = vsub.f32 %v44, %v7491
    %v7493 = vand.u32 %v7492, 4294901760
    %v7494 = vsub.f32 %v7492, %v7493
    %v7495 = vand.u32 %v7494, 4294901760
    %7496 = vmatprep.subr.mxu0 %v7495
    %v7497 = vand.u32 %v43, 4294901760
    %v7498 = vsub.f32 %v43, %v7497
    %v7499 = vand.u32 %v7498, 4294901760
    %v7500 = vsub.f32 %v7498, %v7499
    %v7501 = vand.u32 %v7500, 4294901760
    %7502 = vmatpush1.msra.mxu0 %v7501
    %v7503 = vand.u32 %v42, 4294901760
    %v7504 = vsub.f32 %v42, %v7503
    %v7505 = vand.u32 %v7504, 4294901760
    %v7506 = vsub.f32 %v7504, %v7505
    %v7507 = vand.u32 %v7506, 4294901760
    %7508 = vmatprep.subr.mxu0 %v7507
    %v7509 = vand.u32 %v41, 4294901760
    %v7510 = vsub.f32 %v41, %v7509
    %v7511 = vand.u32 %v7510, 4294901760
    %v7512 = vsub.f32 %v7510, %v7511
    %v7513 = vand.u32 %v7512, 4294901760
    %7514 = vmatpush1.msra.mxu0 %v7513
    %v7515 = vand.u32 %v40, 4294901760
    %v7516 = vsub.f32 %v40, %v7515
    %v7517 = vand.u32 %v7516, 4294901760
    %v7518 = vsub.f32 %v7516, %v7517
    %v7519 = vand.u32 %v7518, 4294901760
    %7520 = vmatprep.subr.mxu0 %v7519
    %v7521 = vand.u32 %v39, 4294901760
    %v7522 = vsub.f32 %v39, %v7521
    %v7523 = vand.u32 %v7522, 4294901760
    %v7524 = vsub.f32 %v7522, %v7523
    %v7525 = vand.u32 %v7524, 4294901760
    %7526 = vmatpush1.msra.mxu0 %v7525
    %v7527 = vand.u32 %v38, 4294901760
    %v7528 = vsub.f32 %v38, %v7527
    %v7529 = vand.u32 %v7528, 4294901760
    %v7530 = vsub.f32 %v7528, %v7529
    %v7531 = vand.u32 %v7530, 4294901760
    %7532 = vmatprep.subr.mxu0 %v7531
    %v7533 = vand.u32 %v37, 4294901760
    %v7534 = vsub.f32 %v37, %v7533
    %v7535 = vand.u32 %v7534, 4294901760
    %v7536 = vsub.f32 %v7534, %v7535
    %v7537 = vand.u32 %v7536, 4294901760
    %7538 = vmatpush1.msra.mxu0 %v7537
    %v7539 = vand.u32 %v36, 4294901760
    %v7540 = vsub.f32 %v36, %v7539
    %v7541 = vand.u32 %v7540, 4294901760
    %v7542 = vsub.f32 %v7540, %v7541
    %v7543 = vand.u32 %v7542, 4294901760
    %7544 = vmatprep.subr.mxu0 %v7543
    %v7545 = vand.u32 %v35, 4294901760
    %v7546 = vsub.f32 %v35, %v7545
    %v7547 = vand.u32 %v7546, 4294901760
    %v7548 = vsub.f32 %v7546, %v7547
    %v7549 = vand.u32 %v7548, 4294901760
    %7550 = vmatpush1.msra.mxu0 %v7549
    %v7551 = vand.u32 %v34, 4294901760
    %v7552 = vsub.f32 %v34, %v7551
    %v7553 = vand.u32 %v7552, 4294901760
    %v7554 = vsub.f32 %v7552, %v7553
    %v7555 = vand.u32 %v7554, 4294901760
    %7556 = vmatprep.subr.mxu0 %v7555
    %v7557 = vand.u32 %v33, 4294901760
    %v7558 = vsub.f32 %v33, %v7557
    %v7559 = vand.u32 %v7558, 4294901760
    %v7560 = vsub.f32 %v7558, %v7559
    %v7561 = vand.u32 %v7560, 4294901760
    %7562 = vmatpush1.msra.mxu0 %v7561
    %v7563 = vand.u32 %v32, 4294901760
    %v7564 = vsub.f32 %v32, %v7563
    %v7565 = vand.u32 %v7564, 4294901760
    %v7566 = vsub.f32 %v7564, %v7565
    %v7567 = vand.u32 %v7566, 4294901760
    %7568 = vmatprep.subr.mxu0 %v7567
    %v7569 = vand.u32 %v31, 4294901760
    %v7570 = vsub.f32 %v31, %v7569
    %v7571 = vand.u32 %v7570, 4294901760
    %v7572 = vsub.f32 %v7570, %v7571
    %v7573 = vand.u32 %v7572, 4294901760
    %7574 = vmatpush1.msra.mxu0 %v7573
    %v7575 = vand.u32 %v30, 4294901760
    %v7576 = vsub.f32 %v30, %v7575
    %v7577 = vand.u32 %v7576, 4294901760
    %v7578 = vsub.f32 %v7576, %v7577
    %v7579 = vand.u32 %v7578, 4294901760
    %7580 = vmatprep.subr.mxu0 %v7579
    %v7581 = vand.u32 %v29, 4294901760
    %v7582 = vsub.f32 %v29, %v7581
    %v7583 = vand.u32 %v7582, 4294901760
    %v7584 = vsub.f32 %v7582, %v7583
    %v7585 = vand.u32 %v7584, 4294901760
    %7586 = vmatpush1.msra.mxu0 %v7585
    %v7587 = vand.u32 %v92, 4294901760
    %v7588 = vsub.f32 %v92, %v7587
    %v7589 = vand.u32 %v7588, 4294901760
    %v7590 = vsub.f32 %v7588, %v7589
    %v7591 = vand.u32 %v7590, 4294901760
    %7592 = vmatprep.subr.mxu0 %v7591
    %v7593 = vand.u32 %v91, 4294901760
    %v7594 = vsub.f32 %v91, %v7593
    %v7595 = vand.u32 %v7594, 4294901760
    %v7596 = vsub.f32 %v7594, %v7595
    %v7597 = vand.u32 %v7596, 4294901760
    %7598 = vmatpush2.msra.mxu0 %v7597
    %v7599 = vand.u32 %v90, 4294901760
    %v7600 = vsub.f32 %v90, %v7599
    %v7601 = vand.u32 %v7600, 4294901760
    %v7602 = vsub.f32 %v7600, %v7601
    %v7603 = vand.u32 %v7602, 4294901760
    %7604 = vmatprep.subr.mxu0 %v7603
    %v7605 = vand.u32 %v89, 4294901760
    %v7606 = vsub.f32 %v89, %v7605
    %v7607 = vand.u32 %v7606, 4294901760
    %v7608 = vsub.f32 %v7606, %v7607
    %v7609 = vand.u32 %v7608, 4294901760
    %7610 = vmatpush2.msra.mxu0 %v7609
    %v7611 = vand.u32 %v88, 4294901760
    %v7612 = vsub.f32 %v88, %v7611
    %v7613 = vand.u32 %v7612, 4294901760
    %v7614 = vsub.f32 %v7612, %v7613
    %v7615 = vand.u32 %v7614, 4294901760
    %7616 = vmatprep.subr.mxu0 %v7615
    %v7617 = vand.u32 %v87, 4294901760
    %v7618 = vsub.f32 %v87, %v7617
    %v7619 = vand.u32 %v7618, 4294901760
    %v7620 = vsub.f32 %v7618, %v7619
    %v7621 = vand.u32 %v7620, 4294901760
    %7622 = vmatpush2.msra.mxu0 %v7621
    %v7623 = vand.u32 %v86, 4294901760
    %v7624 = vsub.f32 %v86, %v7623
    %v7625 = vand.u32 %v7624, 4294901760
    %v7626 = vsub.f32 %v7624, %v7625
    %v7627 = vand.u32 %v7626, 4294901760
    %7628 = vmatprep.subr.mxu0 %v7627
    %v7629 = vand.u32 %v85, 4294901760
    %v7630 = vsub.f32 %v85, %v7629
    %v7631 = vand.u32 %v7630, 4294901760
    %v7632 = vsub.f32 %v7630, %v7631
    %v7633 = vand.u32 %v7632, 4294901760
    %7634 = vmatpush2.msra.mxu0 %v7633
    %v7635 = vand.u32 %v84, 4294901760
    %v7636 = vsub.f32 %v84, %v7635
    %v7637 = vand.u32 %v7636, 4294901760
    %v7638 = vsub.f32 %v7636, %v7637
    %v7639 = vand.u32 %v7638, 4294901760
    %7640 = vmatprep.subr.mxu0 %v7639
    %v7641 = vand.u32 %v83, 4294901760
    %v7642 = vsub.f32 %v83, %v7641
    %v7643 = vand.u32 %v7642, 4294901760
    %v7644 = vsub.f32 %v7642, %v7643
    %v7645 = vand.u32 %v7644, 4294901760
    %7646 = vmatpush2.msra.mxu0 %v7645
    %v7647 = vand.u32 %v82, 4294901760
    %v7648 = vsub.f32 %v82, %v7647
    %v7649 = vand.u32 %v7648, 4294901760
    %v7650 = vsub.f32 %v7648, %v7649
    %v7651 = vand.u32 %v7650, 4294901760
    %7652 = vmatprep.subr.mxu0 %v7651
    %v7653 = vand.u32 %v81, 4294901760
    %v7654 = vsub.f32 %v81, %v7653
    %v7655 = vand.u32 %v7654, 4294901760
    %v7656 = vsub.f32 %v7654, %v7655
    %v7657 = vand.u32 %v7656, 4294901760
    %7658 = vmatpush2.msra.mxu0 %v7657
    %v7659 = vand.u32 %v80, 4294901760
    %v7660 = vsub.f32 %v80, %v7659
    %v7661 = vand.u32 %v7660, 4294901760
    %v7662 = vsub.f32 %v7660, %v7661
    %v7663 = vand.u32 %v7662, 4294901760
    %7664 = vmatprep.subr.mxu0 %v7663
    %v7665 = vand.u32 %v79, 4294901760
    %v7666 = vsub.f32 %v79, %v7665
    %v7667 = vand.u32 %v7666, 4294901760
    %v7668 = vsub.f32 %v7666, %v7667
    %v7669 = vand.u32 %v7668, 4294901760
    %7670 = vmatpush2.msra.mxu0 %v7669
    %v7671 = vand.u32 %v78, 4294901760
    %v7672 = vsub.f32 %v78, %v7671
    %v7673 = vand.u32 %v7672, 4294901760
    %v7674 = vsub.f32 %v7672, %v7673
    %v7675 = vand.u32 %v7674, 4294901760
    %7676 = vmatprep.subr.mxu0 %v7675
    %v7677 = vand.u32 %v77, 4294901760
    %v7678 = vsub.f32 %v77, %v7677
    %v7679 = vand.u32 %v7678, 4294901760
    %v7680 = vsub.f32 %v7678, %v7679
    %v7681 = vand.u32 %v7680, 4294901760
    %7682 = vmatpush2.msra.mxu0 %v7681
    %v7683 = vand.u32 %v76, 4294901760
    %v7684 = vsub.f32 %v76, %v7683
    %v7685 = vand.u32 %v7684, 4294901760
    %v7686 = vsub.f32 %v7684, %v7685
    %v7687 = vand.u32 %v7686, 4294901760
    %7688 = vmatprep.subr.mxu0 %v7687
    %v7689 = vand.u32 %v75, 4294901760
    %v7690 = vsub.f32 %v75, %v7689
    %v7691 = vand.u32 %v7690, 4294901760
    %v7692 = vsub.f32 %v7690, %v7691
    %v7693 = vand.u32 %v7692, 4294901760
    %7694 = vmatpush2.msra.mxu0 %v7693
    %v7695 = vand.u32 %v74, 4294901760
    %v7696 = vsub.f32 %v74, %v7695
    %v7697 = vand.u32 %v7696, 4294901760
    %v7698 = vsub.f32 %v7696, %v7697
    %v7699 = vand.u32 %v7698, 4294901760
    %7700 = vmatprep.subr.mxu0 %v7699
    %v7701 = vand.u32 %v73, 4294901760
    %v7702 = vsub.f32 %v73, %v7701
    %v7703 = vand.u32 %v7702, 4294901760
    %v7704 = vsub.f32 %v7702, %v7703
    %v7705 = vand.u32 %v7704, 4294901760
    %7706 = vmatpush2.msra.mxu0 %v7705
    %v7707 = vand.u32 %v72, 4294901760
    %v7708 = vsub.f32 %v72, %v7707
    %v7709 = vand.u32 %v7708, 4294901760
    %v7710 = vsub.f32 %v7708, %v7709
    %v7711 = vand.u32 %v7710, 4294901760
    %7712 = vmatprep.subr.mxu0 %v7711
    %v7713 = vand.u32 %v71, 4294901760
    %v7714 = vsub.f32 %v71, %v7713
    %v7715 = vand.u32 %v7714, 4294901760
    %v7716 = vsub.f32 %v7714, %v7715
    %v7717 = vand.u32 %v7716, 4294901760
    %7718 = vmatpush2.msra.mxu0 %v7717
    %v7719 = vand.u32 %v70, 4294901760
    %v7720 = vsub.f32 %v70, %v7719
    %v7721 = vand.u32 %v7720, 4294901760
    %v7722 = vsub.f32 %v7720, %v7721
    %v7723 = vand.u32 %v7722, 4294901760
    %7724 = vmatprep.subr.mxu0 %v7723
    %v7725 = vand.u32 %v69, 4294901760
    %v7726 = vsub.f32 %v69, %v7725
    %v7727 = vand.u32 %v7726, 4294901760
    %v7728 = vsub.f32 %v7726, %v7727
    %v7729 = vand.u32 %v7728, 4294901760
    %7730 = vmatpush2.msra.mxu0 %v7729
    %v7731 = vand.u32 %v68, 4294901760
    %v7732 = vsub.f32 %v68, %v7731
    %v7733 = vand.u32 %v7732, 4294901760
    %v7734 = vsub.f32 %v7732, %v7733
    %v7735 = vand.u32 %v7734, 4294901760
    %7736 = vmatprep.subr.mxu0 %v7735
    %v7737 = vand.u32 %v67, 4294901760
    %v7738 = vsub.f32 %v67, %v7737
    %v7739 = vand.u32 %v7738, 4294901760
    %v7740 = vsub.f32 %v7738, %v7739
    %v7741 = vand.u32 %v7740, 4294901760
    %7742 = vmatpush2.msra.mxu0 %v7741
    %v7743 = vand.u32 %v66, 4294901760
    %v7744 = vsub.f32 %v66, %v7743
    %v7745 = vand.u32 %v7744, 4294901760
    %v7746 = vsub.f32 %v7744, %v7745
    %v7747 = vand.u32 %v7746, 4294901760
    %7748 = vmatprep.subr.mxu0 %v7747
    %v7749 = vand.u32 %v65, 4294901760
    %v7750 = vsub.f32 %v65, %v7749
    %v7751 = vand.u32 %v7750, 4294901760
    %v7752 = vsub.f32 %v7750, %v7751
    %v7753 = vand.u32 %v7752, 4294901760
    %7754 = vmatpush2.msra.mxu0 %v7753
    %v7755 = vand.u32 %v64, 4294901760
    %v7756 = vsub.f32 %v64, %v7755
    %v7757 = vand.u32 %v7756, 4294901760
    %v7758 = vsub.f32 %v7756, %v7757
    %v7759 = vand.u32 %v7758, 4294901760
    %7760 = vmatprep.subr.mxu0 %v7759
    %v7761 = vand.u32 %v63, 4294901760
    %v7762 = vsub.f32 %v63, %v7761
    %v7763 = vand.u32 %v7762, 4294901760
    %v7764 = vsub.f32 %v7762, %v7763
    %v7765 = vand.u32 %v7764, 4294901760
    %7766 = vmatpush2.msra.mxu0 %v7765
    %v7767 = vand.u32 %v62, 4294901760
    %v7768 = vsub.f32 %v62, %v7767
    %v7769 = vand.u32 %v7768, 4294901760
    %v7770 = vsub.f32 %v7768, %v7769
    %v7771 = vand.u32 %v7770, 4294901760
    %7772 = vmatprep.subr.mxu0 %v7771
    %v7773 = vand.u32 %v61, 4294901760
    %v7774 = vsub.f32 %v61, %v7773
    %v7775 = vand.u32 %v7774, 4294901760
    %v7776 = vsub.f32 %v7774, %v7775
    %v7777 = vand.u32 %v7776, 4294901760
    %7778 = vmatpush2.msra.mxu0 %v7777
    %v7779 = vand.u32 %v7241, 4294901760
    %7780 = vmatprep.mubr.f32.mxu0 %v7779
    %v7781 = vand.u32 %v7240, 4294901760
    %7782 = vmatmul.mubr.f32.gmra.mxu0 %v7781
    %v7783 = vpop.f32.mrf.mxu0
    %v7784 = vadd.f32 %v7391, %v7783
    %v7785 = vpop.f32.mrf.mxu0
    %v7786 = vadd.f32 %v7393, %v7785
    %7787 = vdwg.mxu0
    %v7788 = vand.u32 %v60, 4294901760
    %v7789 = vsub.f32 %v60, %v7788
    %7790 = vmatprep.subr.mxu0 %v7789
    %v7791 = vand.u32 %v59, 4294901760
    %v7792 = vsub.f32 %v59, %v7791
    %7793 = vmatpush1.msra.mxu0 %v7792
    %v7794 = vand.u32 %v58, 4294901760
    %v7795 = vsub.f32 %v58, %v7794
    %7796 = vmatprep.subr.mxu0 %v7795
    %v7797 = vand.u32 %v57, 4294901760
    %v7798 = vsub.f32 %v57, %v7797
    %7799 = vmatpush1.msra.mxu0 %v7798
    %v7800 = vand.u32 %v56, 4294901760
    %v7801 = vsub.f32 %v56, %v7800
    %7802 = vmatprep.subr.mxu0 %v7801
    %v7803 = vand.u32 %v55, 4294901760
    %v7804 = vsub.f32 %v55, %v7803
    %7805 = vmatpush1.msra.mxu0 %v7804
    %v7806 = vand.u32 %v54, 4294901760
    %v7807 = vsub.f32 %v54, %v7806
    %7808 = vmatprep.subr.mxu0 %v7807
    %v7809 = vand.u32 %v53, 4294901760
    %v7810 = vsub.f32 %v53, %v7809
    %7811 = vmatpush1.msra.mxu0 %v7810
    %v7812 = vand.u32 %v52, 4294901760
    %v7813 = vsub.f32 %v52, %v7812
    %7814 = vmatprep.subr.mxu0 %v7813
    %v7815 = vand.u32 %v51, 4294901760
    %v7816 = vsub.f32 %v51, %v7815
    %7817 = vmatpush1.msra.mxu0 %v7816
    %v7818 = vand.u32 %v50, 4294901760
    %v7819 = vsub.f32 %v50, %v7818
    %7820 = vmatprep.subr.mxu0 %v7819
    %v7821 = vand.u32 %v49, 4294901760
    %v7822 = vsub.f32 %v49, %v7821
    %7823 = vmatpush1.msra.mxu0 %v7822
    %v7824 = vand.u32 %v48, 4294901760
    %v7825 = vsub.f32 %v48, %v7824
    %7826 = vmatprep.subr.mxu0 %v7825
    %v7827 = vand.u32 %v47, 4294901760
    %v7828 = vsub.f32 %v47, %v7827
    %7829 = vmatpush1.msra.mxu0 %v7828
    %v7830 = vand.u32 %v46, 4294901760
    %v7831 = vsub.f32 %v46, %v7830
    %7832 = vmatprep.subr.mxu0 %v7831
    %v7833 = vand.u32 %v45, 4294901760
    %v7834 = vsub.f32 %v45, %v7833
    %7835 = vmatpush1.msra.mxu0 %v7834
    %v7836 = vand.u32 %v44, 4294901760
    %v7837 = vsub.f32 %v44, %v7836
    %7838 = vmatprep.subr.mxu0 %v7837
    %v7839 = vand.u32 %v43, 4294901760
    %v7840 = vsub.f32 %v43, %v7839
    %7841 = vmatpush1.msra.mxu0 %v7840
    %v7842 = vand.u32 %v42, 4294901760
    %v7843 = vsub.f32 %v42, %v7842
    %7844 = vmatprep.subr.mxu0 %v7843
    %v7845 = vand.u32 %v41, 4294901760
    %v7846 = vsub.f32 %v41, %v7845
    %7847 = vmatpush1.msra.mxu0 %v7846
    %v7848 = vand.u32 %v40, 4294901760
    %v7849 = vsub.f32 %v40, %v7848
    %7850 = vmatprep.subr.mxu0 %v7849
    %v7851 = vand.u32 %v39, 4294901760
    %v7852 = vsub.f32 %v39, %v7851
    %7853 = vmatpush1.msra.mxu0 %v7852
    %v7854 = vand.u32 %v38, 4294901760
    %v7855 = vsub.f32 %v38, %v7854
    %7856 = vmatprep.subr.mxu0 %v7855
    %v7857 = vand.u32 %v37, 4294901760
    %v7858 = vsub.f32 %v37, %v7857
    %7859 = vmatpush1.msra.mxu0 %v7858
    %v7860 = vand.u32 %v36, 4294901760
    %v7861 = vsub.f32 %v36, %v7860
    %7862 = vmatprep.subr.mxu0 %v7861
    %v7863 = vand.u32 %v35, 4294901760
    %v7864 = vsub.f32 %v35, %v7863
    %7865 = vmatpush1.msra.mxu0 %v7864
    %v7866 = vand.u32 %v34, 4294901760
    %v7867 = vsub.f32 %v34, %v7866
    %7868 = vmatprep.subr.mxu0 %v7867
    %v7869 = vand.u32 %v33, 4294901760
    %v7870 = vsub.f32 %v33, %v7869
    %7871 = vmatpush1.msra.mxu0 %v7870
    %v7872 = vand.u32 %v32, 4294901760
    %v7873 = vsub.f32 %v32, %v7872
    %7874 = vmatprep.subr.mxu0 %v7873
    %v7875 = vand.u32 %v31, 4294901760
    %v7876 = vsub.f32 %v31, %v7875
    %7877 = vmatpush1.msra.mxu0 %v7876
    %v7878 = vand.u32 %v30, 4294901760
    %v7879 = vsub.f32 %v30, %v7878
    %7880 = vmatprep.subr.mxu0 %v7879
    %v7881 = vand.u32 %v29, 4294901760
    %v7882 = vsub.f32 %v29, %v7881
    %7883 = vmatpush1.msra.mxu0 %v7882
    %v7884 = vand.u32 %v92, 4294901760
    %v7885 = vsub.f32 %v92, %v7884
    %7886 = vmatprep.subr.mxu0 %v7885
    %v7887 = vand.u32 %v91, 4294901760
    %v7888 = vsub.f32 %v91, %v7887
    %7889 = vmatpush2.msra.mxu0 %v7888
    %v7890 = vand.u32 %v90, 4294901760
    %v7891 = vsub.f32 %v90, %v7890
    %7892 = vmatprep.subr.mxu0 %v7891
    %v7893 = vand.u32 %v89, 4294901760
    %v7894 = vsub.f32 %v89, %v7893
    %7895 = vmatpush2.msra.mxu0 %v7894
    %v7896 = vand.u32 %v88, 4294901760
    %v7897 = vsub.f32 %v88, %v7896
    %7898 = vmatprep.subr.mxu0 %v7897
    %v7899 = vand.u32 %v87, 4294901760
    %v7900 = vsub.f32 %v87, %v7899
    %7901 = vmatpush2.msra.mxu0 %v7900
    %v7902 = vand.u32 %v86, 4294901760
    %v7903 = vsub.f32 %v86, %v7902
    %7904 = vmatprep.subr.mxu0 %v7903
    %v7905 = vand.u32 %v85, 4294901760
    %v7906 = vsub.f32 %v85, %v7905
    %7907 = vmatpush2.msra.mxu0 %v7906
    %v7908 = vand.u32 %v84, 4294901760
    %v7909 = vsub.f32 %v84, %v7908
    %7910 = vmatprep.subr.mxu0 %v7909
    %v7911 = vand.u32 %v83, 4294901760
    %v7912 = vsub.f32 %v83, %v7911
    %7913 = vmatpush2.msra.mxu0 %v7912
    %v7914 = vand.u32 %v82, 4294901760
    %v7915 = vsub.f32 %v82, %v7914
    %7916 = vmatprep.subr.mxu0 %v7915
    %v7917 = vand.u32 %v81, 4294901760
    %v7918 = vsub.f32 %v81, %v7917
    %7919 = vmatpush2.msra.mxu0 %v7918
    %v7920 = vand.u32 %v80, 4294901760
    %v7921 = vsub.f32 %v80, %v7920
    %7922 = vmatprep.subr.mxu0 %v7921
    %v7923 = vand.u32 %v79, 4294901760
    %v7924 = vsub.f32 %v79, %v7923
    %7925 = vmatpush2.msra.mxu0 %v7924
    %v7926 = vand.u32 %v78, 4294901760
    %v7927 = vsub.f32 %v78, %v7926
    %7928 = vmatprep.subr.mxu0 %v7927
    %v7929 = vand.u32 %v77, 4294901760
    %v7930 = vsub.f32 %v77, %v7929
    %7931 = vmatpush2.msra.mxu0 %v7930
    %v7932 = vand.u32 %v76, 4294901760
    %v7933 = vsub.f32 %v76, %v7932
    %7934 = vmatprep.subr.mxu0 %v7933
    %v7935 = vand.u32 %v75, 4294901760
    %v7936 = vsub.f32 %v75, %v7935
    %7937 = vmatpush2.msra.mxu0 %v7936
    %v7938 = vand.u32 %v74, 4294901760
    %v7939 = vsub.f32 %v74, %v7938
    %7940 = vmatprep.subr.mxu0 %v7939
    %v7941 = vand.u32 %v73, 4294901760
    %v7942 = vsub.f32 %v73, %v7941
    %7943 = vmatpush2.msra.mxu0 %v7942
    %v7944 = vand.u32 %v72, 4294901760
    %v7945 = vsub.f32 %v72, %v7944
    %7946 = vmatprep.subr.mxu0 %v7945
    %v7947 = vand.u32 %v71, 4294901760
    %v7948 = vsub.f32 %v71, %v7947
    %7949 = vmatpush2.msra.mxu0 %v7948
    %v7950 = vand.u32 %v70, 4294901760
    %v7951 = vsub.f32 %v70, %v7950
    %7952 = vmatprep.subr.mxu0 %v7951
    %v7953 = vand.u32 %v69, 4294901760
    %v7954 = vsub.f32 %v69, %v7953
    %7955 = vmatpush2.msra.mxu0 %v7954
    %v7956 = vand.u32 %v68, 4294901760
    %v7957 = vsub.f32 %v68, %v7956
    %7958 = vmatprep.subr.mxu0 %v7957
    %v7959 = vand.u32 %v67, 4294901760
    %v7960 = vsub.f32 %v67, %v7959
    %7961 = vmatpush2.msra.mxu0 %v7960
    %v7962 = vand.u32 %v66, 4294901760
    %v7963 = vsub.f32 %v66, %v7962
    %7964 = vmatprep.subr.mxu0 %v7963
    %v7965 = vand.u32 %v65, 4294901760
    %v7966 = vsub.f32 %v65, %v7965
    %7967 = vmatpush2.msra.mxu0 %v7966
    %v7968 = vand.u32 %v64, 4294901760
    %v7969 = vsub.f32 %v64, %v7968
    %7970 = vmatprep.subr.mxu0 %v7969
    %v7971 = vand.u32 %v63, 4294901760
    %v7972 = vsub.f32 %v63, %v7971
    %7973 = vmatpush2.msra.mxu0 %v7972
    %v7974 = vand.u32 %v62, 4294901760
    %v7975 = vsub.f32 %v62, %v7974
    %7976 = vmatprep.subr.mxu0 %v7975
    %v7977 = vand.u32 %v61, 4294901760
    %v7978 = vsub.f32 %v61, %v7977
    %7979 = vmatpush2.msra.mxu0 %v7978
    %v7980 = vand.u32 %v7241, 4294901760
    %v7981 = vsub.f32 %v7241, %v7980
    %7982 = vmatprep.mubr.f32.mxu0 %v7981
    %v7983 = vand.u32 %v7240, 4294901760
    %v7984 = vsub.f32 %v7240, %v7983
    %7985 = vmatmul.mubr.f32.gmra.mxu0 %v7984
    %v7986 = vpop.f32.mrf.mxu0
    %v7987 = vadd.f32 %v7784, %v7986
    %v7988 = vpop.f32.mrf.mxu0
    %v7989 = vadd.f32 %v7786, %v7988
    %7990 = vdwg.mxu0
    %v7991 = vand.u32 %v60, 4294901760
    %7992 = vmatprep.subr.mxu0 %v7991
    %v7993 = vand.u32 %v59, 4294901760
    %7994 = vmatpush1.msra.mxu0 %v7993
    %v7995 = vand.u32 %v58, 4294901760
    %7996 = vmatprep.subr.mxu0 %v7995
    %v7997 = vand.u32 %v57, 4294901760
    %7998 = vmatpush1.msra.mxu0 %v7997
    %v7999 = vand.u32 %v56, 4294901760
    %8000 = vmatprep.subr.mxu0 %v7999
    %v8001 = vand.u32 %v55, 4294901760
    %8002 = vmatpush1.msra.mxu0 %v8001
    %v8003 = vand.u32 %v54, 4294901760
    %8004 = vmatprep.subr.mxu0 %v8003
    %v8005 = vand.u32 %v53, 4294901760
    %8006 = vmatpush1.msra.mxu0 %v8005
    %v8007 = vand.u32 %v52, 4294901760
    %8008 = vmatprep.subr.mxu0 %v8007
    %v8009 = vand.u32 %v51, 4294901760
    %8010 = vmatpush1.msra.mxu0 %v8009
    %v8011 = vand.u32 %v50, 4294901760
    %8012 = vmatprep.subr.mxu0 %v8011
    %v8013 = vand.u32 %v49, 4294901760
    %8014 = vmatpush1.msra.mxu0 %v8013
    %v8015 = vand.u32 %v48, 4294901760
    %8016 = vmatprep.subr.mxu0 %v8015
    %v8017 = vand.u32 %v47, 4294901760
    %8018 = vmatpush1.msra.mxu0 %v8017
    %v8019 = vand.u32 %v46, 4294901760
    %8020 = vmatprep.subr.mxu0 %v8019
    %v8021 = vand.u32 %v45, 4294901760
    %8022 = vmatpush1.msra.mxu0 %v8021
    %v8023 = vand.u32 %v44, 4294901760
    %8024 = vmatprep.subr.mxu0 %v8023
    %v8025 = vand.u32 %v43, 4294901760
    %8026 = vmatpush1.msra.mxu0 %v8025
    %v8027 = vand.u32 %v42, 4294901760
    %8028 = vmatprep.subr.mxu0 %v8027
    %v8029 = vand.u32 %v41, 4294901760
    %8030 = vmatpush1.msra.mxu0 %v8029
    %v8031 = vand.u32 %v40, 4294901760
    %8032 = vmatprep.subr.mxu0 %v8031
    %v8033 = vand.u32 %v39, 4294901760
    %8034 = vmatpush1.msra.mxu0 %v8033
    %v8035 = vand.u32 %v38, 4294901760
    %8036 = vmatprep.subr.mxu0 %v8035
    %v8037 = vand.u32 %v37, 4294901760
    %8038 = vmatpush1.msra.mxu0 %v8037
    %v8039 = vand.u32 %v36, 4294901760
    %8040 = vmatprep.subr.mxu0 %v8039
    %v8041 = vand.u32 %v35, 4294901760
    %8042 = vmatpush1.msra.mxu0 %v8041
    %v8043 = vand.u32 %v34, 4294901760
    %8044 = vmatprep.subr.mxu0 %v8043
    %v8045 = vand.u32 %v33, 4294901760
    %8046 = vmatpush1.msra.mxu0 %v8045
    %v8047 = vand.u32 %v32, 4294901760
    %8048 = vmatprep.subr.mxu0 %v8047
    %v8049 = vand.u32 %v31, 4294901760
    %8050 = vmatpush1.msra.mxu0 %v8049
    %v8051 = vand.u32 %v30, 4294901760
    %8052 = vmatprep.subr.mxu0 %v8051
    %v8053 = vand.u32 %v29, 4294901760
    %8054 = vmatpush1.msra.mxu0 %v8053
    %v8055 = vand.u32 %v92, 4294901760
    %8056 = vmatprep.subr.mxu0 %v8055
    %v8057 = vand.u32 %v91, 4294901760
    %8058 = vmatpush2.msra.mxu0 %v8057
    %v8059 = vand.u32 %v90, 4294901760
    %8060 = vmatprep.subr.mxu0 %v8059
    %v8061 = vand.u32 %v89, 4294901760
    %8062 = vmatpush2.msra.mxu0 %v8061
    %v8063 = vand.u32 %v88, 4294901760
    %8064 = vmatprep.subr.mxu0 %v8063
    %v8065 = vand.u32 %v87, 4294901760
    %8066 = vmatpush2.msra.mxu0 %v8065
    %v8067 = vand.u32 %v86, 4294901760
    %8068 = vmatprep.subr.mxu0 %v8067
    %v8069 = vand.u32 %v85, 4294901760
    %8070 = vmatpush2.msra.mxu0 %v8069
    %v8071 = vand.u32 %v84, 4294901760
    %8072 = vmatprep.subr.mxu0 %v8071
    %v8073 = vand.u32 %v83, 4294901760
    %8074 = vmatpush2.msra.mxu0 %v8073
    %v8075 = vand.u32 %v82, 4294901760
    %8076 = vmatprep.subr.mxu0 %v8075
    %v8077 = vand.u32 %v81, 4294901760
    %8078 = vmatpush2.msra.mxu0 %v8077
    %v8079 = vand.u32 %v80, 4294901760
    %8080 = vmatprep.subr.mxu0 %v8079
    %v8081 = vand.u32 %v79, 4294901760
    %8082 = vmatpush2.msra.mxu0 %v8081
    %v8083 = vand.u32 %v78, 4294901760
    %8084 = vmatprep.subr.mxu0 %v8083
    %v8085 = vand.u32 %v77, 4294901760
    %8086 = vmatpush2.msra.mxu0 %v8085
    %v8087 = vand.u32 %v76, 4294901760
    %8088 = vmatprep.subr.mxu0 %v8087
    %v8089 = vand.u32 %v75, 4294901760
    %8090 = vmatpush2.msra.mxu0 %v8089
    %v8091 = vand.u32 %v74, 4294901760
    %8092 = vmatprep.subr.mxu0 %v8091
    %v8093 = vand.u32 %v73, 4294901760
    %8094 = vmatpush2.msra.mxu0 %v8093
    %v8095 = vand.u32 %v72, 4294901760
    %8096 = vmatprep.subr.mxu0 %v8095
    %v8097 = vand.u32 %v71, 4294901760
    %8098 = vmatpush2.msra.mxu0 %v8097
    %v8099 = vand.u32 %v70, 4294901760
    %8100 = vmatprep.subr.mxu0 %v8099
    %v8101 = vand.u32 %v69, 4294901760
    %8102 = vmatpush2.msra.mxu0 %v8101
    %v8103 = vand.u32 %v68, 4294901760
    %8104 = vmatprep.subr.mxu0 %v8103
    %v8105 = vand.u32 %v67, 4294901760
    %8106 = vmatpush2.msra.mxu0 %v8105
    %v8107 = vand.u32 %v66, 4294901760
    %8108 = vmatprep.subr.mxu0 %v8107
    %v8109 = vand.u32 %v65, 4294901760
    %8110 = vmatpush2.msra.mxu0 %v8109
    %v8111 = vand.u32 %v64, 4294901760
    %8112 = vmatprep.subr.mxu0 %v8111
    %v8113 = vand.u32 %v63, 4294901760
    %8114 = vmatpush2.msra.mxu0 %v8113
    %v8115 = vand.u32 %v62, 4294901760
    %8116 = vmatprep.subr.mxu0 %v8115
    %v8117 = vand.u32 %v61, 4294901760
    %8118 = vmatpush2.msra.mxu0 %v8117
    %v8119 = vand.u32 %v7241, 4294901760
    %v8120 = vsub.f32 %v7241, %v8119
    %v8121 = vand.u32 %v8120, 4294901760
    %8122 = vmatprep.mubr.f32.mxu0 %v8121
    %v8123 = vand.u32 %v7240, 4294901760
    %v8124 = vsub.f32 %v7240, %v8123
    %v8125 = vand.u32 %v8124, 4294901760
    %8126 = vmatmul.mubr.f32.gmra.mxu0 %v8125
    %v8127 = vpop.f32.mrf.mxu0
    %v8128 = vadd.f32 %v7987, %v8127
    %v8129 = vpop.f32.mrf.mxu0
    %v8130 = vadd.f32 %v7989, %v8129
    %8131 = vdwg.mxu0
    %v8132 = vand.u32 %v60, 4294901760
    %v8133 = vsub.f32 %v60, %v8132
    %v8134 = vand.u32 %v8133, 4294901760
    %8135 = vmatprep.subr.mxu0 %v8134
    %v8136 = vand.u32 %v59, 4294901760
    %v8137 = vsub.f32 %v59, %v8136
    %v8138 = vand.u32 %v8137, 4294901760
    %8139 = vmatpush1.msra.mxu0 %v8138
    %v8140 = vand.u32 %v58, 4294901760
    %v8141 = vsub.f32 %v58, %v8140
    %v8142 = vand.u32 %v8141, 4294901760
    %8143 = vmatprep.subr.mxu0 %v8142
    %v8144 = vand.u32 %v57, 4294901760
    %v8145 = vsub.f32 %v57, %v8144
    %v8146 = vand.u32 %v8145, 4294901760
    %8147 = vmatpush1.msra.mxu0 %v8146
    %v8148 = vand.u32 %v56, 4294901760
    %v8149 = vsub.f32 %v56, %v8148
    %v8150 = vand.u32 %v8149, 4294901760
    %8151 = vmatprep.subr.mxu0 %v8150
    %v8152 = vand.u32 %v55, 4294901760
    %v8153 = vsub.f32 %v55, %v8152
    %v8154 = vand.u32 %v8153, 4294901760
    %8155 = vmatpush1.msra.mxu0 %v8154
    %v8156 = vand.u32 %v54, 4294901760
    %v8157 = vsub.f32 %v54, %v8156
    %v8158 = vand.u32 %v8157, 4294901760
    %8159 = vmatprep.subr.mxu0 %v8158
    %v8160 = vand.u32 %v53, 4294901760
    %v8161 = vsub.f32 %v53, %v8160
    %v8162 = vand.u32 %v8161, 4294901760
    %8163 = vmatpush1.msra.mxu0 %v8162
    %v8164 = vand.u32 %v52, 4294901760
    %v8165 = vsub.f32 %v52, %v8164
    %v8166 = vand.u32 %v8165, 4294901760
    %8167 = vmatprep.subr.mxu0 %v8166
    %v8168 = vand.u32 %v51, 4294901760
    %v8169 = vsub.f32 %v51, %v8168
    %v8170 = vand.u32 %v8169, 4294901760
    %8171 = vmatpush1.msra.mxu0 %v8170
    %v8172 = vand.u32 %v50, 4294901760
    %v8173 = vsub.f32 %v50, %v8172
    %v8174 = vand.u32 %v8173, 4294901760
    %8175 = vmatprep.subr.mxu0 %v8174
    %v8176 = vand.u32 %v49, 4294901760
    %v8177 = vsub.f32 %v49, %v8176
    %v8178 = vand.u32 %v8177, 4294901760
    %8179 = vmatpush1.msra.mxu0 %v8178
    %v8180 = vand.u32 %v48, 4294901760
    %v8181 = vsub.f32 %v48, %v8180
    %v8182 = vand.u32 %v8181, 4294901760
    %8183 = vmatprep.subr.mxu0 %v8182
    %v8184 = vand.u32 %v47, 4294901760
    %v8185 = vsub.f32 %v47, %v8184
    %v8186 = vand.u32 %v8185, 4294901760
    %8187 = vmatpush1.msra.mxu0 %v8186
    %v8188 = vand.u32 %v46, 4294901760
    %v8189 = vsub.f32 %v46, %v8188
    %v8190 = vand.u32 %v8189, 4294901760
    %8191 = vmatprep.subr.mxu0 %v8190
    %v8192 = vand.u32 %v45, 4294901760
    %v8193 = vsub.f32 %v45, %v8192
    %v8194 = vand.u32 %v8193, 4294901760
    %8195 = vmatpush1.msra.mxu0 %v8194
    %v8196 = vand.u32 %v44, 4294901760
    %v8197 = vsub.f32 %v44, %v8196
    %v8198 = vand.u32 %v8197, 4294901760
    %8199 = vmatprep.subr.mxu0 %v8198
    %v8200 = vand.u32 %v43, 4294901760
    %v8201 = vsub.f32 %v43, %v8200
    %v8202 = vand.u32 %v8201, 4294901760
    %8203 = vmatpush1.msra.mxu0 %v8202
    %v8204 = vand.u32 %v42, 4294901760
    %v8205 = vsub.f32 %v42, %v8204
    %v8206 = vand.u32 %v8205, 4294901760
    %8207 = vmatprep.subr.mxu0 %v8206
    %v8208 = vand.u32 %v41, 4294901760
    %v8209 = vsub.f32 %v41, %v8208
    %v8210 = vand.u32 %v8209, 4294901760
    %8211 = vmatpush1.msra.mxu0 %v8210
    %v8212 = vand.u32 %v40, 4294901760
    %v8213 = vsub.f32 %v40, %v8212
    %v8214 = vand.u32 %v8213, 4294901760
    %8215 = vmatprep.subr.mxu0 %v8214
    %v8216 = vand.u32 %v39, 4294901760
    %v8217 = vsub.f32 %v39, %v8216
    %v8218 = vand.u32 %v8217, 4294901760
    %8219 = vmatpush1.msra.mxu0 %v8218
    %v8220 = vand.u32 %v38, 4294901760
    %v8221 = vsub.f32 %v38, %v8220
    %v8222 = vand.u32 %v8221, 4294901760
    %8223 = vmatprep.subr.mxu0 %v8222
    %v8224 = vand.u32 %v37, 4294901760
    %v8225 = vsub.f32 %v37, %v8224
    %v8226 = vand.u32 %v8225, 4294901760
    %8227 = vmatpush1.msra.mxu0 %v8226
    %v8228 = vand.u32 %v36, 4294901760
    %v8229 = vsub.f32 %v36, %v8228
    %v8230 = vand.u32 %v8229, 4294901760
    %8231 = vmatprep.subr.mxu0 %v8230
    %v8232 = vand.u32 %v35, 4294901760
    %v8233 = vsub.f32 %v35, %v8232
    %v8234 = vand.u32 %v8233, 4294901760
    %8235 = vmatpush1.msra.mxu0 %v8234
    %v8236 = vand.u32 %v34, 4294901760
    %v8237 = vsub.f32 %v34, %v8236
    %v8238 = vand.u32 %v8237, 4294901760
    %8239 = vmatprep.subr.mxu0 %v8238
    %v8240 = vand.u32 %v33, 4294901760
    %v8241 = vsub.f32 %v33, %v8240
    %v8242 = vand.u32 %v8241, 4294901760
    %8243 = vmatpush1.msra.mxu0 %v8242
    %v8244 = vand.u32 %v32, 4294901760
    %v8245 = vsub.f32 %v32, %v8244
    %v8246 = vand.u32 %v8245, 4294901760
    %8247 = vmatprep.subr.mxu0 %v8246
    %v8248 = vand.u32 %v31, 4294901760
    %v8249 = vsub.f32 %v31, %v8248
    %v8250 = vand.u32 %v8249, 4294901760
    %8251 = vmatpush1.msra.mxu0 %v8250
    %v8252 = vand.u32 %v30, 4294901760
    %v8253 = vsub.f32 %v30, %v8252
    %v8254 = vand.u32 %v8253, 4294901760
    %8255 = vmatprep.subr.mxu0 %v8254
    %v8256 = vand.u32 %v29, 4294901760
    %v8257 = vsub.f32 %v29, %v8256
    %v8258 = vand.u32 %v8257, 4294901760
    %8259 = vmatpush1.msra.mxu0 %v8258
    %v8260 = vand.u32 %v92, 4294901760
    %v8261 = vsub.f32 %v92, %v8260
    %v8262 = vand.u32 %v8261, 4294901760
    %8263 = vmatprep.subr.mxu0 %v8262
    %v8264 = vand.u32 %v91, 4294901760
    %v8265 = vsub.f32 %v91, %v8264
    %v8266 = vand.u32 %v8265, 4294901760
    %8267 = vmatpush2.msra.mxu0 %v8266
    %v8268 = vand.u32 %v90, 4294901760
    %v8269 = vsub.f32 %v90, %v8268
    %v8270 = vand.u32 %v8269, 4294901760
    %8271 = vmatprep.subr.mxu0 %v8270
    %v8272 = vand.u32 %v89, 4294901760
    %v8273 = vsub.f32 %v89, %v8272
    %v8274 = vand.u32 %v8273, 4294901760
    %8275 = vmatpush2.msra.mxu0 %v8274
    %v8276 = vand.u32 %v88, 4294901760
    %v8277 = vsub.f32 %v88, %v8276
    %v8278 = vand.u32 %v8277, 4294901760
    %8279 = vmatprep.subr.mxu0 %v8278
    %v8280 = vand.u32 %v87, 4294901760
    %v8281 = vsub.f32 %v87, %v8280
    %v8282 = vand.u32 %v8281, 4294901760
    %8283 = vmatpush2.msra.mxu0 %v8282
    %v8284 = vand.u32 %v86, 4294901760
    %v8285 = vsub.f32 %v86, %v8284
    %v8286 = vand.u32 %v8285, 4294901760
    %8287 = vmatprep.subr.mxu0 %v8286
    %v8288 = vand.u32 %v85, 4294901760
    %v8289 = vsub.f32 %v85, %v8288
    %v8290 = vand.u32 %v8289, 4294901760
    %8291 = vmatpush2.msra.mxu0 %v8290
    %v8292 = vand.u32 %v84, 4294901760
    %v8293 = vsub.f32 %v84, %v8292
    %v8294 = vand.u32 %v8293, 4294901760
    %8295 = vmatprep.subr.mxu0 %v8294
    %v8296 = vand.u32 %v83, 4294901760
    %v8297 = vsub.f32 %v83, %v8296
    %v8298 = vand.u32 %v8297, 4294901760
    %8299 = vmatpush2.msra.mxu0 %v8298
    %v8300 = vand.u32 %v82, 4294901760
    %v8301 = vsub.f32 %v82, %v8300
    %v8302 = vand.u32 %v8301, 4294901760
    %8303 = vmatprep.subr.mxu0 %v8302
    %v8304 = vand.u32 %v81, 4294901760
    %v8305 = vsub.f32 %v81, %v8304
    %v8306 = vand.u32 %v8305, 4294901760
    %8307 = vmatpush2.msra.mxu0 %v8306
    %v8308 = vand.u32 %v80, 4294901760
    %v8309 = vsub.f32 %v80, %v8308
    %v8310 = vand.u32 %v8309, 4294901760
    %8311 = vmatprep.subr.mxu0 %v8310
    %v8312 = vand.u32 %v79, 4294901760
    %v8313 = vsub.f32 %v79, %v8312
    %v8314 = vand.u32 %v8313, 4294901760
    %8315 = vmatpush2.msra.mxu0 %v8314
    %v8316 = vand.u32 %v78, 4294901760
    %v8317 = vsub.f32 %v78, %v8316
    %v8318 = vand.u32 %v8317, 4294901760
    %8319 = vmatprep.subr.mxu0 %v8318
    %v8320 = vand.u32 %v77, 4294901760
    %v8321 = vsub.f32 %v77, %v8320
    %v8322 = vand.u32 %v8321, 4294901760
    %8323 = vmatpush2.msra.mxu0 %v8322
    %v8324 = vand.u32 %v76, 4294901760
    %v8325 = vsub.f32 %v76, %v8324
    %v8326 = vand.u32 %v8325, 4294901760
    %8327 = vmatprep.subr.mxu0 %v8326
    %v8328 = vand.u32 %v75, 4294901760
    %v8329 = vsub.f32 %v75, %v8328
    %v8330 = vand.u32 %v8329, 4294901760
    %8331 = vmatpush2.msra.mxu0 %v8330
    %v8332 = vand.u32 %v74, 4294901760
    %v8333 = vsub.f32 %v74, %v8332
    %v8334 = vand.u32 %v8333, 4294901760
    %8335 = vmatprep.subr.mxu0 %v8334
    %v8336 = vand.u32 %v73, 4294901760
    %v8337 = vsub.f32 %v73, %v8336
    %v8338 = vand.u32 %v8337, 4294901760
    %8339 = vmatpush2.msra.mxu0 %v8338
    %v8340 = vand.u32 %v72, 4294901760
    %v8341 = vsub.f32 %v72, %v8340
    %v8342 = vand.u32 %v8341, 4294901760
    %8343 = vmatprep.subr.mxu0 %v8342
    %v8344 = vand.u32 %v71, 4294901760
    %v8345 = vsub.f32 %v71, %v8344
    %v8346 = vand.u32 %v8345, 4294901760
    %8347 = vmatpush2.msra.mxu0 %v8346
    %v8348 = vand.u32 %v70, 4294901760
    %v8349 = vsub.f32 %v70, %v8348
    %v8350 = vand.u32 %v8349, 4294901760
    %8351 = vmatprep.subr.mxu0 %v8350
    %v8352 = vand.u32 %v69, 4294901760
    %v8353 = vsub.f32 %v69, %v8352
    %v8354 = vand.u32 %v8353, 4294901760
    %8355 = vmatpush2.msra.mxu0 %v8354
    %v8356 = vand.u32 %v68, 4294901760
    %v8357 = vsub.f32 %v68, %v8356
    %v8358 = vand.u32 %v8357, 4294901760
    %8359 = vmatprep.subr.mxu0 %v8358
    %v8360 = vand.u32 %v67, 4294901760
    %v8361 = vsub.f32 %v67, %v8360
    %v8362 = vand.u32 %v8361, 4294901760
    %8363 = vmatpush2.msra.mxu0 %v8362
    %v8364 = vand.u32 %v66, 4294901760
    %v8365 = vsub.f32 %v66, %v8364
    %v8366 = vand.u32 %v8365, 4294901760
    %8367 = vmatprep.subr.mxu0 %v8366
    %v8368 = vand.u32 %v65, 4294901760
    %v8369 = vsub.f32 %v65, %v8368
    %v8370 = vand.u32 %v8369, 4294901760
    %8371 = vmatpush2.msra.mxu0 %v8370
    %v8372 = vand.u32 %v64, 4294901760
    %v8373 = vsub.f32 %v64, %v8372
    %v8374 = vand.u32 %v8373, 4294901760
    %8375 = vmatprep.subr.mxu0 %v8374
    %v8376 = vand.u32 %v63, 4294901760
    %v8377 = vsub.f32 %v63, %v8376
    %v8378 = vand.u32 %v8377, 4294901760
    %8379 = vmatpush2.msra.mxu0 %v8378
    %v8380 = vand.u32 %v62, 4294901760
    %v8381 = vsub.f32 %v62, %v8380
    %v8382 = vand.u32 %v8381, 4294901760
    %8383 = vmatprep.subr.mxu0 %v8382
    %v8384 = vand.u32 %v61, 4294901760
    %v8385 = vsub.f32 %v61, %v8384
    %v8386 = vand.u32 %v8385, 4294901760
    %8387 = vmatpush2.msra.mxu0 %v8386
    %v8388 = vand.u32 %v7241, 4294901760
    %8389 = vmatprep.mubr.f32.mxu0 %v8388
    %v8390 = vand.u32 %v7240, 4294901760
    %8391 = vmatmul.mubr.f32.gmra.mxu0 %v8390
    %v8392 = vpop.f32.mrf.mxu0
    %v8393 = vadd.f32 %v8128, %v8392
    %v8394 = vpop.f32.mrf.mxu0
    %v8395 = vadd.f32 %v8130, %v8394
    %8396 = vdwg.mxu0
    %v8397 = vand.u32 %v60, 4294901760
    %8398 = vmatprep.subr.mxu0 %v8397
    %v8399 = vand.u32 %v59, 4294901760
    %8400 = vmatpush1.msra.mxu0 %v8399
    %v8401 = vand.u32 %v58, 4294901760
    %8402 = vmatprep.subr.mxu0 %v8401
    %v8403 = vand.u32 %v57, 4294901760
    %8404 = vmatpush1.msra.mxu0 %v8403
    %v8405 = vand.u32 %v56, 4294901760
    %8406 = vmatprep.subr.mxu0 %v8405
    %v8407 = vand.u32 %v55, 4294901760
    %8408 = vmatpush1.msra.mxu0 %v8407
    %v8409 = vand.u32 %v54, 4294901760
    %8410 = vmatprep.subr.mxu0 %v8409
    %v8411 = vand.u32 %v53, 4294901760
    %8412 = vmatpush1.msra.mxu0 %v8411
    %v8413 = vand.u32 %v52, 4294901760
    %8414 = vmatprep.subr.mxu0 %v8413
    %v8415 = vand.u32 %v51, 4294901760
    %8416 = vmatpush1.msra.mxu0 %v8415
    %v8417 = vand.u32 %v50, 4294901760
    %8418 = vmatprep.subr.mxu0 %v8417
    %v8419 = vand.u32 %v49, 4294901760
    %8420 = vmatpush1.msra.mxu0 %v8419
    %v8421 = vand.u32 %v48, 4294901760
    %8422 = vmatprep.subr.mxu0 %v8421
    %v8423 = vand.u32 %v47, 4294901760
    %8424 = vmatpush1.msra.mxu0 %v8423
    %v8425 = vand.u32 %v46, 4294901760
    %8426 = vmatprep.subr.mxu0 %v8425
    %v8427 = vand.u32 %v45, 4294901760
    %8428 = vmatpush1.msra.mxu0 %v8427
    %v8429 = vand.u32 %v44, 4294901760
    %8430 = vmatprep.subr.mxu0 %v8429
    %v8431 = vand.u32 %v43, 4294901760
    %8432 = vmatpush1.msra.mxu0 %v8431
    %v8433 = vand.u32 %v42, 4294901760
    %8434 = vmatprep.subr.mxu0 %v8433
    %v8435 = vand.u32 %v41, 4294901760
    %8436 = vmatpush1.msra.mxu0 %v8435
    %v8437 = vand.u32 %v40, 4294901760
    %8438 = vmatprep.subr.mxu0 %v8437
    %v8439 = vand.u32 %v39, 4294901760
    %8440 = vmatpush1.msra.mxu0 %v8439
    %v8441 = vand.u32 %v38, 4294901760
    %8442 = vmatprep.subr.mxu0 %v8441
    %v8443 = vand.u32 %v37, 4294901760
    %8444 = vmatpush1.msra.mxu0 %v8443
    %v8445 = vand.u32 %v36, 4294901760
    %8446 = vmatprep.subr.mxu0 %v8445
    %v8447 = vand.u32 %v35, 4294901760
    %8448 = vmatpush1.msra.mxu0 %v8447
    %v8449 = vand.u32 %v34, 4294901760
    %8450 = vmatprep.subr.mxu0 %v8449
    %v8451 = vand.u32 %v33, 4294901760
    %8452 = vmatpush1.msra.mxu0 %v8451
    %v8453 = vand.u32 %v32, 4294901760
    %8454 = vmatprep.subr.mxu0 %v8453
    %v8455 = vand.u32 %v31, 4294901760
    %8456 = vmatpush1.msra.mxu0 %v8455
    %v8457 = vand.u32 %v30, 4294901760
    %8458 = vmatprep.subr.mxu0 %v8457
    %v8459 = vand.u32 %v29, 4294901760
    %8460 = vmatpush1.msra.mxu0 %v8459
    %v8461 = vand.u32 %v92, 4294901760
    %8462 = vmatprep.subr.mxu0 %v8461
    %v8463 = vand.u32 %v91, 4294901760
    %8464 = vmatpush2.msra.mxu0 %v8463
    %v8465 = vand.u32 %v90, 4294901760
    %8466 = vmatprep.subr.mxu0 %v8465
    %v8467 = vand.u32 %v89, 4294901760
    %8468 = vmatpush2.msra.mxu0 %v8467
    %v8469 = vand.u32 %v88, 4294901760
    %8470 = vmatprep.subr.mxu0 %v8469
    %v8471 = vand.u32 %v87, 4294901760
    %8472 = vmatpush2.msra.mxu0 %v8471
    %v8473 = vand.u32 %v86, 4294901760
    %8474 = vmatprep.subr.mxu0 %v8473
    %v8475 = vand.u32 %v85, 4294901760
    %8476 = vmatpush2.msra.mxu0 %v8475
    %v8477 = vand.u32 %v84, 4294901760
    %8478 = vmatprep.subr.mxu0 %v8477
    %v8479 = vand.u32 %v83, 4294901760
    %8480 = vmatpush2.msra.mxu0 %v8479
    %v8481 = vand.u32 %v82, 4294901760
    %8482 = vmatprep.subr.mxu0 %v8481
    %v8483 = vand.u32 %v81, 4294901760
    %8484 = vmatpush2.msra.mxu0 %v8483
    %v8485 = vand.u32 %v80, 4294901760
    %8486 = vmatprep.subr.mxu0 %v8485
    %v8487 = vand.u32 %v79, 4294901760
    %8488 = vmatpush2.msra.mxu0 %v8487
    %v8489 = vand.u32 %v78, 4294901760
    %8490 = vmatprep.subr.mxu0 %v8489
    %v8491 = vand.u32 %v77, 4294901760
    %8492 = vmatpush2.msra.mxu0 %v8491
    %v8493 = vand.u32 %v76, 4294901760
    %8494 = vmatprep.subr.mxu0 %v8493
    %v8495 = vand.u32 %v75, 4294901760
    %8496 = vmatpush2.msra.mxu0 %v8495
    %v8497 = vand.u32 %v74, 4294901760
    %8498 = vmatprep.subr.mxu0 %v8497
    %v8499 = vand.u32 %v73, 4294901760
    %8500 = vmatpush2.msra.mxu0 %v8499
    %v8501 = vand.u32 %v72, 4294901760
    %8502 = vmatprep.subr.mxu0 %v8501
    %v8503 = vand.u32 %v71, 4294901760
    %8504 = vmatpush2.msra.mxu0 %v8503
    %v8505 = vand.u32 %v70, 4294901760
    %8506 = vmatprep.subr.mxu0 %v8505
    %v8507 = vand.u32 %v69, 4294901760
    %8508 = vmatpush2.msra.mxu0 %v8507
    %v8509 = vand.u32 %v68, 4294901760
    %8510 = vmatprep.subr.mxu0 %v8509
    %v8511 = vand.u32 %v67, 4294901760
    %8512 = vmatpush2.msra.mxu0 %v8511
    %v8513 = vand.u32 %v66, 4294901760
    %8514 = vmatprep.subr.mxu0 %v8513
    %v8515 = vand.u32 %v65, 4294901760
    %8516 = vmatpush2.msra.mxu0 %v8515
    %v8517 = vand.u32 %v64, 4294901760
    %8518 = vmatprep.subr.mxu0 %v8517
    %v8519 = vand.u32 %v63, 4294901760
    %8520 = vmatpush2.msra.mxu0 %v8519
    %v8521 = vand.u32 %v62, 4294901760
    %8522 = vmatprep.subr.mxu0 %v8521
    %v8523 = vand.u32 %v61, 4294901760
    %8524 = vmatpush2.msra.mxu0 %v8523
    %v8525 = vand.u32 %v7241, 4294901760
    %8526 = vmatprep.mubr.f32.mxu0 %v8525
    %v8527 = vand.u32 %v7240, 4294901760
    %8528 = vmatmul.mubr.f32.gmra.mxu0 %v8527
    %v8529 = vpop.f32.mrf.mxu0
    %v8530 = vadd.f32 %v8393, %v8529
    %v8531 = vpop.f32.mrf.mxu0
    %v8532 = vadd.f32 %v8395, %v8531
    %8533 = vdwg.mxu0
    %v8534 = vtanh.pop %v8530
    %v8535 = vtanh.pop %v8532
    %v8536 = vld [vmem:[%s2] sm:$0xff]
    %v8537 = vld [vmem:[%s2 + $0x8] sm:$0xff]
    %v8538 = vld [vmem:[%s2 + $0x10] sm:$0xff]
    %v8539 = vld [vmem:[%s2 + $0x18] sm:$0xff]
    %v8540 = vld [vmem:[%s2 + $0x20] sm:$0xff]
    %v8541 = vld [vmem:[%s2 + $0x28] sm:$0xff]
    %v8542 = vld [vmem:[%s2 + $0x30] sm:$0xff]
    %v8543 = vld [vmem:[%s2 + $0x38] sm:$0xff]
    %v8544 = vld [vmem:[%s2 + $0x40] sm:$0xff]
    %v8545 = vld [vmem:[%s2 + $0x48] sm:$0xff]
    %v8546 = vld [vmem:[%s2 + $0x50] sm:$0xff]
    %v8547 = vld [vmem:[%s2 + $0x58] sm:$0xff]
    %v8548 = vld [vmem:[%s2 + $0x60] sm:$0xff]
    %v8549 = vld [vmem:[%s2 + $0x68] sm:$0xff]
    %v8550 = vld [vmem:[%s2 + $0x70] sm:$0xff]
    %v8551 = vld [vmem:[%s2 + $0x78] sm:$0xff]
    %v8552 = vld [vmem:[%s2 + $0x80] sm:$0xff]
    %v8553 = vld [vmem:[%s2 + $0x88] sm:$0xff]
    %v8554 = vld [vmem:[%s2 + $0x90] sm:$0xff]
    %v8555 = vld [vmem:[%s2 + $0x98] sm:$0xff]
    %v8556 = vld [vmem:[%s2 + $0xa0] sm:$0xff]
    %v8557 = vld [vmem:[%s2 + $0xa8] sm:$0xff]
    %v8558 = vld [vmem:[%s2 + $0xb0] sm:$0xff]
    %v8559 = vld [vmem:[%s2 + $0xb8] sm:$0xff]
    %v8560 = vld [vmem:[%s2 + $0xc0] sm:$0xff]
    %v8561 = vld [vmem:[%s2 + $0xc8] sm:$0xff]
    %v8562 = vld [vmem:[%s2 + $0xd0] sm:$0xff]
    %v8563 = vld [vmem:[%s2 + $0xd8] sm:$0xff]
    %v8564 = vld [vmem:[%s2 + $0xe0] sm:$0xff]
    %v8565 = vld [vmem:[%s2 + $0xe8] sm:$0xff]
    %v8566 = vld [vmem:[%s2 + $0xf0] sm:$0xff]
    %v8567 = vld [vmem:[%s2 + $0xf8] sm:$0xff]
    %8568 = vmatprep.subr.mxu0 0.0
    %v8569 = vand.u32 %v8551, 4294901760
    %8570 = vmatpush1.msra.mxu0 %v8569
    %8571 = vmatprep.subr.mxu0 0.0
    %v8572 = vand.u32 %v8550, 4294901760
    %8573 = vmatpush1.msra.mxu0 %v8572
    %8574 = vmatprep.subr.mxu0 0.0
    %v8575 = vand.u32 %v8549, 4294901760
    %8576 = vmatpush1.msra.mxu0 %v8575
    %8577 = vmatprep.subr.mxu0 0.0
    %v8578 = vand.u32 %v8548, 4294901760
    %8579 = vmatpush1.msra.mxu0 %v8578
    %8580 = vmatprep.subr.mxu0 0.0
    %v8581 = vand.u32 %v8547, 4294901760
    %8582 = vmatpush1.msra.mxu0 %v8581
    %8583 = vmatprep.subr.mxu0 0.0
    %v8584 = vand.u32 %v8546, 4294901760
    %8585 = vmatpush1.msra.mxu0 %v8584
    %8586 = vmatprep.subr.mxu0 0.0
    %v8587 = vand.u32 %v8545, 4294901760
    %8588 = vmatpush1.msra.mxu0 %v8587
    %8589 = vmatprep.subr.mxu0 0.0
    %v8590 = vand.u32 %v8544, 4294901760
    %8591 = vmatpush1.msra.mxu0 %v8590
    %8592 = vmatprep.subr.mxu0 0.0
    %v8593 = vand.u32 %v8543, 4294901760
    %8594 = vmatpush1.msra.mxu0 %v8593
    %8595 = vmatprep.subr.mxu0 0.0
    %v8596 = vand.u32 %v8542, 4294901760
    %8597 = vmatpush1.msra.mxu0 %v8596
    %8598 = vmatprep.subr.mxu0 0.0
    %v8599 = vand.u32 %v8541, 4294901760
    %8600 = vmatpush1.msra.mxu0 %v8599
    %8601 = vmatprep.subr.mxu0 0.0
    %v8602 = vand.u32 %v8540, 4294901760
    %8603 = vmatpush1.msra.mxu0 %v8602
    %8604 = vmatprep.subr.mxu0 0.0
    %v8605 = vand.u32 %v8539, 4294901760
    %8606 = vmatpush1.msra.mxu0 %v8605
    %8607 = vmatprep.subr.mxu0 0.0
    %v8608 = vand.u32 %v8538, 4294901760
    %8609 = vmatpush1.msra.mxu0 %v8608
    %8610 = vmatprep.subr.mxu0 0.0
    %v8611 = vand.u32 %v8537, 4294901760
    %8612 = vmatpush1.msra.mxu0 %v8611
    %8613 = vmatprep.subr.mxu0 0.0
    %v8614 = vand.u32 %v8536, 4294901760
    %8615 = vmatpush1.msra.mxu0 %v8614
    %8616 = vmatprep.subr.mxu0 0.0
    %v8617 = vand.u32 %v8567, 4294901760
    %8618 = vmatpush2.msra.mxu0 %v8617
    %8619 = vmatprep.subr.mxu0 0.0
    %v8620 = vand.u32 %v8566, 4294901760
    %8621 = vmatpush2.msra.mxu0 %v8620
    %8622 = vmatprep.subr.mxu0 0.0
    %v8623 = vand.u32 %v8565, 4294901760
    %8624 = vmatpush2.msra.mxu0 %v8623
    %8625 = vmatprep.subr.mxu0 0.0
    %v8626 = vand.u32 %v8564, 4294901760
    %8627 = vmatpush2.msra.mxu0 %v8626
    %8628 = vmatprep.subr.mxu0 0.0
    %v8629 = vand.u32 %v8563, 4294901760
    %8630 = vmatpush2.msra.mxu0 %v8629
    %8631 = vmatprep.subr.mxu0 0.0
    %v8632 = vand.u32 %v8562, 4294901760
    %8633 = vmatpush2.msra.mxu0 %v8632
    %8634 = vmatprep.subr.mxu0 0.0
    %v8635 = vand.u32 %v8561, 4294901760
    %8636 = vmatpush2.msra.mxu0 %v8635
    %8637 = vmatprep.subr.mxu0 0.0
    %v8638 = vand.u32 %v8560, 4294901760
    %8639 = vmatpush2.msra.mxu0 %v8638
    %8640 = vmatprep.subr.mxu0 0.0
    %v8641 = vand.u32 %v8559, 4294901760
    %8642 = vmatpush2.msra.mxu0 %v8641
    %8643 = vmatprep.subr.mxu0 0.0
    %v8644 = vand.u32 %v8558, 4294901760
    %8645 = vmatpush2.msra.mxu0 %v8644
    %8646 = vmatprep.subr.mxu0 0.0
    %v8647 = vand.u32 %v8557, 4294901760
    %8648 = vmatpush2.msra.mxu0 %v8647
    %8649 = vmatprep.subr.mxu0 0.0
    %v8650 = vand.u32 %v8556, 4294901760
    %8651 = vmatpush2.msra.mxu0 %v8650
    %8652 = vmatprep.subr.mxu0 0.0
    %v8653 = vand.u32 %v8555, 4294901760
    %8654 = vmatpush2.msra.mxu0 %v8653
    %8655 = vmatprep.subr.mxu0 0.0
    %v8656 = vand.u32 %v8554, 4294901760
    %8657 = vmatpush2.msra.mxu0 %v8656
    %8658 = vmatprep.subr.mxu0 0.0
    %v8659 = vand.u32 %v8553, 4294901760
    %8660 = vmatpush2.msra.mxu0 %v8659
    %8661 = vmatprep.subr.mxu0 0.0
    %v8662 = vand.u32 %v8552, 4294901760
    %8663 = vmatpush2.msra.mxu0 %v8662
    %v8664 = vand.u32 %v8535, 4294901760
    %v8665 = vsub.f32 %v8535, %v8664
    %v8666 = vand.u32 %v8665, 4294901760
    %v8667 = vsub.f32 %v8665, %v8666
    %v8668 = vand.u32 %v8667, 4294901760
    %8669 = vmatprep.mubr.f32.mxu0 %v8668
    %v8670 = vand.u32 %v8534, 4294901760
    %v8671 = vsub.f32 %v8534, %v8670
    %v8672 = vand.u32 %v8671, 4294901760
    %v8673 = vsub.f32 %v8671, %v8672
    %v8674 = vand.u32 %v8673, 4294901760
    %8675 = vmatmul.mubr.f32.gmra.mxu0 %v8674
    %v8676 = vpop.f32.mrf.mxu0
    %v8677 = vadd.f32 0.0, %v8676
    %v8678 = vpop.f32.mrf.mxu0
    %8679 = vdwg.mxu0
    %8680 = vmatprep.subr.mxu0 0.0
    %v8681 = vand.u32 %v8551, 4294901760
    %v8682 = vsub.f32 %v8551, %v8681
    %v8683 = vand.u32 %v8682, 4294901760
    %v8684 = vsub.f32 %v8682, %v8683
    %v8685 = vand.u32 %v8684, 4294901760
    %8686 = vmatpush1.msra.mxu0 %v8685
    %8687 = vmatprep.subr.mxu0 0.0
    %v8688 = vand.u32 %v8550, 4294901760
    %v8689 = vsub.f32 %v8550, %v8688
    %v8690 = vand.u32 %v8689, 4294901760
    %v8691 = vsub.f32 %v8689, %v8690
    %v8692 = vand.u32 %v8691, 4294901760
    %8693 = vmatpush1.msra.mxu0 %v8692
    %8694 = vmatprep.subr.mxu0 0.0
    %v8695 = vand.u32 %v8549, 4294901760
    %v8696 = vsub.f32 %v8549, %v8695
    %v8697 = vand.u32 %v8696, 4294901760
    %v8698 = vsub.f32 %v8696, %v8697
    %v8699 = vand.u32 %v8698, 4294901760
    %8700 = vmatpush1.msra.mxu0 %v8699
    %8701 = vmatprep.subr.mxu0 0.0
    %v8702 = vand.u32 %v8548, 4294901760
    %v8703 = vsub.f32 %v8548, %v8702
    %v8704 = vand.u32 %v8703, 4294901760
    %v8705 = vsub.f32 %v8703, %v8704
    %v8706 = vand.u32 %v8705, 4294901760
    %8707 = vmatpush1.msra.mxu0 %v8706
    %8708 = vmatprep.subr.mxu0 0.0
    %v8709 = vand.u32 %v8547, 4294901760
    %v8710 = vsub.f32 %v8547, %v8709
    %v8711 = vand.u32 %v8710, 4294901760
    %v8712 = vsub.f32 %v8710, %v8711
    %v8713 = vand.u32 %v8712, 4294901760
    %8714 = vmatpush1.msra.mxu0 %v8713
    %8715 = vmatprep.subr.mxu0 0.0
    %v8716 = vand.u32 %v8546, 4294901760
    %v8717 = vsub.f32 %v8546, %v8716
    %v8718 = vand.u32 %v8717, 4294901760
    %v8719 = vsub.f32 %v8717, %v8718
    %v8720 = vand.u32 %v8719, 4294901760
    %8721 = vmatpush1.msra.mxu0 %v8720
    %8722 = vmatprep.subr.mxu0 0.0
    %v8723 = vand.u32 %v8545, 4294901760
    %v8724 = vsub.f32 %v8545, %v8723
    %v8725 = vand.u32 %v8724, 4294901760
    %v8726 = vsub.f32 %v8724, %v8725
    %v8727 = vand.u32 %v8726, 4294901760
    %8728 = vmatpush1.msra.mxu0 %v8727
    %8729 = vmatprep.subr.mxu0 0.0
    %v8730 = vand.u32 %v8544, 4294901760
    %v8731 = vsub.f32 %v8544, %v8730
    %v8732 = vand.u32 %v8731, 4294901760
    %v8733 = vsub.f32 %v8731, %v8732
    %v8734 = vand.u32 %v8733, 4294901760
    %8735 = vmatpush1.msra.mxu0 %v8734
    %8736 = vmatprep.subr.mxu0 0.0
    %v8737 = vand.u32 %v8543, 4294901760
    %v8738 = vsub.f32 %v8543, %v8737
    %v8739 = vand.u32 %v8738, 4294901760
    %v8740 = vsub.f32 %v8738, %v8739
    %v8741 = vand.u32 %v8740, 4294901760
    %8742 = vmatpush1.msra.mxu0 %v8741
    %8743 = vmatprep.subr.mxu0 0.0
    %v8744 = vand.u32 %v8542, 4294901760
    %v8745 = vsub.f32 %v8542, %v8744
    %v8746 = vand.u32 %v8745, 4294901760
    %v8747 = vsub.f32 %v8745, %v8746
    %v8748 = vand.u32 %v8747, 4294901760
    %8749 = vmatpush1.msra.mxu0 %v8748
    %8750 = vmatprep.subr.mxu0 0.0
    %v8751 = vand.u32 %v8541, 4294901760
    %v8752 = vsub.f32 %v8541, %v8751
    %v8753 = vand.u32 %v8752, 4294901760
    %v8754 = vsub.f32 %v8752, %v8753
    %v8755 = vand.u32 %v8754, 4294901760
    %8756 = vmatpush1.msra.mxu0 %v8755
    %8757 = vmatprep.subr.mxu0 0.0
    %v8758 = vand.u32 %v8540, 4294901760
    %v8759 = vsub.f32 %v8540, %v8758
    %v8760 = vand.u32 %v8759, 4294901760
    %v8761 = vsub.f32 %v8759, %v8760
    %v8762 = vand.u32 %v8761, 4294901760
    %8763 = vmatpush1.msra.mxu0 %v8762
    %8764 = vmatprep.subr.mxu0 0.0
    %v8765 = vand.u32 %v8539, 4294901760
    %v8766 = vsub.f32 %v8539, %v8765
    %v8767 = vand.u32 %v8766, 4294901760
    %v8768 = vsub.f32 %v8766, %v8767
    %v8769 = vand.u32 %v8768, 4294901760
    %8770 = vmatpush1.msra.mxu0 %v8769
    %8771 = vmatprep.subr.mxu0 0.0
    %v8772 = vand.u32 %v8538, 4294901760
    %v8773 = vsub.f32 %v8538, %v8772
    %v8774 = vand.u32 %v8773, 4294901760
    %v8775 = vsub.f32 %v8773, %v8774
    %v8776 = vand.u32 %v8775, 4294901760
    %8777 = vmatpush1.msra.mxu0 %v8776
    %8778 = vmatprep.subr.mxu0 0.0
    %v8779 = vand.u32 %v8537, 4294901760
    %v8780 = vsub.f32 %v8537, %v8779
    %v8781 = vand.u32 %v8780, 4294901760
    %v8782 = vsub.f32 %v8780, %v8781
    %v8783 = vand.u32 %v8782, 4294901760
    %8784 = vmatpush1.msra.mxu0 %v8783
    %8785 = vmatprep.subr.mxu0 0.0
    %v8786 = vand.u32 %v8536, 4294901760
    %v8787 = vsub.f32 %v8536, %v8786
    %v8788 = vand.u32 %v8787, 4294901760
    %v8789 = vsub.f32 %v8787, %v8788
    %v8790 = vand.u32 %v8789, 4294901760
    %8791 = vmatpush1.msra.mxu0 %v8790
    %8792 = vmatprep.subr.mxu0 0.0
    %v8793 = vand.u32 %v8567, 4294901760
    %v8794 = vsub.f32 %v8567, %v8793
    %v8795 = vand.u32 %v8794, 4294901760
    %v8796 = vsub.f32 %v8794, %v8795
    %v8797 = vand.u32 %v8796, 4294901760
    %8798 = vmatpush2.msra.mxu0 %v8797
    %8799 = vmatprep.subr.mxu0 0.0
    %v8800 = vand.u32 %v8566, 4294901760
    %v8801 = vsub.f32 %v8566, %v8800
    %v8802 = vand.u32 %v8801, 4294901760
    %v8803 = vsub.f32 %v8801, %v8802
    %v8804 = vand.u32 %v8803, 4294901760
    %8805 = vmatpush2.msra.mxu0 %v8804
    %8806 = vmatprep.subr.mxu0 0.0
    %v8807 = vand.u32 %v8565, 4294901760
    %v8808 = vsub.f32 %v8565, %v8807
    %v8809 = vand.u32 %v8808, 4294901760
    %v8810 = vsub.f32 %v8808, %v8809
    %v8811 = vand.u32 %v8810, 4294901760
    %8812 = vmatpush2.msra.mxu0 %v8811
    %8813 = vmatprep.subr.mxu0 0.0
    %v8814 = vand.u32 %v8564, 4294901760
    %v8815 = vsub.f32 %v8564, %v8814
    %v8816 = vand.u32 %v8815, 4294901760
    %v8817 = vsub.f32 %v8815, %v8816
    %v8818 = vand.u32 %v8817, 4294901760
    %8819 = vmatpush2.msra.mxu0 %v8818
    %8820 = vmatprep.subr.mxu0 0.0
    %v8821 = vand.u32 %v8563, 4294901760
    %v8822 = vsub.f32 %v8563, %v8821
    %v8823 = vand.u32 %v8822, 4294901760
    %v8824 = vsub.f32 %v8822, %v8823
    %v8825 = vand.u32 %v8824, 4294901760
    %8826 = vmatpush2.msra.mxu0 %v8825
    %8827 = vmatprep.subr.mxu0 0.0
    %v8828 = vand.u32 %v8562, 4294901760
    %v8829 = vsub.f32 %v8562, %v8828
    %v8830 = vand.u32 %v8829, 4294901760
    %v8831 = vsub.f32 %v8829, %v8830
    %v8832 = vand.u32 %v8831, 4294901760
    %8833 = vmatpush2.msra.mxu0 %v8832
    %8834 = vmatprep.subr.mxu0 0.0
    %v8835 = vand.u32 %v8561, 4294901760
    %v8836 = vsub.f32 %v8561, %v8835
    %v8837 = vand.u32 %v8836, 4294901760
    %v8838 = vsub.f32 %v8836, %v8837
    %v8839 = vand.u32 %v8838, 4294901760
    %8840 = vmatpush2.msra.mxu0 %v8839
    %8841 = vmatprep.subr.mxu0 0.0
    %v8842 = vand.u32 %v8560, 4294901760
    %v8843 = vsub.f32 %v8560, %v8842
    %v8844 = vand.u32 %v8843, 4294901760
    %v8845 = vsub.f32 %v8843, %v8844
    %v8846 = vand.u32 %v8845, 4294901760
    %8847 = vmatpush2.msra.mxu0 %v8846
    %8848 = vmatprep.subr.mxu0 0.0
    %v8849 = vand.u32 %v8559, 4294901760
    %v8850 = vsub.f32 %v8559, %v8849
    %v8851 = vand.u32 %v8850, 4294901760
    %v8852 = vsub.f32 %v8850, %v8851
    %v8853 = vand.u32 %v8852, 4294901760
    %8854 = vmatpush2.msra.mxu0 %v8853
    %8855 = vmatprep.subr.mxu0 0.0
    %v8856 = vand.u32 %v8558, 4294901760
    %v8857 = vsub.f32 %v8558, %v8856
    %v8858 = vand.u32 %v8857, 4294901760
    %v8859 = vsub.f32 %v8857, %v8858
    %v8860 = vand.u32 %v8859, 4294901760
    %8861 = vmatpush2.msra.mxu0 %v8860
    %8862 = vmatprep.subr.mxu0 0.0
    %v8863 = vand.u32 %v8557, 4294901760
    %v8864 = vsub.f32 %v8557, %v8863
    %v8865 = vand.u32 %v8864, 4294901760
    %v8866 = vsub.f32 %v8864, %v8865
    %v8867 = vand.u32 %v8866, 4294901760
    %8868 = vmatpush2.msra.mxu0 %v8867
    %8869 = vmatprep.subr.mxu0 0.0
    %v8870 = vand.u32 %v8556, 4294901760
    %v8871 = vsub.f32 %v8556, %v8870
    %v8872 = vand.u32 %v8871, 4294901760
    %v8873 = vsub.f32 %v8871, %v8872
    %v8874 = vand.u32 %v8873, 4294901760
    %8875 = vmatpush2.msra.mxu0 %v8874
    %8876 = vmatprep.subr.mxu0 0.0
    %v8877 = vand.u32 %v8555, 4294901760
    %v8878 = vsub.f32 %v8555, %v8877
    %v8879 = vand.u32 %v8878, 4294901760
    %v8880 = vsub.f32 %v8878, %v8879
    %v8881 = vand.u32 %v8880, 4294901760
    %8882 = vmatpush2.msra.mxu0 %v8881
    %8883 = vmatprep.subr.mxu0 0.0
    %v8884 = vand.u32 %v8554, 4294901760
    %v8885 = vsub.f32 %v8554, %v8884
    %v8886 = vand.u32 %v8885, 4294901760
    %v8887 = vsub.f32 %v8885, %v8886
    %v8888 = vand.u32 %v8887, 4294901760
    %8889 = vmatpush2.msra.mxu0 %v8888
    %8890 = vmatprep.subr.mxu0 0.0
    %v8891 = vand.u32 %v8553, 4294901760
    %v8892 = vsub.f32 %v8553, %v8891
    %v8893 = vand.u32 %v8892, 4294901760
    %v8894 = vsub.f32 %v8892, %v8893
    %v8895 = vand.u32 %v8894, 4294901760
    %8896 = vmatpush2.msra.mxu0 %v8895
    %8897 = vmatprep.subr.mxu0 0.0
    %v8898 = vand.u32 %v8552, 4294901760
    %v8899 = vsub.f32 %v8552, %v8898
    %v8900 = vand.u32 %v8899, 4294901760
    %v8901 = vsub.f32 %v8899, %v8900
    %v8902 = vand.u32 %v8901, 4294901760
    %8903 = vmatpush2.msra.mxu0 %v8902
    %v8904 = vand.u32 %v8535, 4294901760
    %8905 = vmatprep.mubr.f32.mxu0 %v8904
    %v8906 = vand.u32 %v8534, 4294901760
    %8907 = vmatmul.mubr.f32.gmra.mxu0 %v8906
    %v8908 = vpop.f32.mrf.mxu0
    %v8909 = vadd.f32 %v8677, %v8908
    %v8910 = vpop.f32.mrf.mxu0
    %8911 = vdwg.mxu0
    %8912 = vmatprep.subr.mxu0 0.0
    %v8913 = vand.u32 %v8551, 4294901760
    %v8914 = vsub.f32 %v8551, %v8913
    %8915 = vmatpush1.msra.mxu0 %v8914
    %8916 = vmatprep.subr.mxu0 0.0
    %v8917 = vand.u32 %v8550, 4294901760
    %v8918 = vsub.f32 %v8550, %v8917
    %8919 = vmatpush1.msra.mxu0 %v8918
    %8920 = vmatprep.subr.mxu0 0.0
    %v8921 = vand.u32 %v8549, 4294901760
    %v8922 = vsub.f32 %v8549, %v8921
    %8923 = vmatpush1.msra.mxu0 %v8922
    %8924 = vmatprep.subr.mxu0 0.0
    %v8925 = vand.u32 %v8548, 4294901760
    %v8926 = vsub.f32 %v8548, %v8925
    %8927 = vmatpush1.msra.mxu0 %v8926
    %8928 = vmatprep.subr.mxu0 0.0
    %v8929 = vand.u32 %v8547, 4294901760
    %v8930 = vsub.f32 %v8547, %v8929
    %8931 = vmatpush1.msra.mxu0 %v8930
    %8932 = vmatprep.subr.mxu0 0.0
    %v8933 = vand.u32 %v8546, 4294901760
    %v8934 = vsub.f32 %v8546, %v8933
    %8935 = vmatpush1.msra.mxu0 %v8934
    %8936 = vmatprep.subr.mxu0 0.0
    %v8937 = vand.u32 %v8545, 4294901760
    %v8938 = vsub.f32 %v8545, %v8937
    %8939 = vmatpush1.msra.mxu0 %v8938
    %8940 = vmatprep.subr.mxu0 0.0
    %v8941 = vand.u32 %v8544, 4294901760
    %v8942 = vsub.f32 %v8544, %v8941
    %8943 = vmatpush1.msra.mxu0 %v8942
    %8944 = vmatprep.subr.mxu0 0.0
    %v8945 = vand.u32 %v8543, 4294901760
    %v8946 = vsub.f32 %v8543, %v8945
    %8947 = vmatpush1.msra.mxu0 %v8946
    %8948 = vmatprep.subr.mxu0 0.0
    %v8949 = vand.u32 %v8542, 4294901760
    %v8950 = vsub.f32 %v8542, %v8949
    %8951 = vmatpush1.msra.mxu0 %v8950
    %8952 = vmatprep.subr.mxu0 0.0
    %v8953 = vand.u32 %v8541, 4294901760
    %v8954 = vsub.f32 %v8541, %v8953
    %8955 = vmatpush1.msra.mxu0 %v8954
    %8956 = vmatprep.subr.mxu0 0.0
    %v8957 = vand.u32 %v8540, 4294901760
    %v8958 = vsub.f32 %v8540, %v8957
    %8959 = vmatpush1.msra.mxu0 %v8958
    %8960 = vmatprep.subr.mxu0 0.0
    %v8961 = vand.u32 %v8539, 4294901760
    %v8962 = vsub.f32 %v8539, %v8961
    %8963 = vmatpush1.msra.mxu0 %v8962
    %8964 = vmatprep.subr.mxu0 0.0
    %v8965 = vand.u32 %v8538, 4294901760
    %v8966 = vsub.f32 %v8538, %v8965
    %8967 = vmatpush1.msra.mxu0 %v8966
    %8968 = vmatprep.subr.mxu0 0.0
    %v8969 = vand.u32 %v8537, 4294901760
    %v8970 = vsub.f32 %v8537, %v8969
    %8971 = vmatpush1.msra.mxu0 %v8970
    %8972 = vmatprep.subr.mxu0 0.0
    %v8973 = vand.u32 %v8536, 4294901760
    %v8974 = vsub.f32 %v8536, %v8973
    %8975 = vmatpush1.msra.mxu0 %v8974
    %8976 = vmatprep.subr.mxu0 0.0
    %v8977 = vand.u32 %v8567, 4294901760
    %v8978 = vsub.f32 %v8567, %v8977
    %8979 = vmatpush2.msra.mxu0 %v8978
    %8980 = vmatprep.subr.mxu0 0.0
    %v8981 = vand.u32 %v8566, 4294901760
    %v8982 = vsub.f32 %v8566, %v8981
    %8983 = vmatpush2.msra.mxu0 %v8982
    %8984 = vmatprep.subr.mxu0 0.0
    %v8985 = vand.u32 %v8565, 4294901760
    %v8986 = vsub.f32 %v8565, %v8985
    %8987 = vmatpush2.msra.mxu0 %v8986
    %8988 = vmatprep.subr.mxu0 0.0
    %v8989 = vand.u32 %v8564, 4294901760
    %v8990 = vsub.f32 %v8564, %v8989
    %8991 = vmatpush2.msra.mxu0 %v8990
    %8992 = vmatprep.subr.mxu0 0.0
    %v8993 = vand.u32 %v8563, 4294901760
    %v8994 = vsub.f32 %v8563, %v8993
    %8995 = vmatpush2.msra.mxu0 %v8994
    %8996 = vmatprep.subr.mxu0 0.0
    %v8997 = vand.u32 %v8562, 4294901760
    %v8998 = vsub.f32 %v8562, %v8997
    %8999 = vmatpush2.msra.mxu0 %v8998
    %9000 = vmatprep.subr.mxu0 0.0
    %v9001 = vand.u32 %v8561, 4294901760
    %v9002 = vsub.f32 %v8561, %v9001
    %9003 = vmatpush2.msra.mxu0 %v9002
    %9004 = vmatprep.subr.mxu0 0.0
    %v9005 = vand.u32 %v8560, 4294901760
    %v9006 = vsub.f32 %v8560, %v9005
    %9007 = vmatpush2.msra.mxu0 %v9006
    %9008 = vmatprep.subr.mxu0 0.0
    %v9009 = vand.u32 %v8559, 4294901760
    %v9010 = vsub.f32 %v8559, %v9009
    %9011 = vmatpush2.msra.mxu0 %v9010
    %9012 = vmatprep.subr.mxu0 0.0
    %v9013 = vand.u32 %v8558, 4294901760
    %v9014 = vsub.f32 %v8558, %v9013
    %9015 = vmatpush2.msra.mxu0 %v9014
    %9016 = vmatprep.subr.mxu0 0.0
    %v9017 = vand.u32 %v8557, 4294901760
    %v9018 = vsub.f32 %v8557, %v9017
    %9019 = vmatpush2.msra.mxu0 %v9018
    %9020 = vmatprep.subr.mxu0 0.0
    %v9021 = vand.u32 %v8556, 4294901760
    %v9022 = vsub.f32 %v8556, %v9021
    %9023 = vmatpush2.msra.mxu0 %v9022
    %9024 = vmatprep.subr.mxu0 0.0
    %v9025 = vand.u32 %v8555, 4294901760
    %v9026 = vsub.f32 %v8555, %v9025
    %9027 = vmatpush2.msra.mxu0 %v9026
    %9028 = vmatprep.subr.mxu0 0.0
    %v9029 = vand.u32 %v8554, 4294901760
    %v9030 = vsub.f32 %v8554, %v9029
    %9031 = vmatpush2.msra.mxu0 %v9030
    %9032 = vmatprep.subr.mxu0 0.0
    %v9033 = vand.u32 %v8553, 4294901760
    %v9034 = vsub.f32 %v8553, %v9033
    %9035 = vmatpush2.msra.mxu0 %v9034
    %9036 = vmatprep.subr.mxu0 0.0
    %v9037 = vand.u32 %v8552, 4294901760
    %v9038 = vsub.f32 %v8552, %v9037
    %9039 = vmatpush2.msra.mxu0 %v9038
    %v9040 = vand.u32 %v8535, 4294901760
    %v9041 = vsub.f32 %v8535, %v9040
    %9042 = vmatprep.mubr.f32.mxu0 %v9041
    %v9043 = vand.u32 %v8534, 4294901760
    %v9044 = vsub.f32 %v8534, %v9043
    %9045 = vmatmul.mubr.f32.gmra.mxu0 %v9044
    %v9046 = vpop.f32.mrf.mxu0
    %v9047 = vadd.f32 %v8909, %v9046
    %v9048 = vpop.f32.mrf.mxu0
    %9049 = vdwg.mxu0
    %9050 = vmatprep.subr.mxu0 0.0
    %v9051 = vand.u32 %v8551, 4294901760
    %9052 = vmatpush1.msra.mxu0 %v9051
    %9053 = vmatprep.subr.mxu0 0.0
    %v9054 = vand.u32 %v8550, 4294901760
    %9055 = vmatpush1.msra.mxu0 %v9054
    %9056 = vmatprep.subr.mxu0 0.0
    %v9057 = vand.u32 %v8549, 4294901760
    %9058 = vmatpush1.msra.mxu0 %v9057
    %9059 = vmatprep.subr.mxu0 0.0
    %v9060 = vand.u32 %v8548, 4294901760
    %9061 = vmatpush1.msra.mxu0 %v9060
    %9062 = vmatprep.subr.mxu0 0.0
    %v9063 = vand.u32 %v8547, 4294901760
    %9064 = vmatpush1.msra.mxu0 %v9063
    %9065 = vmatprep.subr.mxu0 0.0
    %v9066 = vand.u32 %v8546, 4294901760
    %9067 = vmatpush1.msra.mxu0 %v9066
    %9068 = vmatprep.subr.mxu0 0.0
    %v9069 = vand.u32 %v8545, 4294901760
    %9070 = vmatpush1.msra.mxu0 %v9069
    %9071 = vmatprep.subr.mxu0 0.0
    %v9072 = vand.u32 %v8544, 4294901760
    %9073 = vmatpush1.msra.mxu0 %v9072
    %9074 = vmatprep.subr.mxu0 0.0
    %v9075 = vand.u32 %v8543, 4294901760
    %9076 = vmatpush1.msra.mxu0 %v9075
    %9077 = vmatprep.subr.mxu0 0.0
    %v9078 = vand.u32 %v8542, 4294901760
    %9079 = vmatpush1.msra.mxu0 %v9078
    %9080 = vmatprep.subr.mxu0 0.0
    %v9081 = vand.u32 %v8541, 4294901760
    %9082 = vmatpush1.msra.mxu0 %v9081
    %9083 = vmatprep.subr.mxu0 0.0
    %v9084 = vand.u32 %v8540, 4294901760
    %9085 = vmatpush1.msra.mxu0 %v9084
    %9086 = vmatprep.subr.mxu0 0.0
    %v9087 = vand.u32 %v8539, 4294901760
    %9088 = vmatpush1.msra.mxu0 %v9087
    %9089 = vmatprep.subr.mxu0 0.0
    %v9090 = vand.u32 %v8538, 4294901760
    %9091 = vmatpush1.msra.mxu0 %v9090
    %9092 = vmatprep.subr.mxu0 0.0
    %v9093 = vand.u32 %v8537, 4294901760
    %9094 = vmatpush1.msra.mxu0 %v9093
    %9095 = vmatprep.subr.mxu0 0.0
    %v9096 = vand.u32 %v8536, 4294901760
    %9097 = vmatpush1.msra.mxu0 %v9096
    %9098 = vmatprep.subr.mxu0 0.0
    %v9099 = vand.u32 %v8567, 4294901760
    %9100 = vmatpush2.msra.mxu0 %v9099
    %9101 = vmatprep.subr.mxu0 0.0
    %v9102 = vand.u32 %v8566, 4294901760
    %9103 = vmatpush2.msra.mxu0 %v9102
    %9104 = vmatprep.subr.mxu0 0.0
    %v9105 = vand.u32 %v8565, 4294901760
    %9106 = vmatpush2.msra.mxu0 %v9105
    %9107 = vmatprep.subr.mxu0 0.0
    %v9108 = vand.u32 %v8564, 4294901760
    %9109 = vmatpush2.msra.mxu0 %v9108
    %9110 = vmatprep.subr.mxu0 0.0
    %v9111 = vand.u32 %v8563, 4294901760
    %9112 = vmatpush2.msra.mxu0 %v9111
    %9113 = vmatprep.subr.mxu0 0.0
    %v9114 = vand.u32 %v8562, 4294901760
    %9115 = vmatpush2.msra.mxu0 %v9114
    %9116 = vmatprep.subr.mxu0 0.0
    %v9117 = vand.u32 %v8561, 4294901760
    %9118 = vmatpush2.msra.mxu0 %v9117
    %9119 = vmatprep.subr.mxu0 0.0
    %v9120 = vand.u32 %v8560, 4294901760
    %9121 = vmatpush2.msra.mxu0 %v9120
    %9122 = vmatprep.subr.mxu0 0.0
    %v9123 = vand.u32 %v8559, 4294901760
    %9124 = vmatpush2.msra.mxu0 %v9123
    %9125 = vmatprep.subr.mxu0 0.0
    %v9126 = vand.u32 %v8558, 4294901760
    %9127 = vmatpush2.msra.mxu0 %v9126
    %9128 = vmatprep.subr.mxu0 0.0
    %v9129 = vand.u32 %v8557, 4294901760
    %9130 = vmatpush2.msra.mxu0 %v9129
    %9131 = vmatprep.subr.mxu0 0.0
    %v9132 = vand.u32 %v8556, 4294901760
    %9133 = vmatpush2.msra.mxu0 %v9132
    %9134 = vmatprep.subr.mxu0 0.0
    %v9135 = vand.u32 %v8555, 4294901760
    %9136 = vmatpush2.msra.mxu0 %v9135
    %9137 = vmatprep.subr.mxu0 0.0
    %v9138 = vand.u32 %v8554, 4294901760
    %9139 = vmatpush2.msra.mxu0 %v9138
    %9140 = vmatprep.subr.mxu0 0.0
    %v9141 = vand.u32 %v8553, 4294901760
    %9142 = vmatpush2.msra.mxu0 %v9141
    %9143 = vmatprep.subr.mxu0 0.0
    %v9144 = vand.u32 %v8552, 4294901760
    %9145 = vmatpush2.msra.mxu0 %v9144
    %v9146 = vand.u32 %v8535, 4294901760
    %v9147 = vsub.f32 %v8535, %v9146
    %v9148 = vand.u32 %v9147, 4294901760
    %9149 = vmatprep.mubr.f32.mxu0 %v9148
    %v9150 = vand.u32 %v8534, 4294901760
    %v9151 = vsub.f32 %v8534, %v9150
    %v9152 = vand.u32 %v9151, 4294901760
    %9153 = vmatmul.mubr.f32.gmra.mxu0 %v9152
    %v9154 = vpop.f32.mrf.mxu0
    %v9155 = vadd.f32 %v9047, %v9154
    %v9156 = vpop.f32.mrf.mxu0
    %9157 = vdwg.mxu0
    %9158 = vmatprep.subr.mxu0 0.0
    %v9159 = vand.u32 %v8551, 4294901760
    %v9160 = vsub.f32 %v8551, %v9159
    %v9161 = vand.u32 %v9160, 4294901760
    %9162 = vmatpush1.msra.mxu0 %v9161
    %9163 = vmatprep.subr.mxu0 0.0
    %v9164 = vand.u32 %v8550, 4294901760
    %v9165 = vsub.f32 %v8550, %v9164
    %v9166 = vand.u32 %v9165, 4294901760
    %9167 = vmatpush1.msra.mxu0 %v9166
    %9168 = vmatprep.subr.mxu0 0.0
    %v9169 = vand.u32 %v8549, 4294901760
    %v9170 = vsub.f32 %v8549, %v9169
    %v9171 = vand.u32 %v9170, 4294901760
    %9172 = vmatpush1.msra.mxu0 %v9171
    %9173 = vmatprep.subr.mxu0 0.0
    %v9174 = vand.u32 %v8548, 4294901760
    %v9175 = vsub.f32 %v8548, %v9174
    %v9176 = vand.u32 %v9175, 4294901760
    %9177 = vmatpush1.msra.mxu0 %v9176
    %9178 = vmatprep.subr.mxu0 0.0
    %v9179 = vand.u32 %v8547, 4294901760
    %v9180 = vsub.f32 %v8547, %v9179
    %v9181 = vand.u32 %v9180, 4294901760
    %9182 = vmatpush1.msra.mxu0 %v9181
    %9183 = vmatprep.subr.mxu0 0.0
    %v9184 = vand.u32 %v8546, 4294901760
    %v9185 = vsub.f32 %v8546, %v9184
    %v9186 = vand.u32 %v9185, 4294901760
    %9187 = vmatpush1.msra.mxu0 %v9186
    %9188 = vmatprep.subr.mxu0 0.0
    %v9189 = vand.u32 %v8545, 4294901760
    %v9190 = vsub.f32 %v8545, %v9189
    %v9191 = vand.u32 %v9190, 4294901760
    %9192 = vmatpush1.msra.mxu0 %v9191
    %9193 = vmatprep.subr.mxu0 0.0
    %v9194 = vand.u32 %v8544, 4294901760
    %v9195 = vsub.f32 %v8544, %v9194
    %v9196 = vand.u32 %v9195, 4294901760
    %9197 = vmatpush1.msra.mxu0 %v9196
    %9198 = vmatprep.subr.mxu0 0.0
    %v9199 = vand.u32 %v8543, 4294901760
    %v9200 = vsub.f32 %v8543, %v9199
    %v9201 = vand.u32 %v9200, 4294901760
    %9202 = vmatpush1.msra.mxu0 %v9201
    %9203 = vmatprep.subr.mxu0 0.0
    %v9204 = vand.u32 %v8542, 4294901760
    %v9205 = vsub.f32 %v8542, %v9204
    %v9206 = vand.u32 %v9205, 4294901760
    %9207 = vmatpush1.msra.mxu0 %v9206
    %9208 = vmatprep.subr.mxu0 0.0
    %v9209 = vand.u32 %v8541, 4294901760
    %v9210 = vsub.f32 %v8541, %v9209
    %v9211 = vand.u32 %v9210, 4294901760
    %9212 = vmatpush1.msra.mxu0 %v9211
    %9213 = vmatprep.subr.mxu0 0.0
    %v9214 = vand.u32 %v8540, 4294901760
    %v9215 = vsub.f32 %v8540, %v9214
    %v9216 = vand.u32 %v9215, 4294901760
    %9217 = vmatpush1.msra.mxu0 %v9216
    %9218 = vmatprep.subr.mxu0 0.0
    %v9219 = vand.u32 %v8539, 4294901760
    %v9220 = vsub.f32 %v8539, %v9219
    %v9221 = vand.u32 %v9220, 4294901760
    %9222 = vmatpush1.msra.mxu0 %v9221
    %9223 = vmatprep.subr.mxu0 0.0
    %v9224 = vand.u32 %v8538, 4294901760
    %v9225 = vsub.f32 %v8538, %v9224
    %v9226 = vand.u32 %v9225, 4294901760
    %9227 = vmatpush1.msra.mxu0 %v9226
    %9228 = vmatprep.subr.mxu0 0.0
    %v9229 = vand.u32 %v8537, 4294901760
    %v9230 = vsub.f32 %v8537, %v9229
    %v9231 = vand.u32 %v9230, 4294901760
    %9232 = vmatpush1.msra.mxu0 %v9231
    %9233 = vmatprep.subr.mxu0 0.0
    %v9234 = vand.u32 %v8536, 4294901760
    %v9235 = vsub.f32 %v8536, %v9234
    %v9236 = vand.u32 %v9235, 4294901760
    %9237 = vmatpush1.msra.mxu0 %v9236
    %9238 = vmatprep.subr.mxu0 0.0
    %v9239 = vand.u32 %v8567, 4294901760
    %v9240 = vsub.f32 %v8567, %v9239
    %v9241 = vand.u32 %v9240, 4294901760
    %9242 = vmatpush2.msra.mxu0 %v9241
    %9243 = vmatprep.subr.mxu0 0.0
    %v9244 = vand.u32 %v8566, 4294901760
    %v9245 = vsub.f32 %v8566, %v9244
    %v9246 = vand.u32 %v9245, 4294901760
    %9247 = vmatpush2.msra.mxu0 %v9246
    %9248 = vmatprep.subr.mxu0 0.0
    %v9249 = vand.u32 %v8565, 4294901760
    %v9250 = vsub.f32 %v8565, %v9249
    %v9251 = vand.u32 %v9250, 4294901760
    %9252 = vmatpush2.msra.mxu0 %v9251
    %9253 = vmatprep.subr.mxu0 0.0
    %v9254 = vand.u32 %v8564, 4294901760
    %v9255 = vsub.f32 %v8564, %v9254
    %v9256 = vand.u32 %v9255, 4294901760
    %9257 = vmatpush2.msra.mxu0 %v9256
    %9258 = vmatprep.subr.mxu0 0.0
    %v9259 = vand.u32 %v8563, 4294901760
    %v9260 = vsub.f32 %v8563, %v9259
    %v9261 = vand.u32 %v9260, 4294901760
    %9262 = vmatpush2.msra.mxu0 %v9261
    %9263 = vmatprep.subr.mxu0 0.0
    %v9264 = vand.u32 %v8562, 4294901760
    %v9265 = vsub.f32 %v8562, %v9264
    %v9266 = vand.u32 %v9265, 4294901760
    %9267 = vmatpush2.msra.mxu0 %v9266
    %9268 = vmatprep.subr.mxu0 0.0
    %v9269 = vand.u32 %v8561, 4294901760
    %v9270 = vsub.f32 %v8561, %v9269
    %v9271 = vand.u32 %v9270, 4294901760
    %9272 = vmatpush2.msra.mxu0 %v9271
    %9273 = vmatprep.subr.mxu0 0.0
    %v9274 = vand.u32 %v8560, 4294901760
    %v9275 = vsub.f32 %v8560, %v9274
    %v9276 = vand.u32 %v9275, 4294901760
    %9277 = vmatpush2.msra.mxu0 %v9276
    %9278 = vmatprep.subr.mxu0 0.0
    %v9279 = vand.u32 %v8559, 4294901760
    %v9280 = vsub.f32 %v8559, %v9279
    %v9281 = vand.u32 %v9280, 4294901760
    %9282 = vmatpush2.msra.mxu0 %v9281
    %9283 = vmatprep.subr.mxu0 0.0
    %v9284 = vand.u32 %v8558, 4294901760
    %v9285 = vsub.f32 %v8558, %v9284
    %v9286 = vand.u32 %v9285, 4294901760
    %9287 = vmatpush2.msra.mxu0 %v9286
    %9288 = vmatprep.subr.mxu0 0.0
    %v9289 = vand.u32 %v8557, 4294901760
    %v9290 = vsub.f32 %v8557, %v9289
    %v9291 = vand.u32 %v9290, 4294901760
    %9292 = vmatpush2.msra.mxu0 %v9291
    %9293 = vmatprep.subr.mxu0 0.0
    %v9294 = vand.u32 %v8556, 4294901760
    %v9295 = vsub.f32 %v8556, %v9294
    %v9296 = vand.u32 %v9295, 4294901760
    %9297 = vmatpush2.msra.mxu0 %v9296
    %9298 = vmatprep.subr.mxu0 0.0
    %v9299 = vand.u32 %v8555, 4294901760
    %v9300 = vsub.f32 %v8555, %v9299
    %v9301 = vand.u32 %v9300, 4294901760
    %9302 = vmatpush2.msra.mxu0 %v9301
    %9303 = vmatprep.subr.mxu0 0.0
    %v9304 = vand.u32 %v8554, 4294901760
    %v9305 = vsub.f32 %v8554, %v9304
    %v9306 = vand.u32 %v9305, 4294901760
    %9307 = vmatpush2.msra.mxu0 %v9306
    %9308 = vmatprep.subr.mxu0 0.0
    %v9309 = vand.u32 %v8553, 4294901760
    %v9310 = vsub.f32 %v8553, %v9309
    %v9311 = vand.u32 %v9310, 4294901760
    %9312 = vmatpush2.msra.mxu0 %v9311
    %9313 = vmatprep.subr.mxu0 0.0
    %v9314 = vand.u32 %v8552, 4294901760
    %v9315 = vsub.f32 %v8552, %v9314
    %v9316 = vand.u32 %v9315, 4294901760
    %9317 = vmatpush2.msra.mxu0 %v9316
    %v9318 = vand.u32 %v8535, 4294901760
    %9319 = vmatprep.mubr.f32.mxu0 %v9318
    %v9320 = vand.u32 %v8534, 4294901760
    %9321 = vmatmul.mubr.f32.gmra.mxu0 %v9320
    %v9322 = vpop.f32.mrf.mxu0
    %v9323 = vadd.f32 %v9155, %v9322
    %v9324 = vpop.f32.mrf.mxu0
    %9325 = vdwg.mxu0
    %9326 = vmatprep.subr.mxu0 0.0
    %v9327 = vand.u32 %v8551, 4294901760
    %9328 = vmatpush1.msra.mxu0 %v9327
    %9329 = vmatprep.subr.mxu0 0.0
    %v9330 = vand.u32 %v8550, 4294901760
    %9331 = vmatpush1.msra.mxu0 %v9330
    %9332 = vmatprep.subr.mxu0 0.0
    %v9333 = vand.u32 %v8549, 4294901760
    %9334 = vmatpush1.msra.mxu0 %v9333
    %9335 = vmatprep.subr.mxu0 0.0
    %v9336 = vand.u32 %v8548, 4294901760
    %9337 = vmatpush1.msra.mxu0 %v9336
    %9338 = vmatprep.subr.mxu0 0.0
    %v9339 = vand.u32 %v8547, 4294901760
    %9340 = vmatpush1.msra.mxu0 %v9339
    %9341 = vmatprep.subr.mxu0 0.0
    %v9342 = vand.u32 %v8546, 4294901760
    %9343 = vmatpush1.msra.mxu0 %v9342
    %9344 = vmatprep.subr.mxu0 0.0
    %v9345 = vand.u32 %v8545, 4294901760
    %9346 = vmatpush1.msra.mxu0 %v9345
    %9347 = vmatprep.subr.mxu0 0.0
    %v9348 = vand.u32 %v8544, 4294901760
    %9349 = vmatpush1.msra.mxu0 %v9348
    %9350 = vmatprep.subr.mxu0 0.0
    %v9351 = vand.u32 %v8543, 4294901760
    %9352 = vmatpush1.msra.mxu0 %v9351
    %9353 = vmatprep.subr.mxu0 0.0
    %v9354 = vand.u32 %v8542, 4294901760
    %9355 = vmatpush1.msra.mxu0 %v9354
    %9356 = vmatprep.subr.mxu0 0.0
    %v9357 = vand.u32 %v8541, 4294901760
    %9358 = vmatpush1.msra.mxu0 %v9357
    %9359 = vmatprep.subr.mxu0 0.0
    %v9360 = vand.u32 %v8540, 4294901760
    %9361 = vmatpush1.msra.mxu0 %v9360
    %9362 = vmatprep.subr.mxu0 0.0
    %v9363 = vand.u32 %v8539, 4294901760
    %9364 = vmatpush1.msra.mxu0 %v9363
    %9365 = vmatprep.subr.mxu0 0.0
    %v9366 = vand.u32 %v8538, 4294901760
    %9367 = vmatpush1.msra.mxu0 %v9366
    %9368 = vmatprep.subr.mxu0 0.0
    %v9369 = vand.u32 %v8537, 4294901760
    %9370 = vmatpush1.msra.mxu0 %v9369
    %9371 = vmatprep.subr.mxu0 0.0
    %v9372 = vand.u32 %v8536, 4294901760
    %9373 = vmatpush1.msra.mxu0 %v9372
    %9374 = vmatprep.subr.mxu0 0.0
    %v9375 = vand.u32 %v8567, 4294901760
    %9376 = vmatpush2.msra.mxu0 %v9375
    %9377 = vmatprep.subr.mxu0 0.0
    %v9378 = vand.u32 %v8566, 4294901760
    %9379 = vmatpush2.msra.mxu0 %v9378
    %9380 = vmatprep.subr.mxu0 0.0
    %v9381 = vand.u32 %v8565, 4294901760
    %9382 = vmatpush2.msra.mxu0 %v9381
    %9383 = vmatprep.subr.mxu0 0.0
    %v9384 = vand.u32 %v8564, 4294901760
    %9385 = vmatpush2.msra.mxu0 %v9384
    %9386 = vmatprep.subr.mxu0 0.0
    %v9387 = vand.u32 %v8563, 4294901760
    %9388 = vmatpush2.msra.mxu0 %v9387
    %9389 = vmatprep.subr.mxu0 0.0
    %v9390 = vand.u32 %v8562, 4294901760
    %9391 = vmatpush2.msra.mxu0 %v9390
    %9392 = vmatprep.subr.mxu0 0.0
    %v9393 = vand.u32 %v8561, 4294901760
    %9394 = vmatpush2.msra.mxu0 %v9393
    %9395 = vmatprep.subr.mxu0 0.0
    %v9396 = vand.u32 %v8560, 4294901760
    %9397 = vmatpush2.msra.mxu0 %v9396
    %9398 = vmatprep.subr.mxu0 0.0
    %v9399 = vand.u32 %v8559, 4294901760
    %9400 = vmatpush2.msra.mxu0 %v9399
    %9401 = vmatprep.subr.mxu0 0.0
    %v9402 = vand.u32 %v8558, 4294901760
    %9403 = vmatpush2.msra.mxu0 %v9402
    %9404 = vmatprep.subr.mxu0 0.0
    %v9405 = vand.u32 %v8557, 4294901760
    %9406 = vmatpush2.msra.mxu0 %v9405
    %9407 = vmatprep.subr.mxu0 0.0
    %v9408 = vand.u32 %v8556, 4294901760
    %9409 = vmatpush2.msra.mxu0 %v9408
    %9410 = vmatprep.subr.mxu0 0.0
    %v9411 = vand.u32 %v8555, 4294901760
    %9412 = vmatpush2.msra.mxu0 %v9411
    %9413 = vmatprep.subr.mxu0 0.0
    %v9414 = vand.u32 %v8554, 4294901760
    %9415 = vmatpush2.msra.mxu0 %v9414
    %9416 = vmatprep.subr.mxu0 0.0
    %v9417 = vand.u32 %v8553, 4294901760
    %9418 = vmatpush2.msra.mxu0 %v9417
    %9419 = vmatprep.subr.mxu0 0.0
    %v9420 = vand.u32 %v8552, 4294901760
    %9421 = vmatpush2.msra.mxu0 %v9420
    %v9422 = vand.u32 %v8535, 4294901760
    %9423 = vmatprep.mubr.f32.mxu0 %v9422
    %v9424 = vand.u32 %v8534, 4294901760
    %9425 = vmatmul.mubr.f32.gmra.mxu0 %v9424
    %v9426 = vpop.f32.mrf.mxu0
    %v9427 = vadd.f32 %v9323, %v9426
    %v9428 = vpop.f32.mrf.mxu0
    %9429 = vdwg.mxu0
    %vm9430 = vcmask 60416
    %v9431 = vsel %vm9430, %v9427, -inf
    %v9432 = vrot.slane %v9431, 4
    %v9433 = vmax.f32 %v9431, %v9432
    %v9434 = vrot.slane %v9433, 2
    %v9435 = vmax.f32 %v9433, %v9434
    %v9436 = vrot.slane %v9435, 1
    %v9437 = vmax.f32 %v9435, %v9436
    %v9438 = vsub.f32 %v9427, %v9437
    %v9439 = vmul.f32 %v9438, 1.442695
    %v9440 = vpow.pop %v9439
    %v9441 = vsel %vm9430, %v9440, 0.0
    %v9442 = vrot.slane %v9441, 4
    %v9443 = vadd.f32 %v9441, %v9442
    %v9444 = vrot.slane %v9443, 2
    %v9445 = vadd.f32 %v9443, %v9444
    %v9446 = vrot.slane %v9445, 1
    %v9447 = vadd.f32 %v9445, %v9446
    %v9448 = vlog2.pop %v9447
    %v9449 = vmul.f32 %v9448, 0.6931472
    %v9450 = vsub.f32 %v9438, %v9449
    %9451 = vst.msk [vmem:[#allocation5] sm:$0xf] %vm9430, %v9450
    // Predicated region
    $region18: #{tpu_custom_call.1} parent=1 // pred_check
      _
    $region19: #{tpu_custom_call.1} parent=1 // pred_check_branch
      %9453 = sbr.rel (0) target = $region21
    $region20: #{tpu_custom_call.1} parent=1 // pred_region
      %s9455 = ssub.s32 64, 64
      %9456 = vsyncadd [#allocation4], %s9455
      %s9458 = sshll.u32 [#allocation5], 4
      %s9459 = int_to_ptr.vmem [resolvable:$true] %s9458
      %9461 = dma.vmem_to_hbm [thread:$0]  %s9459, 64, %s3, [#allocation4]
    $region21: #{tpu_custom_call.1} parent=1 // pred_fallthru
      _
    // Predicated region
    $region22: #{tpu_custom_call.1} parent=1 // pred_check
      _
    $region23: #{tpu_custom_call.1} parent=1 // pred_check_branch
      %9463 = sbr.rel (0) target = $region25
    $region24: #{tpu_custom_call.1} parent=1 // pred_region
      %9464 = dma.done [#allocation4], 64
    $region25: #{tpu_custom_call.1} parent=1 // pred_fallthru
      _
    %9465 = vsyncpa [#allocation3], 1
    %9466 = vsyncpa [#allocation4], 1

</llo_original>
